<compile_context>
chip_gen: v7x
topology: tpu7x:2x2x1
jax: 0.10.0
libtpu: 0.0.40
codegen_flags: <defaults>
</compile_context>

<pallas_src>
import jax
import jax.numpy as jnp
from jax.experimental import pallas as pl
from jax.experimental.pallas import tpu as pltpu


def gabor_kernel(params_ref, x_ref, w_ref, b_ref, o_ref):
    # One packed real matmul computing [lin_re | lin_im] in a single MXU push.
    lin = jnp.dot(x_ref[...], w_ref[...],
                  preferred_element_type=jnp.float32) + b_ref[...]
    d = lin.shape[-1] // 2
    lin_re = lin[:, :d]
    lin_im = lin[:, d:]

    w0 = params_ref[0]       # SMEM scalars, precomputed in the wrapper
    neg_w0 = params_ref[1]   # -w0
    c2 = params_ref[2]       # c*c

    # exp(1j*w0*lin - |c*lin|^2)
    mag = jnp.exp(neg_w0 * lin_im - c2 * (lin_re * lin_re + lin_im * lin_im))
    phase = w0 * lin_re
    # Lane-dense packed output [re | im]: one unmasked full-width store.
    o_ref[...] = jnp.concatenate([mag * jnp.cos(phase),
                                  mag * jnp.sin(phase)], axis=-1)


def pack_gabor_params(weight, bias):
    """One-time prep (hoist out of the hot path).

    weight: complex64 (dim_out, dim_in) in torch.nn.Linear layout.
    bias:   complex64 (dim_out,).
    Returns (W_packed, b_packed) float32 arrays of shape
    (2*dim_in, 2*dim_out) and (1, 2*dim_out)."""
    wr = jnp.real(weight).astype(jnp.float32).T   # (dim_in, dim_out)
    wi = jnp.imag(weight).astype(jnp.float32).T
    top = jnp.concatenate([wr, wi], axis=1)       # rows fed by xr
    bot = jnp.concatenate([-wi, wr], axis=1)      # rows fed by xi
    w_packed = jnp.concatenate([top, bot], axis=0)            # (2*dim_in, 2*dim_out)
    b_packed = jnp.concatenate([jnp.real(bias), jnp.imag(bias)]
                               ).astype(jnp.float32).reshape(1, -1)
    return w_packed, b_packed


def _pick_tile(n, tile_n):
    if tile_n is not None:
        assert n % tile_n == 0, "N must be divisible by tile_n"
        return tile_n
    if n <= 1024:            # tiny: whole array in one block, grid=(1,)
        return n
    for cand in (1024, 512, 256, 128, 64, 32, 16, 8):
        if n % cand == 0:
            return cand
    return n


def gabor_forward_packed(x_packed, w_packed, b_packed, w0, c, *, tile_n=None):
    """Hot path. x_packed: float32 (N, 2*dim_in) = [Re(x) | Im(x)].
    Returns float32 (N, 2*dim_out) = [Re(out) | Im(out)]."""
    N, two_k = x_packed.shape
    two_m = w_packed.shape[1]
    tile_n = _pick_tile(N, tile_n)
    grid = (N // tile_n,)

    params = jnp.asarray([w0, -w0, c * c], dtype=jnp.float32)

    out_packed = pl.pallas_call(
        gabor_kernel,
        out_shape=jax.ShapeDtypeStruct((N, two_m), jnp.float32),
        grid_spec=pltpu.PrefetchScalarGridSpec(
            num_scalar_prefetch=0,
            grid=grid,
            in_specs=[
                pl.BlockSpec(memory_space=pltpu.MemorySpace.SMEM),    # [w0,-w0,c^2]
                pl.BlockSpec((tile_n, two_k), lambda i: (i, 0)),      # packed x tile
                pl.BlockSpec((two_k, two_m), lambda i: (0, 0)),       # packed W (resident)
                pl.BlockSpec((1, two_m), lambda i: (0, 0)),           # packed b (resident)
            ],
            out_specs=pl.BlockSpec((tile_n, two_m), lambda i: (i, 0)),
        ),
        compiler_params=pltpu.CompilerParams(
            dimension_semantics=("parallel",)),
    )(params, x_packed, w_packed, b_packed)
    return out_packed


def complex_gabor_layer(x, weight, bias, w0, c, *, tile_n=None):
    """Module-equivalent convenience wrapper: complex64 in -> complex64 out.
    For repeated calls, pack params once with pack_gabor_params and call
    gabor_forward_packed directly on float planes."""
    w_packed, b_packed = pack_gabor_params(weight, bias)
    x_packed = jnp.concatenate(
        [jnp.real(x), jnp.imag(x)], axis=-1).astype(jnp.float32)
    out_packed = gabor_forward_packed(x_packed, w_packed, b_packed, w0, c,
                                      tile_n=tile_n)
    d = out_packed.shape[-1] // 2
    return jax.lax.complex(out_packed[:, :d], out_packed[:, d:])


if __name__ == "__main__":
    # Small shapes consistent with an implicit-representation layer.
    N, dim_in, dim_out = 256, 32, 64
    w0, c = 10.0, 40.0

    key = jax.random.PRNGKey(0)
    k1, k2, k3, k4, k5, k6 = jax.random.split(key, 6)

    # Deterministic synthetic parameters (torch.nn.Linear bound = 1/sqrt(dim_in)).
    bound = 1.0 / (dim_in ** 0.5)
    w_re = jax.random.uniform(k1, (dim_out, dim_in), jnp.float32, -bound, bound)
    w_im = jax.random.uniform(k2, (dim_out, dim_in), jnp.float32, -bound, bound)
    b_re = jax.random.uniform(k3, (dim_out,), jnp.float32, -bound, bound)
    b_im = jax.random.uniform(k4, (dim_out,), jnp.float32, -bound, bound)
    weight = jax.lax.complex(w_re, w_im)
    bias = jax.lax.complex(b_re, b_im)

    # Complex input (modest magnitudes so exp(-c^2|lin|^2) stays in range).
    x_re = 0.05 * jax.random.normal(k5, (N, dim_in), jnp.float32)
    x_im = 0.05 * jax.random.normal(k6, (N, dim_in), jnp.float32)
    x = jax.lax.complex(x_re, x_im)

    # Hoisted prep (done once), then the packed hot-path call.
    w_packed, b_packed = pack_gabor_params(weight, bias)
    x_packed = jnp.concatenate([x_re, x_im], axis=-1)
    out_packed = gabor_forward_packed(x_packed, w_packed, b_packed, w0, c)
    out_packed = jax.block_until_ready(out_packed)
    out = jax.lax.complex(out_packed[:, :dim_out], out_packed[:, dim_out:])

    # Pure-JAX reference of the PyTorch forward.
    lin = x @ weight.T + bias
    omega = w0 * lin
    scale = c * lin
    ref = jnp.exp(1j * omega - jnp.abs(scale) ** 2)

    assert out.shape == (N, dim_out) and out.dtype == jnp.complex64
    assert jnp.allclose(out, ref, atol=1e-5, rtol=1e-5)
    print("KERNEL_OK")
</pallas_src>

<mosaic_0001>
module attributes {stable_mosaic.version = 11 : i64} {
  func.func @gabor_kernel(%arg0: i32, %arg1: memref<3xf32, #tpu.memory_space<smem>>, %arg2: memref<256x64xf32, #tpu.memory_space<vmem>>, %arg3: memref<64x128xf32, #tpu.memory_space<vmem>>, %arg4: memref<1x128xf32, #tpu.memory_space<vmem>>, %arg5: memref<256x128xf32, #tpu.memory_space<vmem>>) attributes {dimension_semantics = [#tpu.dimension_semantics<parallel>], iteration_bounds = array<i64: 1>, scalar_prefetch = 0 : i64, scratch_operands = 0 : i64, tpu.core_type = #tpu.core_type<tc>, window_params = [{transform_indices = @transform_0, window_bounds = array<i64: 3>}, {transform_indices = @transform_1, window_bounds = array<i64: 256, 64>}, {pipeline_mode = #tpu.pipeline_mode<synchronous>, transform_indices = @transform_2, window_bounds = array<i64: 64, 128>}, {pipeline_mode = #tpu.pipeline_mode<synchronous>, transform_indices = @transform_3, window_bounds = array<i64: 1, 128>}, {transform_indices = @transform_4, window_bounds = array<i64: 256, 128>}]} {
    %c0 = arith.constant 0 : index
    %c0_0 = arith.constant 0 : index
    %0 = vector.load %arg2[%c0, %c0_0] : memref<256x64xf32, #tpu.memory_space<vmem>>, vector<256x64xf32>
    %c0_1 = arith.constant 0 : index
    %c0_2 = arith.constant 0 : index
    %1 = vector.load %arg3[%c0_1, %c0_2] : memref<64x128xf32, #tpu.memory_space<vmem>>, vector<64x128xf32>
    %cst = arith.constant dense<0.000000e+00> : vector<256x128xf32>
    %2 = tpu.matmul %0, %1, %cst {dimension_numbers = #tpu.dot_dimension_numbers<[1], [0], [0], [1], [0, 0, 1, 1], [], []>} : vector<256x64xf32>, vector<64x128xf32>, vector<256x128xf32> -> vector<256x128xf32>
    %c0_3 = arith.constant 0 : index
    %c0_4 = arith.constant 0 : index
    %3 = vector.load %arg4[%c0_3, %c0_4] : memref<1x128xf32, #tpu.memory_space<vmem>>, vector<1x128xf32>
    %4 = vector.broadcast %3 : vector<1x128xf32> to vector<256x128xf32>
    %5 = arith.addf %2, %4 : vector<256x128xf32>
    %6 = vector.extract_strided_slice %5 {offsets = [0, 0], sizes = [256, 64], strides = [1, 1]} : vector<256x128xf32> to vector<256x64xf32>
    %7 = vector.extract_strided_slice %5 {offsets = [0, 64], sizes = [256, 64], strides = [1, 1]} : vector<256x128xf32> to vector<256x64xf32>
    %c0_5 = arith.constant 0 : index
    %8 = memref.load %arg1[%c0_5] : memref<3xf32, #tpu.memory_space<smem>>
    %c1 = arith.constant 1 : index
    %9 = memref.load %arg1[%c1] : memref<3xf32, #tpu.memory_space<smem>>
    %c2 = arith.constant 2 : index
    %10 = memref.load %arg1[%c2] : memref<3xf32, #tpu.memory_space<smem>>
    %11 = vector.broadcast %9 : f32 to vector<256x64xf32>
    %12 = arith.mulf %11, %7 : vector<256x64xf32>
    %13 = arith.mulf %6, %6 : vector<256x64xf32>
    %14 = arith.mulf %7, %7 : vector<256x64xf32>
    %15 = arith.addf %13, %14 : vector<256x64xf32>
    %16 = vector.broadcast %10 : f32 to vector<256x64xf32>
    %17 = arith.mulf %16, %15 : vector<256x64xf32>
    %18 = arith.subf %12, %17 : vector<256x64xf32>
    %19 = math.exp %18 : vector<256x64xf32>
    %20 = vector.broadcast %8 : f32 to vector<256x64xf32>
    %21 = arith.mulf %20, %6 : vector<256x64xf32>
    %22 = math.cos %21 : vector<256x64xf32>
    %23 = arith.mulf %19, %22 : vector<256x64xf32>
    %24 = math.sin %21 : vector<256x64xf32>
    %25 = arith.mulf %19, %24 : vector<256x64xf32>
    %26 = tpu.concatenate %23, %25 in 1 : vector<256x64xf32>, vector<256x64xf32> -> vector<256x128xf32>
    %c0_6 = arith.constant 0 : index
    %c0_7 = arith.constant 0 : index
    %27 = vector.load %arg5[%c0_6, %c0_7] : memref<256x128xf32, #tpu.memory_space<vmem>>, vector<256x128xf32>
    tpu.vector_store %arg5[%c0_6, %c0_7], %26 {strides = array<i32>} : memref<256x128xf32, #tpu.memory_space<vmem>>, vector<256x128xf32>,
    return
  }
  func.func @transform_0(%arg0: i32) -> i32 {
    %c0_i32 = arith.constant 0 : i32
    %c0_i32_0 = arith.constant 0 : i32
    return %c0_i32 : i32
  }
  func.func @transform_1(%arg0: i32) -> (i32, i32) {
    %c0_i32 = arith.constant 0 : i32
    %c0_i32_0 = arith.constant 0 : i32
    return %arg0, %c0_i32 : i32, i32
  }
  func.func @transform_2(%arg0: i32) -> (i32, i32) {
    %c0_i32 = arith.constant 0 : i32
    %c0_i32_0 = arith.constant 0 : i32
    %c0_i32_1 = arith.constant 0 : i32
    return %c0_i32, %c0_i32_0 : i32, i32
  }
  func.func @transform_3(%arg0: i32) -> (i32, i32) {
    %c0_i32 = arith.constant 0 : i32
    %c0_i32_0 = arith.constant 0 : i32
    %c0_i32_1 = arith.constant 0 : i32
    return %c0_i32, %c0_i32_0 : i32, i32
  }
  func.func @transform_4(%arg0: i32) -> (i32, i32) {
    %c0_i32 = arith.constant 0 : i32
    %c0_i32_0 = arith.constant 0 : i32
    return %arg0, %c0_i32 : i32, i32
  }
}

</mosaic_0001>

<llo_original>
// kernel: tpu_custom_call.1
$region0: #{tpu_custom_call.1}
  #allocation0 [shape = 'u32[]', space=smem, size = 0x4, offset = 0x4, fixed_abs, tag = 'smem constant byte address 0x4 - core index']
  #allocation1 [shape = 'u32[144,128]{1,0:T(1,128)}', space=vmem, size = 0x12000, scoped, tag = 'internal scratch']
  %s0 = inlined_call_operand.vmem [shape: f32[3], index: 0, kind: input, shape index: {}]
  %s1 = inlined_call_operand.vmem [shape: f32[256,64], index: 1, kind: input, shape index: {}]
  %s2 = inlined_call_operand.vmem [shape: f32[64,128], index: 2, kind: input, shape index: {}]
  %s3 = inlined_call_operand.vmem [shape: f32[1,128], index: 3, kind: input, shape index: {}]
  %s4 = inlined_call_operand.hbm [shape: f32[256,128], index: 4, kind: output, shape index: {}]
  %s5 = sld [smem:[#allocation0]]
  $region30: #{tpu_custom_call.1} parent=0
    _
  %s7 = ssub.s32 1, %s5
  %s8 = scalar_select 0, %s7, %s5
  $region1: #{tpu_custom_call.1} parent=0
    #allocation2 [shape = 'u8[512]{0}', space=smem, size = 0x200, scoped, tag = 'input window, operand 0, single buffered']
    #allocation3 [shape = 's32[1]{0}', space=sflag, size = 0x4, scoped, tag = 'scoped memory for tpu_custom_call.1']
    #allocation4 [shape = 's32[1]{0}', space=sflag, size = 0x4, scoped, tag = 'scoped memory for tpu_custom_call.1']
    #allocation5 [shape = 'u8[131072]{0}', space=vmem, size = 0x20000, scoped, tag = 'output window, operand 0, single buffered']
    %9 = vsyncpa [#allocation4], 0
    %10 = vsyncpa [#allocation3], 0
    // Predicated region
    $region2: #{tpu_custom_call.1} parent=1 // pred_check
      _
    $region3: #{tpu_custom_call.1} parent=1 // pred_check_branch
      %12 = sbr.rel (0) target = $region5
    $region4: #{tpu_custom_call.1} parent=1 // pred_region
      %s14 = ssub.s32 16, 16
      %15 = vsyncadd [#allocation4], %s14
      %s17 = sshll.u32 %s0, 4
      %s18 = int_to_ptr.vmem [resolvable:$true] %s17
      %20 = dma.vmem_to_smem %s18, 16, [#allocation2], [#allocation4]
    $region5: #{tpu_custom_call.1} parent=1 // pred_fallthru
      _
    // Predicated region
    $region6: #{tpu_custom_call.1} parent=1 // pred_check
      _
    $region7: #{tpu_custom_call.1} parent=1 // pred_check_branch
      %22 = sbr.rel (0) target = $region9
    $region8: #{tpu_custom_call.1} parent=1 // pred_region
      _
    $region9: #{tpu_custom_call.1} parent=1 // pred_fallthru
      _
    // Predicated region
    $region10: #{tpu_custom_call.1} parent=1 // pred_check
      _
    $region11: #{tpu_custom_call.1} parent=1 // pred_check_branch
      %24 = sbr.rel (0) target = $region13
    $region12: #{tpu_custom_call.1} parent=1 // pred_region
      _
    $region13: #{tpu_custom_call.1} parent=1 // pred_fallthru
      _
    // Predicated region
    $region14: #{tpu_custom_call.1} parent=1 // pred_check
      _
    $region15: #{tpu_custom_call.1} parent=1 // pred_check_branch
      %26 = sbr.rel (0) target = $region17
    $region16: #{tpu_custom_call.1} parent=1 // pred_region
      _
    $region17: #{tpu_custom_call.1} parent=1 // pred_fallthru
      _
    // Predicated region
    $region18: #{tpu_custom_call.1} parent=1 // pred_check
      _
    $region19: #{tpu_custom_call.1} parent=1 // pred_check_branch
      %28 = sbr.rel (0) target = $region21
    $region20: #{tpu_custom_call.1} parent=1 // pred_region
      %29 = dma.done [#allocation4], 16
    $region21: #{tpu_custom_call.1} parent=1 // pred_fallthru
      _
    %30 = sfence
    %v31 = vld [vmem:[%s1] sm:$0xff]
    %v32 = vld [vmem:[%s1 + $0x8] sm:$0xff]
    %v33 = vld [vmem:[%s1 + $0x10] sm:$0xff]
    %v34 = vld [vmem:[%s1 + $0x18] sm:$0xff]
    %v35 = vld [vmem:[%s1 + $0x20] sm:$0xff]
    %v36 = vld [vmem:[%s1 + $0x28] sm:$0xff]
    %v37 = vld [vmem:[%s1 + $0x30] sm:$0xff]
    %v38 = vld [vmem:[%s1 + $0x38] sm:$0xff]
    %v39 = vld [vmem:[%s1 + $0x40] sm:$0xff]
    %v40 = vld [vmem:[%s1 + $0x48] sm:$0xff]
    %v41 = vld [vmem:[%s1 + $0x50] sm:$0xff]
    %v42 = vld [vmem:[%s1 + $0x58] sm:$0xff]
    %v43 = vld [vmem:[%s1 + $0x60] sm:$0xff]
    %v44 = vld [vmem:[%s1 + $0x68] sm:$0xff]
    %v45 = vld [vmem:[%s1 + $0x70] sm:$0xff]
    %v46 = vld [vmem:[%s1 + $0x78] sm:$0xff]
    %v47 = vld [vmem:[%s1 + $0x80] sm:$0xff]
    %v48 = vld [vmem:[%s1 + $0x88] sm:$0xff]
    %v49 = vld [vmem:[%s1 + $0x90] sm:$0xff]
    %v50 = vld [vmem:[%s1 + $0x98] sm:$0xff]
    %v51 = vld [vmem:[%s1 + $0xa0] sm:$0xff]
    %v52 = vld [vmem:[%s1 + $0xa8] sm:$0xff]
    %v53 = vld [vmem:[%s1 + $0xb0] sm:$0xff]
    %v54 = vld [vmem:[%s1 + $0xb8] sm:$0xff]
    %v55 = vld [vmem:[%s1 + $0xc0] sm:$0xff]
    %v56 = vld [vmem:[%s1 + $0xc8] sm:$0xff]
    %v57 = vld [vmem:[%s1 + $0xd0] sm:$0xff]
    %v58 = vld [vmem:[%s1 + $0xd8] sm:$0xff]
    %v59 = vld [vmem:[%s1 + $0xe0] sm:$0xff]
    %v60 = vld [vmem:[%s1 + $0xe8] sm:$0xff]
    %v61 = vld [vmem:[%s1 + $0xf0] sm:$0xff]
    %v62 = vld [vmem:[%s1 + $0xf8] sm:$0xff]
    %v63 = vld [vmem:[%s2] sm:$0xff]
    %v64 = vld [vmem:[%s2 + $0x8] sm:$0xff]
    %v65 = vld [vmem:[%s2 + $0x10] sm:$0xff]
    %v66 = vld [vmem:[%s2 + $0x18] sm:$0xff]
    %v67 = vld [vmem:[%s2 + $0x20] sm:$0xff]
    %v68 = vld [vmem:[%s2 + $0x28] sm:$0xff]
    %v69 = vld [vmem:[%s2 + $0x30] sm:$0xff]
    %v70 = vld [vmem:[%s2 + $0x38] sm:$0xff]
    %v71 = vld [vmem:[%s3] sm:$0x1]
    %v73 = vlaneseq
    %v74 = vshrl.u32 %v73, 7
    %v75 = vsub.s32 0, %v74
    %v76 = vrot.slane %v71, %v75
    %vm78 = vcmask 523264
    %v80 = vsel %vm78, %v31, 0
    %v83 = vsel %vm78, %v32, 0
    %v86 = vsel %vm78, %v33, 0
    %v89 = vsel %vm78, %v34, 0
    %v92 = vsel %vm78, %v35, 0
    %v95 = vsel %vm78, %v36, 0
    %v98 = vsel %vm78, %v37, 0
    %v101 = vsel %vm78, %v38, 0
    %v104 = vsel %vm78, %v39, 0
    %v107 = vsel %vm78, %v40, 0
    %v110 = vsel %vm78, %v41, 0
    %v113 = vsel %vm78, %v42, 0
    %v116 = vsel %vm78, %v43, 0
    %v119 = vsel %vm78, %v44, 0
    %v122 = vsel %vm78, %v45, 0
    %v125 = vsel %vm78, %v46, 0
    %v128 = vsel %vm78, %v47, 0
    %v131 = vsel %vm78, %v48, 0
    %v134 = vsel %vm78, %v49, 0
    %v137 = vsel %vm78, %v50, 0
    %v140 = vsel %vm78, %v51, 0
    %v143 = vsel %vm78, %v52, 0
    %v146 = vsel %vm78, %v53, 0
    %v149 = vsel %vm78, %v54, 0
    %v152 = vsel %vm78, %v55, 0
    %v155 = vsel %vm78, %v56, 0
    %v158 = vsel %vm78, %v57, 0
    %v161 = vsel %vm78, %v58, 0
    %v164 = vsel %vm78, %v59, 0
    %v167 = vsel %vm78, %v60, 0
    %v170 = vsel %vm78, %v61, 0
    %v173 = vsel %vm78, %v62, 0
    %175 = vmatprep.subr.mxu0 0.0
    %176 = vmatpush1.msra.mxu0 %v63
    %177 = vmatprep.subr.mxu0 0.0
    %178 = vmatpush1.msra.mxu0 %v64
    %179 = vmatprep.subr.mxu0 0.0
    %180 = vmatpush1.msra.mxu0 %v65
    %181 = vmatprep.subr.mxu0 0.0
    %182 = vmatpush1.msra.mxu0 %v66
    %183 = vmatprep.subr.mxu0 0.0
    %184 = vmatpush1.msra.mxu0 %v67
    %185 = vmatprep.subr.mxu0 0.0
    %186 = vmatpush1.msra.mxu0 %v68
    %187 = vmatprep.subr.mxu0 0.0
    %188 = vmatpush1.msra.mxu0 %v69
    %189 = vmatprep.subr.mxu0 0.0
    %190 = vmatpush1.msra.mxu0 %v70
    %191 = vmatprep.subr.mxu0 0.0
    %192 = vmatpush1.msra.mxu0 0.0
    %193 = vmatprep.subr.mxu0 0.0
    %194 = vmatpush1.msra.mxu0 0.0
    %195 = vmatprep.subr.mxu0 0.0
    %196 = vmatpush1.msra.mxu0 0.0
    %197 = vmatprep.subr.mxu0 0.0
    %198 = vmatpush1.msra.mxu0 0.0
    %199 = vmatprep.subr.mxu0 0.0
    %200 = vmatpush1.msra.mxu0 0.0
    %201 = vmatprep.subr.mxu0 0.0
    %202 = vmatpush1.msra.mxu0 0.0
    %203 = vmatprep.subr.mxu0 0.0
    %204 = vmatpush1.msra.mxu0 0.0
    %205 = vmatprep.subr.mxu0 0.0
    %206 = vmatpush1.msra.mxu0 0.0
    %207 = vmatprep.subr.mxu0 0.0
    %208 = vmatpush1.msra.mxu0 0.0
    %209 = vmatprep.subr.mxu0 0.0
    %210 = vmatpush1.msra.mxu0 0.0
    %211 = vmatprep.subr.mxu0 0.0
    %212 = vmatpush1.msra.mxu0 0.0
    %213 = vmatprep.subr.mxu0 0.0
    %214 = vmatpush1.msra.mxu0 0.0
    %215 = vmatprep.subr.mxu0 0.0
    %216 = vmatpush1.msra.mxu0 0.0
    %217 = vmatprep.subr.mxu0 0.0
    %218 = vmatpush1.msra.mxu0 0.0
    %219 = vmatprep.subr.mxu0 0.0
    %220 = vmatpush1.msra.mxu0 0.0
    %221 = vmatprep.subr.mxu0 0.0
    %222 = vmatpush1.msra.mxu0 0.0
    %223 = vmatprep.subr.mxu0 0.0
    %224 = vmatpush1.msra.mxu0 0.0
    %225 = vmatprep.subr.mxu0 0.0
    %226 = vmatpush1.msra.mxu0 0.0
    %227 = vmatprep.subr.mxu0 0.0
    %228 = vmatpush1.msra.mxu0 0.0
    %229 = vmatprep.subr.mxu0 0.0
    %230 = vmatpush1.msra.mxu0 0.0
    %231 = vmatprep.subr.mxu0 0.0
    %232 = vmatpush1.msra.mxu0 0.0
    %233 = vmatprep.subr.mxu0 0.0
    %234 = vmatpush1.msra.mxu0 0.0
    %235 = vmatprep.subr.mxu0 0.0
    %236 = vmatpush1.msra.mxu0 0.0
    %237 = vmatprep.subr.mxu0 0.0
    %238 = vmatpush1.msra.mxu0 0.0
    %239 = vmatprep.mubr.f32.mxu0 0.0
    %240 = vmatmul.mubr.f32.gmra.mrb[0].mxu0 %v80
    %v241 = vpop.f32.mrb[0].mxu0
    %v242 = vadd.f32 %v76, %v241
    %v243 = vpop.f32.mrb[0].mxu0
    %244 = vmatprep.mubr.f32.mxu0 0.0
    %245 = vmatmul.mubr.f32.gmra.mrb[0].mxu0 %v83
    %v246 = vpop.f32.mrb[0].mxu0
    %v247 = vadd.f32 %v76, %v246
    %v248 = vpop.f32.mrb[0].mxu0
    %249 = vmatprep.mubr.f32.mxu0 0.0
    %250 = vmatmul.mubr.f32.gmra.mrb[0].mxu0 %v86
    %v251 = vpop.f32.mrb[0].mxu0
    %v252 = vadd.f32 %v76, %v251
    %v253 = vpop.f32.mrb[0].mxu0
    %254 = vmatprep.mubr.f32.mxu0 0.0
    %255 = vmatmul.mubr.f32.gmra.mrb[0].mxu0 %v89
    %v256 = vpop.f32.mrb[0].mxu0
    %v257 = vadd.f32 %v76, %v256
    %v258 = vpop.f32.mrb[0].mxu0
    %259 = vmatprep.mubr.f32.mxu0 0.0
    %260 = vmatmul.mubr.f32.gmra.mrb[0].mxu0 %v92
    %v261 = vpop.f32.mrb[0].mxu0
    %v262 = vadd.f32 %v76, %v261
    %v263 = vpop.f32.mrb[0].mxu0
    %264 = vmatprep.mubr.f32.mxu0 0.0
    %265 = vmatmul.mubr.f32.gmra.mrb[0].mxu0 %v95
    %v266 = vpop.f32.mrb[0].mxu0
    %v267 = vadd.f32 %v76, %v266
    %v268 = vpop.f32.mrb[0].mxu0
    %269 = vmatprep.mubr.f32.mxu0 0.0
    %270 = vmatmul.mubr.f32.gmra.mrb[0].mxu0 %v98
    %v271 = vpop.f32.mrb[0].mxu0
    %v272 = vadd.f32 %v76, %v271
    %v273 = vpop.f32.mrb[0].mxu0
    %274 = vmatprep.mubr.f32.mxu0 0.0
    %275 = vmatmul.mubr.f32.gmra.mrb[0].mxu0 %v101
    %v276 = vpop.f32.mrb[0].mxu0
    %v277 = vadd.f32 %v76, %v276
    %v278 = vpop.f32.mrb[0].mxu0
    %279 = vmatprep.mubr.f32.mxu0 0.0
    %280 = vmatmul.mubr.f32.gmra.mrb[0].mxu0 %v104
    %v281 = vpop.f32.mrb[0].mxu0
    %v282 = vadd.f32 %v76, %v281
    %v283 = vpop.f32.mrb[0].mxu0
    %284 = vmatprep.mubr.f32.mxu0 0.0
    %285 = vmatmul.mubr.f32.gmra.mrb[0].mxu0 %v107
    %v286 = vpop.f32.mrb[0].mxu0
    %v287 = vadd.f32 %v76, %v286
    %v288 = vpop.f32.mrb[0].mxu0
    %289 = vmatprep.mubr.f32.mxu0 0.0
    %290 = vmatmul.mubr.f32.gmra.mrb[0].mxu0 %v110
    %v291 = vpop.f32.mrb[0].mxu0
    %v292 = vadd.f32 %v76, %v291
    %v293 = vpop.f32.mrb[0].mxu0
    %294 = vmatprep.mubr.f32.mxu0 0.0
    %295 = vmatmul.mubr.f32.gmra.mrb[0].mxu0 %v113
    %v296 = vpop.f32.mrb[0].mxu0
    %v297 = vadd.f32 %v76, %v296
    %v298 = vpop.f32.mrb[0].mxu0
    %299 = vmatprep.mubr.f32.mxu0 0.0
    %300 = vmatmul.mubr.f32.gmra.mrb[0].mxu0 %v116
    %v301 = vpop.f32.mrb[0].mxu0
    %v302 = vadd.f32 %v76, %v301
    %v303 = vpop.f32.mrb[0].mxu0
    %304 = vmatprep.mubr.f32.mxu0 0.0
    %305 = vmatmul.mubr.f32.gmra.mrb[0].mxu0 %v119
    %v306 = vpop.f32.mrb[0].mxu0
    %v307 = vadd.f32 %v76, %v306
    %v308 = vpop.f32.mrb[0].mxu0
    %309 = vmatprep.mubr.f32.mxu0 0.0
    %310 = vmatmul.mubr.f32.gmra.mrb[0].mxu0 %v122
    %v311 = vpop.f32.mrb[0].mxu0
    %v312 = vadd.f32 %v76, %v311
    %v313 = vpop.f32.mrb[0].mxu0
    %314 = vmatprep.mubr.f32.mxu0 0.0
    %315 = vmatmul.mubr.f32.gmra.mrb[0].mxu0 %v125
    %v316 = vpop.f32.mrb[0].mxu0
    %v317 = vadd.f32 %v76, %v316
    %v318 = vpop.f32.mrb[0].mxu0
    %319 = vmatprep.mubr.f32.mxu0 0.0
    %320 = vmatmul.mubr.f32.gmra.mrb[0].mxu0 %v128
    %v321 = vpop.f32.mrb[0].mxu0
    %v322 = vadd.f32 %v76, %v321
    %v323 = vpop.f32.mrb[0].mxu0
    %324 = vmatprep.mubr.f32.mxu0 0.0
    %325 = vmatmul.mubr.f32.gmra.mrb[0].mxu0 %v131
    %v326 = vpop.f32.mrb[0].mxu0
    %v327 = vadd.f32 %v76, %v326
    %v328 = vpop.f32.mrb[0].mxu0
    %329 = vmatprep.mubr.f32.mxu0 0.0
    %330 = vmatmul.mubr.f32.gmra.mrb[0].mxu0 %v134
    %v331 = vpop.f32.mrb[0].mxu0
    %v332 = vadd.f32 %v76, %v331
    %v333 = vpop.f32.mrb[0].mxu0
    %334 = vmatprep.mubr.f32.mxu0 0.0
    %335 = vmatmul.mubr.f32.gmra.mrb[0].mxu0 %v137
    %v336 = vpop.f32.mrb[0].mxu0
    %v337 = vadd.f32 %v76, %v336
    %v338 = vpop.f32.mrb[0].mxu0
    %339 = vmatprep.mubr.f32.mxu0 0.0
    %340 = vmatmul.mubr.f32.gmra.mrb[0].mxu0 %v140
    %v341 = vpop.f32.mrb[0].mxu0
    %v342 = vadd.f32 %v76, %v341
    %v343 = vpop.f32.mrb[0].mxu0
    %344 = vmatprep.mubr.f32.mxu0 0.0
    %345 = vmatmul.mubr.f32.gmra.mrb[0].mxu0 %v143
    %v346 = vpop.f32.mrb[0].mxu0
    %v347 = vadd.f32 %v76, %v346
    %v348 = vpop.f32.mrb[0].mxu0
    %349 = vmatprep.mubr.f32.mxu0 0.0
    %350 = vmatmul.mubr.f32.gmra.mrb[0].mxu0 %v146
    %v351 = vpop.f32.mrb[0].mxu0
    %v352 = vadd.f32 %v76, %v351
    %v353 = vpop.f32.mrb[0].mxu0
    %354 = vmatprep.mubr.f32.mxu0 0.0
    %355 = vmatmul.mubr.f32.gmra.mrb[0].mxu0 %v149
    %v356 = vpop.f32.mrb[0].mxu0
    %v357 = vadd.f32 %v76, %v356
    %v358 = vpop.f32.mrb[0].mxu0
    %359 = vmatprep.mubr.f32.mxu0 0.0
    %360 = vmatmul.mubr.f32.gmra.mrb[0].mxu0 %v152
    %v361 = vpop.f32.mrb[0].mxu0
    %v362 = vadd.f32 %v76, %v361
    %v363 = vpop.f32.mrb[0].mxu0
    %364 = vmatprep.mubr.f32.mxu0 0.0
    %365 = vmatmul.mubr.f32.gmra.mrb[0].mxu0 %v155
    %v366 = vpop.f32.mrb[0].mxu0
    %v367 = vadd.f32 %v76, %v366
    %v368 = vpop.f32.mrb[0].mxu0
    %369 = vmatprep.mubr.f32.mxu0 0.0
    %370 = vmatmul.mubr.f32.gmra.mrb[0].mxu0 %v158
    %v371 = vpop.f32.mrb[0].mxu0
    %v372 = vadd.f32 %v76, %v371
    %v373 = vpop.f32.mrb[0].mxu0
    %374 = vmatprep.mubr.f32.mxu0 0.0
    %375 = vmatmul.mubr.f32.gmra.mrb[0].mxu0 %v161
    %v376 = vpop.f32.mrb[0].mxu0
    %v377 = vadd.f32 %v76, %v376
    %v378 = vpop.f32.mrb[0].mxu0
    %379 = vmatprep.mubr.f32.mxu0 0.0
    %380 = vmatmul.mubr.f32.gmra.mrb[0].mxu0 %v164
    %v381 = vpop.f32.mrb[0].mxu0
    %v382 = vadd.f32 %v76, %v381
    %v383 = vpop.f32.mrb[0].mxu0
    %384 = vmatprep.mubr.f32.mxu0 0.0
    %385 = vmatmul.mubr.f32.gmra.mrb[0].mxu0 %v167
    %v386 = vpop.f32.mrb[0].mxu0
    %v387 = vadd.f32 %v76, %v386
    %v388 = vpop.f32.mrb[0].mxu0
    %389 = vmatprep.mubr.f32.mxu0 0.0
    %390 = vmatmul.mubr.f32.gmra.mrb[0].mxu0 %v170
    %v391 = vpop.f32.mrb[0].mxu0
    %v392 = vadd.f32 %v76, %v391
    %v393 = vpop.f32.mrb[0].mxu0
    %394 = vmatprep.mubr.f32.mxu0 0.0
    %395 = vmatmul.mubr.f32.gmra.mrb[0].mxu0 %v173
    %v396 = vpop.f32.mrb[0].mxu0
    %v397 = vadd.f32 %v76, %v396
    %v398 = vpop.f32.mrb[0].mxu0
    %399 = vdwg.mxu0
    %s400 = sld [smem:[#allocation2]]
    %s401 = sld [smem:[#allocation2 + $0x1]]
    %s402 = sld [smem:[#allocation2 + $0x2]]
    %v403 = vstv %s401
    %v404 = vmul.f32 %v403, %v242
    %v405 = vmul.f32 %v403, %v247
    %v406 = vmul.f32 %v403, %v252
    %v407 = vmul.f32 %v403, %v257
    %v408 = vmul.f32 %v403, %v262
    %v409 = vmul.f32 %v403, %v267
    %v410 = vmul.f32 %v403, %v272
    %v411 = vmul.f32 %v403, %v277
    %v412 = vmul.f32 %v403, %v282
    %v413 = vmul.f32 %v403, %v287
    %v414 = vmul.f32 %v403, %v292
    %v415 = vmul.f32 %v403, %v297
    %v416 = vmul.f32 %v403, %v302
    %v417 = vmul.f32 %v403, %v307
    %v418 = vmul.f32 %v403, %v312
    %v419 = vmul.f32 %v403, %v317
    %v420 = vmul.f32 %v403, %v322
    %v421 = vmul.f32 %v403, %v327
    %v422 = vmul.f32 %v403, %v332
    %v423 = vmul.f32 %v403, %v337
    %v424 = vmul.f32 %v403, %v342
    %v425 = vmul.f32 %v403, %v347
    %v426 = vmul.f32 %v403, %v352
    %v427 = vmul.f32 %v403, %v357
    %v428 = vmul.f32 %v403, %v362
    %v429 = vmul.f32 %v403, %v367
    %v430 = vmul.f32 %v403, %v372
    %v431 = vmul.f32 %v403, %v377
    %v432 = vmul.f32 %v403, %v382
    %v433 = vmul.f32 %v403, %v387
    %v434 = vmul.f32 %v403, %v392
    %v435 = vmul.f32 %v403, %v397
    %v436 = vmul.f32 %v242, %v242
    %v437 = vmul.f32 %v247, %v247
    %v438 = vmul.f32 %v252, %v252
    %v439 = vmul.f32 %v257, %v257
    %v440 = vmul.f32 %v262, %v262
    %v441 = vmul.f32 %v267, %v267
    %v442 = vmul.f32 %v272, %v272
    %v443 = vmul.f32 %v277, %v277
    %v444 = vmul.f32 %v282, %v282
    %v445 = vmul.f32 %v287, %v287
    %v446 = vmul.f32 %v292, %v292
    %v447 = vmul.f32 %v297, %v297
    %v448 = vmul.f32 %v302, %v302
    %v449 = vmul.f32 %v307, %v307
    %v450 = vmul.f32 %v312, %v312
    %v451 = vmul.f32 %v317, %v317
    %v452 = vmul.f32 %v322, %v322
    %v453 = vmul.f32 %v327, %v327
    %v454 = vmul.f32 %v332, %v332
    %v455 = vmul.f32 %v337, %v337
    %v456 = vmul.f32 %v342, %v342
    %v457 = vmul.f32 %v347, %v347
    %v458 = vmul.f32 %v352, %v352
    %v459 = vmul.f32 %v357, %v357
    %v460 = vmul.f32 %v362, %v362
    %v461 = vmul.f32 %v367, %v367
    %v462 = vmul.f32 %v372, %v372
    %v463 = vmul.f32 %v377, %v377
    %v464 = vmul.f32 %v382, %v382
    %v465 = vmul.f32 %v387, %v387
    %v466 = vmul.f32 %v392, %v392
    %v467 = vmul.f32 %v397, %v397
    %500 = vrot.lane.b32.xlu0 %v436, 64
    %v501 = vpop.permute.xlu0 %500
    %502 = vrot.lane.b32.xlu0 %v437, 64
    %v503 = vpop.permute.xlu0 %502
    %504 = vrot.lane.b32.xlu0 %v438, 64
    %v505 = vpop.permute.xlu0 %504
    %506 = vrot.lane.b32.xlu0 %v439, 64
    %v507 = vpop.permute.xlu0 %506
    %508 = vrot.lane.b32.xlu0 %v440, 64
    %v509 = vpop.permute.xlu0 %508
    %510 = vrot.lane.b32.xlu0 %v441, 64
    %v511 = vpop.permute.xlu0 %510
    %512 = vrot.lane.b32.xlu0 %v442, 64
    %v513 = vpop.permute.xlu0 %512
    %514 = vrot.lane.b32.xlu0 %v443, 64
    %v515 = vpop.permute.xlu0 %514
    %516 = vrot.lane.b32.xlu0 %v444, 64
    %v517 = vpop.permute.xlu0 %516
    %518 = vrot.lane.b32.xlu0 %v445, 64
    %v519 = vpop.permute.xlu0 %518
    %520 = vrot.lane.b32.xlu0 %v446, 64
    %v521 = vpop.permute.xlu0 %520
    %522 = vrot.lane.b32.xlu0 %v447, 64
    %v523 = vpop.permute.xlu0 %522
    %524 = vrot.lane.b32.xlu0 %v448, 64
    %v525 = vpop.permute.xlu0 %524
    %526 = vrot.lane.b32.xlu0 %v449, 64
    %v527 = vpop.permute.xlu0 %526
    %528 = vrot.lane.b32.xlu0 %v450, 64
    %v529 = vpop.permute.xlu0 %528
    %530 = vrot.lane.b32.xlu0 %v451, 64
    %v531 = vpop.permute.xlu0 %530
    %532 = vrot.lane.b32.xlu0 %v452, 64
    %v533 = vpop.permute.xlu0 %532
    %534 = vrot.lane.b32.xlu0 %v453, 64
    %v535 = vpop.permute.xlu0 %534
    %536 = vrot.lane.b32.xlu0 %v454, 64
    %v537 = vpop.permute.xlu0 %536
    %538 = vrot.lane.b32.xlu0 %v455, 64
    %v539 = vpop.permute.xlu0 %538
    %540 = vrot.lane.b32.xlu0 %v456, 64
    %v541 = vpop.permute.xlu0 %540
    %542 = vrot.lane.b32.xlu0 %v457, 64
    %v543 = vpop.permute.xlu0 %542
    %544 = vrot.lane.b32.xlu0 %v458, 64
    %v545 = vpop.permute.xlu0 %544
    %546 = vrot.lane.b32.xlu0 %v459, 64
    %v547 = vpop.permute.xlu0 %546
    %548 = vrot.lane.b32.xlu0 %v460, 64
    %v549 = vpop.permute.xlu0 %548
    %550 = vrot.lane.b32.xlu0 %v461, 64
    %v551 = vpop.permute.xlu0 %550
    %552 = vrot.lane.b32.xlu0 %v462, 64
    %v553 = vpop.permute.xlu0 %552
    %554 = vrot.lane.b32.xlu0 %v463, 64
    %v555 = vpop.permute.xlu0 %554
    %556 = vrot.lane.b32.xlu0 %v464, 64
    %v557 = vpop.permute.xlu0 %556
    %558 = vrot.lane.b32.xlu0 %v465, 64
    %v559 = vpop.permute.xlu0 %558
    %560 = vrot.lane.b32.xlu0 %v466, 64
    %v561 = vpop.permute.xlu0 %560
    %562 = vrot.lane.b32.xlu0 %v467, 64
    %v563 = vpop.permute.xlu0 %562
    %v596 = vadd.f32 %v436, %v501
    %v597 = vadd.f32 %v437, %v503
    %v598 = vadd.f32 %v438, %v505
    %v599 = vadd.f32 %v439, %v507
    %v600 = vadd.f32 %v440, %v509
    %v601 = vadd.f32 %v441, %v511
    %v602 = vadd.f32 %v442, %v513
    %v603 = vadd.f32 %v443, %v515
    %v604 = vadd.f32 %v444, %v517
    %v605 = vadd.f32 %v445, %v519
    %v606 = vadd.f32 %v446, %v521
    %v607 = vadd.f32 %v447, %v523
    %v608 = vadd.f32 %v448, %v525
    %v609 = vadd.f32 %v449, %v527
    %v610 = vadd.f32 %v450, %v529
    %v611 = vadd.f32 %v451, %v531
    %v612 = vadd.f32 %v452, %v533
    %v613 = vadd.f32 %v453, %v535
    %v614 = vadd.f32 %v454, %v537
    %v615 = vadd.f32 %v455, %v539
    %v616 = vadd.f32 %v456, %v541
    %v617 = vadd.f32 %v457, %v543
    %v618 = vadd.f32 %v458, %v545
    %v619 = vadd.f32 %v459, %v547
    %v620 = vadd.f32 %v460, %v549
    %v621 = vadd.f32 %v461, %v551
    %v622 = vadd.f32 %v462, %v553
    %v623 = vadd.f32 %v463, %v555
    %v624 = vadd.f32 %v464, %v557
    %v625 = vadd.f32 %v465, %v559
    %v626 = vadd.f32 %v466, %v561
    %v627 = vadd.f32 %v467, %v563
    %v628 = vstv %s402
    %v629 = vmul.f32 %v628, %v596
    %v630 = vmul.f32 %v628, %v597
    %v631 = vmul.f32 %v628, %v598
    %v632 = vmul.f32 %v628, %v599
    %v633 = vmul.f32 %v628, %v600
    %v634 = vmul.f32 %v628, %v601
    %v635 = vmul.f32 %v628, %v602
    %v636 = vmul.f32 %v628, %v603
    %v637 = vmul.f32 %v628, %v604
    %v638 = vmul.f32 %v628, %v605
    %v639 = vmul.f32 %v628, %v606
    %v640 = vmul.f32 %v628, %v607
    %v641 = vmul.f32 %v628, %v608
    %v642 = vmul.f32 %v628, %v609
    %v643 = vmul.f32 %v628, %v610
    %v644 = vmul.f32 %v628, %v611
    %v645 = vmul.f32 %v628, %v612
    %v646 = vmul.f32 %v628, %v613
    %v647 = vmul.f32 %v628, %v614
    %v648 = vmul.f32 %v628, %v615
    %v649 = vmul.f32 %v628, %v616
    %v650 = vmul.f32 %v628, %v617
    %v651 = vmul.f32 %v628, %v618
    %v652 = vmul.f32 %v628, %v619
    %v653 = vmul.f32 %v628, %v620
    %v654 = vmul.f32 %v628, %v621
    %v655 = vmul.f32 %v628, %v622
    %v656 = vmul.f32 %v628, %v623
    %v657 = vmul.f32 %v628, %v624
    %v658 = vmul.f32 %v628, %v625
    %v659 = vmul.f32 %v628, %v626
    %v660 = vmul.f32 %v628, %v627
    %693 = vrot.lane.b32.xlu0 %v629, 64
    %v694 = vpop.permute.xlu0 %693
    %695 = vrot.lane.b32.xlu0 %v630, 64
    %v696 = vpop.permute.xlu0 %695
    %697 = vrot.lane.b32.xlu0 %v631, 64
    %v698 = vpop.permute.xlu0 %697
    %699 = vrot.lane.b32.xlu0 %v632, 64
    %v700 = vpop.permute.xlu0 %699
    %701 = vrot.lane.b32.xlu0 %v633, 64
    %v702 = vpop.permute.xlu0 %701
    %703 = vrot.lane.b32.xlu0 %v634, 64
    %v704 = vpop.permute.xlu0 %703
    %705 = vrot.lane.b32.xlu0 %v635, 64
    %v706 = vpop.permute.xlu0 %705
    %707 = vrot.lane.b32.xlu0 %v636, 64
    %v708 = vpop.permute.xlu0 %707
    %709 = vrot.lane.b32.xlu0 %v637, 64
    %v710 = vpop.permute.xlu0 %709
    %711 = vrot.lane.b32.xlu0 %v638, 64
    %v712 = vpop.permute.xlu0 %711
    %713 = vrot.lane.b32.xlu0 %v639, 64
    %v714 = vpop.permute.xlu0 %713
    %715 = vrot.lane.b32.xlu0 %v640, 64
    %v716 = vpop.permute.xlu0 %715
    %717 = vrot.lane.b32.xlu0 %v641, 64
    %v718 = vpop.permute.xlu0 %717
    %719 = vrot.lane.b32.xlu0 %v642, 64
    %v720 = vpop.permute.xlu0 %719
    %721 = vrot.lane.b32.xlu0 %v643, 64
    %v722 = vpop.permute.xlu0 %721
    %723 = vrot.lane.b32.xlu0 %v644, 64
    %v724 = vpop.permute.xlu0 %723
    %725 = vrot.lane.b32.xlu0 %v645, 64
    %v726 = vpop.permute.xlu0 %725
    %727 = vrot.lane.b32.xlu0 %v646, 64
    %v728 = vpop.permute.xlu0 %727
    %729 = vrot.lane.b32.xlu0 %v647, 64
    %v730 = vpop.permute.xlu0 %729
    %731 = vrot.lane.b32.xlu0 %v648, 64
    %v732 = vpop.permute.xlu0 %731
    %733 = vrot.lane.b32.xlu0 %v649, 64
    %v734 = vpop.permute.xlu0 %733
    %735 = vrot.lane.b32.xlu0 %v650, 64
    %v736 = vpop.permute.xlu0 %735
    %737 = vrot.lane.b32.xlu0 %v651, 64
    %v738 = vpop.permute.xlu0 %737
    %739 = vrot.lane.b32.xlu0 %v652, 64
    %v740 = vpop.permute.xlu0 %739
    %741 = vrot.lane.b32.xlu0 %v653, 64
    %v742 = vpop.permute.xlu0 %741
    %743 = vrot.lane.b32.xlu0 %v654, 64
    %v744 = vpop.permute.xlu0 %743
    %745 = vrot.lane.b32.xlu0 %v655, 64
    %v746 = vpop.permute.xlu0 %745
    %747 = vrot.lane.b32.xlu0 %v656, 64
    %v748 = vpop.permute.xlu0 %747
    %749 = vrot.lane.b32.xlu0 %v657, 64
    %v750 = vpop.permute.xlu0 %749
    %751 = vrot.lane.b32.xlu0 %v658, 64
    %v752 = vpop.permute.xlu0 %751
    %753 = vrot.lane.b32.xlu0 %v659, 64
    %v754 = vpop.permute.xlu0 %753
    %755 = vrot.lane.b32.xlu0 %v660, 64
    %v756 = vpop.permute.xlu0 %755
    %v789 = vsub.f32 %v404, %v694
    %v790 = vsub.f32 %v405, %v696
    %v791 = vsub.f32 %v406, %v698
    %v792 = vsub.f32 %v407, %v700
    %v793 = vsub.f32 %v408, %v702
    %v794 = vsub.f32 %v409, %v704
    %v795 = vsub.f32 %v410, %v706
    %v796 = vsub.f32 %v411, %v708
    %v797 = vsub.f32 %v412, %v710
    %v798 = vsub.f32 %v413, %v712
    %v799 = vsub.f32 %v414, %v714
    %v800 = vsub.f32 %v415, %v716
    %v801 = vsub.f32 %v416, %v718
    %v802 = vsub.f32 %v417, %v720
    %v803 = vsub.f32 %v418, %v722
    %v804 = vsub.f32 %v419, %v724
    %v805 = vsub.f32 %v420, %v726
    %v806 = vsub.f32 %v421, %v728
    %v807 = vsub.f32 %v422, %v730
    %v808 = vsub.f32 %v423, %v732
    %v809 = vsub.f32 %v424, %v734
    %v810 = vsub.f32 %v425, %v736
    %v811 = vsub.f32 %v426, %v738
    %v812 = vsub.f32 %v427, %v740
    %v813 = vsub.f32 %v428, %v742
    %v814 = vsub.f32 %v429, %v744
    %v815 = vsub.f32 %v430, %v746
    %v816 = vsub.f32 %v431, %v748
    %v817 = vsub.f32 %v432, %v750
    %v818 = vsub.f32 %v433, %v752
    %v819 = vsub.f32 %v434, %v754
    %v820 = vsub.f32 %v435, %v756
    %v821 = vmul.f32 %v789, 1.442695
    %v822 = vpow.pop %v821
    %v823 = vmul.f32 %v790, 1.442695
    %v824 = vpow.pop %v823
    %v825 = vmul.f32 %v791, 1.442695
    %v826 = vpow.pop %v825
    %v827 = vmul.f32 %v792, 1.442695
    %v828 = vpow.pop %v827
    %v829 = vmul.f32 %v793, 1.442695
    %v830 = vpow.pop %v829
    %v831 = vmul.f32 %v794, 1.442695
    %v832 = vpow.pop %v831
    %v833 = vmul.f32 %v795, 1.442695
    %v834 = vpow.pop %v833
    %v835 = vmul.f32 %v796, 1.442695
    %v836 = vpow.pop %v835
    %v837 = vmul.f32 %v797, 1.442695
    %v838 = vpow.pop %v837
    %v839 = vmul.f32 %v798, 1.442695
    %v840 = vpow.pop %v839
    %v841 = vmul.f32 %v799, 1.442695
    %v842 = vpow.pop %v841
    %v843 = vmul.f32 %v800, 1.442695
    %v844 = vpow.pop %v843
    %v845 = vmul.f32 %v801, 1.442695
    %v846 = vpow.pop %v845
    %v847 = vmul.f32 %v802, 1.442695
    %v848 = vpow.pop %v847
    %v849 = vmul.f32 %v803, 1.442695
    %v850 = vpow.pop %v849
    %v851 = vmul.f32 %v804, 1.442695
    %v852 = vpow.pop %v851
    %v853 = vmul.f32 %v805, 1.442695
    %v854 = vpow.pop %v853
    %v855 = vmul.f32 %v806, 1.442695
    %v856 = vpow.pop %v855
    %v857 = vmul.f32 %v807, 1.442695
    %v858 = vpow.pop %v857
    %v859 = vmul.f32 %v808, 1.442695
    %v860 = vpow.pop %v859
    %v861 = vmul.f32 %v809, 1.442695
    %v862 = vpow.pop %v861
    %v863 = vmul.f32 %v810, 1.442695
    %v864 = vpow.pop %v863
    %v865 = vmul.f32 %v811, 1.442695
    %v866 = vpow.pop %v865
    %v867 = vmul.f32 %v812, 1.442695
    %v868 = vpow.pop %v867
    %v869 = vmul.f32 %v813, 1.442695
    %v870 = vpow.pop %v869
    %v871 = vmul.f32 %v814, 1.442695
    %v872 = vpow.pop %v871
    %v873 = vmul.f32 %v815, 1.442695
    %v874 = vpow.pop %v873
    %v875 = vmul.f32 %v816, 1.442695
    %v876 = vpow.pop %v875
    %v877 = vmul.f32 %v817, 1.442695
    %v878 = vpow.pop %v877
    %v879 = vmul.f32 %v818, 1.442695
    %v880 = vpow.pop %v879
    %v881 = vmul.f32 %v819, 1.442695
    %v882 = vpow.pop %v881
    %v883 = vmul.f32 %v820, 1.442695
    %v884 = vpow.pop %v883
    %v885 = vstv %s400
    %v886 = vmul.f32 %v885, %v242
    %v887 = vmul.f32 %v885, %v247
    %v888 = vmul.f32 %v885, %v252
    %v889 = vmul.f32 %v885, %v257
    %v890 = vmul.f32 %v885, %v262
    %v891 = vmul.f32 %v885, %v267
    %v892 = vmul.f32 %v885, %v272
    %v893 = vmul.f32 %v885, %v277
    %v894 = vmul.f32 %v885, %v282
    %v895 = vmul.f32 %v885, %v287
    %v896 = vmul.f32 %v885, %v292
    %v897 = vmul.f32 %v885, %v297
    %v898 = vmul.f32 %v885, %v302
    %v899 = vmul.f32 %v885, %v307
    %v900 = vmul.f32 %v885, %v312
    %v901 = vmul.f32 %v885, %v317
    %v902 = vmul.f32 %v885, %v322
    %v903 = vmul.f32 %v885, %v327
    %v904 = vmul.f32 %v885, %v332
    %v905 = vmul.f32 %v885, %v337
    %v906 = vmul.f32 %v885, %v342
    %v907 = vmul.f32 %v885, %v347
    %v908 = vmul.f32 %v885, %v352
    %v909 = vmul.f32 %v885, %v357
    %v910 = vmul.f32 %v885, %v362
    %v911 = vmul.f32 %v885, %v367
    %v912 = vmul.f32 %v885, %v372
    %v913 = vmul.f32 %v885, %v377
    %v914 = vmul.f32 %v885, %v382
    %v915 = vmul.f32 %v885, %v387
    %v916 = vmul.f32 %v885, %v392
    %v917 = vmul.f32 %v885, %v397
    %v918 = vand.u32 2147483647, %v886
    %vm919 = vcmp.le.f32.partialorder %v918, 0.7853982
    %vm920 = vcmp.lt.s32.totalorder %v886, 0
    %v921 = vand.u32 %v886, 2139095040
    %v922 = vshrl.u32 %v921, 23
    %v923 = vsub.s32 %v922, 127
    %v924 = vand.u32 2147483647, %v886
    %v925 = vand.u32 %v924, 8388607
    %v926 = vor.u32 %v925, 8388608
    %v927 = vsub.s32 0, %v926
    %v928 = vadd.s32 %v923, 1
    %vm929 = vcmp.gt.s32.totalorder %v928, 0
    %v930 = vsel %vm929, %v928, 0
    %v931 = vshrl.u32 %v930, 5
    %v932 = vand.u32 %v930, 31
    %v933 = vsub.s32 32, %v932
    %v934 = vshrl.u32 683565275, %v933
    %v935 = vshll.u32 683565275, %v932
    %v936 = vshrl.u32 2475754826, %v933
    %v937 = vor.u32 %v935, %v936
    %v938 = vshll.u32 2475754826, %v932
    %v939 = vshrl.u32 2131351028, %v933
    %v940 = vor.u32 %v938, %v939
    %v941 = vshll.u32 2131351028, %v932
    %v942 = vshrl.u32 2102212464, %v933
    %v943 = vor.u32 %v941, %v942
    %v944 = vshll.u32 2102212464, %v932
    %v945 = vshrl.u32 920167782, %v933
    %v946 = vor.u32 %v944, %v945
    %v947 = vshll.u32 920167782, %v932
    %v948 = vshrl.u32 1326507024, %v933
    %v949 = vor.u32 %v947, %v948
    %vm950 = vcmp.lt.s32.totalorder %v931, 1
    %vm951 = vcmp.lt.s32.totalorder %v931, 2
    %vm952 = vcmp.lt.s32.totalorder %v931, 3
    %vm953 = vcmp.lt.s32.totalorder %v931, 4
    %v954 = vsel %vm950, %v934, %v937
    %v955 = vsel %vm953, %v943, 2102212464
    %v956 = vsel %vm952, %v940, %v955
    %v957 = vsel %vm951, %v954, %v956
    %v958 = vsel %vm950, %v937, %v940
    %v959 = vsel %vm953, %v946, 920167782
    %v960 = vsel %vm952, %v943, %v959
    %v961 = vsel %vm951, %v958, %v960
    %v962 = vsel %vm950, %v940, %v943
    %v963 = vsel %vm953, %v949, 1326507024
    %v964 = vsel %vm952, %v946, %v963
    %v965 = vsel %vm951, %v962, %v964
    %v966 = vshll.u32 %v926, 8
    %v967 = vmul.u32.u64.compose %v966, %v965
    %v968 = vextract.low.u32 %v967
    %v969 = vextract.high.u32 %v967
    %v970 = vmul.u32.u64.compose %v966, %v961
    %v971 = vextract.low.u32 %v970
    %v972 = vextract.high.u32 %v970
    %v973 = vmul.u32 %v966, %v957
    %v974 = vadd.s32 %v969, %v971
    %vm975 = vc.u32 %v969, %v971
    %v976 = vadd.s32 %v972, 1
    %v977 = vsel %vm975, %v976, %v972
    %v978 = vadd.s32 %v973, %v977
    %v979 = vadd.s32 %v978, 536870912
    %v980 = vshrl.u32 %v979, 30
    %v981 = vshll.u32 %v980, 30
    %v982 = vsub.s32 %v978, %v981
    %vm983 = vcmp.lt.s32.totalorder %v982, 0
    %v984 = vsub.s32 0, %v982
    %v985 = vsel %vm983, %v984, %v982
    %v986 = vclz %v985
    %v987 = vsub.s32 %v986, 2
    %vm988 = vcmp.gt.s32.totalorder 0, %v987
    %v989 = vsel %vm988, 0, %v987
    %v990 = vsub.s32 32, %v989
    %v991 = vshll.u32 %v982, %v989
    %v992 = vshrl.u32 %v974, %v990
    %v993 = vor.u32 %v991, %v992
    %v994 = vsub.s32 4294967266, %v989
    %v995 = vadd.s32 %v994, 127
    %v996 = vshll.u32 %v995, 23
    %v997 = vor.u32 4788187, %v996
    %v998 = vand.u32 2147483647, %v997
    %v1000 = vcvt.s32.f32 %v993
    %v1001 = vmul.f32 %v1000, %v998
    %v1002 = vxor.u32 %v1001, 2147483648
    %v1003 = vsel %vm920, %v1002, %v1001
    %v1004 = vsub.s32 4, %v980
    %v1005 = vsel %vm920, %v1004, %v980
    %v1006 = vsel %vm919, %v886, %v1003
    %v1007 = vsel %vm919, 0, %v1005
    %v1008 = vcosq.f32.pop %v1006
    %v1009 = vsinq.f32.pop %v1006
    %vm1010 = vweird.f32 %v886
    %v1011 = vand.u32 %v1007, 3
    %vm1012 = vcmp.lt.s32.totalorder %v1011, 2
    %vm1013 = vcmp.eq.s32.totalorder %v1011, 0
    %v1014 = vxor.u32 %v1009, 2147483648
    %v1015 = vsel %vm1013, %v1008, %v1014
    %vm1016 = vcmp.eq.s32.totalorder %v1011, 2
    %v1017 = vxor.u32 %v1008, 2147483648
    %v1018 = vsel %vm1016, %v1017, %v1009
    %v1019 = vsel %vm1012, %v1015, %v1018
    %v1020 = vsel %vm1010, nan, %v1019
    %v1021 = vand.u32 2147483647, %v887
    %vm1022 = vcmp.le.f32.partialorder %v1021, 0.7853982
    %vm1023 = vcmp.lt.s32.totalorder %v887, 0
    %v1024 = vand.u32 %v887, 2139095040
    %v1025 = vshrl.u32 %v1024, 23
    %v1026 = vsub.s32 %v1025, 127
    %v1027 = vand.u32 2147483647, %v887
    %v1028 = vand.u32 %v1027, 8388607
    %v1029 = vor.u32 %v1028, 8388608
    %v1030 = vsub.s32 0, %v1029
    %v1031 = vadd.s32 %v1026, 1
    %vm1032 = vcmp.gt.s32.totalorder %v1031, 0
    %v1033 = vsel %vm1032, %v1031, 0
    %v1034 = vshrl.u32 %v1033, 5
    %v1035 = vand.u32 %v1033, 31
    %v1036 = vsub.s32 32, %v1035
    %v1037 = vshrl.u32 683565275, %v1036
    %v1038 = vshll.u32 683565275, %v1035
    %v1039 = vshrl.u32 2475754826, %v1036
    %v1040 = vor.u32 %v1038, %v1039
    %v1041 = vshll.u32 2475754826, %v1035
    %v1042 = vshrl.u32 2131351028, %v1036
    %v1043 = vor.u32 %v1041, %v1042
    %v1044 = vshll.u32 2131351028, %v1035
    %v1045 = vshrl.u32 2102212464, %v1036
    %v1046 = vor.u32 %v1044, %v1045
    %v1047 = vshll.u32 2102212464, %v1035
    %v1048 = vshrl.u32 920167782, %v1036
    %v1049 = vor.u32 %v1047, %v1048
    %v1050 = vshll.u32 920167782, %v1035
    %v1051 = vshrl.u32 1326507024, %v1036
    %v1052 = vor.u32 %v1050, %v1051
    %vm1053 = vcmp.lt.s32.totalorder %v1034, 1
    %vm1054 = vcmp.lt.s32.totalorder %v1034, 2
    %vm1055 = vcmp.lt.s32.totalorder %v1034, 3
    %vm1056 = vcmp.lt.s32.totalorder %v1034, 4
    %v1057 = vsel %vm1053, %v1037, %v1040
    %v1058 = vsel %vm1056, %v1046, 2102212464
    %v1059 = vsel %vm1055, %v1043, %v1058
    %v1060 = vsel %vm1054, %v1057, %v1059
    %v1061 = vsel %vm1053, %v1040, %v1043
    %v1062 = vsel %vm1056, %v1049, 920167782
    %v1063 = vsel %vm1055, %v1046, %v1062
    %v1064 = vsel %vm1054, %v1061, %v1063
    %v1065 = vsel %vm1053, %v1043, %v1046
    %v1066 = vsel %vm1056, %v1052, 1326507024
    %v1067 = vsel %vm1055, %v1049, %v1066
    %v1068 = vsel %vm1054, %v1065, %v1067
    %v1069 = vshll.u32 %v1029, 8
    %v1070 = vmul.u32.u64.compose %v1069, %v1068
    %v1071 = vextract.low.u32 %v1070
    %v1072 = vextract.high.u32 %v1070
    %v1073 = vmul.u32.u64.compose %v1069, %v1064
    %v1074 = vextract.low.u32 %v1073
    %v1075 = vextract.high.u32 %v1073
    %v1076 = vmul.u32 %v1069, %v1060
    %v1077 = vadd.s32 %v1072, %v1074
    %vm1078 = vc.u32 %v1072, %v1074
    %v1079 = vadd.s32 %v1075, 1
    %v1080 = vsel %vm1078, %v1079, %v1075
    %v1081 = vadd.s32 %v1076, %v1080
    %v1082 = vadd.s32 %v1081, 536870912
    %v1083 = vshrl.u32 %v1082, 30
    %v1084 = vshll.u32 %v1083, 30
    %v1085 = vsub.s32 %v1081, %v1084
    %vm1086 = vcmp.lt.s32.totalorder %v1085, 0
    %v1087 = vsub.s32 0, %v1085
    %v1088 = vsel %vm1086, %v1087, %v1085
    %v1089 = vclz %v1088
    %v1090 = vsub.s32 %v1089, 2
    %vm1091 = vcmp.gt.s32.totalorder 0, %v1090
    %v1092 = vsel %vm1091, 0, %v1090
    %v1093 = vsub.s32 32, %v1092
    %v1094 = vshll.u32 %v1085, %v1092
    %v1095 = vshrl.u32 %v1077, %v1093
    %v1096 = vor.u32 %v1094, %v1095
    %v1097 = vsub.s32 4294967266, %v1092
    %v1098 = vadd.s32 %v1097, 127
    %v1099 = vshll.u32 %v1098, 23
    %v1100 = vor.u32 4788187, %v1099
    %v1101 = vand.u32 2147483647, %v1100
    %v1103 = vcvt.s32.f32 %v1096
    %v1104 = vmul.f32 %v1103, %v1101
    %v1105 = vxor.u32 %v1104, 2147483648
    %v1106 = vsel %vm1023, %v1105, %v1104
    %v1107 = vsub.s32 4, %v1083
    %v1108 = vsel %vm1023, %v1107, %v1083
    %v1109 = vsel %vm1022, %v887, %v1106
    %v1110 = vsel %vm1022, 0, %v1108
    %v1111 = vcosq.f32.pop %v1109
    %v1112 = vsinq.f32.pop %v1109
    %vm1113 = vweird.f32 %v887
    %v1114 = vand.u32 %v1110, 3
    %vm1115 = vcmp.lt.s32.totalorder %v1114, 2
    %vm1116 = vcmp.eq.s32.totalorder %v1114, 0
    %v1117 = vxor.u32 %v1112, 2147483648
    %v1118 = vsel %vm1116, %v1111, %v1117
    %vm1119 = vcmp.eq.s32.totalorder %v1114, 2
    %v1120 = vxor.u32 %v1111, 2147483648
    %v1121 = vsel %vm1119, %v1120, %v1112
    %v1122 = vsel %vm1115, %v1118, %v1121
    %v1123 = vsel %vm1113, nan, %v1122
    %v1124 = vand.u32 2147483647, %v888
    %vm1125 = vcmp.le.f32.partialorder %v1124, 0.7853982
    %vm1126 = vcmp.lt.s32.totalorder %v888, 0
    %v1127 = vand.u32 %v888, 2139095040
    %v1128 = vshrl.u32 %v1127, 23
    %v1129 = vsub.s32 %v1128, 127
    %v1130 = vand.u32 2147483647, %v888
    %v1131 = vand.u32 %v1130, 8388607
    %v1132 = vor.u32 %v1131, 8388608
    %v1133 = vsub.s32 0, %v1132
    %v1134 = vadd.s32 %v1129, 1
    %vm1135 = vcmp.gt.s32.totalorder %v1134, 0
    %v1136 = vsel %vm1135, %v1134, 0
    %v1137 = vshrl.u32 %v1136, 5
    %v1138 = vand.u32 %v1136, 31
    %v1139 = vsub.s32 32, %v1138
    %v1140 = vshrl.u32 683565275, %v1139
    %v1141 = vshll.u32 683565275, %v1138
    %v1142 = vshrl.u32 2475754826, %v1139
    %v1143 = vor.u32 %v1141, %v1142
    %v1144 = vshll.u32 2475754826, %v1138
    %v1145 = vshrl.u32 2131351028, %v1139
    %v1146 = vor.u32 %v1144, %v1145
    %v1147 = vshll.u32 2131351028, %v1138
    %v1148 = vshrl.u32 2102212464, %v1139
    %v1149 = vor.u32 %v1147, %v1148
    %v1150 = vshll.u32 2102212464, %v1138
    %v1151 = vshrl.u32 920167782, %v1139
    %v1152 = vor.u32 %v1150, %v1151
    %v1153 = vshll.u32 920167782, %v1138
    %v1154 = vshrl.u32 1326507024, %v1139
    %v1155 = vor.u32 %v1153, %v1154
    %vm1156 = vcmp.lt.s32.totalorder %v1137, 1
    %vm1157 = vcmp.lt.s32.totalorder %v1137, 2
    %vm1158 = vcmp.lt.s32.totalorder %v1137, 3
    %vm1159 = vcmp.lt.s32.totalorder %v1137, 4
    %v1160 = vsel %vm1156, %v1140, %v1143
    %v1161 = vsel %vm1159, %v1149, 2102212464
    %v1162 = vsel %vm1158, %v1146, %v1161
    %v1163 = vsel %vm1157, %v1160, %v1162
    %v1164 = vsel %vm1156, %v1143, %v1146
    %v1165 = vsel %vm1159, %v1152, 920167782
    %v1166 = vsel %vm1158, %v1149, %v1165
    %v1167 = vsel %vm1157, %v1164, %v1166
    %v1168 = vsel %vm1156, %v1146, %v1149
    %v1169 = vsel %vm1159, %v1155, 1326507024
    %v1170 = vsel %vm1158, %v1152, %v1169
    %v1171 = vsel %vm1157, %v1168, %v1170
    %v1172 = vshll.u32 %v1132, 8
    %v1173 = vmul.u32.u64.compose %v1172, %v1171
    %v1174 = vextract.low.u32 %v1173
    %v1175 = vextract.high.u32 %v1173
    %v1176 = vmul.u32.u64.compose %v1172, %v1167
    %v1177 = vextract.low.u32 %v1176
    %v1178 = vextract.high.u32 %v1176
    %v1179 = vmul.u32 %v1172, %v1163
    %v1180 = vadd.s32 %v1175, %v1177
    %vm1181 = vc.u32 %v1175, %v1177
    %v1182 = vadd.s32 %v1178, 1
    %v1183 = vsel %vm1181, %v1182, %v1178
    %v1184 = vadd.s32 %v1179, %v1183
    %v1185 = vadd.s32 %v1184, 536870912
    %v1186 = vshrl.u32 %v1185, 30
    %v1187 = vshll.u32 %v1186, 30
    %v1188 = vsub.s32 %v1184, %v1187
    %vm1189 = vcmp.lt.s32.totalorder %v1188, 0
    %v1190 = vsub.s32 0, %v1188
    %v1191 = vsel %vm1189, %v1190, %v1188
    %v1192 = vclz %v1191
    %v1193 = vsub.s32 %v1192, 2
    %vm1194 = vcmp.gt.s32.totalorder 0, %v1193
    %v1195 = vsel %vm1194, 0, %v1193
    %v1196 = vsub.s32 32, %v1195
    %v1197 = vshll.u32 %v1188, %v1195
    %v1198 = vshrl.u32 %v1180, %v1196
    %v1199 = vor.u32 %v1197, %v1198
    %v1200 = vsub.s32 4294967266, %v1195
    %v1201 = vadd.s32 %v1200, 127
    %v1202 = vshll.u32 %v1201, 23
    %v1203 = vor.u32 4788187, %v1202
    %v1204 = vand.u32 2147483647, %v1203
    %v1206 = vcvt.s32.f32 %v1199
    %v1207 = vmul.f32 %v1206, %v1204
    %v1208 = vxor.u32 %v1207, 2147483648
    %v1209 = vsel %vm1126, %v1208, %v1207
    %v1210 = vsub.s32 4, %v1186
    %v1211 = vsel %vm1126, %v1210, %v1186
    %v1212 = vsel %vm1125, %v888, %v1209
    %v1213 = vsel %vm1125, 0, %v1211
    %v1214 = vcosq.f32.pop %v1212
    %v1215 = vsinq.f32.pop %v1212
    %vm1216 = vweird.f32 %v888
    %v1217 = vand.u32 %v1213, 3
    %vm1218 = vcmp.lt.s32.totalorder %v1217, 2
    %vm1219 = vcmp.eq.s32.totalorder %v1217, 0
    %v1220 = vxor.u32 %v1215, 2147483648
    %v1221 = vsel %vm1219, %v1214, %v1220
    %vm1222 = vcmp.eq.s32.totalorder %v1217, 2
    %v1223 = vxor.u32 %v1214, 2147483648
    %v1224 = vsel %vm1222, %v1223, %v1215
    %v1225 = vsel %vm1218, %v1221, %v1224
    %v1226 = vsel %vm1216, nan, %v1225
    %v1227 = vand.u32 2147483647, %v889
    %vm1228 = vcmp.le.f32.partialorder %v1227, 0.7853982
    %vm1229 = vcmp.lt.s32.totalorder %v889, 0
    %v1230 = vand.u32 %v889, 2139095040
    %v1231 = vshrl.u32 %v1230, 23
    %v1232 = vsub.s32 %v1231, 127
    %v1233 = vand.u32 2147483647, %v889
    %v1234 = vand.u32 %v1233, 8388607
    %v1235 = vor.u32 %v1234, 8388608
    %v1236 = vsub.s32 0, %v1235
    %v1237 = vadd.s32 %v1232, 1
    %vm1238 = vcmp.gt.s32.totalorder %v1237, 0
    %v1239 = vsel %vm1238, %v1237, 0
    %v1240 = vshrl.u32 %v1239, 5
    %v1241 = vand.u32 %v1239, 31
    %v1242 = vsub.s32 32, %v1241
    %v1243 = vshrl.u32 683565275, %v1242
    %v1244 = vshll.u32 683565275, %v1241
    %v1245 = vshrl.u32 2475754826, %v1242
    %v1246 = vor.u32 %v1244, %v1245
    %v1247 = vshll.u32 2475754826, %v1241
    %v1248 = vshrl.u32 2131351028, %v1242
    %v1249 = vor.u32 %v1247, %v1248
    %v1250 = vshll.u32 2131351028, %v1241
    %v1251 = vshrl.u32 2102212464, %v1242
    %v1252 = vor.u32 %v1250, %v1251
    %v1253 = vshll.u32 2102212464, %v1241
    %v1254 = vshrl.u32 920167782, %v1242
    %v1255 = vor.u32 %v1253, %v1254
    %v1256 = vshll.u32 920167782, %v1241
    %v1257 = vshrl.u32 1326507024, %v1242
    %v1258 = vor.u32 %v1256, %v1257
    %vm1259 = vcmp.lt.s32.totalorder %v1240, 1
    %vm1260 = vcmp.lt.s32.totalorder %v1240, 2
    %vm1261 = vcmp.lt.s32.totalorder %v1240, 3
    %vm1262 = vcmp.lt.s32.totalorder %v1240, 4
    %v1263 = vsel %vm1259, %v1243, %v1246
    %v1264 = vsel %vm1262, %v1252, 2102212464
    %v1265 = vsel %vm1261, %v1249, %v1264
    %v1266 = vsel %vm1260, %v1263, %v1265
    %v1267 = vsel %vm1259, %v1246, %v1249
    %v1268 = vsel %vm1262, %v1255, 920167782
    %v1269 = vsel %vm1261, %v1252, %v1268
    %v1270 = vsel %vm1260, %v1267, %v1269
    %v1271 = vsel %vm1259, %v1249, %v1252
    %v1272 = vsel %vm1262, %v1258, 1326507024
    %v1273 = vsel %vm1261, %v1255, %v1272
    %v1274 = vsel %vm1260, %v1271, %v1273
    %v1275 = vshll.u32 %v1235, 8
    %v1276 = vmul.u32.u64.compose %v1275, %v1274
    %v1277 = vextract.low.u32 %v1276
    %v1278 = vextract.high.u32 %v1276
    %v1279 = vmul.u32.u64.compose %v1275, %v1270
    %v1280 = vextract.low.u32 %v1279
    %v1281 = vextract.high.u32 %v1279
    %v1282 = vmul.u32 %v1275, %v1266
    %v1283 = vadd.s32 %v1278, %v1280
    %vm1284 = vc.u32 %v1278, %v1280
    %v1285 = vadd.s32 %v1281, 1
    %v1286 = vsel %vm1284, %v1285, %v1281
    %v1287 = vadd.s32 %v1282, %v1286
    %v1288 = vadd.s32 %v1287, 536870912
    %v1289 = vshrl.u32 %v1288, 30
    %v1290 = vshll.u32 %v1289, 30
    %v1291 = vsub.s32 %v1287, %v1290
    %vm1292 = vcmp.lt.s32.totalorder %v1291, 0
    %v1293 = vsub.s32 0, %v1291
    %v1294 = vsel %vm1292, %v1293, %v1291
    %v1295 = vclz %v1294
    %v1296 = vsub.s32 %v1295, 2
    %vm1297 = vcmp.gt.s32.totalorder 0, %v1296
    %v1298 = vsel %vm1297, 0, %v1296
    %v1299 = vsub.s32 32, %v1298
    %v1300 = vshll.u32 %v1291, %v1298
    %v1301 = vshrl.u32 %v1283, %v1299
    %v1302 = vor.u32 %v1300, %v1301
    %v1303 = vsub.s32 4294967266, %v1298
    %v1304 = vadd.s32 %v1303, 127
    %v1305 = vshll.u32 %v1304, 23
    %v1306 = vor.u32 4788187, %v1305
    %v1307 = vand.u32 2147483647, %v1306
    %v1309 = vcvt.s32.f32 %v1302
    %v1310 = vmul.f32 %v1309, %v1307
    %v1311 = vxor.u32 %v1310, 2147483648
    %v1312 = vsel %vm1229, %v1311, %v1310
    %v1313 = vsub.s32 4, %v1289
    %v1314 = vsel %vm1229, %v1313, %v1289
    %v1315 = vsel %vm1228, %v889, %v1312
    %v1316 = vsel %vm1228, 0, %v1314
    %v1317 = vcosq.f32.pop %v1315
    %v1318 = vsinq.f32.pop %v1315
    %vm1319 = vweird.f32 %v889
    %v1320 = vand.u32 %v1316, 3
    %vm1321 = vcmp.lt.s32.totalorder %v1320, 2
    %vm1322 = vcmp.eq.s32.totalorder %v1320, 0
    %v1323 = vxor.u32 %v1318, 2147483648
    %v1324 = vsel %vm1322, %v1317, %v1323
    %vm1325 = vcmp.eq.s32.totalorder %v1320, 2
    %v1326 = vxor.u32 %v1317, 2147483648
    %v1327 = vsel %vm1325, %v1326, %v1318
    %v1328 = vsel %vm1321, %v1324, %v1327
    %v1329 = vsel %vm1319, nan, %v1328
    %v1330 = vand.u32 2147483647, %v890
    %vm1331 = vcmp.le.f32.partialorder %v1330, 0.7853982
    %vm1332 = vcmp.lt.s32.totalorder %v890, 0
    %v1333 = vand.u32 %v890, 2139095040
    %v1334 = vshrl.u32 %v1333, 23
    %v1335 = vsub.s32 %v1334, 127
    %v1336 = vand.u32 2147483647, %v890
    %v1337 = vand.u32 %v1336, 8388607
    %v1338 = vor.u32 %v1337, 8388608
    %v1339 = vsub.s32 0, %v1338
    %v1340 = vadd.s32 %v1335, 1
    %vm1341 = vcmp.gt.s32.totalorder %v1340, 0
    %v1342 = vsel %vm1341, %v1340, 0
    %v1343 = vshrl.u32 %v1342, 5
    %v1344 = vand.u32 %v1342, 31
    %v1345 = vsub.s32 32, %v1344
    %v1346 = vshrl.u32 683565275, %v1345
    %v1347 = vshll.u32 683565275, %v1344
    %v1348 = vshrl.u32 2475754826, %v1345
    %v1349 = vor.u32 %v1347, %v1348
    %v1350 = vshll.u32 2475754826, %v1344
    %v1351 = vshrl.u32 2131351028, %v1345
    %v1352 = vor.u32 %v1350, %v1351
    %v1353 = vshll.u32 2131351028, %v1344
    %v1354 = vshrl.u32 2102212464, %v1345
    %v1355 = vor.u32 %v1353, %v1354
    %v1356 = vshll.u32 2102212464, %v1344
    %v1357 = vshrl.u32 920167782, %v1345
    %v1358 = vor.u32 %v1356, %v1357
    %v1359 = vshll.u32 920167782, %v1344
    %v1360 = vshrl.u32 1326507024, %v1345
    %v1361 = vor.u32 %v1359, %v1360
    %vm1362 = vcmp.lt.s32.totalorder %v1343, 1
    %vm1363 = vcmp.lt.s32.totalorder %v1343, 2
    %vm1364 = vcmp.lt.s32.totalorder %v1343, 3
    %vm1365 = vcmp.lt.s32.totalorder %v1343, 4
    %v1366 = vsel %vm1362, %v1346, %v1349
    %v1367 = vsel %vm1365, %v1355, 2102212464
    %v1368 = vsel %vm1364, %v1352, %v1367
    %v1369 = vsel %vm1363, %v1366, %v1368
    %v1370 = vsel %vm1362, %v1349, %v1352
    %v1371 = vsel %vm1365, %v1358, 920167782
    %v1372 = vsel %vm1364, %v1355, %v1371
    %v1373 = vsel %vm1363, %v1370, %v1372
    %v1374 = vsel %vm1362, %v1352, %v1355
    %v1375 = vsel %vm1365, %v1361, 1326507024
    %v1376 = vsel %vm1364, %v1358, %v1375
    %v1377 = vsel %vm1363, %v1374, %v1376
    %v1378 = vshll.u32 %v1338, 8
    %v1379 = vmul.u32.u64.compose %v1378, %v1377
    %v1380 = vextract.low.u32 %v1379
    %v1381 = vextract.high.u32 %v1379
    %v1382 = vmul.u32.u64.compose %v1378, %v1373
    %v1383 = vextract.low.u32 %v1382
    %v1384 = vextract.high.u32 %v1382
    %v1385 = vmul.u32 %v1378, %v1369
    %v1386 = vadd.s32 %v1381, %v1383
    %vm1387 = vc.u32 %v1381, %v1383
    %v1388 = vadd.s32 %v1384, 1
    %v1389 = vsel %vm1387, %v1388, %v1384
    %v1390 = vadd.s32 %v1385, %v1389
    %v1391 = vadd.s32 %v1390, 536870912
    %v1392 = vshrl.u32 %v1391, 30
    %v1393 = vshll.u32 %v1392, 30
    %v1394 = vsub.s32 %v1390, %v1393
    %vm1395 = vcmp.lt.s32.totalorder %v1394, 0
    %v1396 = vsub.s32 0, %v1394
    %v1397 = vsel %vm1395, %v1396, %v1394
    %v1398 = vclz %v1397
    %v1399 = vsub.s32 %v1398, 2
    %vm1400 = vcmp.gt.s32.totalorder 0, %v1399
    %v1401 = vsel %vm1400, 0, %v1399
    %v1402 = vsub.s32 32, %v1401
    %v1403 = vshll.u32 %v1394, %v1401
    %v1404 = vshrl.u32 %v1386, %v1402
    %v1405 = vor.u32 %v1403, %v1404
    %v1406 = vsub.s32 4294967266, %v1401
    %v1407 = vadd.s32 %v1406, 127
    %v1408 = vshll.u32 %v1407, 23
    %v1409 = vor.u32 4788187, %v1408
    %v1410 = vand.u32 2147483647, %v1409
    %v1412 = vcvt.s32.f32 %v1405
    %v1413 = vmul.f32 %v1412, %v1410
    %v1414 = vxor.u32 %v1413, 2147483648
    %v1415 = vsel %vm1332, %v1414, %v1413
    %v1416 = vsub.s32 4, %v1392
    %v1417 = vsel %vm1332, %v1416, %v1392
    %v1418 = vsel %vm1331, %v890, %v1415
    %v1419 = vsel %vm1331, 0, %v1417
    %v1420 = vcosq.f32.pop %v1418
    %v1421 = vsinq.f32.pop %v1418
    %vm1422 = vweird.f32 %v890
    %v1423 = vand.u32 %v1419, 3
    %vm1424 = vcmp.lt.s32.totalorder %v1423, 2
    %vm1425 = vcmp.eq.s32.totalorder %v1423, 0
    %v1426 = vxor.u32 %v1421, 2147483648
    %v1427 = vsel %vm1425, %v1420, %v1426
    %vm1428 = vcmp.eq.s32.totalorder %v1423, 2
    %v1429 = vxor.u32 %v1420, 2147483648
    %v1430 = vsel %vm1428, %v1429, %v1421
    %v1431 = vsel %vm1424, %v1427, %v1430
    %v1432 = vsel %vm1422, nan, %v1431
    %v1433 = vand.u32 2147483647, %v891
    %vm1434 = vcmp.le.f32.partialorder %v1433, 0.7853982
    %vm1435 = vcmp.lt.s32.totalorder %v891, 0
    %v1436 = vand.u32 %v891, 2139095040
    %v1437 = vshrl.u32 %v1436, 23
    %v1438 = vsub.s32 %v1437, 127
    %v1439 = vand.u32 2147483647, %v891
    %v1440 = vand.u32 %v1439, 8388607
    %v1441 = vor.u32 %v1440, 8388608
    %v1442 = vsub.s32 0, %v1441
    %v1443 = vadd.s32 %v1438, 1
    %vm1444 = vcmp.gt.s32.totalorder %v1443, 0
    %v1445 = vsel %vm1444, %v1443, 0
    %v1446 = vshrl.u32 %v1445, 5
    %v1447 = vand.u32 %v1445, 31
    %v1448 = vsub.s32 32, %v1447
    %v1449 = vshrl.u32 683565275, %v1448
    %v1450 = vshll.u32 683565275, %v1447
    %v1451 = vshrl.u32 2475754826, %v1448
    %v1452 = vor.u32 %v1450, %v1451
    %v1453 = vshll.u32 2475754826, %v1447
    %v1454 = vshrl.u32 2131351028, %v1448
    %v1455 = vor.u32 %v1453, %v1454
    %v1456 = vshll.u32 2131351028, %v1447
    %v1457 = vshrl.u32 2102212464, %v1448
    %v1458 = vor.u32 %v1456, %v1457
    %v1459 = vshll.u32 2102212464, %v1447
    %v1460 = vshrl.u32 920167782, %v1448
    %v1461 = vor.u32 %v1459, %v1460
    %v1462 = vshll.u32 920167782, %v1447
    %v1463 = vshrl.u32 1326507024, %v1448
    %v1464 = vor.u32 %v1462, %v1463
    %vm1465 = vcmp.lt.s32.totalorder %v1446, 1
    %vm1466 = vcmp.lt.s32.totalorder %v1446, 2
    %vm1467 = vcmp.lt.s32.totalorder %v1446, 3
    %vm1468 = vcmp.lt.s32.totalorder %v1446, 4
    %v1469 = vsel %vm1465, %v1449, %v1452
    %v1470 = vsel %vm1468, %v1458, 2102212464
    %v1471 = vsel %vm1467, %v1455, %v1470
    %v1472 = vsel %vm1466, %v1469, %v1471
    %v1473 = vsel %vm1465, %v1452, %v1455
    %v1474 = vsel %vm1468, %v1461, 920167782
    %v1475 = vsel %vm1467, %v1458, %v1474
    %v1476 = vsel %vm1466, %v1473, %v1475
    %v1477 = vsel %vm1465, %v1455, %v1458
    %v1478 = vsel %vm1468, %v1464, 1326507024
    %v1479 = vsel %vm1467, %v1461, %v1478
    %v1480 = vsel %vm1466, %v1477, %v1479
    %v1481 = vshll.u32 %v1441, 8
    %v1482 = vmul.u32.u64.compose %v1481, %v1480
    %v1483 = vextract.low.u32 %v1482
    %v1484 = vextract.high.u32 %v1482
    %v1485 = vmul.u32.u64.compose %v1481, %v1476
    %v1486 = vextract.low.u32 %v1485
    %v1487 = vextract.high.u32 %v1485
    %v1488 = vmul.u32 %v1481, %v1472
    %v1489 = vadd.s32 %v1484, %v1486
    %vm1490 = vc.u32 %v1484, %v1486
    %v1491 = vadd.s32 %v1487, 1
    %v1492 = vsel %vm1490, %v1491, %v1487
    %v1493 = vadd.s32 %v1488, %v1492
    %v1494 = vadd.s32 %v1493, 536870912
    %v1495 = vshrl.u32 %v1494, 30
    %v1496 = vshll.u32 %v1495, 30
    %v1497 = vsub.s32 %v1493, %v1496
    %vm1498 = vcmp.lt.s32.totalorder %v1497, 0
    %v1499 = vsub.s32 0, %v1497
    %v1500 = vsel %vm1498, %v1499, %v1497
    %v1501 = vclz %v1500
    %v1502 = vsub.s32 %v1501, 2
    %vm1503 = vcmp.gt.s32.totalorder 0, %v1502
    %v1504 = vsel %vm1503, 0, %v1502
    %v1505 = vsub.s32 32, %v1504
    %v1506 = vshll.u32 %v1497, %v1504
    %v1507 = vshrl.u32 %v1489, %v1505
    %v1508 = vor.u32 %v1506, %v1507
    %v1509 = vsub.s32 4294967266, %v1504
    %v1510 = vadd.s32 %v1509, 127
    %v1511 = vshll.u32 %v1510, 23
    %v1512 = vor.u32 4788187, %v1511
    %v1513 = vand.u32 2147483647, %v1512
    %v1515 = vcvt.s32.f32 %v1508
    %v1516 = vmul.f32 %v1515, %v1513
    %v1517 = vxor.u32 %v1516, 2147483648
    %v1518 = vsel %vm1435, %v1517, %v1516
    %v1519 = vsub.s32 4, %v1495
    %v1520 = vsel %vm1435, %v1519, %v1495
    %v1521 = vsel %vm1434, %v891, %v1518
    %v1522 = vsel %vm1434, 0, %v1520
    %v1523 = vcosq.f32.pop %v1521
    %v1524 = vsinq.f32.pop %v1521
    %vm1525 = vweird.f32 %v891
    %v1526 = vand.u32 %v1522, 3
    %vm1527 = vcmp.lt.s32.totalorder %v1526, 2
    %vm1528 = vcmp.eq.s32.totalorder %v1526, 0
    %v1529 = vxor.u32 %v1524, 2147483648
    %v1530 = vsel %vm1528, %v1523, %v1529
    %vm1531 = vcmp.eq.s32.totalorder %v1526, 2
    %v1532 = vxor.u32 %v1523, 2147483648
    %v1533 = vsel %vm1531, %v1532, %v1524
    %v1534 = vsel %vm1527, %v1530, %v1533
    %v1535 = vsel %vm1525, nan, %v1534
    %v1536 = vand.u32 2147483647, %v892
    %vm1537 = vcmp.le.f32.partialorder %v1536, 0.7853982
    %vm1538 = vcmp.lt.s32.totalorder %v892, 0
    %v1539 = vand.u32 %v892, 2139095040
    %v1540 = vshrl.u32 %v1539, 23
    %v1541 = vsub.s32 %v1540, 127
    %v1542 = vand.u32 2147483647, %v892
    %v1543 = vand.u32 %v1542, 8388607
    %v1544 = vor.u32 %v1543, 8388608
    %v1545 = vsub.s32 0, %v1544
    %v1546 = vadd.s32 %v1541, 1
    %vm1547 = vcmp.gt.s32.totalorder %v1546, 0
    %v1548 = vsel %vm1547, %v1546, 0
    %v1549 = vshrl.u32 %v1548, 5
    %v1550 = vand.u32 %v1548, 31
    %v1551 = vsub.s32 32, %v1550
    %v1552 = vshrl.u32 683565275, %v1551
    %v1553 = vshll.u32 683565275, %v1550
    %v1554 = vshrl.u32 2475754826, %v1551
    %v1555 = vor.u32 %v1553, %v1554
    %v1556 = vshll.u32 2475754826, %v1550
    %v1557 = vshrl.u32 2131351028, %v1551
    %v1558 = vor.u32 %v1556, %v1557
    %v1559 = vshll.u32 2131351028, %v1550
    %v1560 = vshrl.u32 2102212464, %v1551
    %v1561 = vor.u32 %v1559, %v1560
    %v1562 = vshll.u32 2102212464, %v1550
    %v1563 = vshrl.u32 920167782, %v1551
    %v1564 = vor.u32 %v1562, %v1563
    %v1565 = vshll.u32 920167782, %v1550
    %v1566 = vshrl.u32 1326507024, %v1551
    %v1567 = vor.u32 %v1565, %v1566
    %vm1568 = vcmp.lt.s32.totalorder %v1549, 1
    %vm1569 = vcmp.lt.s32.totalorder %v1549, 2
    %vm1570 = vcmp.lt.s32.totalorder %v1549, 3
    %vm1571 = vcmp.lt.s32.totalorder %v1549, 4
    %v1572 = vsel %vm1568, %v1552, %v1555
    %v1573 = vsel %vm1571, %v1561, 2102212464
    %v1574 = vsel %vm1570, %v1558, %v1573
    %v1575 = vsel %vm1569, %v1572, %v1574
    %v1576 = vsel %vm1568, %v1555, %v1558
    %v1577 = vsel %vm1571, %v1564, 920167782
    %v1578 = vsel %vm1570, %v1561, %v1577
    %v1579 = vsel %vm1569, %v1576, %v1578
    %v1580 = vsel %vm1568, %v1558, %v1561
    %v1581 = vsel %vm1571, %v1567, 1326507024
    %v1582 = vsel %vm1570, %v1564, %v1581
    %v1583 = vsel %vm1569, %v1580, %v1582
    %v1584 = vshll.u32 %v1544, 8
    %v1585 = vmul.u32.u64.compose %v1584, %v1583
    %v1586 = vextract.low.u32 %v1585
    %v1587 = vextract.high.u32 %v1585
    %v1588 = vmul.u32.u64.compose %v1584, %v1579
    %v1589 = vextract.low.u32 %v1588
    %v1590 = vextract.high.u32 %v1588
    %v1591 = vmul.u32 %v1584, %v1575
    %v1592 = vadd.s32 %v1587, %v1589
    %vm1593 = vc.u32 %v1587, %v1589
    %v1594 = vadd.s32 %v1590, 1
    %v1595 = vsel %vm1593, %v1594, %v1590
    %v1596 = vadd.s32 %v1591, %v1595
    %v1597 = vadd.s32 %v1596, 536870912
    %v1598 = vshrl.u32 %v1597, 30
    %v1599 = vshll.u32 %v1598, 30
    %v1600 = vsub.s32 %v1596, %v1599
    %vm1601 = vcmp.lt.s32.totalorder %v1600, 0
    %v1602 = vsub.s32 0, %v1600
    %v1603 = vsel %vm1601, %v1602, %v1600
    %v1604 = vclz %v1603
    %v1605 = vsub.s32 %v1604, 2
    %vm1606 = vcmp.gt.s32.totalorder 0, %v1605
    %v1607 = vsel %vm1606, 0, %v1605
    %v1608 = vsub.s32 32, %v1607
    %v1609 = vshll.u32 %v1600, %v1607
    %v1610 = vshrl.u32 %v1592, %v1608
    %v1611 = vor.u32 %v1609, %v1610
    %v1612 = vsub.s32 4294967266, %v1607
    %v1613 = vadd.s32 %v1612, 127
    %v1614 = vshll.u32 %v1613, 23
    %v1615 = vor.u32 4788187, %v1614
    %v1616 = vand.u32 2147483647, %v1615
    %v1618 = vcvt.s32.f32 %v1611
    %v1619 = vmul.f32 %v1618, %v1616
    %v1620 = vxor.u32 %v1619, 2147483648
    %v1621 = vsel %vm1538, %v1620, %v1619
    %v1622 = vsub.s32 4, %v1598
    %v1623 = vsel %vm1538, %v1622, %v1598
    %v1624 = vsel %vm1537, %v892, %v1621
    %v1625 = vsel %vm1537, 0, %v1623
    %v1626 = vcosq.f32.pop %v1624
    %v1627 = vsinq.f32.pop %v1624
    %vm1628 = vweird.f32 %v892
    %v1629 = vand.u32 %v1625, 3
    %vm1630 = vcmp.lt.s32.totalorder %v1629, 2
    %vm1631 = vcmp.eq.s32.totalorder %v1629, 0
    %v1632 = vxor.u32 %v1627, 2147483648
    %v1633 = vsel %vm1631, %v1626, %v1632
    %vm1634 = vcmp.eq.s32.totalorder %v1629, 2
    %v1635 = vxor.u32 %v1626, 2147483648
    %v1636 = vsel %vm1634, %v1635, %v1627
    %v1637 = vsel %vm1630, %v1633, %v1636
    %v1638 = vsel %vm1628, nan, %v1637
    %v1639 = vand.u32 2147483647, %v893
    %vm1640 = vcmp.le.f32.partialorder %v1639, 0.7853982
    %vm1641 = vcmp.lt.s32.totalorder %v893, 0
    %v1642 = vand.u32 %v893, 2139095040
    %v1643 = vshrl.u32 %v1642, 23
    %v1644 = vsub.s32 %v1643, 127
    %v1645 = vand.u32 2147483647, %v893
    %v1646 = vand.u32 %v1645, 8388607
    %v1647 = vor.u32 %v1646, 8388608
    %v1648 = vsub.s32 0, %v1647
    %v1649 = vadd.s32 %v1644, 1
    %vm1650 = vcmp.gt.s32.totalorder %v1649, 0
    %v1651 = vsel %vm1650, %v1649, 0
    %v1652 = vshrl.u32 %v1651, 5
    %v1653 = vand.u32 %v1651, 31
    %v1654 = vsub.s32 32, %v1653
    %v1655 = vshrl.u32 683565275, %v1654
    %v1656 = vshll.u32 683565275, %v1653
    %v1657 = vshrl.u32 2475754826, %v1654
    %v1658 = vor.u32 %v1656, %v1657
    %v1659 = vshll.u32 2475754826, %v1653
    %v1660 = vshrl.u32 2131351028, %v1654
    %v1661 = vor.u32 %v1659, %v1660
    %v1662 = vshll.u32 2131351028, %v1653
    %v1663 = vshrl.u32 2102212464, %v1654
    %v1664 = vor.u32 %v1662, %v1663
    %v1665 = vshll.u32 2102212464, %v1653
    %v1666 = vshrl.u32 920167782, %v1654
    %v1667 = vor.u32 %v1665, %v1666
    %v1668 = vshll.u32 920167782, %v1653
    %v1669 = vshrl.u32 1326507024, %v1654
    %v1670 = vor.u32 %v1668, %v1669
    %vm1671 = vcmp.lt.s32.totalorder %v1652, 1
    %vm1672 = vcmp.lt.s32.totalorder %v1652, 2
    %vm1673 = vcmp.lt.s32.totalorder %v1652, 3
    %vm1674 = vcmp.lt.s32.totalorder %v1652, 4
    %v1675 = vsel %vm1671, %v1655, %v1658
    %v1676 = vsel %vm1674, %v1664, 2102212464
    %v1677 = vsel %vm1673, %v1661, %v1676
    %v1678 = vsel %vm1672, %v1675, %v1677
    %v1679 = vsel %vm1671, %v1658, %v1661
    %v1680 = vsel %vm1674, %v1667, 920167782
    %v1681 = vsel %vm1673, %v1664, %v1680
    %v1682 = vsel %vm1672, %v1679, %v1681
    %v1683 = vsel %vm1671, %v1661, %v1664
    %v1684 = vsel %vm1674, %v1670, 1326507024
    %v1685 = vsel %vm1673, %v1667, %v1684
    %v1686 = vsel %vm1672, %v1683, %v1685
    %v1687 = vshll.u32 %v1647, 8
    %v1688 = vmul.u32.u64.compose %v1687, %v1686
    %v1689 = vextract.low.u32 %v1688
    %v1690 = vextract.high.u32 %v1688
    %v1691 = vmul.u32.u64.compose %v1687, %v1682
    %v1692 = vextract.low.u32 %v1691
    %v1693 = vextract.high.u32 %v1691
    %v1694 = vmul.u32 %v1687, %v1678
    %v1695 = vadd.s32 %v1690, %v1692
    %vm1696 = vc.u32 %v1690, %v1692
    %v1697 = vadd.s32 %v1693, 1
    %v1698 = vsel %vm1696, %v1697, %v1693
    %v1699 = vadd.s32 %v1694, %v1698
    %v1700 = vadd.s32 %v1699, 536870912
    %v1701 = vshrl.u32 %v1700, 30
    %v1702 = vshll.u32 %v1701, 30
    %v1703 = vsub.s32 %v1699, %v1702
    %vm1704 = vcmp.lt.s32.totalorder %v1703, 0
    %v1705 = vsub.s32 0, %v1703
    %v1706 = vsel %vm1704, %v1705, %v1703
    %v1707 = vclz %v1706
    %v1708 = vsub.s32 %v1707, 2
    %vm1709 = vcmp.gt.s32.totalorder 0, %v1708
    %v1710 = vsel %vm1709, 0, %v1708
    %v1711 = vsub.s32 32, %v1710
    %v1712 = vshll.u32 %v1703, %v1710
    %v1713 = vshrl.u32 %v1695, %v1711
    %v1714 = vor.u32 %v1712, %v1713
    %v1715 = vsub.s32 4294967266, %v1710
    %v1716 = vadd.s32 %v1715, 127
    %v1717 = vshll.u32 %v1716, 23
    %v1718 = vor.u32 4788187, %v1717
    %v1719 = vand.u32 2147483647, %v1718
    %v1721 = vcvt.s32.f32 %v1714
    %v1722 = vmul.f32 %v1721, %v1719
    %v1723 = vxor.u32 %v1722, 2147483648
    %v1724 = vsel %vm1641, %v1723, %v1722
    %v1725 = vsub.s32 4, %v1701
    %v1726 = vsel %vm1641, %v1725, %v1701
    %v1727 = vsel %vm1640, %v893, %v1724
    %v1728 = vsel %vm1640, 0, %v1726
    %v1729 = vcosq.f32.pop %v1727
    %v1730 = vsinq.f32.pop %v1727
    %vm1731 = vweird.f32 %v893
    %v1732 = vand.u32 %v1728, 3
    %vm1733 = vcmp.lt.s32.totalorder %v1732, 2
    %vm1734 = vcmp.eq.s32.totalorder %v1732, 0
    %v1735 = vxor.u32 %v1730, 2147483648
    %v1736 = vsel %vm1734, %v1729, %v1735
    %vm1737 = vcmp.eq.s32.totalorder %v1732, 2
    %v1738 = vxor.u32 %v1729, 2147483648
    %v1739 = vsel %vm1737, %v1738, %v1730
    %v1740 = vsel %vm1733, %v1736, %v1739
    %v1741 = vsel %vm1731, nan, %v1740
    %v1742 = vand.u32 2147483647, %v894
    %vm1743 = vcmp.le.f32.partialorder %v1742, 0.7853982
    %vm1744 = vcmp.lt.s32.totalorder %v894, 0
    %v1745 = vand.u32 %v894, 2139095040
    %v1746 = vshrl.u32 %v1745, 23
    %v1747 = vsub.s32 %v1746, 127
    %v1748 = vand.u32 2147483647, %v894
    %v1749 = vand.u32 %v1748, 8388607
    %v1750 = vor.u32 %v1749, 8388608
    %v1751 = vsub.s32 0, %v1750
    %v1752 = vadd.s32 %v1747, 1
    %vm1753 = vcmp.gt.s32.totalorder %v1752, 0
    %v1754 = vsel %vm1753, %v1752, 0
    %v1755 = vshrl.u32 %v1754, 5
    %v1756 = vand.u32 %v1754, 31
    %v1757 = vsub.s32 32, %v1756
    %v1758 = vshrl.u32 683565275, %v1757
    %v1759 = vshll.u32 683565275, %v1756
    %v1760 = vshrl.u32 2475754826, %v1757
    %v1761 = vor.u32 %v1759, %v1760
    %v1762 = vshll.u32 2475754826, %v1756
    %v1763 = vshrl.u32 2131351028, %v1757
    %v1764 = vor.u32 %v1762, %v1763
    %v1765 = vshll.u32 2131351028, %v1756
    %v1766 = vshrl.u32 2102212464, %v1757
    %v1767 = vor.u32 %v1765, %v1766
    %v1768 = vshll.u32 2102212464, %v1756
    %v1769 = vshrl.u32 920167782, %v1757
    %v1770 = vor.u32 %v1768, %v1769
    %v1771 = vshll.u32 920167782, %v1756
    %v1772 = vshrl.u32 1326507024, %v1757
    %v1773 = vor.u32 %v1771, %v1772
    %vm1774 = vcmp.lt.s32.totalorder %v1755, 1
    %vm1775 = vcmp.lt.s32.totalorder %v1755, 2
    %vm1776 = vcmp.lt.s32.totalorder %v1755, 3
    %vm1777 = vcmp.lt.s32.totalorder %v1755, 4
    %v1778 = vsel %vm1774, %v1758, %v1761
    %v1779 = vsel %vm1777, %v1767, 2102212464
    %v1780 = vsel %vm1776, %v1764, %v1779
    %v1781 = vsel %vm1775, %v1778, %v1780
    %v1782 = vsel %vm1774, %v1761, %v1764
    %v1783 = vsel %vm1777, %v1770, 920167782
    %v1784 = vsel %vm1776, %v1767, %v1783
    %v1785 = vsel %vm1775, %v1782, %v1784
    %v1786 = vsel %vm1774, %v1764, %v1767
    %v1787 = vsel %vm1777, %v1773, 1326507024
    %v1788 = vsel %vm1776, %v1770, %v1787
    %v1789 = vsel %vm1775, %v1786, %v1788
    %v1790 = vshll.u32 %v1750, 8
    %v1791 = vmul.u32.u64.compose %v1790, %v1789
    %v1792 = vextract.low.u32 %v1791
    %v1793 = vextract.high.u32 %v1791
    %v1794 = vmul.u32.u64.compose %v1790, %v1785
    %v1795 = vextract.low.u32 %v1794
    %v1796 = vextract.high.u32 %v1794
    %v1797 = vmul.u32 %v1790, %v1781
    %v1798 = vadd.s32 %v1793, %v1795
    %vm1799 = vc.u32 %v1793, %v1795
    %v1800 = vadd.s32 %v1796, 1
    %v1801 = vsel %vm1799, %v1800, %v1796
    %v1802 = vadd.s32 %v1797, %v1801
    %v1803 = vadd.s32 %v1802, 536870912
    %v1804 = vshrl.u32 %v1803, 30
    %v1805 = vshll.u32 %v1804, 30
    %v1806 = vsub.s32 %v1802, %v1805
    %vm1807 = vcmp.lt.s32.totalorder %v1806, 0
    %v1808 = vsub.s32 0, %v1806
    %v1809 = vsel %vm1807, %v1808, %v1806
    %v1810 = vclz %v1809
    %v1811 = vsub.s32 %v1810, 2
    %vm1812 = vcmp.gt.s32.totalorder 0, %v1811
    %v1813 = vsel %vm1812, 0, %v1811
    %v1814 = vsub.s32 32, %v1813
    %v1815 = vshll.u32 %v1806, %v1813
    %v1816 = vshrl.u32 %v1798, %v1814
    %v1817 = vor.u32 %v1815, %v1816
    %v1818 = vsub.s32 4294967266, %v1813
    %v1819 = vadd.s32 %v1818, 127
    %v1820 = vshll.u32 %v1819, 23
    %v1821 = vor.u32 4788187, %v1820
    %v1822 = vand.u32 2147483647, %v1821
    %v1824 = vcvt.s32.f32 %v1817
    %v1825 = vmul.f32 %v1824, %v1822
    %v1826 = vxor.u32 %v1825, 2147483648
    %v1827 = vsel %vm1744, %v1826, %v1825
    %v1828 = vsub.s32 4, %v1804
    %v1829 = vsel %vm1744, %v1828, %v1804
    %v1830 = vsel %vm1743, %v894, %v1827
    %v1831 = vsel %vm1743, 0, %v1829
    %v1832 = vcosq.f32.pop %v1830
    %v1833 = vsinq.f32.pop %v1830
    %vm1834 = vweird.f32 %v894
    %v1835 = vand.u32 %v1831, 3
    %vm1836 = vcmp.lt.s32.totalorder %v1835, 2
    %vm1837 = vcmp.eq.s32.totalorder %v1835, 0
    %v1838 = vxor.u32 %v1833, 2147483648
    %v1839 = vsel %vm1837, %v1832, %v1838
    %vm1840 = vcmp.eq.s32.totalorder %v1835, 2
    %v1841 = vxor.u32 %v1832, 2147483648
    %v1842 = vsel %vm1840, %v1841, %v1833
    %v1843 = vsel %vm1836, %v1839, %v1842
    %v1844 = vsel %vm1834, nan, %v1843
    %v1845 = vand.u32 2147483647, %v895
    %vm1846 = vcmp.le.f32.partialorder %v1845, 0.7853982
    %vm1847 = vcmp.lt.s32.totalorder %v895, 0
    %v1848 = vand.u32 %v895, 2139095040
    %v1849 = vshrl.u32 %v1848, 23
    %v1850 = vsub.s32 %v1849, 127
    %v1851 = vand.u32 2147483647, %v895
    %v1852 = vand.u32 %v1851, 8388607
    %v1853 = vor.u32 %v1852, 8388608
    %v1854 = vsub.s32 0, %v1853
    %v1855 = vadd.s32 %v1850, 1
    %vm1856 = vcmp.gt.s32.totalorder %v1855, 0
    %v1857 = vsel %vm1856, %v1855, 0
    %v1858 = vshrl.u32 %v1857, 5
    %v1859 = vand.u32 %v1857, 31
    %v1860 = vsub.s32 32, %v1859
    %v1861 = vshrl.u32 683565275, %v1860
    %v1862 = vshll.u32 683565275, %v1859
    %v1863 = vshrl.u32 2475754826, %v1860
    %v1864 = vor.u32 %v1862, %v1863
    %v1865 = vshll.u32 2475754826, %v1859
    %v1866 = vshrl.u32 2131351028, %v1860
    %v1867 = vor.u32 %v1865, %v1866
    %v1868 = vshll.u32 2131351028, %v1859
    %v1869 = vshrl.u32 2102212464, %v1860
    %v1870 = vor.u32 %v1868, %v1869
    %v1871 = vshll.u32 2102212464, %v1859
    %v1872 = vshrl.u32 920167782, %v1860
    %v1873 = vor.u32 %v1871, %v1872
    %v1874 = vshll.u32 920167782, %v1859
    %v1875 = vshrl.u32 1326507024, %v1860
    %v1876 = vor.u32 %v1874, %v1875
    %vm1877 = vcmp.lt.s32.totalorder %v1858, 1
    %vm1878 = vcmp.lt.s32.totalorder %v1858, 2
    %vm1879 = vcmp.lt.s32.totalorder %v1858, 3
    %vm1880 = vcmp.lt.s32.totalorder %v1858, 4
    %v1881 = vsel %vm1877, %v1861, %v1864
    %v1882 = vsel %vm1880, %v1870, 2102212464
    %v1883 = vsel %vm1879, %v1867, %v1882
    %v1884 = vsel %vm1878, %v1881, %v1883
    %v1885 = vsel %vm1877, %v1864, %v1867
    %v1886 = vsel %vm1880, %v1873, 920167782
    %v1887 = vsel %vm1879, %v1870, %v1886
    %v1888 = vsel %vm1878, %v1885, %v1887
    %v1889 = vsel %vm1877, %v1867, %v1870
    %v1890 = vsel %vm1880, %v1876, 1326507024
    %v1891 = vsel %vm1879, %v1873, %v1890
    %v1892 = vsel %vm1878, %v1889, %v1891
    %v1893 = vshll.u32 %v1853, 8
    %v1894 = vmul.u32.u64.compose %v1893, %v1892
    %v1895 = vextract.low.u32 %v1894
    %v1896 = vextract.high.u32 %v1894
    %v1897 = vmul.u32.u64.compose %v1893, %v1888
    %v1898 = vextract.low.u32 %v1897
    %v1899 = vextract.high.u32 %v1897
    %v1900 = vmul.u32 %v1893, %v1884
    %v1901 = vadd.s32 %v1896, %v1898
    %vm1902 = vc.u32 %v1896, %v1898
    %v1903 = vadd.s32 %v1899, 1
    %v1904 = vsel %vm1902, %v1903, %v1899
    %v1905 = vadd.s32 %v1900, %v1904
    %v1906 = vadd.s32 %v1905, 536870912
    %v1907 = vshrl.u32 %v1906, 30
    %v1908 = vshll.u32 %v1907, 30
    %v1909 = vsub.s32 %v1905, %v1908
    %vm1910 = vcmp.lt.s32.totalorder %v1909, 0
    %v1911 = vsub.s32 0, %v1909
    %v1912 = vsel %vm1910, %v1911, %v1909
    %v1913 = vclz %v1912
    %v1914 = vsub.s32 %v1913, 2
    %vm1915 = vcmp.gt.s32.totalorder 0, %v1914
    %v1916 = vsel %vm1915, 0, %v1914
    %v1917 = vsub.s32 32, %v1916
    %v1918 = vshll.u32 %v1909, %v1916
    %v1919 = vshrl.u32 %v1901, %v1917
    %v1920 = vor.u32 %v1918, %v1919
    %v1921 = vsub.s32 4294967266, %v1916
    %v1922 = vadd.s32 %v1921, 127
    %v1923 = vshll.u32 %v1922, 23
    %v1924 = vor.u32 4788187, %v1923
    %v1925 = vand.u32 2147483647, %v1924
    %v1927 = vcvt.s32.f32 %v1920
    %v1928 = vmul.f32 %v1927, %v1925
    %v1929 = vxor.u32 %v1928, 2147483648
    %v1930 = vsel %vm1847, %v1929, %v1928
    %v1931 = vsub.s32 4, %v1907
    %v1932 = vsel %vm1847, %v1931, %v1907
    %v1933 = vsel %vm1846, %v895, %v1930
    %v1934 = vsel %vm1846, 0, %v1932
    %v1935 = vcosq.f32.pop %v1933
    %v1936 = vsinq.f32.pop %v1933
    %vm1937 = vweird.f32 %v895
    %v1938 = vand.u32 %v1934, 3
    %vm1939 = vcmp.lt.s32.totalorder %v1938, 2
    %vm1940 = vcmp.eq.s32.totalorder %v1938, 0
    %v1941 = vxor.u32 %v1936, 2147483648
    %v1942 = vsel %vm1940, %v1935, %v1941
    %vm1943 = vcmp.eq.s32.totalorder %v1938, 2
    %v1944 = vxor.u32 %v1935, 2147483648
    %v1945 = vsel %vm1943, %v1944, %v1936
    %v1946 = vsel %vm1939, %v1942, %v1945
    %v1947 = vsel %vm1937, nan, %v1946
    %v1948 = vand.u32 2147483647, %v896
    %vm1949 = vcmp.le.f32.partialorder %v1948, 0.7853982
    %vm1950 = vcmp.lt.s32.totalorder %v896, 0
    %v1951 = vand.u32 %v896, 2139095040
    %v1952 = vshrl.u32 %v1951, 23
    %v1953 = vsub.s32 %v1952, 127
    %v1954 = vand.u32 2147483647, %v896
    %v1955 = vand.u32 %v1954, 8388607
    %v1956 = vor.u32 %v1955, 8388608
    %v1957 = vsub.s32 0, %v1956
    %v1958 = vadd.s32 %v1953, 1
    %vm1959 = vcmp.gt.s32.totalorder %v1958, 0
    %v1960 = vsel %vm1959, %v1958, 0
    %v1961 = vshrl.u32 %v1960, 5
    %v1962 = vand.u32 %v1960, 31
    %v1963 = vsub.s32 32, %v1962
    %v1964 = vshrl.u32 683565275, %v1963
    %v1965 = vshll.u32 683565275, %v1962
    %v1966 = vshrl.u32 2475754826, %v1963
    %v1967 = vor.u32 %v1965, %v1966
    %v1968 = vshll.u32 2475754826, %v1962
    %v1969 = vshrl.u32 2131351028, %v1963
    %v1970 = vor.u32 %v1968, %v1969
    %v1971 = vshll.u32 2131351028, %v1962
    %v1972 = vshrl.u32 2102212464, %v1963
    %v1973 = vor.u32 %v1971, %v1972
    %v1974 = vshll.u32 2102212464, %v1962
    %v1975 = vshrl.u32 920167782, %v1963
    %v1976 = vor.u32 %v1974, %v1975
    %v1977 = vshll.u32 920167782, %v1962
    %v1978 = vshrl.u32 1326507024, %v1963
    %v1979 = vor.u32 %v1977, %v1978
    %vm1980 = vcmp.lt.s32.totalorder %v1961, 1
    %vm1981 = vcmp.lt.s32.totalorder %v1961, 2
    %vm1982 = vcmp.lt.s32.totalorder %v1961, 3
    %vm1983 = vcmp.lt.s32.totalorder %v1961, 4
    %v1984 = vsel %vm1980, %v1964, %v1967
    %v1985 = vsel %vm1983, %v1973, 2102212464
    %v1986 = vsel %vm1982, %v1970, %v1985
    %v1987 = vsel %vm1981, %v1984, %v1986
    %v1988 = vsel %vm1980, %v1967, %v1970
    %v1989 = vsel %vm1983, %v1976, 920167782
    %v1990 = vsel %vm1982, %v1973, %v1989
    %v1991 = vsel %vm1981, %v1988, %v1990
    %v1992 = vsel %vm1980, %v1970, %v1973
    %v1993 = vsel %vm1983, %v1979, 1326507024
    %v1994 = vsel %vm1982, %v1976, %v1993
    %v1995 = vsel %vm1981, %v1992, %v1994
    %v1996 = vshll.u32 %v1956, 8
    %v1997 = vmul.u32.u64.compose %v1996, %v1995
    %v1998 = vextract.low.u32 %v1997
    %v1999 = vextract.high.u32 %v1997
    %v2000 = vmul.u32.u64.compose %v1996, %v1991
    %v2001 = vextract.low.u32 %v2000
    %v2002 = vextract.high.u32 %v2000
    %v2003 = vmul.u32 %v1996, %v1987
    %v2004 = vadd.s32 %v1999, %v2001
    %vm2005 = vc.u32 %v1999, %v2001
    %v2006 = vadd.s32 %v2002, 1
    %v2007 = vsel %vm2005, %v2006, %v2002
    %v2008 = vadd.s32 %v2003, %v2007
    %v2009 = vadd.s32 %v2008, 536870912
    %v2010 = vshrl.u32 %v2009, 30
    %v2011 = vshll.u32 %v2010, 30
    %v2012 = vsub.s32 %v2008, %v2011
    %vm2013 = vcmp.lt.s32.totalorder %v2012, 0
    %v2014 = vsub.s32 0, %v2012
    %v2015 = vsel %vm2013, %v2014, %v2012
    %v2016 = vclz %v2015
    %v2017 = vsub.s32 %v2016, 2
    %vm2018 = vcmp.gt.s32.totalorder 0, %v2017
    %v2019 = vsel %vm2018, 0, %v2017
    %v2020 = vsub.s32 32, %v2019
    %v2021 = vshll.u32 %v2012, %v2019
    %v2022 = vshrl.u32 %v2004, %v2020
    %v2023 = vor.u32 %v2021, %v2022
    %v2024 = vsub.s32 4294967266, %v2019
    %v2025 = vadd.s32 %v2024, 127
    %v2026 = vshll.u32 %v2025, 23
    %v2027 = vor.u32 4788187, %v2026
    %v2028 = vand.u32 2147483647, %v2027
    %v2030 = vcvt.s32.f32 %v2023
    %v2031 = vmul.f32 %v2030, %v2028
    %v2032 = vxor.u32 %v2031, 2147483648
    %v2033 = vsel %vm1950, %v2032, %v2031
    %v2034 = vsub.s32 4, %v2010
    %v2035 = vsel %vm1950, %v2034, %v2010
    %v2036 = vsel %vm1949, %v896, %v2033
    %v2037 = vsel %vm1949, 0, %v2035
    %v2038 = vcosq.f32.pop %v2036
    %v2039 = vsinq.f32.pop %v2036
    %vm2040 = vweird.f32 %v896
    %v2041 = vand.u32 %v2037, 3
    %vm2042 = vcmp.lt.s32.totalorder %v2041, 2
    %vm2043 = vcmp.eq.s32.totalorder %v2041, 0
    %v2044 = vxor.u32 %v2039, 2147483648
    %v2045 = vsel %vm2043, %v2038, %v2044
    %vm2046 = vcmp.eq.s32.totalorder %v2041, 2
    %v2047 = vxor.u32 %v2038, 2147483648
    %v2048 = vsel %vm2046, %v2047, %v2039
    %v2049 = vsel %vm2042, %v2045, %v2048
    %v2050 = vsel %vm2040, nan, %v2049
    %v2051 = vand.u32 2147483647, %v897
    %vm2052 = vcmp.le.f32.partialorder %v2051, 0.7853982
    %vm2053 = vcmp.lt.s32.totalorder %v897, 0
    %v2054 = vand.u32 %v897, 2139095040
    %v2055 = vshrl.u32 %v2054, 23
    %v2056 = vsub.s32 %v2055, 127
    %v2057 = vand.u32 2147483647, %v897
    %v2058 = vand.u32 %v2057, 8388607
    %v2059 = vor.u32 %v2058, 8388608
    %v2060 = vsub.s32 0, %v2059
    %v2061 = vadd.s32 %v2056, 1
    %vm2062 = vcmp.gt.s32.totalorder %v2061, 0
    %v2063 = vsel %vm2062, %v2061, 0
    %v2064 = vshrl.u32 %v2063, 5
    %v2065 = vand.u32 %v2063, 31
    %v2066 = vsub.s32 32, %v2065
    %v2067 = vshrl.u32 683565275, %v2066
    %v2068 = vshll.u32 683565275, %v2065
    %v2069 = vshrl.u32 2475754826, %v2066
    %v2070 = vor.u32 %v2068, %v2069
    %v2071 = vshll.u32 2475754826, %v2065
    %v2072 = vshrl.u32 2131351028, %v2066
    %v2073 = vor.u32 %v2071, %v2072
    %v2074 = vshll.u32 2131351028, %v2065
    %v2075 = vshrl.u32 2102212464, %v2066
    %v2076 = vor.u32 %v2074, %v2075
    %v2077 = vshll.u32 2102212464, %v2065
    %v2078 = vshrl.u32 920167782, %v2066
    %v2079 = vor.u32 %v2077, %v2078
    %v2080 = vshll.u32 920167782, %v2065
    %v2081 = vshrl.u32 1326507024, %v2066
    %v2082 = vor.u32 %v2080, %v2081
    %vm2083 = vcmp.lt.s32.totalorder %v2064, 1
    %vm2084 = vcmp.lt.s32.totalorder %v2064, 2
    %vm2085 = vcmp.lt.s32.totalorder %v2064, 3
    %vm2086 = vcmp.lt.s32.totalorder %v2064, 4
    %v2087 = vsel %vm2083, %v2067, %v2070
    %v2088 = vsel %vm2086, %v2076, 2102212464
    %v2089 = vsel %vm2085, %v2073, %v2088
    %v2090 = vsel %vm2084, %v2087, %v2089
    %v2091 = vsel %vm2083, %v2070, %v2073
    %v2092 = vsel %vm2086, %v2079, 920167782
    %v2093 = vsel %vm2085, %v2076, %v2092
    %v2094 = vsel %vm2084, %v2091, %v2093
    %v2095 = vsel %vm2083, %v2073, %v2076
    %v2096 = vsel %vm2086, %v2082, 1326507024
    %v2097 = vsel %vm2085, %v2079, %v2096
    %v2098 = vsel %vm2084, %v2095, %v2097
    %v2099 = vshll.u32 %v2059, 8
    %v2100 = vmul.u32.u64.compose %v2099, %v2098
    %v2101 = vextract.low.u32 %v2100
    %v2102 = vextract.high.u32 %v2100
    %v2103 = vmul.u32.u64.compose %v2099, %v2094
    %v2104 = vextract.low.u32 %v2103
    %v2105 = vextract.high.u32 %v2103
    %v2106 = vmul.u32 %v2099, %v2090
    %v2107 = vadd.s32 %v2102, %v2104
    %vm2108 = vc.u32 %v2102, %v2104
    %v2109 = vadd.s32 %v2105, 1
    %v2110 = vsel %vm2108, %v2109, %v2105
    %v2111 = vadd.s32 %v2106, %v2110
    %v2112 = vadd.s32 %v2111, 536870912
    %v2113 = vshrl.u32 %v2112, 30
    %v2114 = vshll.u32 %v2113, 30
    %v2115 = vsub.s32 %v2111, %v2114
    %vm2116 = vcmp.lt.s32.totalorder %v2115, 0
    %v2117 = vsub.s32 0, %v2115
    %v2118 = vsel %vm2116, %v2117, %v2115
    %v2119 = vclz %v2118
    %v2120 = vsub.s32 %v2119, 2
    %vm2121 = vcmp.gt.s32.totalorder 0, %v2120
    %v2122 = vsel %vm2121, 0, %v2120
    %v2123 = vsub.s32 32, %v2122
    %v2124 = vshll.u32 %v2115, %v2122
    %v2125 = vshrl.u32 %v2107, %v2123
    %v2126 = vor.u32 %v2124, %v2125
    %v2127 = vsub.s32 4294967266, %v2122
    %v2128 = vadd.s32 %v2127, 127
    %v2129 = vshll.u32 %v2128, 23
    %v2130 = vor.u32 4788187, %v2129
    %v2131 = vand.u32 2147483647, %v2130
    %v2133 = vcvt.s32.f32 %v2126
    %v2134 = vmul.f32 %v2133, %v2131
    %v2135 = vxor.u32 %v2134, 2147483648
    %v2136 = vsel %vm2053, %v2135, %v2134
    %v2137 = vsub.s32 4, %v2113
    %v2138 = vsel %vm2053, %v2137, %v2113
    %v2139 = vsel %vm2052, %v897, %v2136
    %v2140 = vsel %vm2052, 0, %v2138
    %v2141 = vcosq.f32.pop %v2139
    %v2142 = vsinq.f32.pop %v2139
    %vm2143 = vweird.f32 %v897
    %v2144 = vand.u32 %v2140, 3
    %vm2145 = vcmp.lt.s32.totalorder %v2144, 2
    %vm2146 = vcmp.eq.s32.totalorder %v2144, 0
    %v2147 = vxor.u32 %v2142, 2147483648
    %v2148 = vsel %vm2146, %v2141, %v2147
    %vm2149 = vcmp.eq.s32.totalorder %v2144, 2
    %v2150 = vxor.u32 %v2141, 2147483648
    %v2151 = vsel %vm2149, %v2150, %v2142
    %v2152 = vsel %vm2145, %v2148, %v2151
    %v2153 = vsel %vm2143, nan, %v2152
    %v2154 = vand.u32 2147483647, %v898
    %vm2155 = vcmp.le.f32.partialorder %v2154, 0.7853982
    %vm2156 = vcmp.lt.s32.totalorder %v898, 0
    %v2157 = vand.u32 %v898, 2139095040
    %v2158 = vshrl.u32 %v2157, 23
    %v2159 = vsub.s32 %v2158, 127
    %v2160 = vand.u32 2147483647, %v898
    %v2161 = vand.u32 %v2160, 8388607
    %v2162 = vor.u32 %v2161, 8388608
    %v2163 = vsub.s32 0, %v2162
    %v2164 = vadd.s32 %v2159, 1
    %vm2165 = vcmp.gt.s32.totalorder %v2164, 0
    %v2166 = vsel %vm2165, %v2164, 0
    %v2167 = vshrl.u32 %v2166, 5
    %v2168 = vand.u32 %v2166, 31
    %v2169 = vsub.s32 32, %v2168
    %v2170 = vshrl.u32 683565275, %v2169
    %v2171 = vshll.u32 683565275, %v2168
    %v2172 = vshrl.u32 2475754826, %v2169
    %v2173 = vor.u32 %v2171, %v2172
    %v2174 = vshll.u32 2475754826, %v2168
    %v2175 = vshrl.u32 2131351028, %v2169
    %v2176 = vor.u32 %v2174, %v2175
    %v2177 = vshll.u32 2131351028, %v2168
    %v2178 = vshrl.u32 2102212464, %v2169
    %v2179 = vor.u32 %v2177, %v2178
    %v2180 = vshll.u32 2102212464, %v2168
    %v2181 = vshrl.u32 920167782, %v2169
    %v2182 = vor.u32 %v2180, %v2181
    %v2183 = vshll.u32 920167782, %v2168
    %v2184 = vshrl.u32 1326507024, %v2169
    %v2185 = vor.u32 %v2183, %v2184
    %vm2186 = vcmp.lt.s32.totalorder %v2167, 1
    %vm2187 = vcmp.lt.s32.totalorder %v2167, 2
    %vm2188 = vcmp.lt.s32.totalorder %v2167, 3
    %vm2189 = vcmp.lt.s32.totalorder %v2167, 4
    %v2190 = vsel %vm2186, %v2170, %v2173
    %v2191 = vsel %vm2189, %v2179, 2102212464
    %v2192 = vsel %vm2188, %v2176, %v2191
    %v2193 = vsel %vm2187, %v2190, %v2192
    %v2194 = vsel %vm2186, %v2173, %v2176
    %v2195 = vsel %vm2189, %v2182, 920167782
    %v2196 = vsel %vm2188, %v2179, %v2195
    %v2197 = vsel %vm2187, %v2194, %v2196
    %v2198 = vsel %vm2186, %v2176, %v2179
    %v2199 = vsel %vm2189, %v2185, 1326507024
    %v2200 = vsel %vm2188, %v2182, %v2199
    %v2201 = vsel %vm2187, %v2198, %v2200
    %v2202 = vshll.u32 %v2162, 8
    %v2203 = vmul.u32.u64.compose %v2202, %v2201
    %v2204 = vextract.low.u32 %v2203
    %v2205 = vextract.high.u32 %v2203
    %v2206 = vmul.u32.u64.compose %v2202, %v2197
    %v2207 = vextract.low.u32 %v2206
    %v2208 = vextract.high.u32 %v2206
    %v2209 = vmul.u32 %v2202, %v2193
    %v2210 = vadd.s32 %v2205, %v2207
    %vm2211 = vc.u32 %v2205, %v2207
    %v2212 = vadd.s32 %v2208, 1
    %v2213 = vsel %vm2211, %v2212, %v2208
    %v2214 = vadd.s32 %v2209, %v2213
    %v2215 = vadd.s32 %v2214, 536870912
    %v2216 = vshrl.u32 %v2215, 30
    %v2217 = vshll.u32 %v2216, 30
    %v2218 = vsub.s32 %v2214, %v2217
    %vm2219 = vcmp.lt.s32.totalorder %v2218, 0
    %v2220 = vsub.s32 0, %v2218
    %v2221 = vsel %vm2219, %v2220, %v2218
    %v2222 = vclz %v2221
    %v2223 = vsub.s32 %v2222, 2
    %vm2224 = vcmp.gt.s32.totalorder 0, %v2223
    %v2225 = vsel %vm2224, 0, %v2223
    %v2226 = vsub.s32 32, %v2225
    %v2227 = vshll.u32 %v2218, %v2225
    %v2228 = vshrl.u32 %v2210, %v2226
    %v2229 = vor.u32 %v2227, %v2228
    %v2230 = vsub.s32 4294967266, %v2225
    %v2231 = vadd.s32 %v2230, 127
    %v2232 = vshll.u32 %v2231, 23
    %v2233 = vor.u32 4788187, %v2232
    %v2234 = vand.u32 2147483647, %v2233
    %v2236 = vcvt.s32.f32 %v2229
    %v2237 = vmul.f32 %v2236, %v2234
    %v2238 = vxor.u32 %v2237, 2147483648
    %v2239 = vsel %vm2156, %v2238, %v2237
    %v2240 = vsub.s32 4, %v2216
    %v2241 = vsel %vm2156, %v2240, %v2216
    %v2242 = vsel %vm2155, %v898, %v2239
    %v2243 = vsel %vm2155, 0, %v2241
    %v2244 = vcosq.f32.pop %v2242
    %v2245 = vsinq.f32.pop %v2242
    %vm2246 = vweird.f32 %v898
    %v2247 = vand.u32 %v2243, 3
    %vm2248 = vcmp.lt.s32.totalorder %v2247, 2
    %vm2249 = vcmp.eq.s32.totalorder %v2247, 0
    %v2250 = vxor.u32 %v2245, 2147483648
    %v2251 = vsel %vm2249, %v2244, %v2250
    %vm2252 = vcmp.eq.s32.totalorder %v2247, 2
    %v2253 = vxor.u32 %v2244, 2147483648
    %v2254 = vsel %vm2252, %v2253, %v2245
    %v2255 = vsel %vm2248, %v2251, %v2254
    %v2256 = vsel %vm2246, nan, %v2255
    %v2257 = vand.u32 2147483647, %v899
    %vm2258 = vcmp.le.f32.partialorder %v2257, 0.7853982
    %vm2259 = vcmp.lt.s32.totalorder %v899, 0
    %v2260 = vand.u32 %v899, 2139095040
    %v2261 = vshrl.u32 %v2260, 23
    %v2262 = vsub.s32 %v2261, 127
    %v2263 = vand.u32 2147483647, %v899
    %v2264 = vand.u32 %v2263, 8388607
    %v2265 = vor.u32 %v2264, 8388608
    %v2266 = vsub.s32 0, %v2265
    %v2267 = vadd.s32 %v2262, 1
    %vm2268 = vcmp.gt.s32.totalorder %v2267, 0
    %v2269 = vsel %vm2268, %v2267, 0
    %v2270 = vshrl.u32 %v2269, 5
    %v2271 = vand.u32 %v2269, 31
    %v2272 = vsub.s32 32, %v2271
    %v2273 = vshrl.u32 683565275, %v2272
    %v2274 = vshll.u32 683565275, %v2271
    %v2275 = vshrl.u32 2475754826, %v2272
    %v2276 = vor.u32 %v2274, %v2275
    %v2277 = vshll.u32 2475754826, %v2271
    %v2278 = vshrl.u32 2131351028, %v2272
    %v2279 = vor.u32 %v2277, %v2278
    %v2280 = vshll.u32 2131351028, %v2271
    %v2281 = vshrl.u32 2102212464, %v2272
    %v2282 = vor.u32 %v2280, %v2281
    %v2283 = vshll.u32 2102212464, %v2271
    %v2284 = vshrl.u32 920167782, %v2272
    %v2285 = vor.u32 %v2283, %v2284
    %v2286 = vshll.u32 920167782, %v2271
    %v2287 = vshrl.u32 1326507024, %v2272
    %v2288 = vor.u32 %v2286, %v2287
    %vm2289 = vcmp.lt.s32.totalorder %v2270, 1
    %vm2290 = vcmp.lt.s32.totalorder %v2270, 2
    %vm2291 = vcmp.lt.s32.totalorder %v2270, 3
    %vm2292 = vcmp.lt.s32.totalorder %v2270, 4
    %v2293 = vsel %vm2289, %v2273, %v2276
    %v2294 = vsel %vm2292, %v2282, 2102212464
    %v2295 = vsel %vm2291, %v2279, %v2294
    %v2296 = vsel %vm2290, %v2293, %v2295
    %v2297 = vsel %vm2289, %v2276, %v2279
    %v2298 = vsel %vm2292, %v2285, 920167782
    %v2299 = vsel %vm2291, %v2282, %v2298
    %v2300 = vsel %vm2290, %v2297, %v2299
    %v2301 = vsel %vm2289, %v2279, %v2282
    %v2302 = vsel %vm2292, %v2288, 1326507024
    %v2303 = vsel %vm2291, %v2285, %v2302
    %v2304 = vsel %vm2290, %v2301, %v2303
    %v2305 = vshll.u32 %v2265, 8
    %v2306 = vmul.u32.u64.compose %v2305, %v2304
    %v2307 = vextract.low.u32 %v2306
    %v2308 = vextract.high.u32 %v2306
    %v2309 = vmul.u32.u64.compose %v2305, %v2300
    %v2310 = vextract.low.u32 %v2309
    %v2311 = vextract.high.u32 %v2309
    %v2312 = vmul.u32 %v2305, %v2296
    %v2313 = vadd.s32 %v2308, %v2310
    %vm2314 = vc.u32 %v2308, %v2310
    %v2315 = vadd.s32 %v2311, 1
    %v2316 = vsel %vm2314, %v2315, %v2311
    %v2317 = vadd.s32 %v2312, %v2316
    %v2318 = vadd.s32 %v2317, 536870912
    %v2319 = vshrl.u32 %v2318, 30
    %v2320 = vshll.u32 %v2319, 30
    %v2321 = vsub.s32 %v2317, %v2320
    %vm2322 = vcmp.lt.s32.totalorder %v2321, 0
    %v2323 = vsub.s32 0, %v2321
    %v2324 = vsel %vm2322, %v2323, %v2321
    %v2325 = vclz %v2324
    %v2326 = vsub.s32 %v2325, 2
    %vm2327 = vcmp.gt.s32.totalorder 0, %v2326
    %v2328 = vsel %vm2327, 0, %v2326
    %v2329 = vsub.s32 32, %v2328
    %v2330 = vshll.u32 %v2321, %v2328
    %v2331 = vshrl.u32 %v2313, %v2329
    %v2332 = vor.u32 %v2330, %v2331
    %v2333 = vsub.s32 4294967266, %v2328
    %v2334 = vadd.s32 %v2333, 127
    %v2335 = vshll.u32 %v2334, 23
    %v2336 = vor.u32 4788187, %v2335
    %v2337 = vand.u32 2147483647, %v2336
    %v2339 = vcvt.s32.f32 %v2332
    %v2340 = vmul.f32 %v2339, %v2337
    %v2341 = vxor.u32 %v2340, 2147483648
    %v2342 = vsel %vm2259, %v2341, %v2340
    %v2343 = vsub.s32 4, %v2319
    %v2344 = vsel %vm2259, %v2343, %v2319
    %v2345 = vsel %vm2258, %v899, %v2342
    %v2346 = vsel %vm2258, 0, %v2344
    %v2347 = vcosq.f32.pop %v2345
    %v2348 = vsinq.f32.pop %v2345
    %vm2349 = vweird.f32 %v899
    %v2350 = vand.u32 %v2346, 3
    %vm2351 = vcmp.lt.s32.totalorder %v2350, 2
    %vm2352 = vcmp.eq.s32.totalorder %v2350, 0
    %v2353 = vxor.u32 %v2348, 2147483648
    %v2354 = vsel %vm2352, %v2347, %v2353
    %vm2355 = vcmp.eq.s32.totalorder %v2350, 2
    %v2356 = vxor.u32 %v2347, 2147483648
    %v2357 = vsel %vm2355, %v2356, %v2348
    %v2358 = vsel %vm2351, %v2354, %v2357
    %v2359 = vsel %vm2349, nan, %v2358
    %v2360 = vand.u32 2147483647, %v900
    %vm2361 = vcmp.le.f32.partialorder %v2360, 0.7853982
    %vm2362 = vcmp.lt.s32.totalorder %v900, 0
    %v2363 = vand.u32 %v900, 2139095040
    %v2364 = vshrl.u32 %v2363, 23
    %v2365 = vsub.s32 %v2364, 127
    %v2366 = vand.u32 2147483647, %v900
    %v2367 = vand.u32 %v2366, 8388607
    %v2368 = vor.u32 %v2367, 8388608
    %v2369 = vsub.s32 0, %v2368
    %v2370 = vadd.s32 %v2365, 1
    %vm2371 = vcmp.gt.s32.totalorder %v2370, 0
    %v2372 = vsel %vm2371, %v2370, 0
    %v2373 = vshrl.u32 %v2372, 5
    %v2374 = vand.u32 %v2372, 31
    %v2375 = vsub.s32 32, %v2374
    %v2376 = vshrl.u32 683565275, %v2375
    %v2377 = vshll.u32 683565275, %v2374
    %v2378 = vshrl.u32 2475754826, %v2375
    %v2379 = vor.u32 %v2377, %v2378
    %v2380 = vshll.u32 2475754826, %v2374
    %v2381 = vshrl.u32 2131351028, %v2375
    %v2382 = vor.u32 %v2380, %v2381
    %v2383 = vshll.u32 2131351028, %v2374
    %v2384 = vshrl.u32 2102212464, %v2375
    %v2385 = vor.u32 %v2383, %v2384
    %v2386 = vshll.u32 2102212464, %v2374
    %v2387 = vshrl.u32 920167782, %v2375
    %v2388 = vor.u32 %v2386, %v2387
    %v2389 = vshll.u32 920167782, %v2374
    %v2390 = vshrl.u32 1326507024, %v2375
    %v2391 = vor.u32 %v2389, %v2390
    %vm2392 = vcmp.lt.s32.totalorder %v2373, 1
    %vm2393 = vcmp.lt.s32.totalorder %v2373, 2
    %vm2394 = vcmp.lt.s32.totalorder %v2373, 3
    %vm2395 = vcmp.lt.s32.totalorder %v2373, 4
    %v2396 = vsel %vm2392, %v2376, %v2379
    %v2397 = vsel %vm2395, %v2385, 2102212464
    %v2398 = vsel %vm2394, %v2382, %v2397
    %v2399 = vsel %vm2393, %v2396, %v2398
    %v2400 = vsel %vm2392, %v2379, %v2382
    %v2401 = vsel %vm2395, %v2388, 920167782
    %v2402 = vsel %vm2394, %v2385, %v2401
    %v2403 = vsel %vm2393, %v2400, %v2402
    %v2404 = vsel %vm2392, %v2382, %v2385
    %v2405 = vsel %vm2395, %v2391, 1326507024
    %v2406 = vsel %vm2394, %v2388, %v2405
    %v2407 = vsel %vm2393, %v2404, %v2406
    %v2408 = vshll.u32 %v2368, 8
    %v2409 = vmul.u32.u64.compose %v2408, %v2407
    %v2410 = vextract.low.u32 %v2409
    %v2411 = vextract.high.u32 %v2409
    %v2412 = vmul.u32.u64.compose %v2408, %v2403
    %v2413 = vextract.low.u32 %v2412
    %v2414 = vextract.high.u32 %v2412
    %v2415 = vmul.u32 %v2408, %v2399
    %v2416 = vadd.s32 %v2411, %v2413
    %vm2417 = vc.u32 %v2411, %v2413
    %v2418 = vadd.s32 %v2414, 1
    %v2419 = vsel %vm2417, %v2418, %v2414
    %v2420 = vadd.s32 %v2415, %v2419
    %v2421 = vadd.s32 %v2420, 536870912
    %v2422 = vshrl.u32 %v2421, 30
    %v2423 = vshll.u32 %v2422, 30
    %v2424 = vsub.s32 %v2420, %v2423
    %vm2425 = vcmp.lt.s32.totalorder %v2424, 0
    %v2426 = vsub.s32 0, %v2424
    %v2427 = vsel %vm2425, %v2426, %v2424
    %v2428 = vclz %v2427
    %v2429 = vsub.s32 %v2428, 2
    %vm2430 = vcmp.gt.s32.totalorder 0, %v2429
    %v2431 = vsel %vm2430, 0, %v2429
    %v2432 = vsub.s32 32, %v2431
    %v2433 = vshll.u32 %v2424, %v2431
    %v2434 = vshrl.u32 %v2416, %v2432
    %v2435 = vor.u32 %v2433, %v2434
    %v2436 = vsub.s32 4294967266, %v2431
    %v2437 = vadd.s32 %v2436, 127
    %v2438 = vshll.u32 %v2437, 23
    %v2439 = vor.u32 4788187, %v2438
    %v2440 = vand.u32 2147483647, %v2439
    %v2442 = vcvt.s32.f32 %v2435
    %v2443 = vmul.f32 %v2442, %v2440
    %v2444 = vxor.u32 %v2443, 2147483648
    %v2445 = vsel %vm2362, %v2444, %v2443
    %v2446 = vsub.s32 4, %v2422
    %v2447 = vsel %vm2362, %v2446, %v2422
    %v2448 = vsel %vm2361, %v900, %v2445
    %v2449 = vsel %vm2361, 0, %v2447
    %v2450 = vcosq.f32.pop %v2448
    %v2451 = vsinq.f32.pop %v2448
    %vm2452 = vweird.f32 %v900
    %v2453 = vand.u32 %v2449, 3
    %vm2454 = vcmp.lt.s32.totalorder %v2453, 2
    %vm2455 = vcmp.eq.s32.totalorder %v2453, 0
    %v2456 = vxor.u32 %v2451, 2147483648
    %v2457 = vsel %vm2455, %v2450, %v2456
    %vm2458 = vcmp.eq.s32.totalorder %v2453, 2
    %v2459 = vxor.u32 %v2450, 2147483648
    %v2460 = vsel %vm2458, %v2459, %v2451
    %v2461 = vsel %vm2454, %v2457, %v2460
    %v2462 = vsel %vm2452, nan, %v2461
    %v2463 = vand.u32 2147483647, %v901
    %vm2464 = vcmp.le.f32.partialorder %v2463, 0.7853982
    %vm2465 = vcmp.lt.s32.totalorder %v901, 0
    %v2466 = vand.u32 %v901, 2139095040
    %v2467 = vshrl.u32 %v2466, 23
    %v2468 = vsub.s32 %v2467, 127
    %v2469 = vand.u32 2147483647, %v901
    %v2470 = vand.u32 %v2469, 8388607
    %v2471 = vor.u32 %v2470, 8388608
    %v2472 = vsub.s32 0, %v2471
    %v2473 = vadd.s32 %v2468, 1
    %vm2474 = vcmp.gt.s32.totalorder %v2473, 0
    %v2475 = vsel %vm2474, %v2473, 0
    %v2476 = vshrl.u32 %v2475, 5
    %v2477 = vand.u32 %v2475, 31
    %v2478 = vsub.s32 32, %v2477
    %v2479 = vshrl.u32 683565275, %v2478
    %v2480 = vshll.u32 683565275, %v2477
    %v2481 = vshrl.u32 2475754826, %v2478
    %v2482 = vor.u32 %v2480, %v2481
    %v2483 = vshll.u32 2475754826, %v2477
    %v2484 = vshrl.u32 2131351028, %v2478
    %v2485 = vor.u32 %v2483, %v2484
    %v2486 = vshll.u32 2131351028, %v2477
    %v2487 = vshrl.u32 2102212464, %v2478
    %v2488 = vor.u32 %v2486, %v2487
    %v2489 = vshll.u32 2102212464, %v2477
    %v2490 = vshrl.u32 920167782, %v2478
    %v2491 = vor.u32 %v2489, %v2490
    %v2492 = vshll.u32 920167782, %v2477
    %v2493 = vshrl.u32 1326507024, %v2478
    %v2494 = vor.u32 %v2492, %v2493
    %vm2495 = vcmp.lt.s32.totalorder %v2476, 1
    %vm2496 = vcmp.lt.s32.totalorder %v2476, 2
    %vm2497 = vcmp.lt.s32.totalorder %v2476, 3
    %vm2498 = vcmp.lt.s32.totalorder %v2476, 4
    %v2499 = vsel %vm2495, %v2479, %v2482
    %v2500 = vsel %vm2498, %v2488, 2102212464
    %v2501 = vsel %vm2497, %v2485, %v2500
    %v2502 = vsel %vm2496, %v2499, %v2501
    %v2503 = vsel %vm2495, %v2482, %v2485
    %v2504 = vsel %vm2498, %v2491, 920167782
    %v2505 = vsel %vm2497, %v2488, %v2504
    %v2506 = vsel %vm2496, %v2503, %v2505
    %v2507 = vsel %vm2495, %v2485, %v2488
    %v2508 = vsel %vm2498, %v2494, 1326507024
    %v2509 = vsel %vm2497, %v2491, %v2508
    %v2510 = vsel %vm2496, %v2507, %v2509
    %v2511 = vshll.u32 %v2471, 8
    %v2512 = vmul.u32.u64.compose %v2511, %v2510
    %v2513 = vextract.low.u32 %v2512
    %v2514 = vextract.high.u32 %v2512
    %v2515 = vmul.u32.u64.compose %v2511, %v2506
    %v2516 = vextract.low.u32 %v2515
    %v2517 = vextract.high.u32 %v2515
    %v2518 = vmul.u32 %v2511, %v2502
    %v2519 = vadd.s32 %v2514, %v2516
    %vm2520 = vc.u32 %v2514, %v2516
    %v2521 = vadd.s32 %v2517, 1
    %v2522 = vsel %vm2520, %v2521, %v2517
    %v2523 = vadd.s32 %v2518, %v2522
    %v2524 = vadd.s32 %v2523, 536870912
    %v2525 = vshrl.u32 %v2524, 30
    %v2526 = vshll.u32 %v2525, 30
    %v2527 = vsub.s32 %v2523, %v2526
    %vm2528 = vcmp.lt.s32.totalorder %v2527, 0
    %v2529 = vsub.s32 0, %v2527
    %v2530 = vsel %vm2528, %v2529, %v2527
    %v2531 = vclz %v2530
    %v2532 = vsub.s32 %v2531, 2
    %vm2533 = vcmp.gt.s32.totalorder 0, %v2532
    %v2534 = vsel %vm2533, 0, %v2532
    %v2535 = vsub.s32 32, %v2534
    %v2536 = vshll.u32 %v2527, %v2534
    %v2537 = vshrl.u32 %v2519, %v2535
    %v2538 = vor.u32 %v2536, %v2537
    %v2539 = vsub.s32 4294967266, %v2534
    %v2540 = vadd.s32 %v2539, 127
    %v2541 = vshll.u32 %v2540, 23
    %v2542 = vor.u32 4788187, %v2541
    %v2543 = vand.u32 2147483647, %v2542
    %v2545 = vcvt.s32.f32 %v2538
    %v2546 = vmul.f32 %v2545, %v2543
    %v2547 = vxor.u32 %v2546, 2147483648
    %v2548 = vsel %vm2465, %v2547, %v2546
    %v2549 = vsub.s32 4, %v2525
    %v2550 = vsel %vm2465, %v2549, %v2525
    %v2551 = vsel %vm2464, %v901, %v2548
    %v2552 = vsel %vm2464, 0, %v2550
    %v2553 = vcosq.f32.pop %v2551
    %v2554 = vsinq.f32.pop %v2551
    %vm2555 = vweird.f32 %v901
    %v2556 = vand.u32 %v2552, 3
    %vm2557 = vcmp.lt.s32.totalorder %v2556, 2
    %vm2558 = vcmp.eq.s32.totalorder %v2556, 0
    %v2559 = vxor.u32 %v2554, 2147483648
    %v2560 = vsel %vm2558, %v2553, %v2559
    %vm2561 = vcmp.eq.s32.totalorder %v2556, 2
    %v2562 = vxor.u32 %v2553, 2147483648
    %v2563 = vsel %vm2561, %v2562, %v2554
    %v2564 = vsel %vm2557, %v2560, %v2563
    %v2565 = vsel %vm2555, nan, %v2564
    %v2566 = vand.u32 2147483647, %v902
    %vm2567 = vcmp.le.f32.partialorder %v2566, 0.7853982
    %vm2568 = vcmp.lt.s32.totalorder %v902, 0
    %v2569 = vand.u32 %v902, 2139095040
    %v2570 = vshrl.u32 %v2569, 23
    %v2571 = vsub.s32 %v2570, 127
    %v2572 = vand.u32 2147483647, %v902
    %v2573 = vand.u32 %v2572, 8388607
    %v2574 = vor.u32 %v2573, 8388608
    %v2575 = vsub.s32 0, %v2574
    %v2576 = vadd.s32 %v2571, 1
    %vm2577 = vcmp.gt.s32.totalorder %v2576, 0
    %v2578 = vsel %vm2577, %v2576, 0
    %v2579 = vshrl.u32 %v2578, 5
    %v2580 = vand.u32 %v2578, 31
    %v2581 = vsub.s32 32, %v2580
    %v2582 = vshrl.u32 683565275, %v2581
    %v2583 = vshll.u32 683565275, %v2580
    %v2584 = vshrl.u32 2475754826, %v2581
    %v2585 = vor.u32 %v2583, %v2584
    %v2586 = vshll.u32 2475754826, %v2580
    %v2587 = vshrl.u32 2131351028, %v2581
    %v2588 = vor.u32 %v2586, %v2587
    %v2589 = vshll.u32 2131351028, %v2580
    %v2590 = vshrl.u32 2102212464, %v2581
    %v2591 = vor.u32 %v2589, %v2590
    %v2592 = vshll.u32 2102212464, %v2580
    %v2593 = vshrl.u32 920167782, %v2581
    %v2594 = vor.u32 %v2592, %v2593
    %v2595 = vshll.u32 920167782, %v2580
    %v2596 = vshrl.u32 1326507024, %v2581
    %v2597 = vor.u32 %v2595, %v2596
    %vm2598 = vcmp.lt.s32.totalorder %v2579, 1
    %vm2599 = vcmp.lt.s32.totalorder %v2579, 2
    %vm2600 = vcmp.lt.s32.totalorder %v2579, 3
    %vm2601 = vcmp.lt.s32.totalorder %v2579, 4
    %v2602 = vsel %vm2598, %v2582, %v2585
    %v2603 = vsel %vm2601, %v2591, 2102212464
    %v2604 = vsel %vm2600, %v2588, %v2603
    %v2605 = vsel %vm2599, %v2602, %v2604
    %v2606 = vsel %vm2598, %v2585, %v2588
    %v2607 = vsel %vm2601, %v2594, 920167782
    %v2608 = vsel %vm2600, %v2591, %v2607
    %v2609 = vsel %vm2599, %v2606, %v2608
    %v2610 = vsel %vm2598, %v2588, %v2591
    %v2611 = vsel %vm2601, %v2597, 1326507024
    %v2612 = vsel %vm2600, %v2594, %v2611
    %v2613 = vsel %vm2599, %v2610, %v2612
    %v2614 = vshll.u32 %v2574, 8
    %v2615 = vmul.u32.u64.compose %v2614, %v2613
    %v2616 = vextract.low.u32 %v2615
    %v2617 = vextract.high.u32 %v2615
    %v2618 = vmul.u32.u64.compose %v2614, %v2609
    %v2619 = vextract.low.u32 %v2618
    %v2620 = vextract.high.u32 %v2618
    %v2621 = vmul.u32 %v2614, %v2605
    %v2622 = vadd.s32 %v2617, %v2619
    %vm2623 = vc.u32 %v2617, %v2619
    %v2624 = vadd.s32 %v2620, 1
    %v2625 = vsel %vm2623, %v2624, %v2620
    %v2626 = vadd.s32 %v2621, %v2625
    %v2627 = vadd.s32 %v2626, 536870912
    %v2628 = vshrl.u32 %v2627, 30
    %v2629 = vshll.u32 %v2628, 30
    %v2630 = vsub.s32 %v2626, %v2629
    %vm2631 = vcmp.lt.s32.totalorder %v2630, 0
    %v2632 = vsub.s32 0, %v2630
    %v2633 = vsel %vm2631, %v2632, %v2630
    %v2634 = vclz %v2633
    %v2635 = vsub.s32 %v2634, 2
    %vm2636 = vcmp.gt.s32.totalorder 0, %v2635
    %v2637 = vsel %vm2636, 0, %v2635
    %v2638 = vsub.s32 32, %v2637
    %v2639 = vshll.u32 %v2630, %v2637
    %v2640 = vshrl.u32 %v2622, %v2638
    %v2641 = vor.u32 %v2639, %v2640
    %v2642 = vsub.s32 4294967266, %v2637
    %v2643 = vadd.s32 %v2642, 127
    %v2644 = vshll.u32 %v2643, 23
    %v2645 = vor.u32 4788187, %v2644
    %v2646 = vand.u32 2147483647, %v2645
    %v2648 = vcvt.s32.f32 %v2641
    %v2649 = vmul.f32 %v2648, %v2646
    %v2650 = vxor.u32 %v2649, 2147483648
    %v2651 = vsel %vm2568, %v2650, %v2649
    %v2652 = vsub.s32 4, %v2628
    %v2653 = vsel %vm2568, %v2652, %v2628
    %v2654 = vsel %vm2567, %v902, %v2651
    %v2655 = vsel %vm2567, 0, %v2653
    %v2656 = vcosq.f32.pop %v2654
    %v2657 = vsinq.f32.pop %v2654
    %vm2658 = vweird.f32 %v902
    %v2659 = vand.u32 %v2655, 3
    %vm2660 = vcmp.lt.s32.totalorder %v2659, 2
    %vm2661 = vcmp.eq.s32.totalorder %v2659, 0
    %v2662 = vxor.u32 %v2657, 2147483648
    %v2663 = vsel %vm2661, %v2656, %v2662
    %vm2664 = vcmp.eq.s32.totalorder %v2659, 2
    %v2665 = vxor.u32 %v2656, 2147483648
    %v2666 = vsel %vm2664, %v2665, %v2657
    %v2667 = vsel %vm2660, %v2663, %v2666
    %v2668 = vsel %vm2658, nan, %v2667
    %v2669 = vand.u32 2147483647, %v903
    %vm2670 = vcmp.le.f32.partialorder %v2669, 0.7853982
    %vm2671 = vcmp.lt.s32.totalorder %v903, 0
    %v2672 = vand.u32 %v903, 2139095040
    %v2673 = vshrl.u32 %v2672, 23
    %v2674 = vsub.s32 %v2673, 127
    %v2675 = vand.u32 2147483647, %v903
    %v2676 = vand.u32 %v2675, 8388607
    %v2677 = vor.u32 %v2676, 8388608
    %v2678 = vsub.s32 0, %v2677
    %v2679 = vadd.s32 %v2674, 1
    %vm2680 = vcmp.gt.s32.totalorder %v2679, 0
    %v2681 = vsel %vm2680, %v2679, 0
    %v2682 = vshrl.u32 %v2681, 5
    %v2683 = vand.u32 %v2681, 31
    %v2684 = vsub.s32 32, %v2683
    %v2685 = vshrl.u32 683565275, %v2684
    %v2686 = vshll.u32 683565275, %v2683
    %v2687 = vshrl.u32 2475754826, %v2684
    %v2688 = vor.u32 %v2686, %v2687
    %v2689 = vshll.u32 2475754826, %v2683
    %v2690 = vshrl.u32 2131351028, %v2684
    %v2691 = vor.u32 %v2689, %v2690
    %v2692 = vshll.u32 2131351028, %v2683
    %v2693 = vshrl.u32 2102212464, %v2684
    %v2694 = vor.u32 %v2692, %v2693
    %v2695 = vshll.u32 2102212464, %v2683
    %v2696 = vshrl.u32 920167782, %v2684
    %v2697 = vor.u32 %v2695, %v2696
    %v2698 = vshll.u32 920167782, %v2683
    %v2699 = vshrl.u32 1326507024, %v2684
    %v2700 = vor.u32 %v2698, %v2699
    %vm2701 = vcmp.lt.s32.totalorder %v2682, 1
    %vm2702 = vcmp.lt.s32.totalorder %v2682, 2
    %vm2703 = vcmp.lt.s32.totalorder %v2682, 3
    %vm2704 = vcmp.lt.s32.totalorder %v2682, 4
    %v2705 = vsel %vm2701, %v2685, %v2688
    %v2706 = vsel %vm2704, %v2694, 2102212464
    %v2707 = vsel %vm2703, %v2691, %v2706
    %v2708 = vsel %vm2702, %v2705, %v2707
    %v2709 = vsel %vm2701, %v2688, %v2691
    %v2710 = vsel %vm2704, %v2697, 920167782
    %v2711 = vsel %vm2703, %v2694, %v2710
    %v2712 = vsel %vm2702, %v2709, %v2711
    %v2713 = vsel %vm2701, %v2691, %v2694
    %v2714 = vsel %vm2704, %v2700, 1326507024
    %v2715 = vsel %vm2703, %v2697, %v2714
    %v2716 = vsel %vm2702, %v2713, %v2715
    %v2717 = vshll.u32 %v2677, 8
    %v2718 = vmul.u32.u64.compose %v2717, %v2716
    %v2719 = vextract.low.u32 %v2718
    %v2720 = vextract.high.u32 %v2718
    %v2721 = vmul.u32.u64.compose %v2717, %v2712
    %v2722 = vextract.low.u32 %v2721
    %v2723 = vextract.high.u32 %v2721
    %v2724 = vmul.u32 %v2717, %v2708
    %v2725 = vadd.s32 %v2720, %v2722
    %vm2726 = vc.u32 %v2720, %v2722
    %v2727 = vadd.s32 %v2723, 1
    %v2728 = vsel %vm2726, %v2727, %v2723
    %v2729 = vadd.s32 %v2724, %v2728
    %v2730 = vadd.s32 %v2729, 536870912
    %v2731 = vshrl.u32 %v2730, 30
    %v2732 = vshll.u32 %v2731, 30
    %v2733 = vsub.s32 %v2729, %v2732
    %vm2734 = vcmp.lt.s32.totalorder %v2733, 0
    %v2735 = vsub.s32 0, %v2733
    %v2736 = vsel %vm2734, %v2735, %v2733
    %v2737 = vclz %v2736
    %v2738 = vsub.s32 %v2737, 2
    %vm2739 = vcmp.gt.s32.totalorder 0, %v2738
    %v2740 = vsel %vm2739, 0, %v2738
    %v2741 = vsub.s32 32, %v2740
    %v2742 = vshll.u32 %v2733, %v2740
    %v2743 = vshrl.u32 %v2725, %v2741
    %v2744 = vor.u32 %v2742, %v2743
    %v2745 = vsub.s32 4294967266, %v2740
    %v2746 = vadd.s32 %v2745, 127
    %v2747 = vshll.u32 %v2746, 23
    %v2748 = vor.u32 4788187, %v2747
    %v2749 = vand.u32 2147483647, %v2748
    %v2751 = vcvt.s32.f32 %v2744
    %v2752 = vmul.f32 %v2751, %v2749
    %v2753 = vxor.u32 %v2752, 2147483648
    %v2754 = vsel %vm2671, %v2753, %v2752
    %v2755 = vsub.s32 4, %v2731
    %v2756 = vsel %vm2671, %v2755, %v2731
    %v2757 = vsel %vm2670, %v903, %v2754
    %v2758 = vsel %vm2670, 0, %v2756
    %v2759 = vcosq.f32.pop %v2757
    %v2760 = vsinq.f32.pop %v2757
    %vm2761 = vweird.f32 %v903
    %v2762 = vand.u32 %v2758, 3
    %vm2763 = vcmp.lt.s32.totalorder %v2762, 2
    %vm2764 = vcmp.eq.s32.totalorder %v2762, 0
    %v2765 = vxor.u32 %v2760, 2147483648
    %v2766 = vsel %vm2764, %v2759, %v2765
    %vm2767 = vcmp.eq.s32.totalorder %v2762, 2
    %v2768 = vxor.u32 %v2759, 2147483648
    %v2769 = vsel %vm2767, %v2768, %v2760
    %v2770 = vsel %vm2763, %v2766, %v2769
    %v2771 = vsel %vm2761, nan, %v2770
    %v2772 = vand.u32 2147483647, %v904
    %vm2773 = vcmp.le.f32.partialorder %v2772, 0.7853982
    %vm2774 = vcmp.lt.s32.totalorder %v904, 0
    %v2775 = vand.u32 %v904, 2139095040
    %v2776 = vshrl.u32 %v2775, 23
    %v2777 = vsub.s32 %v2776, 127
    %v2778 = vand.u32 2147483647, %v904
    %v2779 = vand.u32 %v2778, 8388607
    %v2780 = vor.u32 %v2779, 8388608
    %v2781 = vsub.s32 0, %v2780
    %v2782 = vadd.s32 %v2777, 1
    %vm2783 = vcmp.gt.s32.totalorder %v2782, 0
    %v2784 = vsel %vm2783, %v2782, 0
    %v2785 = vshrl.u32 %v2784, 5
    %v2786 = vand.u32 %v2784, 31
    %v2787 = vsub.s32 32, %v2786
    %v2788 = vshrl.u32 683565275, %v2787
    %v2789 = vshll.u32 683565275, %v2786
    %v2790 = vshrl.u32 2475754826, %v2787
    %v2791 = vor.u32 %v2789, %v2790
    %v2792 = vshll.u32 2475754826, %v2786
    %v2793 = vshrl.u32 2131351028, %v2787
    %v2794 = vor.u32 %v2792, %v2793
    %v2795 = vshll.u32 2131351028, %v2786
    %v2796 = vshrl.u32 2102212464, %v2787
    %v2797 = vor.u32 %v2795, %v2796
    %v2798 = vshll.u32 2102212464, %v2786
    %v2799 = vshrl.u32 920167782, %v2787
    %v2800 = vor.u32 %v2798, %v2799
    %v2801 = vshll.u32 920167782, %v2786
    %v2802 = vshrl.u32 1326507024, %v2787
    %v2803 = vor.u32 %v2801, %v2802
    %vm2804 = vcmp.lt.s32.totalorder %v2785, 1
    %vm2805 = vcmp.lt.s32.totalorder %v2785, 2
    %vm2806 = vcmp.lt.s32.totalorder %v2785, 3
    %vm2807 = vcmp.lt.s32.totalorder %v2785, 4
    %v2808 = vsel %vm2804, %v2788, %v2791
    %v2809 = vsel %vm2807, %v2797, 2102212464
    %v2810 = vsel %vm2806, %v2794, %v2809
    %v2811 = vsel %vm2805, %v2808, %v2810
    %v2812 = vsel %vm2804, %v2791, %v2794
    %v2813 = vsel %vm2807, %v2800, 920167782
    %v2814 = vsel %vm2806, %v2797, %v2813
    %v2815 = vsel %vm2805, %v2812, %v2814
    %v2816 = vsel %vm2804, %v2794, %v2797
    %v2817 = vsel %vm2807, %v2803, 1326507024
    %v2818 = vsel %vm2806, %v2800, %v2817
    %v2819 = vsel %vm2805, %v2816, %v2818
    %v2820 = vshll.u32 %v2780, 8
    %v2821 = vmul.u32.u64.compose %v2820, %v2819
    %v2822 = vextract.low.u32 %v2821
    %v2823 = vextract.high.u32 %v2821
    %v2824 = vmul.u32.u64.compose %v2820, %v2815
    %v2825 = vextract.low.u32 %v2824
    %v2826 = vextract.high.u32 %v2824
    %v2827 = vmul.u32 %v2820, %v2811
    %v2828 = vadd.s32 %v2823, %v2825
    %vm2829 = vc.u32 %v2823, %v2825
    %v2830 = vadd.s32 %v2826, 1
    %v2831 = vsel %vm2829, %v2830, %v2826
    %v2832 = vadd.s32 %v2827, %v2831
    %v2833 = vadd.s32 %v2832, 536870912
    %v2834 = vshrl.u32 %v2833, 30
    %v2835 = vshll.u32 %v2834, 30
    %v2836 = vsub.s32 %v2832, %v2835
    %vm2837 = vcmp.lt.s32.totalorder %v2836, 0
    %v2838 = vsub.s32 0, %v2836
    %v2839 = vsel %vm2837, %v2838, %v2836
    %v2840 = vclz %v2839
    %v2841 = vsub.s32 %v2840, 2
    %vm2842 = vcmp.gt.s32.totalorder 0, %v2841
    %v2843 = vsel %vm2842, 0, %v2841
    %v2844 = vsub.s32 32, %v2843
    %v2845 = vshll.u32 %v2836, %v2843
    %v2846 = vshrl.u32 %v2828, %v2844
    %v2847 = vor.u32 %v2845, %v2846
    %v2848 = vsub.s32 4294967266, %v2843
    %v2849 = vadd.s32 %v2848, 127
    %v2850 = vshll.u32 %v2849, 23
    %v2851 = vor.u32 4788187, %v2850
    %v2852 = vand.u32 2147483647, %v2851
    %v2854 = vcvt.s32.f32 %v2847
    %v2855 = vmul.f32 %v2854, %v2852
    %v2856 = vxor.u32 %v2855, 2147483648
    %v2857 = vsel %vm2774, %v2856, %v2855
    %v2858 = vsub.s32 4, %v2834
    %v2859 = vsel %vm2774, %v2858, %v2834
    %v2860 = vsel %vm2773, %v904, %v2857
    %v2861 = vsel %vm2773, 0, %v2859
    %v2862 = vcosq.f32.pop %v2860
    %v2863 = vsinq.f32.pop %v2860
    %vm2864 = vweird.f32 %v904
    %v2865 = vand.u32 %v2861, 3
    %vm2866 = vcmp.lt.s32.totalorder %v2865, 2
    %vm2867 = vcmp.eq.s32.totalorder %v2865, 0
    %v2868 = vxor.u32 %v2863, 2147483648
    %v2869 = vsel %vm2867, %v2862, %v2868
    %vm2870 = vcmp.eq.s32.totalorder %v2865, 2
    %v2871 = vxor.u32 %v2862, 2147483648
    %v2872 = vsel %vm2870, %v2871, %v2863
    %v2873 = vsel %vm2866, %v2869, %v2872
    %v2874 = vsel %vm2864, nan, %v2873
    %v2875 = vand.u32 2147483647, %v905
    %vm2876 = vcmp.le.f32.partialorder %v2875, 0.7853982
    %vm2877 = vcmp.lt.s32.totalorder %v905, 0
    %v2878 = vand.u32 %v905, 2139095040
    %v2879 = vshrl.u32 %v2878, 23
    %v2880 = vsub.s32 %v2879, 127
    %v2881 = vand.u32 2147483647, %v905
    %v2882 = vand.u32 %v2881, 8388607
    %v2883 = vor.u32 %v2882, 8388608
    %v2884 = vsub.s32 0, %v2883
    %v2885 = vadd.s32 %v2880, 1
    %vm2886 = vcmp.gt.s32.totalorder %v2885, 0
    %v2887 = vsel %vm2886, %v2885, 0
    %v2888 = vshrl.u32 %v2887, 5
    %v2889 = vand.u32 %v2887, 31
    %v2890 = vsub.s32 32, %v2889
    %v2891 = vshrl.u32 683565275, %v2890
    %v2892 = vshll.u32 683565275, %v2889
    %v2893 = vshrl.u32 2475754826, %v2890
    %v2894 = vor.u32 %v2892, %v2893
    %v2895 = vshll.u32 2475754826, %v2889
    %v2896 = vshrl.u32 2131351028, %v2890
    %v2897 = vor.u32 %v2895, %v2896
    %v2898 = vshll.u32 2131351028, %v2889
    %v2899 = vshrl.u32 2102212464, %v2890
    %v2900 = vor.u32 %v2898, %v2899
    %v2901 = vshll.u32 2102212464, %v2889
    %v2902 = vshrl.u32 920167782, %v2890
    %v2903 = vor.u32 %v2901, %v2902
    %v2904 = vshll.u32 920167782, %v2889
    %v2905 = vshrl.u32 1326507024, %v2890
    %v2906 = vor.u32 %v2904, %v2905
    %vm2907 = vcmp.lt.s32.totalorder %v2888, 1
    %vm2908 = vcmp.lt.s32.totalorder %v2888, 2
    %vm2909 = vcmp.lt.s32.totalorder %v2888, 3
    %vm2910 = vcmp.lt.s32.totalorder %v2888, 4
    %v2911 = vsel %vm2907, %v2891, %v2894
    %v2912 = vsel %vm2910, %v2900, 2102212464
    %v2913 = vsel %vm2909, %v2897, %v2912
    %v2914 = vsel %vm2908, %v2911, %v2913
    %v2915 = vsel %vm2907, %v2894, %v2897
    %v2916 = vsel %vm2910, %v2903, 920167782
    %v2917 = vsel %vm2909, %v2900, %v2916
    %v2918 = vsel %vm2908, %v2915, %v2917
    %v2919 = vsel %vm2907, %v2897, %v2900
    %v2920 = vsel %vm2910, %v2906, 1326507024
    %v2921 = vsel %vm2909, %v2903, %v2920
    %v2922 = vsel %vm2908, %v2919, %v2921
    %v2923 = vshll.u32 %v2883, 8
    %v2924 = vmul.u32.u64.compose %v2923, %v2922
    %v2925 = vextract.low.u32 %v2924
    %v2926 = vextract.high.u32 %v2924
    %v2927 = vmul.u32.u64.compose %v2923, %v2918
    %v2928 = vextract.low.u32 %v2927
    %v2929 = vextract.high.u32 %v2927
    %v2930 = vmul.u32 %v2923, %v2914
    %v2931 = vadd.s32 %v2926, %v2928
    %vm2932 = vc.u32 %v2926, %v2928
    %v2933 = vadd.s32 %v2929, 1
    %v2934 = vsel %vm2932, %v2933, %v2929
    %v2935 = vadd.s32 %v2930, %v2934
    %v2936 = vadd.s32 %v2935, 536870912
    %v2937 = vshrl.u32 %v2936, 30
    %v2938 = vshll.u32 %v2937, 30
    %v2939 = vsub.s32 %v2935, %v2938
    %vm2940 = vcmp.lt.s32.totalorder %v2939, 0
    %v2941 = vsub.s32 0, %v2939
    %v2942 = vsel %vm2940, %v2941, %v2939
    %v2943 = vclz %v2942
    %v2944 = vsub.s32 %v2943, 2
    %vm2945 = vcmp.gt.s32.totalorder 0, %v2944
    %v2946 = vsel %vm2945, 0, %v2944
    %v2947 = vsub.s32 32, %v2946
    %v2948 = vshll.u32 %v2939, %v2946
    %v2949 = vshrl.u32 %v2931, %v2947
    %v2950 = vor.u32 %v2948, %v2949
    %v2951 = vsub.s32 4294967266, %v2946
    %v2952 = vadd.s32 %v2951, 127
    %v2953 = vshll.u32 %v2952, 23
    %v2954 = vor.u32 4788187, %v2953
    %v2955 = vand.u32 2147483647, %v2954
    %v2957 = vcvt.s32.f32 %v2950
    %v2958 = vmul.f32 %v2957, %v2955
    %v2959 = vxor.u32 %v2958, 2147483648
    %v2960 = vsel %vm2877, %v2959, %v2958
    %v2961 = vsub.s32 4, %v2937
    %v2962 = vsel %vm2877, %v2961, %v2937
    %v2963 = vsel %vm2876, %v905, %v2960
    %v2964 = vsel %vm2876, 0, %v2962
    %v2965 = vcosq.f32.pop %v2963
    %v2966 = vsinq.f32.pop %v2963
    %vm2967 = vweird.f32 %v905
    %v2968 = vand.u32 %v2964, 3
    %vm2969 = vcmp.lt.s32.totalorder %v2968, 2
    %vm2970 = vcmp.eq.s32.totalorder %v2968, 0
    %v2971 = vxor.u32 %v2966, 2147483648
    %v2972 = vsel %vm2970, %v2965, %v2971
    %vm2973 = vcmp.eq.s32.totalorder %v2968, 2
    %v2974 = vxor.u32 %v2965, 2147483648
    %v2975 = vsel %vm2973, %v2974, %v2966
    %v2976 = vsel %vm2969, %v2972, %v2975
    %v2977 = vsel %vm2967, nan, %v2976
    %v2978 = vand.u32 2147483647, %v906
    %vm2979 = vcmp.le.f32.partialorder %v2978, 0.7853982
    %vm2980 = vcmp.lt.s32.totalorder %v906, 0
    %v2981 = vand.u32 %v906, 2139095040
    %v2982 = vshrl.u32 %v2981, 23
    %v2983 = vsub.s32 %v2982, 127
    %v2984 = vand.u32 2147483647, %v906
    %v2985 = vand.u32 %v2984, 8388607
    %v2986 = vor.u32 %v2985, 8388608
    %v2987 = vsub.s32 0, %v2986
    %v2988 = vadd.s32 %v2983, 1
    %vm2989 = vcmp.gt.s32.totalorder %v2988, 0
    %v2990 = vsel %vm2989, %v2988, 0
    %v2991 = vshrl.u32 %v2990, 5
    %v2992 = vand.u32 %v2990, 31
    %v2993 = vsub.s32 32, %v2992
    %v2994 = vshrl.u32 683565275, %v2993
    %v2995 = vshll.u32 683565275, %v2992
    %v2996 = vshrl.u32 2475754826, %v2993
    %v2997 = vor.u32 %v2995, %v2996
    %v2998 = vshll.u32 2475754826, %v2992
    %v2999 = vshrl.u32 2131351028, %v2993
    %v3000 = vor.u32 %v2998, %v2999
    %v3001 = vshll.u32 2131351028, %v2992
    %v3002 = vshrl.u32 2102212464, %v2993
    %v3003 = vor.u32 %v3001, %v3002
    %v3004 = vshll.u32 2102212464, %v2992
    %v3005 = vshrl.u32 920167782, %v2993
    %v3006 = vor.u32 %v3004, %v3005
    %v3007 = vshll.u32 920167782, %v2992
    %v3008 = vshrl.u32 1326507024, %v2993
    %v3009 = vor.u32 %v3007, %v3008
    %vm3010 = vcmp.lt.s32.totalorder %v2991, 1
    %vm3011 = vcmp.lt.s32.totalorder %v2991, 2
    %vm3012 = vcmp.lt.s32.totalorder %v2991, 3
    %vm3013 = vcmp.lt.s32.totalorder %v2991, 4
    %v3014 = vsel %vm3010, %v2994, %v2997
    %v3015 = vsel %vm3013, %v3003, 2102212464
    %v3016 = vsel %vm3012, %v3000, %v3015
    %v3017 = vsel %vm3011, %v3014, %v3016
    %v3018 = vsel %vm3010, %v2997, %v3000
    %v3019 = vsel %vm3013, %v3006, 920167782
    %v3020 = vsel %vm3012, %v3003, %v3019
    %v3021 = vsel %vm3011, %v3018, %v3020
    %v3022 = vsel %vm3010, %v3000, %v3003
    %v3023 = vsel %vm3013, %v3009, 1326507024
    %v3024 = vsel %vm3012, %v3006, %v3023
    %v3025 = vsel %vm3011, %v3022, %v3024
    %v3026 = vshll.u32 %v2986, 8
    %v3027 = vmul.u32.u64.compose %v3026, %v3025
    %v3028 = vextract.low.u32 %v3027
    %v3029 = vextract.high.u32 %v3027
    %v3030 = vmul.u32.u64.compose %v3026, %v3021
    %v3031 = vextract.low.u32 %v3030
    %v3032 = vextract.high.u32 %v3030
    %v3033 = vmul.u32 %v3026, %v3017
    %v3034 = vadd.s32 %v3029, %v3031
    %vm3035 = vc.u32 %v3029, %v3031
    %v3036 = vadd.s32 %v3032, 1
    %v3037 = vsel %vm3035, %v3036, %v3032
    %v3038 = vadd.s32 %v3033, %v3037
    %v3039 = vadd.s32 %v3038, 536870912
    %v3040 = vshrl.u32 %v3039, 30
    %v3041 = vshll.u32 %v3040, 30
    %v3042 = vsub.s32 %v3038, %v3041
    %vm3043 = vcmp.lt.s32.totalorder %v3042, 0
    %v3044 = vsub.s32 0, %v3042
    %v3045 = vsel %vm3043, %v3044, %v3042
    %v3046 = vclz %v3045
    %v3047 = vsub.s32 %v3046, 2
    %vm3048 = vcmp.gt.s32.totalorder 0, %v3047
    %v3049 = vsel %vm3048, 0, %v3047
    %v3050 = vsub.s32 32, %v3049
    %v3051 = vshll.u32 %v3042, %v3049
    %v3052 = vshrl.u32 %v3034, %v3050
    %v3053 = vor.u32 %v3051, %v3052
    %v3054 = vsub.s32 4294967266, %v3049
    %v3055 = vadd.s32 %v3054, 127
    %v3056 = vshll.u32 %v3055, 23
    %v3057 = vor.u32 4788187, %v3056
    %v3058 = vand.u32 2147483647, %v3057
    %v3060 = vcvt.s32.f32 %v3053
    %v3061 = vmul.f32 %v3060, %v3058
    %v3062 = vxor.u32 %v3061, 2147483648
    %v3063 = vsel %vm2980, %v3062, %v3061
    %v3064 = vsub.s32 4, %v3040
    %v3065 = vsel %vm2980, %v3064, %v3040
    %v3066 = vsel %vm2979, %v906, %v3063
    %v3067 = vsel %vm2979, 0, %v3065
    %v3068 = vcosq.f32.pop %v3066
    %v3069 = vsinq.f32.pop %v3066
    %vm3070 = vweird.f32 %v906
    %v3071 = vand.u32 %v3067, 3
    %vm3072 = vcmp.lt.s32.totalorder %v3071, 2
    %vm3073 = vcmp.eq.s32.totalorder %v3071, 0
    %v3074 = vxor.u32 %v3069, 2147483648
    %v3075 = vsel %vm3073, %v3068, %v3074
    %vm3076 = vcmp.eq.s32.totalorder %v3071, 2
    %v3077 = vxor.u32 %v3068, 2147483648
    %v3078 = vsel %vm3076, %v3077, %v3069
    %v3079 = vsel %vm3072, %v3075, %v3078
    %v3080 = vsel %vm3070, nan, %v3079
    %v3081 = vand.u32 2147483647, %v907
    %vm3082 = vcmp.le.f32.partialorder %v3081, 0.7853982
    %vm3083 = vcmp.lt.s32.totalorder %v907, 0
    %v3084 = vand.u32 %v907, 2139095040
    %v3085 = vshrl.u32 %v3084, 23
    %v3086 = vsub.s32 %v3085, 127
    %v3087 = vand.u32 2147483647, %v907
    %v3088 = vand.u32 %v3087, 8388607
    %v3089 = vor.u32 %v3088, 8388608
    %v3090 = vsub.s32 0, %v3089
    %v3091 = vadd.s32 %v3086, 1
    %vm3092 = vcmp.gt.s32.totalorder %v3091, 0
    %v3093 = vsel %vm3092, %v3091, 0
    %v3094 = vshrl.u32 %v3093, 5
    %v3095 = vand.u32 %v3093, 31
    %v3096 = vsub.s32 32, %v3095
    %v3097 = vshrl.u32 683565275, %v3096
    %v3098 = vshll.u32 683565275, %v3095
    %v3099 = vshrl.u32 2475754826, %v3096
    %v3100 = vor.u32 %v3098, %v3099
    %v3101 = vshll.u32 2475754826, %v3095
    %v3102 = vshrl.u32 2131351028, %v3096
    %v3103 = vor.u32 %v3101, %v3102
    %v3104 = vshll.u32 2131351028, %v3095
    %v3105 = vshrl.u32 2102212464, %v3096
    %v3106 = vor.u32 %v3104, %v3105
    %v3107 = vshll.u32 2102212464, %v3095
    %v3108 = vshrl.u32 920167782, %v3096
    %v3109 = vor.u32 %v3107, %v3108
    %v3110 = vshll.u32 920167782, %v3095
    %v3111 = vshrl.u32 1326507024, %v3096
    %v3112 = vor.u32 %v3110, %v3111
    %vm3113 = vcmp.lt.s32.totalorder %v3094, 1
    %vm3114 = vcmp.lt.s32.totalorder %v3094, 2
    %vm3115 = vcmp.lt.s32.totalorder %v3094, 3
    %vm3116 = vcmp.lt.s32.totalorder %v3094, 4
    %v3117 = vsel %vm3113, %v3097, %v3100
    %v3118 = vsel %vm3116, %v3106, 2102212464
    %v3119 = vsel %vm3115, %v3103, %v3118
    %v3120 = vsel %vm3114, %v3117, %v3119
    %v3121 = vsel %vm3113, %v3100, %v3103
    %v3122 = vsel %vm3116, %v3109, 920167782
    %v3123 = vsel %vm3115, %v3106, %v3122
    %v3124 = vsel %vm3114, %v3121, %v3123
    %v3125 = vsel %vm3113, %v3103, %v3106
    %v3126 = vsel %vm3116, %v3112, 1326507024
    %v3127 = vsel %vm3115, %v3109, %v3126
    %v3128 = vsel %vm3114, %v3125, %v3127
    %v3129 = vshll.u32 %v3089, 8
    %v3130 = vmul.u32.u64.compose %v3129, %v3128
    %v3131 = vextract.low.u32 %v3130
    %v3132 = vextract.high.u32 %v3130
    %v3133 = vmul.u32.u64.compose %v3129, %v3124
    %v3134 = vextract.low.u32 %v3133
    %v3135 = vextract.high.u32 %v3133
    %v3136 = vmul.u32 %v3129, %v3120
    %v3137 = vadd.s32 %v3132, %v3134
    %vm3138 = vc.u32 %v3132, %v3134
    %v3139 = vadd.s32 %v3135, 1
    %v3140 = vsel %vm3138, %v3139, %v3135
    %v3141 = vadd.s32 %v3136, %v3140
    %v3142 = vadd.s32 %v3141, 536870912
    %v3143 = vshrl.u32 %v3142, 30
    %v3144 = vshll.u32 %v3143, 30
    %v3145 = vsub.s32 %v3141, %v3144
    %vm3146 = vcmp.lt.s32.totalorder %v3145, 0
    %v3147 = vsub.s32 0, %v3145
    %v3148 = vsel %vm3146, %v3147, %v3145
    %v3149 = vclz %v3148
    %v3150 = vsub.s32 %v3149, 2
    %vm3151 = vcmp.gt.s32.totalorder 0, %v3150
    %v3152 = vsel %vm3151, 0, %v3150
    %v3153 = vsub.s32 32, %v3152
    %v3154 = vshll.u32 %v3145, %v3152
    %v3155 = vshrl.u32 %v3137, %v3153
    %v3156 = vor.u32 %v3154, %v3155
    %v3157 = vsub.s32 4294967266, %v3152
    %v3158 = vadd.s32 %v3157, 127
    %v3159 = vshll.u32 %v3158, 23
    %v3160 = vor.u32 4788187, %v3159
    %v3161 = vand.u32 2147483647, %v3160
    %v3163 = vcvt.s32.f32 %v3156
    %v3164 = vmul.f32 %v3163, %v3161
    %v3165 = vxor.u32 %v3164, 2147483648
    %v3166 = vsel %vm3083, %v3165, %v3164
    %v3167 = vsub.s32 4, %v3143
    %v3168 = vsel %vm3083, %v3167, %v3143
    %v3169 = vsel %vm3082, %v907, %v3166
    %v3170 = vsel %vm3082, 0, %v3168
    %v3171 = vcosq.f32.pop %v3169
    %v3172 = vsinq.f32.pop %v3169
    %vm3173 = vweird.f32 %v907
    %v3174 = vand.u32 %v3170, 3
    %vm3175 = vcmp.lt.s32.totalorder %v3174, 2
    %vm3176 = vcmp.eq.s32.totalorder %v3174, 0
    %v3177 = vxor.u32 %v3172, 2147483648
    %v3178 = vsel %vm3176, %v3171, %v3177
    %vm3179 = vcmp.eq.s32.totalorder %v3174, 2
    %v3180 = vxor.u32 %v3171, 2147483648
    %v3181 = vsel %vm3179, %v3180, %v3172
    %v3182 = vsel %vm3175, %v3178, %v3181
    %v3183 = vsel %vm3173, nan, %v3182
    %v3184 = vand.u32 2147483647, %v908
    %vm3185 = vcmp.le.f32.partialorder %v3184, 0.7853982
    %vm3186 = vcmp.lt.s32.totalorder %v908, 0
    %v3187 = vand.u32 %v908, 2139095040
    %v3188 = vshrl.u32 %v3187, 23
    %v3189 = vsub.s32 %v3188, 127
    %v3190 = vand.u32 2147483647, %v908
    %v3191 = vand.u32 %v3190, 8388607
    %v3192 = vor.u32 %v3191, 8388608
    %v3193 = vsub.s32 0, %v3192
    %v3194 = vadd.s32 %v3189, 1
    %vm3195 = vcmp.gt.s32.totalorder %v3194, 0
    %v3196 = vsel %vm3195, %v3194, 0
    %v3197 = vshrl.u32 %v3196, 5
    %v3198 = vand.u32 %v3196, 31
    %v3199 = vsub.s32 32, %v3198
    %v3200 = vshrl.u32 683565275, %v3199
    %v3201 = vshll.u32 683565275, %v3198
    %v3202 = vshrl.u32 2475754826, %v3199
    %v3203 = vor.u32 %v3201, %v3202
    %v3204 = vshll.u32 2475754826, %v3198
    %v3205 = vshrl.u32 2131351028, %v3199
    %v3206 = vor.u32 %v3204, %v3205
    %v3207 = vshll.u32 2131351028, %v3198
    %v3208 = vshrl.u32 2102212464, %v3199
    %v3209 = vor.u32 %v3207, %v3208
    %v3210 = vshll.u32 2102212464, %v3198
    %v3211 = vshrl.u32 920167782, %v3199
    %v3212 = vor.u32 %v3210, %v3211
    %v3213 = vshll.u32 920167782, %v3198
    %v3214 = vshrl.u32 1326507024, %v3199
    %v3215 = vor.u32 %v3213, %v3214
    %vm3216 = vcmp.lt.s32.totalorder %v3197, 1
    %vm3217 = vcmp.lt.s32.totalorder %v3197, 2
    %vm3218 = vcmp.lt.s32.totalorder %v3197, 3
    %vm3219 = vcmp.lt.s32.totalorder %v3197, 4
    %v3220 = vsel %vm3216, %v3200, %v3203
    %v3221 = vsel %vm3219, %v3209, 2102212464
    %v3222 = vsel %vm3218, %v3206, %v3221
    %v3223 = vsel %vm3217, %v3220, %v3222
    %v3224 = vsel %vm3216, %v3203, %v3206
    %v3225 = vsel %vm3219, %v3212, 920167782
    %v3226 = vsel %vm3218, %v3209, %v3225
    %v3227 = vsel %vm3217, %v3224, %v3226
    %v3228 = vsel %vm3216, %v3206, %v3209
    %v3229 = vsel %vm3219, %v3215, 1326507024
    %v3230 = vsel %vm3218, %v3212, %v3229
    %v3231 = vsel %vm3217, %v3228, %v3230
    %v3232 = vshll.u32 %v3192, 8
    %v3233 = vmul.u32.u64.compose %v3232, %v3231
    %v3234 = vextract.low.u32 %v3233
    %v3235 = vextract.high.u32 %v3233
    %v3236 = vmul.u32.u64.compose %v3232, %v3227
    %v3237 = vextract.low.u32 %v3236
    %v3238 = vextract.high.u32 %v3236
    %v3239 = vmul.u32 %v3232, %v3223
    %v3240 = vadd.s32 %v3235, %v3237
    %vm3241 = vc.u32 %v3235, %v3237
    %v3242 = vadd.s32 %v3238, 1
    %v3243 = vsel %vm3241, %v3242, %v3238
    %v3244 = vadd.s32 %v3239, %v3243
    %v3245 = vadd.s32 %v3244, 536870912
    %v3246 = vshrl.u32 %v3245, 30
    %v3247 = vshll.u32 %v3246, 30
    %v3248 = vsub.s32 %v3244, %v3247
    %vm3249 = vcmp.lt.s32.totalorder %v3248, 0
    %v3250 = vsub.s32 0, %v3248
    %v3251 = vsel %vm3249, %v3250, %v3248
    %v3252 = vclz %v3251
    %v3253 = vsub.s32 %v3252, 2
    %vm3254 = vcmp.gt.s32.totalorder 0, %v3253
    %v3255 = vsel %vm3254, 0, %v3253
    %v3256 = vsub.s32 32, %v3255
    %v3257 = vshll.u32 %v3248, %v3255
    %v3258 = vshrl.u32 %v3240, %v3256
    %v3259 = vor.u32 %v3257, %v3258
    %v3260 = vsub.s32 4294967266, %v3255
    %v3261 = vadd.s32 %v3260, 127
    %v3262 = vshll.u32 %v3261, 23
    %v3263 = vor.u32 4788187, %v3262
    %v3264 = vand.u32 2147483647, %v3263
    %v3266 = vcvt.s32.f32 %v3259
    %v3267 = vmul.f32 %v3266, %v3264
    %v3268 = vxor.u32 %v3267, 2147483648
    %v3269 = vsel %vm3186, %v3268, %v3267
    %v3270 = vsub.s32 4, %v3246
    %v3271 = vsel %vm3186, %v3270, %v3246
    %v3272 = vsel %vm3185, %v908, %v3269
    %v3273 = vsel %vm3185, 0, %v3271
    %v3274 = vcosq.f32.pop %v3272
    %v3275 = vsinq.f32.pop %v3272
    %vm3276 = vweird.f32 %v908
    %v3277 = vand.u32 %v3273, 3
    %vm3278 = vcmp.lt.s32.totalorder %v3277, 2
    %vm3279 = vcmp.eq.s32.totalorder %v3277, 0
    %v3280 = vxor.u32 %v3275, 2147483648
    %v3281 = vsel %vm3279, %v3274, %v3280
    %vm3282 = vcmp.eq.s32.totalorder %v3277, 2
    %v3283 = vxor.u32 %v3274, 2147483648
    %v3284 = vsel %vm3282, %v3283, %v3275
    %v3285 = vsel %vm3278, %v3281, %v3284
    %v3286 = vsel %vm3276, nan, %v3285
    %v3287 = vand.u32 2147483647, %v909
    %vm3288 = vcmp.le.f32.partialorder %v3287, 0.7853982
    %vm3289 = vcmp.lt.s32.totalorder %v909, 0
    %v3290 = vand.u32 %v909, 2139095040
    %v3291 = vshrl.u32 %v3290, 23
    %v3292 = vsub.s32 %v3291, 127
    %v3293 = vand.u32 2147483647, %v909
    %v3294 = vand.u32 %v3293, 8388607
    %v3295 = vor.u32 %v3294, 8388608
    %v3296 = vsub.s32 0, %v3295
    %v3297 = vadd.s32 %v3292, 1
    %vm3298 = vcmp.gt.s32.totalorder %v3297, 0
    %v3299 = vsel %vm3298, %v3297, 0
    %v3300 = vshrl.u32 %v3299, 5
    %v3301 = vand.u32 %v3299, 31
    %v3302 = vsub.s32 32, %v3301
    %v3303 = vshrl.u32 683565275, %v3302
    %v3304 = vshll.u32 683565275, %v3301
    %v3305 = vshrl.u32 2475754826, %v3302
    %v3306 = vor.u32 %v3304, %v3305
    %v3307 = vshll.u32 2475754826, %v3301
    %v3308 = vshrl.u32 2131351028, %v3302
    %v3309 = vor.u32 %v3307, %v3308
    %v3310 = vshll.u32 2131351028, %v3301
    %v3311 = vshrl.u32 2102212464, %v3302
    %v3312 = vor.u32 %v3310, %v3311
    %v3313 = vshll.u32 2102212464, %v3301
    %v3314 = vshrl.u32 920167782, %v3302
    %v3315 = vor.u32 %v3313, %v3314
    %v3316 = vshll.u32 920167782, %v3301
    %v3317 = vshrl.u32 1326507024, %v3302
    %v3318 = vor.u32 %v3316, %v3317
    %vm3319 = vcmp.lt.s32.totalorder %v3300, 1
    %vm3320 = vcmp.lt.s32.totalorder %v3300, 2
    %vm3321 = vcmp.lt.s32.totalorder %v3300, 3
    %vm3322 = vcmp.lt.s32.totalorder %v3300, 4
    %v3323 = vsel %vm3319, %v3303, %v3306
    %v3324 = vsel %vm3322, %v3312, 2102212464
    %v3325 = vsel %vm3321, %v3309, %v3324
    %v3326 = vsel %vm3320, %v3323, %v3325
    %v3327 = vsel %vm3319, %v3306, %v3309
    %v3328 = vsel %vm3322, %v3315, 920167782
    %v3329 = vsel %vm3321, %v3312, %v3328
    %v3330 = vsel %vm3320, %v3327, %v3329
    %v3331 = vsel %vm3319, %v3309, %v3312
    %v3332 = vsel %vm3322, %v3318, 1326507024
    %v3333 = vsel %vm3321, %v3315, %v3332
    %v3334 = vsel %vm3320, %v3331, %v3333
    %v3335 = vshll.u32 %v3295, 8
    %v3336 = vmul.u32.u64.compose %v3335, %v3334
    %v3337 = vextract.low.u32 %v3336
    %v3338 = vextract.high.u32 %v3336
    %v3339 = vmul.u32.u64.compose %v3335, %v3330
    %v3340 = vextract.low.u32 %v3339
    %v3341 = vextract.high.u32 %v3339
    %v3342 = vmul.u32 %v3335, %v3326
    %v3343 = vadd.s32 %v3338, %v3340
    %vm3344 = vc.u32 %v3338, %v3340
    %v3345 = vadd.s32 %v3341, 1
    %v3346 = vsel %vm3344, %v3345, %v3341
    %v3347 = vadd.s32 %v3342, %v3346
    %v3348 = vadd.s32 %v3347, 536870912
    %v3349 = vshrl.u32 %v3348, 30
    %v3350 = vshll.u32 %v3349, 30
    %v3351 = vsub.s32 %v3347, %v3350
    %vm3352 = vcmp.lt.s32.totalorder %v3351, 0
    %v3353 = vsub.s32 0, %v3351
    %v3354 = vsel %vm3352, %v3353, %v3351
    %v3355 = vclz %v3354
    %v3356 = vsub.s32 %v3355, 2
    %vm3357 = vcmp.gt.s32.totalorder 0, %v3356
    %v3358 = vsel %vm3357, 0, %v3356
    %v3359 = vsub.s32 32, %v3358
    %v3360 = vshll.u32 %v3351, %v3358
    %v3361 = vshrl.u32 %v3343, %v3359
    %v3362 = vor.u32 %v3360, %v3361
    %v3363 = vsub.s32 4294967266, %v3358
    %v3364 = vadd.s32 %v3363, 127
    %v3365 = vshll.u32 %v3364, 23
    %v3366 = vor.u32 4788187, %v3365
    %v3367 = vand.u32 2147483647, %v3366
    %v3369 = vcvt.s32.f32 %v3362
    %v3370 = vmul.f32 %v3369, %v3367
    %v3371 = vxor.u32 %v3370, 2147483648
    %v3372 = vsel %vm3289, %v3371, %v3370
    %v3373 = vsub.s32 4, %v3349
    %v3374 = vsel %vm3289, %v3373, %v3349
    %v3375 = vsel %vm3288, %v909, %v3372
    %v3376 = vsel %vm3288, 0, %v3374
    %v3377 = vcosq.f32.pop %v3375
    %v3378 = vsinq.f32.pop %v3375
    %vm3379 = vweird.f32 %v909
    %v3380 = vand.u32 %v3376, 3
    %vm3381 = vcmp.lt.s32.totalorder %v3380, 2
    %vm3382 = vcmp.eq.s32.totalorder %v3380, 0
    %v3383 = vxor.u32 %v3378, 2147483648
    %v3384 = vsel %vm3382, %v3377, %v3383
    %vm3385 = vcmp.eq.s32.totalorder %v3380, 2
    %v3386 = vxor.u32 %v3377, 2147483648
    %v3387 = vsel %vm3385, %v3386, %v3378
    %v3388 = vsel %vm3381, %v3384, %v3387
    %v3389 = vsel %vm3379, nan, %v3388
    %v3390 = vand.u32 2147483647, %v910
    %vm3391 = vcmp.le.f32.partialorder %v3390, 0.7853982
    %vm3392 = vcmp.lt.s32.totalorder %v910, 0
    %v3393 = vand.u32 %v910, 2139095040
    %v3394 = vshrl.u32 %v3393, 23
    %v3395 = vsub.s32 %v3394, 127
    %v3396 = vand.u32 2147483647, %v910
    %v3397 = vand.u32 %v3396, 8388607
    %v3398 = vor.u32 %v3397, 8388608
    %v3399 = vsub.s32 0, %v3398
    %v3400 = vadd.s32 %v3395, 1
    %vm3401 = vcmp.gt.s32.totalorder %v3400, 0
    %v3402 = vsel %vm3401, %v3400, 0
    %v3403 = vshrl.u32 %v3402, 5
    %v3404 = vand.u32 %v3402, 31
    %v3405 = vsub.s32 32, %v3404
    %v3406 = vshrl.u32 683565275, %v3405
    %v3407 = vshll.u32 683565275, %v3404
    %v3408 = vshrl.u32 2475754826, %v3405
    %v3409 = vor.u32 %v3407, %v3408
    %v3410 = vshll.u32 2475754826, %v3404
    %v3411 = vshrl.u32 2131351028, %v3405
    %v3412 = vor.u32 %v3410, %v3411
    %v3413 = vshll.u32 2131351028, %v3404
    %v3414 = vshrl.u32 2102212464, %v3405
    %v3415 = vor.u32 %v3413, %v3414
    %v3416 = vshll.u32 2102212464, %v3404
    %v3417 = vshrl.u32 920167782, %v3405
    %v3418 = vor.u32 %v3416, %v3417
    %v3419 = vshll.u32 920167782, %v3404
    %v3420 = vshrl.u32 1326507024, %v3405
    %v3421 = vor.u32 %v3419, %v3420
    %vm3422 = vcmp.lt.s32.totalorder %v3403, 1
    %vm3423 = vcmp.lt.s32.totalorder %v3403, 2
    %vm3424 = vcmp.lt.s32.totalorder %v3403, 3
    %vm3425 = vcmp.lt.s32.totalorder %v3403, 4
    %v3426 = vsel %vm3422, %v3406, %v3409
    %v3427 = vsel %vm3425, %v3415, 2102212464
    %v3428 = vsel %vm3424, %v3412, %v3427
    %v3429 = vsel %vm3423, %v3426, %v3428
    %v3430 = vsel %vm3422, %v3409, %v3412
    %v3431 = vsel %vm3425, %v3418, 920167782
    %v3432 = vsel %vm3424, %v3415, %v3431
    %v3433 = vsel %vm3423, %v3430, %v3432
    %v3434 = vsel %vm3422, %v3412, %v3415
    %v3435 = vsel %vm3425, %v3421, 1326507024
    %v3436 = vsel %vm3424, %v3418, %v3435
    %v3437 = vsel %vm3423, %v3434, %v3436
    %v3438 = vshll.u32 %v3398, 8
    %v3439 = vmul.u32.u64.compose %v3438, %v3437
    %v3440 = vextract.low.u32 %v3439
    %v3441 = vextract.high.u32 %v3439
    %v3442 = vmul.u32.u64.compose %v3438, %v3433
    %v3443 = vextract.low.u32 %v3442
    %v3444 = vextract.high.u32 %v3442
    %v3445 = vmul.u32 %v3438, %v3429
    %v3446 = vadd.s32 %v3441, %v3443
    %vm3447 = vc.u32 %v3441, %v3443
    %v3448 = vadd.s32 %v3444, 1
    %v3449 = vsel %vm3447, %v3448, %v3444
    %v3450 = vadd.s32 %v3445, %v3449
    %v3451 = vadd.s32 %v3450, 536870912
    %v3452 = vshrl.u32 %v3451, 30
    %v3453 = vshll.u32 %v3452, 30
    %v3454 = vsub.s32 %v3450, %v3453
    %vm3455 = vcmp.lt.s32.totalorder %v3454, 0
    %v3456 = vsub.s32 0, %v3454
    %v3457 = vsel %vm3455, %v3456, %v3454
    %v3458 = vclz %v3457
    %v3459 = vsub.s32 %v3458, 2
    %vm3460 = vcmp.gt.s32.totalorder 0, %v3459
    %v3461 = vsel %vm3460, 0, %v3459
    %v3462 = vsub.s32 32, %v3461
    %v3463 = vshll.u32 %v3454, %v3461
    %v3464 = vshrl.u32 %v3446, %v3462
    %v3465 = vor.u32 %v3463, %v3464
    %v3466 = vsub.s32 4294967266, %v3461
    %v3467 = vadd.s32 %v3466, 127
    %v3468 = vshll.u32 %v3467, 23
    %v3469 = vor.u32 4788187, %v3468
    %v3470 = vand.u32 2147483647, %v3469
    %v3472 = vcvt.s32.f32 %v3465
    %v3473 = vmul.f32 %v3472, %v3470
    %v3474 = vxor.u32 %v3473, 2147483648
    %v3475 = vsel %vm3392, %v3474, %v3473
    %v3476 = vsub.s32 4, %v3452
    %v3477 = vsel %vm3392, %v3476, %v3452
    %v3478 = vsel %vm3391, %v910, %v3475
    %v3479 = vsel %vm3391, 0, %v3477
    %v3480 = vcosq.f32.pop %v3478
    %v3481 = vsinq.f32.pop %v3478
    %vm3482 = vweird.f32 %v910
    %v3483 = vand.u32 %v3479, 3
    %vm3484 = vcmp.lt.s32.totalorder %v3483, 2
    %vm3485 = vcmp.eq.s32.totalorder %v3483, 0
    %v3486 = vxor.u32 %v3481, 2147483648
    %v3487 = vsel %vm3485, %v3480, %v3486
    %vm3488 = vcmp.eq.s32.totalorder %v3483, 2
    %v3489 = vxor.u32 %v3480, 2147483648
    %v3490 = vsel %vm3488, %v3489, %v3481
    %v3491 = vsel %vm3484, %v3487, %v3490
    %v3492 = vsel %vm3482, nan, %v3491
    %v3493 = vand.u32 2147483647, %v911
    %vm3494 = vcmp.le.f32.partialorder %v3493, 0.7853982
    %vm3495 = vcmp.lt.s32.totalorder %v911, 0
    %v3496 = vand.u32 %v911, 2139095040
    %v3497 = vshrl.u32 %v3496, 23
    %v3498 = vsub.s32 %v3497, 127
    %v3499 = vand.u32 2147483647, %v911
    %v3500 = vand.u32 %v3499, 8388607
    %v3501 = vor.u32 %v3500, 8388608
    %v3502 = vsub.s32 0, %v3501
    %v3503 = vadd.s32 %v3498, 1
    %vm3504 = vcmp.gt.s32.totalorder %v3503, 0
    %v3505 = vsel %vm3504, %v3503, 0
    %v3506 = vshrl.u32 %v3505, 5
    %v3507 = vand.u32 %v3505, 31
    %v3508 = vsub.s32 32, %v3507
    %v3509 = vshrl.u32 683565275, %v3508
    %v3510 = vshll.u32 683565275, %v3507
    %v3511 = vshrl.u32 2475754826, %v3508
    %v3512 = vor.u32 %v3510, %v3511
    %v3513 = vshll.u32 2475754826, %v3507
    %v3514 = vshrl.u32 2131351028, %v3508
    %v3515 = vor.u32 %v3513, %v3514
    %v3516 = vshll.u32 2131351028, %v3507
    %v3517 = vshrl.u32 2102212464, %v3508
    %v3518 = vor.u32 %v3516, %v3517
    %v3519 = vshll.u32 2102212464, %v3507
    %v3520 = vshrl.u32 920167782, %v3508
    %v3521 = vor.u32 %v3519, %v3520
    %v3522 = vshll.u32 920167782, %v3507
    %v3523 = vshrl.u32 1326507024, %v3508
    %v3524 = vor.u32 %v3522, %v3523
    %vm3525 = vcmp.lt.s32.totalorder %v3506, 1
    %vm3526 = vcmp.lt.s32.totalorder %v3506, 2
    %vm3527 = vcmp.lt.s32.totalorder %v3506, 3
    %vm3528 = vcmp.lt.s32.totalorder %v3506, 4
    %v3529 = vsel %vm3525, %v3509, %v3512
    %v3530 = vsel %vm3528, %v3518, 2102212464
    %v3531 = vsel %vm3527, %v3515, %v3530
    %v3532 = vsel %vm3526, %v3529, %v3531
    %v3533 = vsel %vm3525, %v3512, %v3515
    %v3534 = vsel %vm3528, %v3521, 920167782
    %v3535 = vsel %vm3527, %v3518, %v3534
    %v3536 = vsel %vm3526, %v3533, %v3535
    %v3537 = vsel %vm3525, %v3515, %v3518
    %v3538 = vsel %vm3528, %v3524, 1326507024
    %v3539 = vsel %vm3527, %v3521, %v3538
    %v3540 = vsel %vm3526, %v3537, %v3539
    %v3541 = vshll.u32 %v3501, 8
    %v3542 = vmul.u32.u64.compose %v3541, %v3540
    %v3543 = vextract.low.u32 %v3542
    %v3544 = vextract.high.u32 %v3542
    %v3545 = vmul.u32.u64.compose %v3541, %v3536
    %v3546 = vextract.low.u32 %v3545
    %v3547 = vextract.high.u32 %v3545
    %v3548 = vmul.u32 %v3541, %v3532
    %v3549 = vadd.s32 %v3544, %v3546
    %vm3550 = vc.u32 %v3544, %v3546
    %v3551 = vadd.s32 %v3547, 1
    %v3552 = vsel %vm3550, %v3551, %v3547
    %v3553 = vadd.s32 %v3548, %v3552
    %v3554 = vadd.s32 %v3553, 536870912
    %v3555 = vshrl.u32 %v3554, 30
    %v3556 = vshll.u32 %v3555, 30
    %v3557 = vsub.s32 %v3553, %v3556
    %vm3558 = vcmp.lt.s32.totalorder %v3557, 0
    %v3559 = vsub.s32 0, %v3557
    %v3560 = vsel %vm3558, %v3559, %v3557
    %v3561 = vclz %v3560
    %v3562 = vsub.s32 %v3561, 2
    %vm3563 = vcmp.gt.s32.totalorder 0, %v3562
    %v3564 = vsel %vm3563, 0, %v3562
    %v3565 = vsub.s32 32, %v3564
    %v3566 = vshll.u32 %v3557, %v3564
    %v3567 = vshrl.u32 %v3549, %v3565
    %v3568 = vor.u32 %v3566, %v3567
    %v3569 = vsub.s32 4294967266, %v3564
    %v3570 = vadd.s32 %v3569, 127
    %v3571 = vshll.u32 %v3570, 23
    %v3572 = vor.u32 4788187, %v3571
    %v3573 = vand.u32 2147483647, %v3572
    %v3575 = vcvt.s32.f32 %v3568
    %v3576 = vmul.f32 %v3575, %v3573
    %v3577 = vxor.u32 %v3576, 2147483648
    %v3578 = vsel %vm3495, %v3577, %v3576
    %v3579 = vsub.s32 4, %v3555
    %v3580 = vsel %vm3495, %v3579, %v3555
    %v3581 = vsel %vm3494, %v911, %v3578
    %v3582 = vsel %vm3494, 0, %v3580
    %v3583 = vcosq.f32.pop %v3581
    %v3584 = vsinq.f32.pop %v3581
    %vm3585 = vweird.f32 %v911
    %v3586 = vand.u32 %v3582, 3
    %vm3587 = vcmp.lt.s32.totalorder %v3586, 2
    %vm3588 = vcmp.eq.s32.totalorder %v3586, 0
    %v3589 = vxor.u32 %v3584, 2147483648
    %v3590 = vsel %vm3588, %v3583, %v3589
    %vm3591 = vcmp.eq.s32.totalorder %v3586, 2
    %v3592 = vxor.u32 %v3583, 2147483648
    %v3593 = vsel %vm3591, %v3592, %v3584
    %v3594 = vsel %vm3587, %v3590, %v3593
    %v3595 = vsel %vm3585, nan, %v3594
    %v3596 = vand.u32 2147483647, %v912
    %vm3597 = vcmp.le.f32.partialorder %v3596, 0.7853982
    %vm3598 = vcmp.lt.s32.totalorder %v912, 0
    %v3599 = vand.u32 %v912, 2139095040
    %v3600 = vshrl.u32 %v3599, 23
    %v3601 = vsub.s32 %v3600, 127
    %v3602 = vand.u32 2147483647, %v912
    %v3603 = vand.u32 %v3602, 8388607
    %v3604 = vor.u32 %v3603, 8388608
    %v3605 = vsub.s32 0, %v3604
    %v3606 = vadd.s32 %v3601, 1
    %vm3607 = vcmp.gt.s32.totalorder %v3606, 0
    %v3608 = vsel %vm3607, %v3606, 0
    %v3609 = vshrl.u32 %v3608, 5
    %v3610 = vand.u32 %v3608, 31
    %v3611 = vsub.s32 32, %v3610
    %v3612 = vshrl.u32 683565275, %v3611
    %v3613 = vshll.u32 683565275, %v3610
    %v3614 = vshrl.u32 2475754826, %v3611
    %v3615 = vor.u32 %v3613, %v3614
    %v3616 = vshll.u32 2475754826, %v3610
    %v3617 = vshrl.u32 2131351028, %v3611
    %v3618 = vor.u32 %v3616, %v3617
    %v3619 = vshll.u32 2131351028, %v3610
    %v3620 = vshrl.u32 2102212464, %v3611
    %v3621 = vor.u32 %v3619, %v3620
    %v3622 = vshll.u32 2102212464, %v3610
    %v3623 = vshrl.u32 920167782, %v3611
    %v3624 = vor.u32 %v3622, %v3623
    %v3625 = vshll.u32 920167782, %v3610
    %v3626 = vshrl.u32 1326507024, %v3611
    %v3627 = vor.u32 %v3625, %v3626
    %vm3628 = vcmp.lt.s32.totalorder %v3609, 1
    %vm3629 = vcmp.lt.s32.totalorder %v3609, 2
    %vm3630 = vcmp.lt.s32.totalorder %v3609, 3
    %vm3631 = vcmp.lt.s32.totalorder %v3609, 4
    %v3632 = vsel %vm3628, %v3612, %v3615
    %v3633 = vsel %vm3631, %v3621, 2102212464
    %v3634 = vsel %vm3630, %v3618, %v3633
    %v3635 = vsel %vm3629, %v3632, %v3634
    %v3636 = vsel %vm3628, %v3615, %v3618
    %v3637 = vsel %vm3631, %v3624, 920167782
    %v3638 = vsel %vm3630, %v3621, %v3637
    %v3639 = vsel %vm3629, %v3636, %v3638
    %v3640 = vsel %vm3628, %v3618, %v3621
    %v3641 = vsel %vm3631, %v3627, 1326507024
    %v3642 = vsel %vm3630, %v3624, %v3641
    %v3643 = vsel %vm3629, %v3640, %v3642
    %v3644 = vshll.u32 %v3604, 8
    %v3645 = vmul.u32.u64.compose %v3644, %v3643
    %v3646 = vextract.low.u32 %v3645
    %v3647 = vextract.high.u32 %v3645
    %v3648 = vmul.u32.u64.compose %v3644, %v3639
    %v3649 = vextract.low.u32 %v3648
    %v3650 = vextract.high.u32 %v3648
    %v3651 = vmul.u32 %v3644, %v3635
    %v3652 = vadd.s32 %v3647, %v3649
    %vm3653 = vc.u32 %v3647, %v3649
    %v3654 = vadd.s32 %v3650, 1
    %v3655 = vsel %vm3653, %v3654, %v3650
    %v3656 = vadd.s32 %v3651, %v3655
    %v3657 = vadd.s32 %v3656, 536870912
    %v3658 = vshrl.u32 %v3657, 30
    %v3659 = vshll.u32 %v3658, 30
    %v3660 = vsub.s32 %v3656, %v3659
    %vm3661 = vcmp.lt.s32.totalorder %v3660, 0
    %v3662 = vsub.s32 0, %v3660
    %v3663 = vsel %vm3661, %v3662, %v3660
    %v3664 = vclz %v3663
    %v3665 = vsub.s32 %v3664, 2
    %vm3666 = vcmp.gt.s32.totalorder 0, %v3665
    %v3667 = vsel %vm3666, 0, %v3665
    %v3668 = vsub.s32 32, %v3667
    %v3669 = vshll.u32 %v3660, %v3667
    %v3670 = vshrl.u32 %v3652, %v3668
    %v3671 = vor.u32 %v3669, %v3670
    %v3672 = vsub.s32 4294967266, %v3667
    %v3673 = vadd.s32 %v3672, 127
    %v3674 = vshll.u32 %v3673, 23
    %v3675 = vor.u32 4788187, %v3674
    %v3676 = vand.u32 2147483647, %v3675
    %v3678 = vcvt.s32.f32 %v3671
    %v3679 = vmul.f32 %v3678, %v3676
    %v3680 = vxor.u32 %v3679, 2147483648
    %v3681 = vsel %vm3598, %v3680, %v3679
    %v3682 = vsub.s32 4, %v3658
    %v3683 = vsel %vm3598, %v3682, %v3658
    %v3684 = vsel %vm3597, %v912, %v3681
    %v3685 = vsel %vm3597, 0, %v3683
    %v3686 = vcosq.f32.pop %v3684
    %v3687 = vsinq.f32.pop %v3684
    %vm3688 = vweird.f32 %v912
    %v3689 = vand.u32 %v3685, 3
    %vm3690 = vcmp.lt.s32.totalorder %v3689, 2
    %vm3691 = vcmp.eq.s32.totalorder %v3689, 0
    %v3692 = vxor.u32 %v3687, 2147483648
    %v3693 = vsel %vm3691, %v3686, %v3692
    %vm3694 = vcmp.eq.s32.totalorder %v3689, 2
    %v3695 = vxor.u32 %v3686, 2147483648
    %v3696 = vsel %vm3694, %v3695, %v3687
    %v3697 = vsel %vm3690, %v3693, %v3696
    %v3698 = vsel %vm3688, nan, %v3697
    %v3699 = vand.u32 2147483647, %v913
    %vm3700 = vcmp.le.f32.partialorder %v3699, 0.7853982
    %vm3701 = vcmp.lt.s32.totalorder %v913, 0
    %v3702 = vand.u32 %v913, 2139095040
    %v3703 = vshrl.u32 %v3702, 23
    %v3704 = vsub.s32 %v3703, 127
    %v3705 = vand.u32 2147483647, %v913
    %v3706 = vand.u32 %v3705, 8388607
    %v3707 = vor.u32 %v3706, 8388608
    %v3708 = vsub.s32 0, %v3707
    %v3709 = vadd.s32 %v3704, 1
    %vm3710 = vcmp.gt.s32.totalorder %v3709, 0
    %v3711 = vsel %vm3710, %v3709, 0
    %v3712 = vshrl.u32 %v3711, 5
    %v3713 = vand.u32 %v3711, 31
    %v3714 = vsub.s32 32, %v3713
    %v3715 = vshrl.u32 683565275, %v3714
    %v3716 = vshll.u32 683565275, %v3713
    %v3717 = vshrl.u32 2475754826, %v3714
    %v3718 = vor.u32 %v3716, %v3717
    %v3719 = vshll.u32 2475754826, %v3713
    %v3720 = vshrl.u32 2131351028, %v3714
    %v3721 = vor.u32 %v3719, %v3720
    %v3722 = vshll.u32 2131351028, %v3713
    %v3723 = vshrl.u32 2102212464, %v3714
    %v3724 = vor.u32 %v3722, %v3723
    %v3725 = vshll.u32 2102212464, %v3713
    %v3726 = vshrl.u32 920167782, %v3714
    %v3727 = vor.u32 %v3725, %v3726
    %v3728 = vshll.u32 920167782, %v3713
    %v3729 = vshrl.u32 1326507024, %v3714
    %v3730 = vor.u32 %v3728, %v3729
    %vm3731 = vcmp.lt.s32.totalorder %v3712, 1
    %vm3732 = vcmp.lt.s32.totalorder %v3712, 2
    %vm3733 = vcmp.lt.s32.totalorder %v3712, 3
    %vm3734 = vcmp.lt.s32.totalorder %v3712, 4
    %v3735 = vsel %vm3731, %v3715, %v3718
    %v3736 = vsel %vm3734, %v3724, 2102212464
    %v3737 = vsel %vm3733, %v3721, %v3736
    %v3738 = vsel %vm3732, %v3735, %v3737
    %v3739 = vsel %vm3731, %v3718, %v3721
    %v3740 = vsel %vm3734, %v3727, 920167782
    %v3741 = vsel %vm3733, %v3724, %v3740
    %v3742 = vsel %vm3732, %v3739, %v3741
    %v3743 = vsel %vm3731, %v3721, %v3724
    %v3744 = vsel %vm3734, %v3730, 1326507024
    %v3745 = vsel %vm3733, %v3727, %v3744
    %v3746 = vsel %vm3732, %v3743, %v3745
    %v3747 = vshll.u32 %v3707, 8
    %v3748 = vmul.u32.u64.compose %v3747, %v3746
    %v3749 = vextract.low.u32 %v3748
    %v3750 = vextract.high.u32 %v3748
    %v3751 = vmul.u32.u64.compose %v3747, %v3742
    %v3752 = vextract.low.u32 %v3751
    %v3753 = vextract.high.u32 %v3751
    %v3754 = vmul.u32 %v3747, %v3738
    %v3755 = vadd.s32 %v3750, %v3752
    %vm3756 = vc.u32 %v3750, %v3752
    %v3757 = vadd.s32 %v3753, 1
    %v3758 = vsel %vm3756, %v3757, %v3753
    %v3759 = vadd.s32 %v3754, %v3758
    %v3760 = vadd.s32 %v3759, 536870912
    %v3761 = vshrl.u32 %v3760, 30
    %v3762 = vshll.u32 %v3761, 30
    %v3763 = vsub.s32 %v3759, %v3762
    %vm3764 = vcmp.lt.s32.totalorder %v3763, 0
    %v3765 = vsub.s32 0, %v3763
    %v3766 = vsel %vm3764, %v3765, %v3763
    %v3767 = vclz %v3766
    %v3768 = vsub.s32 %v3767, 2
    %vm3769 = vcmp.gt.s32.totalorder 0, %v3768
    %v3770 = vsel %vm3769, 0, %v3768
    %v3771 = vsub.s32 32, %v3770
    %v3772 = vshll.u32 %v3763, %v3770
    %v3773 = vshrl.u32 %v3755, %v3771
    %v3774 = vor.u32 %v3772, %v3773
    %v3775 = vsub.s32 4294967266, %v3770
    %v3776 = vadd.s32 %v3775, 127
    %v3777 = vshll.u32 %v3776, 23
    %v3778 = vor.u32 4788187, %v3777
    %v3779 = vand.u32 2147483647, %v3778
    %v3781 = vcvt.s32.f32 %v3774
    %v3782 = vmul.f32 %v3781, %v3779
    %v3783 = vxor.u32 %v3782, 2147483648
    %v3784 = vsel %vm3701, %v3783, %v3782
    %v3785 = vsub.s32 4, %v3761
    %v3786 = vsel %vm3701, %v3785, %v3761
    %v3787 = vsel %vm3700, %v913, %v3784
    %v3788 = vsel %vm3700, 0, %v3786
    %v3789 = vcosq.f32.pop %v3787
    %v3790 = vsinq.f32.pop %v3787
    %vm3791 = vweird.f32 %v913
    %v3792 = vand.u32 %v3788, 3
    %vm3793 = vcmp.lt.s32.totalorder %v3792, 2
    %vm3794 = vcmp.eq.s32.totalorder %v3792, 0
    %v3795 = vxor.u32 %v3790, 2147483648
    %v3796 = vsel %vm3794, %v3789, %v3795
    %vm3797 = vcmp.eq.s32.totalorder %v3792, 2
    %v3798 = vxor.u32 %v3789, 2147483648
    %v3799 = vsel %vm3797, %v3798, %v3790
    %v3800 = vsel %vm3793, %v3796, %v3799
    %v3801 = vsel %vm3791, nan, %v3800
    %v3802 = vand.u32 2147483647, %v914
    %vm3803 = vcmp.le.f32.partialorder %v3802, 0.7853982
    %vm3804 = vcmp.lt.s32.totalorder %v914, 0
    %v3805 = vand.u32 %v914, 2139095040
    %v3806 = vshrl.u32 %v3805, 23
    %v3807 = vsub.s32 %v3806, 127
    %v3808 = vand.u32 2147483647, %v914
    %v3809 = vand.u32 %v3808, 8388607
    %v3810 = vor.u32 %v3809, 8388608
    %v3811 = vsub.s32 0, %v3810
    %v3812 = vadd.s32 %v3807, 1
    %vm3813 = vcmp.gt.s32.totalorder %v3812, 0
    %v3814 = vsel %vm3813, %v3812, 0
    %v3815 = vshrl.u32 %v3814, 5
    %v3816 = vand.u32 %v3814, 31
    %v3817 = vsub.s32 32, %v3816
    %v3818 = vshrl.u32 683565275, %v3817
    %v3819 = vshll.u32 683565275, %v3816
    %v3820 = vshrl.u32 2475754826, %v3817
    %v3821 = vor.u32 %v3819, %v3820
    %v3822 = vshll.u32 2475754826, %v3816
    %v3823 = vshrl.u32 2131351028, %v3817
    %v3824 = vor.u32 %v3822, %v3823
    %v3825 = vshll.u32 2131351028, %v3816
    %v3826 = vshrl.u32 2102212464, %v3817
    %v3827 = vor.u32 %v3825, %v3826
    %v3828 = vshll.u32 2102212464, %v3816
    %v3829 = vshrl.u32 920167782, %v3817
    %v3830 = vor.u32 %v3828, %v3829
    %v3831 = vshll.u32 920167782, %v3816
    %v3832 = vshrl.u32 1326507024, %v3817
    %v3833 = vor.u32 %v3831, %v3832
    %vm3834 = vcmp.lt.s32.totalorder %v3815, 1
    %vm3835 = vcmp.lt.s32.totalorder %v3815, 2
    %vm3836 = vcmp.lt.s32.totalorder %v3815, 3
    %vm3837 = vcmp.lt.s32.totalorder %v3815, 4
    %v3838 = vsel %vm3834, %v3818, %v3821
    %v3839 = vsel %vm3837, %v3827, 2102212464
    %v3840 = vsel %vm3836, %v3824, %v3839
    %v3841 = vsel %vm3835, %v3838, %v3840
    %v3842 = vsel %vm3834, %v3821, %v3824
    %v3843 = vsel %vm3837, %v3830, 920167782
    %v3844 = vsel %vm3836, %v3827, %v3843
    %v3845 = vsel %vm3835, %v3842, %v3844
    %v3846 = vsel %vm3834, %v3824, %v3827
    %v3847 = vsel %vm3837, %v3833, 1326507024
    %v3848 = vsel %vm3836, %v3830, %v3847
    %v3849 = vsel %vm3835, %v3846, %v3848
    %v3850 = vshll.u32 %v3810, 8
    %v3851 = vmul.u32.u64.compose %v3850, %v3849
    %v3852 = vextract.low.u32 %v3851
    %v3853 = vextract.high.u32 %v3851
    %v3854 = vmul.u32.u64.compose %v3850, %v3845
    %v3855 = vextract.low.u32 %v3854
    %v3856 = vextract.high.u32 %v3854
    %v3857 = vmul.u32 %v3850, %v3841
    %v3858 = vadd.s32 %v3853, %v3855
    %vm3859 = vc.u32 %v3853, %v3855
    %v3860 = vadd.s32 %v3856, 1
    %v3861 = vsel %vm3859, %v3860, %v3856
    %v3862 = vadd.s32 %v3857, %v3861
    %v3863 = vadd.s32 %v3862, 536870912
    %v3864 = vshrl.u32 %v3863, 30
    %v3865 = vshll.u32 %v3864, 30
    %v3866 = vsub.s32 %v3862, %v3865
    %vm3867 = vcmp.lt.s32.totalorder %v3866, 0
    %v3868 = vsub.s32 0, %v3866
    %v3869 = vsel %vm3867, %v3868, %v3866
    %v3870 = vclz %v3869
    %v3871 = vsub.s32 %v3870, 2
    %vm3872 = vcmp.gt.s32.totalorder 0, %v3871
    %v3873 = vsel %vm3872, 0, %v3871
    %v3874 = vsub.s32 32, %v3873
    %v3875 = vshll.u32 %v3866, %v3873
    %v3876 = vshrl.u32 %v3858, %v3874
    %v3877 = vor.u32 %v3875, %v3876
    %v3878 = vsub.s32 4294967266, %v3873
    %v3879 = vadd.s32 %v3878, 127
    %v3880 = vshll.u32 %v3879, 23
    %v3881 = vor.u32 4788187, %v3880
    %v3882 = vand.u32 2147483647, %v3881
    %v3884 = vcvt.s32.f32 %v3877
    %v3885 = vmul.f32 %v3884, %v3882
    %v3886 = vxor.u32 %v3885, 2147483648
    %v3887 = vsel %vm3804, %v3886, %v3885
    %v3888 = vsub.s32 4, %v3864
    %v3889 = vsel %vm3804, %v3888, %v3864
    %v3890 = vsel %vm3803, %v914, %v3887
    %v3891 = vsel %vm3803, 0, %v3889
    %v3892 = vcosq.f32.pop %v3890
    %v3893 = vsinq.f32.pop %v3890
    %vm3894 = vweird.f32 %v914
    %v3895 = vand.u32 %v3891, 3
    %vm3896 = vcmp.lt.s32.totalorder %v3895, 2
    %vm3897 = vcmp.eq.s32.totalorder %v3895, 0
    %v3898 = vxor.u32 %v3893, 2147483648
    %v3899 = vsel %vm3897, %v3892, %v3898
    %vm3900 = vcmp.eq.s32.totalorder %v3895, 2
    %v3901 = vxor.u32 %v3892, 2147483648
    %v3902 = vsel %vm3900, %v3901, %v3893
    %v3903 = vsel %vm3896, %v3899, %v3902
    %v3904 = vsel %vm3894, nan, %v3903
    %v3905 = vand.u32 2147483647, %v915
    %vm3906 = vcmp.le.f32.partialorder %v3905, 0.7853982
    %vm3907 = vcmp.lt.s32.totalorder %v915, 0
    %v3908 = vand.u32 %v915, 2139095040
    %v3909 = vshrl.u32 %v3908, 23
    %v3910 = vsub.s32 %v3909, 127
    %v3911 = vand.u32 2147483647, %v915
    %v3912 = vand.u32 %v3911, 8388607
    %v3913 = vor.u32 %v3912, 8388608
    %v3914 = vsub.s32 0, %v3913
    %v3915 = vadd.s32 %v3910, 1
    %vm3916 = vcmp.gt.s32.totalorder %v3915, 0
    %v3917 = vsel %vm3916, %v3915, 0
    %v3918 = vshrl.u32 %v3917, 5
    %v3919 = vand.u32 %v3917, 31
    %v3920 = vsub.s32 32, %v3919
    %v3921 = vshrl.u32 683565275, %v3920
    %v3922 = vshll.u32 683565275, %v3919
    %v3923 = vshrl.u32 2475754826, %v3920
    %v3924 = vor.u32 %v3922, %v3923
    %v3925 = vshll.u32 2475754826, %v3919
    %v3926 = vshrl.u32 2131351028, %v3920
    %v3927 = vor.u32 %v3925, %v3926
    %v3928 = vshll.u32 2131351028, %v3919
    %v3929 = vshrl.u32 2102212464, %v3920
    %v3930 = vor.u32 %v3928, %v3929
    %v3931 = vshll.u32 2102212464, %v3919
    %v3932 = vshrl.u32 920167782, %v3920
    %v3933 = vor.u32 %v3931, %v3932
    %v3934 = vshll.u32 920167782, %v3919
    %v3935 = vshrl.u32 1326507024, %v3920
    %v3936 = vor.u32 %v3934, %v3935
    %vm3937 = vcmp.lt.s32.totalorder %v3918, 1
    %vm3938 = vcmp.lt.s32.totalorder %v3918, 2
    %vm3939 = vcmp.lt.s32.totalorder %v3918, 3
    %vm3940 = vcmp.lt.s32.totalorder %v3918, 4
    %v3941 = vsel %vm3937, %v3921, %v3924
    %v3942 = vsel %vm3940, %v3930, 2102212464
    %v3943 = vsel %vm3939, %v3927, %v3942
    %v3944 = vsel %vm3938, %v3941, %v3943
    %v3945 = vsel %vm3937, %v3924, %v3927
    %v3946 = vsel %vm3940, %v3933, 920167782
    %v3947 = vsel %vm3939, %v3930, %v3946
    %v3948 = vsel %vm3938, %v3945, %v3947
    %v3949 = vsel %vm3937, %v3927, %v3930
    %v3950 = vsel %vm3940, %v3936, 1326507024
    %v3951 = vsel %vm3939, %v3933, %v3950
    %v3952 = vsel %vm3938, %v3949, %v3951
    %v3953 = vshll.u32 %v3913, 8
    %v3954 = vmul.u32.u64.compose %v3953, %v3952
    %v3955 = vextract.low.u32 %v3954
    %v3956 = vextract.high.u32 %v3954
    %v3957 = vmul.u32.u64.compose %v3953, %v3948
    %v3958 = vextract.low.u32 %v3957
    %v3959 = vextract.high.u32 %v3957
    %v3960 = vmul.u32 %v3953, %v3944
    %v3961 = vadd.s32 %v3956, %v3958
    %vm3962 = vc.u32 %v3956, %v3958
    %v3963 = vadd.s32 %v3959, 1
    %v3964 = vsel %vm3962, %v3963, %v3959
    %v3965 = vadd.s32 %v3960, %v3964
    %v3966 = vadd.s32 %v3965, 536870912
    %v3967 = vshrl.u32 %v3966, 30
    %v3968 = vshll.u32 %v3967, 30
    %v3969 = vsub.s32 %v3965, %v3968
    %vm3970 = vcmp.lt.s32.totalorder %v3969, 0
    %v3971 = vsub.s32 0, %v3969
    %v3972 = vsel %vm3970, %v3971, %v3969
    %v3973 = vclz %v3972
    %v3974 = vsub.s32 %v3973, 2
    %vm3975 = vcmp.gt.s32.totalorder 0, %v3974
    %v3976 = vsel %vm3975, 0, %v3974
    %v3977 = vsub.s32 32, %v3976
    %v3978 = vshll.u32 %v3969, %v3976
    %v3979 = vshrl.u32 %v3961, %v3977
    %v3980 = vor.u32 %v3978, %v3979
    %v3981 = vsub.s32 4294967266, %v3976
    %v3982 = vadd.s32 %v3981, 127
    %v3983 = vshll.u32 %v3982, 23
    %v3984 = vor.u32 4788187, %v3983
    %v3985 = vand.u32 2147483647, %v3984
    %v3987 = vcvt.s32.f32 %v3980
    %v3988 = vmul.f32 %v3987, %v3985
    %v3989 = vxor.u32 %v3988, 2147483648
    %v3990 = vsel %vm3907, %v3989, %v3988
    %v3991 = vsub.s32 4, %v3967
    %v3992 = vsel %vm3907, %v3991, %v3967
    %v3993 = vsel %vm3906, %v915, %v3990
    %v3994 = vsel %vm3906, 0, %v3992
    %v3995 = vcosq.f32.pop %v3993
    %v3996 = vsinq.f32.pop %v3993
    %vm3997 = vweird.f32 %v915
    %v3998 = vand.u32 %v3994, 3
    %vm3999 = vcmp.lt.s32.totalorder %v3998, 2
    %vm4000 = vcmp.eq.s32.totalorder %v3998, 0
    %v4001 = vxor.u32 %v3996, 2147483648
    %v4002 = vsel %vm4000, %v3995, %v4001
    %vm4003 = vcmp.eq.s32.totalorder %v3998, 2
    %v4004 = vxor.u32 %v3995, 2147483648
    %v4005 = vsel %vm4003, %v4004, %v3996
    %v4006 = vsel %vm3999, %v4002, %v4005
    %v4007 = vsel %vm3997, nan, %v4006
    %v4008 = vand.u32 2147483647, %v916
    %vm4009 = vcmp.le.f32.partialorder %v4008, 0.7853982
    %vm4010 = vcmp.lt.s32.totalorder %v916, 0
    %v4011 = vand.u32 %v916, 2139095040
    %v4012 = vshrl.u32 %v4011, 23
    %v4013 = vsub.s32 %v4012, 127
    %v4014 = vand.u32 2147483647, %v916
    %v4015 = vand.u32 %v4014, 8388607
    %v4016 = vor.u32 %v4015, 8388608
    %v4017 = vsub.s32 0, %v4016
    %v4018 = vadd.s32 %v4013, 1
    %vm4019 = vcmp.gt.s32.totalorder %v4018, 0
    %v4020 = vsel %vm4019, %v4018, 0
    %v4021 = vshrl.u32 %v4020, 5
    %v4022 = vand.u32 %v4020, 31
    %v4023 = vsub.s32 32, %v4022
    %v4024 = vshrl.u32 683565275, %v4023
    %v4025 = vshll.u32 683565275, %v4022
    %v4026 = vshrl.u32 2475754826, %v4023
    %v4027 = vor.u32 %v4025, %v4026
    %v4028 = vshll.u32 2475754826, %v4022
    %v4029 = vshrl.u32 2131351028, %v4023
    %v4030 = vor.u32 %v4028, %v4029
    %v4031 = vshll.u32 2131351028, %v4022
    %v4032 = vshrl.u32 2102212464, %v4023
    %v4033 = vor.u32 %v4031, %v4032
    %v4034 = vshll.u32 2102212464, %v4022
    %v4035 = vshrl.u32 920167782, %v4023
    %v4036 = vor.u32 %v4034, %v4035
    %v4037 = vshll.u32 920167782, %v4022
    %v4038 = vshrl.u32 1326507024, %v4023
    %v4039 = vor.u32 %v4037, %v4038
    %vm4040 = vcmp.lt.s32.totalorder %v4021, 1
    %vm4041 = vcmp.lt.s32.totalorder %v4021, 2
    %vm4042 = vcmp.lt.s32.totalorder %v4021, 3
    %vm4043 = vcmp.lt.s32.totalorder %v4021, 4
    %v4044 = vsel %vm4040, %v4024, %v4027
    %v4045 = vsel %vm4043, %v4033, 2102212464
    %v4046 = vsel %vm4042, %v4030, %v4045
    %v4047 = vsel %vm4041, %v4044, %v4046
    %v4048 = vsel %vm4040, %v4027, %v4030
    %v4049 = vsel %vm4043, %v4036, 920167782
    %v4050 = vsel %vm4042, %v4033, %v4049
    %v4051 = vsel %vm4041, %v4048, %v4050
    %v4052 = vsel %vm4040, %v4030, %v4033
    %v4053 = vsel %vm4043, %v4039, 1326507024
    %v4054 = vsel %vm4042, %v4036, %v4053
    %v4055 = vsel %vm4041, %v4052, %v4054
    %v4056 = vshll.u32 %v4016, 8
    %v4057 = vmul.u32.u64.compose %v4056, %v4055
    %v4058 = vextract.low.u32 %v4057
    %v4059 = vextract.high.u32 %v4057
    %v4060 = vmul.u32.u64.compose %v4056, %v4051
    %v4061 = vextract.low.u32 %v4060
    %v4062 = vextract.high.u32 %v4060
    %v4063 = vmul.u32 %v4056, %v4047
    %v4064 = vadd.s32 %v4059, %v4061
    %vm4065 = vc.u32 %v4059, %v4061
    %v4066 = vadd.s32 %v4062, 1
    %v4067 = vsel %vm4065, %v4066, %v4062
    %v4068 = vadd.s32 %v4063, %v4067
    %v4069 = vadd.s32 %v4068, 536870912
    %v4070 = vshrl.u32 %v4069, 30
    %v4071 = vshll.u32 %v4070, 30
    %v4072 = vsub.s32 %v4068, %v4071
    %vm4073 = vcmp.lt.s32.totalorder %v4072, 0
    %v4074 = vsub.s32 0, %v4072
    %v4075 = vsel %vm4073, %v4074, %v4072
    %v4076 = vclz %v4075
    %v4077 = vsub.s32 %v4076, 2
    %vm4078 = vcmp.gt.s32.totalorder 0, %v4077
    %v4079 = vsel %vm4078, 0, %v4077
    %v4080 = vsub.s32 32, %v4079
    %v4081 = vshll.u32 %v4072, %v4079
    %v4082 = vshrl.u32 %v4064, %v4080
    %v4083 = vor.u32 %v4081, %v4082
    %v4084 = vsub.s32 4294967266, %v4079
    %v4085 = vadd.s32 %v4084, 127
    %v4086 = vshll.u32 %v4085, 23
    %v4087 = vor.u32 4788187, %v4086
    %v4088 = vand.u32 2147483647, %v4087
    %v4090 = vcvt.s32.f32 %v4083
    %v4091 = vmul.f32 %v4090, %v4088
    %v4092 = vxor.u32 %v4091, 2147483648
    %v4093 = vsel %vm4010, %v4092, %v4091
    %v4094 = vsub.s32 4, %v4070
    %v4095 = vsel %vm4010, %v4094, %v4070
    %v4096 = vsel %vm4009, %v916, %v4093
    %v4097 = vsel %vm4009, 0, %v4095
    %v4098 = vcosq.f32.pop %v4096
    %v4099 = vsinq.f32.pop %v4096
    %vm4100 = vweird.f32 %v916
    %v4101 = vand.u32 %v4097, 3
    %vm4102 = vcmp.lt.s32.totalorder %v4101, 2
    %vm4103 = vcmp.eq.s32.totalorder %v4101, 0
    %v4104 = vxor.u32 %v4099, 2147483648
    %v4105 = vsel %vm4103, %v4098, %v4104
    %vm4106 = vcmp.eq.s32.totalorder %v4101, 2
    %v4107 = vxor.u32 %v4098, 2147483648
    %v4108 = vsel %vm4106, %v4107, %v4099
    %v4109 = vsel %vm4102, %v4105, %v4108
    %v4110 = vsel %vm4100, nan, %v4109
    %v4111 = vand.u32 2147483647, %v917
    %vm4112 = vcmp.le.f32.partialorder %v4111, 0.7853982
    %vm4113 = vcmp.lt.s32.totalorder %v917, 0
    %v4114 = vand.u32 %v917, 2139095040
    %v4115 = vshrl.u32 %v4114, 23
    %v4116 = vsub.s32 %v4115, 127
    %v4117 = vand.u32 2147483647, %v917
    %v4118 = vand.u32 %v4117, 8388607
    %v4119 = vor.u32 %v4118, 8388608
    %v4120 = vsub.s32 0, %v4119
    %v4121 = vadd.s32 %v4116, 1
    %vm4122 = vcmp.gt.s32.totalorder %v4121, 0
    %v4123 = vsel %vm4122, %v4121, 0
    %v4124 = vshrl.u32 %v4123, 5
    %v4125 = vand.u32 %v4123, 31
    %v4126 = vsub.s32 32, %v4125
    %v4127 = vshrl.u32 683565275, %v4126
    %v4128 = vshll.u32 683565275, %v4125
    %v4129 = vshrl.u32 2475754826, %v4126
    %v4130 = vor.u32 %v4128, %v4129
    %v4131 = vshll.u32 2475754826, %v4125
    %v4132 = vshrl.u32 2131351028, %v4126
    %v4133 = vor.u32 %v4131, %v4132
    %v4134 = vshll.u32 2131351028, %v4125
    %v4135 = vshrl.u32 2102212464, %v4126
    %v4136 = vor.u32 %v4134, %v4135
    %v4137 = vshll.u32 2102212464, %v4125
    %v4138 = vshrl.u32 920167782, %v4126
    %v4139 = vor.u32 %v4137, %v4138
    %v4140 = vshll.u32 920167782, %v4125
    %v4141 = vshrl.u32 1326507024, %v4126
    %v4142 = vor.u32 %v4140, %v4141
    %vm4143 = vcmp.lt.s32.totalorder %v4124, 1
    %vm4144 = vcmp.lt.s32.totalorder %v4124, 2
    %vm4145 = vcmp.lt.s32.totalorder %v4124, 3
    %vm4146 = vcmp.lt.s32.totalorder %v4124, 4
    %v4147 = vsel %vm4143, %v4127, %v4130
    %v4148 = vsel %vm4146, %v4136, 2102212464
    %v4149 = vsel %vm4145, %v4133, %v4148
    %v4150 = vsel %vm4144, %v4147, %v4149
    %v4151 = vsel %vm4143, %v4130, %v4133
    %v4152 = vsel %vm4146, %v4139, 920167782
    %v4153 = vsel %vm4145, %v4136, %v4152
    %v4154 = vsel %vm4144, %v4151, %v4153
    %v4155 = vsel %vm4143, %v4133, %v4136
    %v4156 = vsel %vm4146, %v4142, 1326507024
    %v4157 = vsel %vm4145, %v4139, %v4156
    %v4158 = vsel %vm4144, %v4155, %v4157
    %v4159 = vshll.u32 %v4119, 8
    %v4160 = vmul.u32.u64.compose %v4159, %v4158
    %v4161 = vextract.low.u32 %v4160
    %v4162 = vextract.high.u32 %v4160
    %v4163 = vmul.u32.u64.compose %v4159, %v4154
    %v4164 = vextract.low.u32 %v4163
    %v4165 = vextract.high.u32 %v4163
    %v4166 = vmul.u32 %v4159, %v4150
    %v4167 = vadd.s32 %v4162, %v4164
    %vm4168 = vc.u32 %v4162, %v4164
    %v4169 = vadd.s32 %v4165, 1
    %v4170 = vsel %vm4168, %v4169, %v4165
    %v4171 = vadd.s32 %v4166, %v4170
    %v4172 = vadd.s32 %v4171, 536870912
    %v4173 = vshrl.u32 %v4172, 30
    %v4174 = vshll.u32 %v4173, 30
    %v4175 = vsub.s32 %v4171, %v4174
    %vm4176 = vcmp.lt.s32.totalorder %v4175, 0
    %v4177 = vsub.s32 0, %v4175
    %v4178 = vsel %vm4176, %v4177, %v4175
    %v4179 = vclz %v4178
    %v4180 = vsub.s32 %v4179, 2
    %vm4181 = vcmp.gt.s32.totalorder 0, %v4180
    %v4182 = vsel %vm4181, 0, %v4180
    %v4183 = vsub.s32 32, %v4182
    %v4184 = vshll.u32 %v4175, %v4182
    %v4185 = vshrl.u32 %v4167, %v4183
    %v4186 = vor.u32 %v4184, %v4185
    %v4187 = vsub.s32 4294967266, %v4182
    %v4188 = vadd.s32 %v4187, 127
    %v4189 = vshll.u32 %v4188, 23
    %v4190 = vor.u32 4788187, %v4189
    %v4191 = vand.u32 2147483647, %v4190
    %v4193 = vcvt.s32.f32 %v4186
    %v4194 = vmul.f32 %v4193, %v4191
    %v4195 = vxor.u32 %v4194, 2147483648
    %v4196 = vsel %vm4113, %v4195, %v4194
    %v4197 = vsub.s32 4, %v4173
    %v4198 = vsel %vm4113, %v4197, %v4173
    %v4199 = vsel %vm4112, %v917, %v4196
    %v4200 = vsel %vm4112, 0, %v4198
    %v4201 = vcosq.f32.pop %v4199
    %v4202 = vsinq.f32.pop %v4199
    %vm4203 = vweird.f32 %v917
    %v4204 = vand.u32 %v4200, 3
    %vm4205 = vcmp.lt.s32.totalorder %v4204, 2
    %vm4206 = vcmp.eq.s32.totalorder %v4204, 0
    %v4207 = vxor.u32 %v4202, 2147483648
    %v4208 = vsel %vm4206, %v4201, %v4207
    %vm4209 = vcmp.eq.s32.totalorder %v4204, 2
    %v4210 = vxor.u32 %v4201, 2147483648
    %v4211 = vsel %vm4209, %v4210, %v4202
    %v4212 = vsel %vm4205, %v4208, %v4211
    %v4213 = vsel %vm4203, nan, %v4212
    %4246 = vrot.lane.b32.xlu0 %v1020, 64
    %v4247 = vpop.permute.xlu0 %4246
    %4248 = vrot.lane.b32.xlu0 %v1123, 64
    %v4249 = vpop.permute.xlu0 %4248
    %4250 = vrot.lane.b32.xlu0 %v1226, 64
    %v4251 = vpop.permute.xlu0 %4250
    %4252 = vrot.lane.b32.xlu0 %v1329, 64
    %v4253 = vpop.permute.xlu0 %4252
    %4254 = vrot.lane.b32.xlu0 %v1432, 64
    %v4255 = vpop.permute.xlu0 %4254
    %4256 = vrot.lane.b32.xlu0 %v1535, 64
    %v4257 = vpop.permute.xlu0 %4256
    %4258 = vrot.lane.b32.xlu0 %v1638, 64
    %v4259 = vpop.permute.xlu0 %4258
    %4260 = vrot.lane.b32.xlu0 %v1741, 64
    %v4261 = vpop.permute.xlu0 %4260
    %4262 = vrot.lane.b32.xlu0 %v1844, 64
    %v4263 = vpop.permute.xlu0 %4262
    %4264 = vrot.lane.b32.xlu0 %v1947, 64
    %v4265 = vpop.permute.xlu0 %4264
    %4266 = vrot.lane.b32.xlu0 %v2050, 64
    %v4267 = vpop.permute.xlu0 %4266
    %4268 = vrot.lane.b32.xlu0 %v2153, 64
    %v4269 = vpop.permute.xlu0 %4268
    %4270 = vrot.lane.b32.xlu0 %v2256, 64
    %v4271 = vpop.permute.xlu0 %4270
    %4272 = vrot.lane.b32.xlu0 %v2359, 64
    %v4273 = vpop.permute.xlu0 %4272
    %4274 = vrot.lane.b32.xlu0 %v2462, 64
    %v4275 = vpop.permute.xlu0 %4274
    %4276 = vrot.lane.b32.xlu0 %v2565, 64
    %v4277 = vpop.permute.xlu0 %4276
    %4278 = vrot.lane.b32.xlu0 %v2668, 64
    %v4279 = vpop.permute.xlu0 %4278
    %4280 = vrot.lane.b32.xlu0 %v2771, 64
    %v4281 = vpop.permute.xlu0 %4280
    %4282 = vrot.lane.b32.xlu0 %v2874, 64
    %v4283 = vpop.permute.xlu0 %4282
    %4284 = vrot.lane.b32.xlu0 %v2977, 64
    %v4285 = vpop.permute.xlu0 %4284
    %4286 = vrot.lane.b32.xlu0 %v3080, 64
    %v4287 = vpop.permute.xlu0 %4286
    %4288 = vrot.lane.b32.xlu0 %v3183, 64
    %v4289 = vpop.permute.xlu0 %4288
    %4290 = vrot.lane.b32.xlu0 %v3286, 64
    %v4291 = vpop.permute.xlu0 %4290
    %4292 = vrot.lane.b32.xlu0 %v3389, 64
    %v4293 = vpop.permute.xlu0 %4292
    %4294 = vrot.lane.b32.xlu0 %v3492, 64
    %v4295 = vpop.permute.xlu0 %4294
    %4296 = vrot.lane.b32.xlu0 %v3595, 64
    %v4297 = vpop.permute.xlu0 %4296
    %4298 = vrot.lane.b32.xlu0 %v3698, 64
    %v4299 = vpop.permute.xlu0 %4298
    %4300 = vrot.lane.b32.xlu0 %v3801, 64
    %v4301 = vpop.permute.xlu0 %4300
    %4302 = vrot.lane.b32.xlu0 %v3904, 64
    %v4303 = vpop.permute.xlu0 %4302
    %4304 = vrot.lane.b32.xlu0 %v4007, 64
    %v4305 = vpop.permute.xlu0 %4304
    %4306 = vrot.lane.b32.xlu0 %v4110, 64
    %v4307 = vpop.permute.xlu0 %4306
    %4308 = vrot.lane.b32.xlu0 %v4213, 64
    %v4309 = vpop.permute.xlu0 %4308
    %v4342 = vmul.f32 %v822, %v4247
    %v4343 = vmul.f32 %v824, %v4249
    %v4344 = vmul.f32 %v826, %v4251
    %v4345 = vmul.f32 %v828, %v4253
    %v4346 = vmul.f32 %v830, %v4255
    %v4347 = vmul.f32 %v832, %v4257
    %v4348 = vmul.f32 %v834, %v4259
    %v4349 = vmul.f32 %v836, %v4261
    %v4350 = vmul.f32 %v838, %v4263
    %v4351 = vmul.f32 %v840, %v4265
    %v4352 = vmul.f32 %v842, %v4267
    %v4353 = vmul.f32 %v844, %v4269
    %v4354 = vmul.f32 %v846, %v4271
    %v4355 = vmul.f32 %v848, %v4273
    %v4356 = vmul.f32 %v850, %v4275
    %v4357 = vmul.f32 %v852, %v4277
    %v4358 = vmul.f32 %v854, %v4279
    %v4359 = vmul.f32 %v856, %v4281
    %v4360 = vmul.f32 %v858, %v4283
    %v4361 = vmul.f32 %v860, %v4285
    %v4362 = vmul.f32 %v862, %v4287
    %v4363 = vmul.f32 %v864, %v4289
    %v4364 = vmul.f32 %v866, %v4291
    %v4365 = vmul.f32 %v868, %v4293
    %v4366 = vmul.f32 %v870, %v4295
    %v4367 = vmul.f32 %v872, %v4297
    %v4368 = vmul.f32 %v874, %v4299
    %v4369 = vmul.f32 %v876, %v4301
    %v4370 = vmul.f32 %v878, %v4303
    %v4371 = vmul.f32 %v880, %v4305
    %v4372 = vmul.f32 %v882, %v4307
    %v4373 = vmul.f32 %v884, %v4309
    %v4374 = vand.u32 2147483647, %v886
    %vm4375 = vcmp.le.f32.partialorder %v4374, 0.7853982
    %vm4376 = vcmp.lt.s32.totalorder %v886, 0
    %v4377 = vand.u32 %v886, 2139095040
    %v4378 = vshrl.u32 %v4377, 23
    %v4379 = vsub.s32 %v4378, 127
    %v4380 = vand.u32 2147483647, %v886
    %v4381 = vand.u32 %v4380, 8388607
    %v4382 = vor.u32 %v4381, 8388608
    %v4383 = vsub.s32 0, %v4382
    %v4384 = vadd.s32 %v4379, 1
    %vm4385 = vcmp.gt.s32.totalorder %v4384, 0
    %v4386 = vsel %vm4385, %v4384, 0
    %v4387 = vshrl.u32 %v4386, 5
    %v4388 = vand.u32 %v4386, 31
    %v4389 = vsub.s32 32, %v4388
    %v4390 = vshrl.u32 683565275, %v4389
    %v4391 = vshll.u32 683565275, %v4388
    %v4392 = vshrl.u32 2475754826, %v4389
    %v4393 = vor.u32 %v4391, %v4392
    %v4394 = vshll.u32 2475754826, %v4388
    %v4395 = vshrl.u32 2131351028, %v4389
    %v4396 = vor.u32 %v4394, %v4395
    %v4397 = vshll.u32 2131351028, %v4388
    %v4398 = vshrl.u32 2102212464, %v4389
    %v4399 = vor.u32 %v4397, %v4398
    %v4400 = vshll.u32 2102212464, %v4388
    %v4401 = vshrl.u32 920167782, %v4389
    %v4402 = vor.u32 %v4400, %v4401
    %v4403 = vshll.u32 920167782, %v4388
    %v4404 = vshrl.u32 1326507024, %v4389
    %v4405 = vor.u32 %v4403, %v4404
    %vm4406 = vcmp.lt.s32.totalorder %v4387, 1
    %vm4407 = vcmp.lt.s32.totalorder %v4387, 2
    %vm4408 = vcmp.lt.s32.totalorder %v4387, 3
    %vm4409 = vcmp.lt.s32.totalorder %v4387, 4
    %v4410 = vsel %vm4406, %v4390, %v4393
    %v4411 = vsel %vm4409, %v4399, 2102212464
    %v4412 = vsel %vm4408, %v4396, %v4411
    %v4413 = vsel %vm4407, %v4410, %v4412
    %v4414 = vsel %vm4406, %v4393, %v4396
    %v4415 = vsel %vm4409, %v4402, 920167782
    %v4416 = vsel %vm4408, %v4399, %v4415
    %v4417 = vsel %vm4407, %v4414, %v4416
    %v4418 = vsel %vm4406, %v4396, %v4399
    %v4419 = vsel %vm4409, %v4405, 1326507024
    %v4420 = vsel %vm4408, %v4402, %v4419
    %v4421 = vsel %vm4407, %v4418, %v4420
    %v4422 = vshll.u32 %v4382, 8
    %v4423 = vmul.u32.u64.compose %v4422, %v4421
    %v4424 = vextract.low.u32 %v4423
    %v4425 = vextract.high.u32 %v4423
    %v4426 = vmul.u32.u64.compose %v4422, %v4417
    %v4427 = vextract.low.u32 %v4426
    %v4428 = vextract.high.u32 %v4426
    %v4429 = vmul.u32 %v4422, %v4413
    %v4430 = vadd.s32 %v4425, %v4427
    %vm4431 = vc.u32 %v4425, %v4427
    %v4432 = vadd.s32 %v4428, 1
    %v4433 = vsel %vm4431, %v4432, %v4428
    %v4434 = vadd.s32 %v4429, %v4433
    %v4435 = vadd.s32 %v4434, 536870912
    %v4436 = vshrl.u32 %v4435, 30
    %v4437 = vshll.u32 %v4436, 30
    %v4438 = vsub.s32 %v4434, %v4437
    %vm4439 = vcmp.lt.s32.totalorder %v4438, 0
    %v4440 = vsub.s32 0, %v4438
    %v4441 = vsel %vm4439, %v4440, %v4438
    %v4442 = vclz %v4441
    %v4443 = vsub.s32 %v4442, 2
    %vm4444 = vcmp.gt.s32.totalorder 0, %v4443
    %v4445 = vsel %vm4444, 0, %v4443
    %v4446 = vsub.s32 32, %v4445
    %v4447 = vshll.u32 %v4438, %v4445
    %v4448 = vshrl.u32 %v4430, %v4446
    %v4449 = vor.u32 %v4447, %v4448
    %v4450 = vsub.s32 4294967266, %v4445
    %v4451 = vadd.s32 %v4450, 127
    %v4452 = vshll.u32 %v4451, 23
    %v4453 = vor.u32 4788187, %v4452
    %v4454 = vand.u32 2147483647, %v4453
    %v4456 = vcvt.s32.f32 %v4449
    %v4457 = vmul.f32 %v4456, %v4454
    %v4458 = vxor.u32 %v4457, 2147483648
    %v4459 = vsel %vm4376, %v4458, %v4457
    %v4460 = vsub.s32 4, %v4436
    %v4461 = vsel %vm4376, %v4460, %v4436
    %v4462 = vsel %vm4375, %v886, %v4459
    %v4463 = vsel %vm4375, 0, %v4461
    %v4464 = vcosq.f32.pop %v4462
    %v4465 = vsinq.f32.pop %v4462
    %vm4466 = vweird.f32 %v886
    %v4467 = vadd.s32 %v4463, 3
    %v4468 = vand.u32 %v4467, 3
    %vm4469 = vcmp.lt.s32.totalorder %v4468, 2
    %vm4470 = vcmp.eq.s32.totalorder %v4468, 0
    %v4471 = vxor.u32 %v4465, 2147483648
    %v4472 = vsel %vm4470, %v4464, %v4471
    %vm4473 = vcmp.eq.s32.totalorder %v4468, 2
    %v4474 = vxor.u32 %v4464, 2147483648
    %v4475 = vsel %vm4473, %v4474, %v4465
    %v4476 = vsel %vm4469, %v4472, %v4475
    %v4477 = vsel %vm4466, nan, %v4476
    %v4478 = vand.u32 2147483647, %v887
    %vm4479 = vcmp.le.f32.partialorder %v4478, 0.7853982
    %vm4480 = vcmp.lt.s32.totalorder %v887, 0
    %v4481 = vand.u32 %v887, 2139095040
    %v4482 = vshrl.u32 %v4481, 23
    %v4483 = vsub.s32 %v4482, 127
    %v4484 = vand.u32 2147483647, %v887
    %v4485 = vand.u32 %v4484, 8388607
    %v4486 = vor.u32 %v4485, 8388608
    %v4487 = vsub.s32 0, %v4486
    %v4488 = vadd.s32 %v4483, 1
    %vm4489 = vcmp.gt.s32.totalorder %v4488, 0
    %v4490 = vsel %vm4489, %v4488, 0
    %v4491 = vshrl.u32 %v4490, 5
    %v4492 = vand.u32 %v4490, 31
    %v4493 = vsub.s32 32, %v4492
    %v4494 = vshrl.u32 683565275, %v4493
    %v4495 = vshll.u32 683565275, %v4492
    %v4496 = vshrl.u32 2475754826, %v4493
    %v4497 = vor.u32 %v4495, %v4496
    %v4498 = vshll.u32 2475754826, %v4492
    %v4499 = vshrl.u32 2131351028, %v4493
    %v4500 = vor.u32 %v4498, %v4499
    %v4501 = vshll.u32 2131351028, %v4492
    %v4502 = vshrl.u32 2102212464, %v4493
    %v4503 = vor.u32 %v4501, %v4502
    %v4504 = vshll.u32 2102212464, %v4492
    %v4505 = vshrl.u32 920167782, %v4493
    %v4506 = vor.u32 %v4504, %v4505
    %v4507 = vshll.u32 920167782, %v4492
    %v4508 = vshrl.u32 1326507024, %v4493
    %v4509 = vor.u32 %v4507, %v4508
    %vm4510 = vcmp.lt.s32.totalorder %v4491, 1
    %vm4511 = vcmp.lt.s32.totalorder %v4491, 2
    %vm4512 = vcmp.lt.s32.totalorder %v4491, 3
    %vm4513 = vcmp.lt.s32.totalorder %v4491, 4
    %v4514 = vsel %vm4510, %v4494, %v4497
    %v4515 = vsel %vm4513, %v4503, 2102212464
    %v4516 = vsel %vm4512, %v4500, %v4515
    %v4517 = vsel %vm4511, %v4514, %v4516
    %v4518 = vsel %vm4510, %v4497, %v4500
    %v4519 = vsel %vm4513, %v4506, 920167782
    %v4520 = vsel %vm4512, %v4503, %v4519
    %v4521 = vsel %vm4511, %v4518, %v4520
    %v4522 = vsel %vm4510, %v4500, %v4503
    %v4523 = vsel %vm4513, %v4509, 1326507024
    %v4524 = vsel %vm4512, %v4506, %v4523
    %v4525 = vsel %vm4511, %v4522, %v4524
    %v4526 = vshll.u32 %v4486, 8
    %v4527 = vmul.u32.u64.compose %v4526, %v4525
    %v4528 = vextract.low.u32 %v4527
    %v4529 = vextract.high.u32 %v4527
    %v4530 = vmul.u32.u64.compose %v4526, %v4521
    %v4531 = vextract.low.u32 %v4530
    %v4532 = vextract.high.u32 %v4530
    %v4533 = vmul.u32 %v4526, %v4517
    %v4534 = vadd.s32 %v4529, %v4531
    %vm4535 = vc.u32 %v4529, %v4531
    %v4536 = vadd.s32 %v4532, 1
    %v4537 = vsel %vm4535, %v4536, %v4532
    %v4538 = vadd.s32 %v4533, %v4537
    %v4539 = vadd.s32 %v4538, 536870912
    %v4540 = vshrl.u32 %v4539, 30
    %v4541 = vshll.u32 %v4540, 30
    %v4542 = vsub.s32 %v4538, %v4541
    %vm4543 = vcmp.lt.s32.totalorder %v4542, 0
    %v4544 = vsub.s32 0, %v4542
    %v4545 = vsel %vm4543, %v4544, %v4542
    %v4546 = vclz %v4545
    %v4547 = vsub.s32 %v4546, 2
    %vm4548 = vcmp.gt.s32.totalorder 0, %v4547
    %v4549 = vsel %vm4548, 0, %v4547
    %v4550 = vsub.s32 32, %v4549
    %v4551 = vshll.u32 %v4542, %v4549
    %v4552 = vshrl.u32 %v4534, %v4550
    %v4553 = vor.u32 %v4551, %v4552
    %v4554 = vsub.s32 4294967266, %v4549
    %v4555 = vadd.s32 %v4554, 127
    %v4556 = vshll.u32 %v4555, 23
    %v4557 = vor.u32 4788187, %v4556
    %v4558 = vand.u32 2147483647, %v4557
    %v4560 = vcvt.s32.f32 %v4553
    %v4561 = vmul.f32 %v4560, %v4558
    %v4562 = vxor.u32 %v4561, 2147483648
    %v4563 = vsel %vm4480, %v4562, %v4561
    %v4564 = vsub.s32 4, %v4540
    %v4565 = vsel %vm4480, %v4564, %v4540
    %v4566 = vsel %vm4479, %v887, %v4563
    %v4567 = vsel %vm4479, 0, %v4565
    %v4568 = vcosq.f32.pop %v4566
    %v4569 = vsinq.f32.pop %v4566
    %vm4570 = vweird.f32 %v887
    %v4571 = vadd.s32 %v4567, 3
    %v4572 = vand.u32 %v4571, 3
    %vm4573 = vcmp.lt.s32.totalorder %v4572, 2
    %vm4574 = vcmp.eq.s32.totalorder %v4572, 0
    %v4575 = vxor.u32 %v4569, 2147483648
    %v4576 = vsel %vm4574, %v4568, %v4575
    %vm4577 = vcmp.eq.s32.totalorder %v4572, 2
    %v4578 = vxor.u32 %v4568, 2147483648
    %v4579 = vsel %vm4577, %v4578, %v4569
    %v4580 = vsel %vm4573, %v4576, %v4579
    %v4581 = vsel %vm4570, nan, %v4580
    %v4582 = vand.u32 2147483647, %v888
    %vm4583 = vcmp.le.f32.partialorder %v4582, 0.7853982
    %vm4584 = vcmp.lt.s32.totalorder %v888, 0
    %v4585 = vand.u32 %v888, 2139095040
    %v4586 = vshrl.u32 %v4585, 23
    %v4587 = vsub.s32 %v4586, 127
    %v4588 = vand.u32 2147483647, %v888
    %v4589 = vand.u32 %v4588, 8388607
    %v4590 = vor.u32 %v4589, 8388608
    %v4591 = vsub.s32 0, %v4590
    %v4592 = vadd.s32 %v4587, 1
    %vm4593 = vcmp.gt.s32.totalorder %v4592, 0
    %v4594 = vsel %vm4593, %v4592, 0
    %v4595 = vshrl.u32 %v4594, 5
    %v4596 = vand.u32 %v4594, 31
    %v4597 = vsub.s32 32, %v4596
    %v4598 = vshrl.u32 683565275, %v4597
    %v4599 = vshll.u32 683565275, %v4596
    %v4600 = vshrl.u32 2475754826, %v4597
    %v4601 = vor.u32 %v4599, %v4600
    %v4602 = vshll.u32 2475754826, %v4596
    %v4603 = vshrl.u32 2131351028, %v4597
    %v4604 = vor.u32 %v4602, %v4603
    %v4605 = vshll.u32 2131351028, %v4596
    %v4606 = vshrl.u32 2102212464, %v4597
    %v4607 = vor.u32 %v4605, %v4606
    %v4608 = vshll.u32 2102212464, %v4596
    %v4609 = vshrl.u32 920167782, %v4597
    %v4610 = vor.u32 %v4608, %v4609
    %v4611 = vshll.u32 920167782, %v4596
    %v4612 = vshrl.u32 1326507024, %v4597
    %v4613 = vor.u32 %v4611, %v4612
    %vm4614 = vcmp.lt.s32.totalorder %v4595, 1
    %vm4615 = vcmp.lt.s32.totalorder %v4595, 2
    %vm4616 = vcmp.lt.s32.totalorder %v4595, 3
    %vm4617 = vcmp.lt.s32.totalorder %v4595, 4
    %v4618 = vsel %vm4614, %v4598, %v4601
    %v4619 = vsel %vm4617, %v4607, 2102212464
    %v4620 = vsel %vm4616, %v4604, %v4619
    %v4621 = vsel %vm4615, %v4618, %v4620
    %v4622 = vsel %vm4614, %v4601, %v4604
    %v4623 = vsel %vm4617, %v4610, 920167782
    %v4624 = vsel %vm4616, %v4607, %v4623
    %v4625 = vsel %vm4615, %v4622, %v4624
    %v4626 = vsel %vm4614, %v4604, %v4607
    %v4627 = vsel %vm4617, %v4613, 1326507024
    %v4628 = vsel %vm4616, %v4610, %v4627
    %v4629 = vsel %vm4615, %v4626, %v4628
    %v4630 = vshll.u32 %v4590, 8
    %v4631 = vmul.u32.u64.compose %v4630, %v4629
    %v4632 = vextract.low.u32 %v4631
    %v4633 = vextract.high.u32 %v4631
    %v4634 = vmul.u32.u64.compose %v4630, %v4625
    %v4635 = vextract.low.u32 %v4634
    %v4636 = vextract.high.u32 %v4634
    %v4637 = vmul.u32 %v4630, %v4621
    %v4638 = vadd.s32 %v4633, %v4635
    %vm4639 = vc.u32 %v4633, %v4635
    %v4640 = vadd.s32 %v4636, 1
    %v4641 = vsel %vm4639, %v4640, %v4636
    %v4642 = vadd.s32 %v4637, %v4641
    %v4643 = vadd.s32 %v4642, 536870912
    %v4644 = vshrl.u32 %v4643, 30
    %v4645 = vshll.u32 %v4644, 30
    %v4646 = vsub.s32 %v4642, %v4645
    %vm4647 = vcmp.lt.s32.totalorder %v4646, 0
    %v4648 = vsub.s32 0, %v4646
    %v4649 = vsel %vm4647, %v4648, %v4646
    %v4650 = vclz %v4649
    %v4651 = vsub.s32 %v4650, 2
    %vm4652 = vcmp.gt.s32.totalorder 0, %v4651
    %v4653 = vsel %vm4652, 0, %v4651
    %v4654 = vsub.s32 32, %v4653
    %v4655 = vshll.u32 %v4646, %v4653
    %v4656 = vshrl.u32 %v4638, %v4654
    %v4657 = vor.u32 %v4655, %v4656
    %v4658 = vsub.s32 4294967266, %v4653
    %v4659 = vadd.s32 %v4658, 127
    %v4660 = vshll.u32 %v4659, 23
    %v4661 = vor.u32 4788187, %v4660
    %v4662 = vand.u32 2147483647, %v4661
    %v4664 = vcvt.s32.f32 %v4657
    %v4665 = vmul.f32 %v4664, %v4662
    %v4666 = vxor.u32 %v4665, 2147483648
    %v4667 = vsel %vm4584, %v4666, %v4665
    %v4668 = vsub.s32 4, %v4644
    %v4669 = vsel %vm4584, %v4668, %v4644
    %v4670 = vsel %vm4583, %v888, %v4667
    %v4671 = vsel %vm4583, 0, %v4669
    %v4672 = vcosq.f32.pop %v4670
    %v4673 = vsinq.f32.pop %v4670
    %vm4674 = vweird.f32 %v888
    %v4675 = vadd.s32 %v4671, 3
    %v4676 = vand.u32 %v4675, 3
    %vm4677 = vcmp.lt.s32.totalorder %v4676, 2
    %vm4678 = vcmp.eq.s32.totalorder %v4676, 0
    %v4679 = vxor.u32 %v4673, 2147483648
    %v4680 = vsel %vm4678, %v4672, %v4679
    %vm4681 = vcmp.eq.s32.totalorder %v4676, 2
    %v4682 = vxor.u32 %v4672, 2147483648
    %v4683 = vsel %vm4681, %v4682, %v4673
    %v4684 = vsel %vm4677, %v4680, %v4683
    %v4685 = vsel %vm4674, nan, %v4684
    %v4686 = vand.u32 2147483647, %v889
    %vm4687 = vcmp.le.f32.partialorder %v4686, 0.7853982
    %vm4688 = vcmp.lt.s32.totalorder %v889, 0
    %v4689 = vand.u32 %v889, 2139095040
    %v4690 = vshrl.u32 %v4689, 23
    %v4691 = vsub.s32 %v4690, 127
    %v4692 = vand.u32 2147483647, %v889
    %v4693 = vand.u32 %v4692, 8388607
    %v4694 = vor.u32 %v4693, 8388608
    %v4695 = vsub.s32 0, %v4694
    %v4696 = vadd.s32 %v4691, 1
    %vm4697 = vcmp.gt.s32.totalorder %v4696, 0
    %v4698 = vsel %vm4697, %v4696, 0
    %v4699 = vshrl.u32 %v4698, 5
    %v4700 = vand.u32 %v4698, 31
    %v4701 = vsub.s32 32, %v4700
    %v4702 = vshrl.u32 683565275, %v4701
    %v4703 = vshll.u32 683565275, %v4700
    %v4704 = vshrl.u32 2475754826, %v4701
    %v4705 = vor.u32 %v4703, %v4704
    %v4706 = vshll.u32 2475754826, %v4700
    %v4707 = vshrl.u32 2131351028, %v4701
    %v4708 = vor.u32 %v4706, %v4707
    %v4709 = vshll.u32 2131351028, %v4700
    %v4710 = vshrl.u32 2102212464, %v4701
    %v4711 = vor.u32 %v4709, %v4710
    %v4712 = vshll.u32 2102212464, %v4700
    %v4713 = vshrl.u32 920167782, %v4701
    %v4714 = vor.u32 %v4712, %v4713
    %v4715 = vshll.u32 920167782, %v4700
    %v4716 = vshrl.u32 1326507024, %v4701
    %v4717 = vor.u32 %v4715, %v4716
    %vm4718 = vcmp.lt.s32.totalorder %v4699, 1
    %vm4719 = vcmp.lt.s32.totalorder %v4699, 2
    %vm4720 = vcmp.lt.s32.totalorder %v4699, 3
    %vm4721 = vcmp.lt.s32.totalorder %v4699, 4
    %v4722 = vsel %vm4718, %v4702, %v4705
    %v4723 = vsel %vm4721, %v4711, 2102212464
    %v4724 = vsel %vm4720, %v4708, %v4723
    %v4725 = vsel %vm4719, %v4722, %v4724
    %v4726 = vsel %vm4718, %v4705, %v4708
    %v4727 = vsel %vm4721, %v4714, 920167782
    %v4728 = vsel %vm4720, %v4711, %v4727
    %v4729 = vsel %vm4719, %v4726, %v4728
    %v4730 = vsel %vm4718, %v4708, %v4711
    %v4731 = vsel %vm4721, %v4717, 1326507024
    %v4732 = vsel %vm4720, %v4714, %v4731
    %v4733 = vsel %vm4719, %v4730, %v4732
    %v4734 = vshll.u32 %v4694, 8
    %v4735 = vmul.u32.u64.compose %v4734, %v4733
    %v4736 = vextract.low.u32 %v4735
    %v4737 = vextract.high.u32 %v4735
    %v4738 = vmul.u32.u64.compose %v4734, %v4729
    %v4739 = vextract.low.u32 %v4738
    %v4740 = vextract.high.u32 %v4738
    %v4741 = vmul.u32 %v4734, %v4725
    %v4742 = vadd.s32 %v4737, %v4739
    %vm4743 = vc.u32 %v4737, %v4739
    %v4744 = vadd.s32 %v4740, 1
    %v4745 = vsel %vm4743, %v4744, %v4740
    %v4746 = vadd.s32 %v4741, %v4745
    %v4747 = vadd.s32 %v4746, 536870912
    %v4748 = vshrl.u32 %v4747, 30
    %v4749 = vshll.u32 %v4748, 30
    %v4750 = vsub.s32 %v4746, %v4749
    %vm4751 = vcmp.lt.s32.totalorder %v4750, 0
    %v4752 = vsub.s32 0, %v4750
    %v4753 = vsel %vm4751, %v4752, %v4750
    %v4754 = vclz %v4753
    %v4755 = vsub.s32 %v4754, 2
    %vm4756 = vcmp.gt.s32.totalorder 0, %v4755
    %v4757 = vsel %vm4756, 0, %v4755
    %v4758 = vsub.s32 32, %v4757
    %v4759 = vshll.u32 %v4750, %v4757
    %v4760 = vshrl.u32 %v4742, %v4758
    %v4761 = vor.u32 %v4759, %v4760
    %v4762 = vsub.s32 4294967266, %v4757
    %v4763 = vadd.s32 %v4762, 127
    %v4764 = vshll.u32 %v4763, 23
    %v4765 = vor.u32 4788187, %v4764
    %v4766 = vand.u32 2147483647, %v4765
    %v4768 = vcvt.s32.f32 %v4761
    %v4769 = vmul.f32 %v4768, %v4766
    %v4770 = vxor.u32 %v4769, 2147483648
    %v4771 = vsel %vm4688, %v4770, %v4769
    %v4772 = vsub.s32 4, %v4748
    %v4773 = vsel %vm4688, %v4772, %v4748
    %v4774 = vsel %vm4687, %v889, %v4771
    %v4775 = vsel %vm4687, 0, %v4773
    %v4776 = vcosq.f32.pop %v4774
    %v4777 = vsinq.f32.pop %v4774
    %vm4778 = vweird.f32 %v889
    %v4779 = vadd.s32 %v4775, 3
    %v4780 = vand.u32 %v4779, 3
    %vm4781 = vcmp.lt.s32.totalorder %v4780, 2
    %vm4782 = vcmp.eq.s32.totalorder %v4780, 0
    %v4783 = vxor.u32 %v4777, 2147483648
    %v4784 = vsel %vm4782, %v4776, %v4783
    %vm4785 = vcmp.eq.s32.totalorder %v4780, 2
    %v4786 = vxor.u32 %v4776, 2147483648
    %v4787 = vsel %vm4785, %v4786, %v4777
    %v4788 = vsel %vm4781, %v4784, %v4787
    %v4789 = vsel %vm4778, nan, %v4788
    %v4790 = vand.u32 2147483647, %v890
    %vm4791 = vcmp.le.f32.partialorder %v4790, 0.7853982
    %vm4792 = vcmp.lt.s32.totalorder %v890, 0
    %v4793 = vand.u32 %v890, 2139095040
    %v4794 = vshrl.u32 %v4793, 23
    %v4795 = vsub.s32 %v4794, 127
    %v4796 = vand.u32 2147483647, %v890
    %v4797 = vand.u32 %v4796, 8388607
    %v4798 = vor.u32 %v4797, 8388608
    %v4799 = vsub.s32 0, %v4798
    %v4800 = vadd.s32 %v4795, 1
    %vm4801 = vcmp.gt.s32.totalorder %v4800, 0
    %v4802 = vsel %vm4801, %v4800, 0
    %v4803 = vshrl.u32 %v4802, 5
    %v4804 = vand.u32 %v4802, 31
    %v4805 = vsub.s32 32, %v4804
    %v4806 = vshrl.u32 683565275, %v4805
    %v4807 = vshll.u32 683565275, %v4804
    %v4808 = vshrl.u32 2475754826, %v4805
    %v4809 = vor.u32 %v4807, %v4808
    %v4810 = vshll.u32 2475754826, %v4804
    %v4811 = vshrl.u32 2131351028, %v4805
    %v4812 = vor.u32 %v4810, %v4811
    %v4813 = vshll.u32 2131351028, %v4804
    %v4814 = vshrl.u32 2102212464, %v4805
    %v4815 = vor.u32 %v4813, %v4814
    %v4816 = vshll.u32 2102212464, %v4804
    %v4817 = vshrl.u32 920167782, %v4805
    %v4818 = vor.u32 %v4816, %v4817
    %v4819 = vshll.u32 920167782, %v4804
    %v4820 = vshrl.u32 1326507024, %v4805
    %v4821 = vor.u32 %v4819, %v4820
    %vm4822 = vcmp.lt.s32.totalorder %v4803, 1
    %vm4823 = vcmp.lt.s32.totalorder %v4803, 2
    %vm4824 = vcmp.lt.s32.totalorder %v4803, 3
    %vm4825 = vcmp.lt.s32.totalorder %v4803, 4
    %v4826 = vsel %vm4822, %v4806, %v4809
    %v4827 = vsel %vm4825, %v4815, 2102212464
    %v4828 = vsel %vm4824, %v4812, %v4827
    %v4829 = vsel %vm4823, %v4826, %v4828
    %v4830 = vsel %vm4822, %v4809, %v4812
    %v4831 = vsel %vm4825, %v4818, 920167782
    %v4832 = vsel %vm4824, %v4815, %v4831
    %v4833 = vsel %vm4823, %v4830, %v4832
    %v4834 = vsel %vm4822, %v4812, %v4815
    %v4835 = vsel %vm4825, %v4821, 1326507024
    %v4836 = vsel %vm4824, %v4818, %v4835
    %v4837 = vsel %vm4823, %v4834, %v4836
    %v4838 = vshll.u32 %v4798, 8
    %v4839 = vmul.u32.u64.compose %v4838, %v4837
    %v4840 = vextract.low.u32 %v4839
    %v4841 = vextract.high.u32 %v4839
    %v4842 = vmul.u32.u64.compose %v4838, %v4833
    %v4843 = vextract.low.u32 %v4842
    %v4844 = vextract.high.u32 %v4842
    %v4845 = vmul.u32 %v4838, %v4829
    %v4846 = vadd.s32 %v4841, %v4843
    %vm4847 = vc.u32 %v4841, %v4843
    %v4848 = vadd.s32 %v4844, 1
    %v4849 = vsel %vm4847, %v4848, %v4844
    %v4850 = vadd.s32 %v4845, %v4849
    %v4851 = vadd.s32 %v4850, 536870912
    %v4852 = vshrl.u32 %v4851, 30
    %v4853 = vshll.u32 %v4852, 30
    %v4854 = vsub.s32 %v4850, %v4853
    %vm4855 = vcmp.lt.s32.totalorder %v4854, 0
    %v4856 = vsub.s32 0, %v4854
    %v4857 = vsel %vm4855, %v4856, %v4854
    %v4858 = vclz %v4857
    %v4859 = vsub.s32 %v4858, 2
    %vm4860 = vcmp.gt.s32.totalorder 0, %v4859
    %v4861 = vsel %vm4860, 0, %v4859
    %v4862 = vsub.s32 32, %v4861
    %v4863 = vshll.u32 %v4854, %v4861
    %v4864 = vshrl.u32 %v4846, %v4862
    %v4865 = vor.u32 %v4863, %v4864
    %v4866 = vsub.s32 4294967266, %v4861
    %v4867 = vadd.s32 %v4866, 127
    %v4868 = vshll.u32 %v4867, 23
    %v4869 = vor.u32 4788187, %v4868
    %v4870 = vand.u32 2147483647, %v4869
    %v4872 = vcvt.s32.f32 %v4865
    %v4873 = vmul.f32 %v4872, %v4870
    %v4874 = vxor.u32 %v4873, 2147483648
    %v4875 = vsel %vm4792, %v4874, %v4873
    %v4876 = vsub.s32 4, %v4852
    %v4877 = vsel %vm4792, %v4876, %v4852
    %v4878 = vsel %vm4791, %v890, %v4875
    %v4879 = vsel %vm4791, 0, %v4877
    %v4880 = vcosq.f32.pop %v4878
    %v4881 = vsinq.f32.pop %v4878
    %vm4882 = vweird.f32 %v890
    %v4883 = vadd.s32 %v4879, 3
    %v4884 = vand.u32 %v4883, 3
    %vm4885 = vcmp.lt.s32.totalorder %v4884, 2
    %vm4886 = vcmp.eq.s32.totalorder %v4884, 0
    %v4887 = vxor.u32 %v4881, 2147483648
    %v4888 = vsel %vm4886, %v4880, %v4887
    %vm4889 = vcmp.eq.s32.totalorder %v4884, 2
    %v4890 = vxor.u32 %v4880, 2147483648
    %v4891 = vsel %vm4889, %v4890, %v4881
    %v4892 = vsel %vm4885, %v4888, %v4891
    %v4893 = vsel %vm4882, nan, %v4892
    %v4894 = vand.u32 2147483647, %v891
    %vm4895 = vcmp.le.f32.partialorder %v4894, 0.7853982
    %vm4896 = vcmp.lt.s32.totalorder %v891, 0
    %v4897 = vand.u32 %v891, 2139095040
    %v4898 = vshrl.u32 %v4897, 23
    %v4899 = vsub.s32 %v4898, 127
    %v4900 = vand.u32 2147483647, %v891
    %v4901 = vand.u32 %v4900, 8388607
    %v4902 = vor.u32 %v4901, 8388608
    %v4903 = vsub.s32 0, %v4902
    %v4904 = vadd.s32 %v4899, 1
    %vm4905 = vcmp.gt.s32.totalorder %v4904, 0
    %v4906 = vsel %vm4905, %v4904, 0
    %v4907 = vshrl.u32 %v4906, 5
    %v4908 = vand.u32 %v4906, 31
    %v4909 = vsub.s32 32, %v4908
    %v4910 = vshrl.u32 683565275, %v4909
    %v4911 = vshll.u32 683565275, %v4908
    %v4912 = vshrl.u32 2475754826, %v4909
    %v4913 = vor.u32 %v4911, %v4912
    %v4914 = vshll.u32 2475754826, %v4908
    %v4915 = vshrl.u32 2131351028, %v4909
    %v4916 = vor.u32 %v4914, %v4915
    %v4917 = vshll.u32 2131351028, %v4908
    %v4918 = vshrl.u32 2102212464, %v4909
    %v4919 = vor.u32 %v4917, %v4918
    %v4920 = vshll.u32 2102212464, %v4908
    %v4921 = vshrl.u32 920167782, %v4909
    %v4922 = vor.u32 %v4920, %v4921
    %v4923 = vshll.u32 920167782, %v4908
    %v4924 = vshrl.u32 1326507024, %v4909
    %v4925 = vor.u32 %v4923, %v4924
    %vm4926 = vcmp.lt.s32.totalorder %v4907, 1
    %vm4927 = vcmp.lt.s32.totalorder %v4907, 2
    %vm4928 = vcmp.lt.s32.totalorder %v4907, 3
    %vm4929 = vcmp.lt.s32.totalorder %v4907, 4
    %v4930 = vsel %vm4926, %v4910, %v4913
    %v4931 = vsel %vm4929, %v4919, 2102212464
    %v4932 = vsel %vm4928, %v4916, %v4931
    %v4933 = vsel %vm4927, %v4930, %v4932
    %v4934 = vsel %vm4926, %v4913, %v4916
    %v4935 = vsel %vm4929, %v4922, 920167782
    %v4936 = vsel %vm4928, %v4919, %v4935
    %v4937 = vsel %vm4927, %v4934, %v4936
    %v4938 = vsel %vm4926, %v4916, %v4919
    %v4939 = vsel %vm4929, %v4925, 1326507024
    %v4940 = vsel %vm4928, %v4922, %v4939
    %v4941 = vsel %vm4927, %v4938, %v4940
    %v4942 = vshll.u32 %v4902, 8
    %v4943 = vmul.u32.u64.compose %v4942, %v4941
    %v4944 = vextract.low.u32 %v4943
    %v4945 = vextract.high.u32 %v4943
    %v4946 = vmul.u32.u64.compose %v4942, %v4937
    %v4947 = vextract.low.u32 %v4946
    %v4948 = vextract.high.u32 %v4946
    %v4949 = vmul.u32 %v4942, %v4933
    %v4950 = vadd.s32 %v4945, %v4947
    %vm4951 = vc.u32 %v4945, %v4947
    %v4952 = vadd.s32 %v4948, 1
    %v4953 = vsel %vm4951, %v4952, %v4948
    %v4954 = vadd.s32 %v4949, %v4953
    %v4955 = vadd.s32 %v4954, 536870912
    %v4956 = vshrl.u32 %v4955, 30
    %v4957 = vshll.u32 %v4956, 30
    %v4958 = vsub.s32 %v4954, %v4957
    %vm4959 = vcmp.lt.s32.totalorder %v4958, 0
    %v4960 = vsub.s32 0, %v4958
    %v4961 = vsel %vm4959, %v4960, %v4958
    %v4962 = vclz %v4961
    %v4963 = vsub.s32 %v4962, 2
    %vm4964 = vcmp.gt.s32.totalorder 0, %v4963
    %v4965 = vsel %vm4964, 0, %v4963
    %v4966 = vsub.s32 32, %v4965
    %v4967 = vshll.u32 %v4958, %v4965
    %v4968 = vshrl.u32 %v4950, %v4966
    %v4969 = vor.u32 %v4967, %v4968
    %v4970 = vsub.s32 4294967266, %v4965
    %v4971 = vadd.s32 %v4970, 127
    %v4972 = vshll.u32 %v4971, 23
    %v4973 = vor.u32 4788187, %v4972
    %v4974 = vand.u32 2147483647, %v4973
    %v4976 = vcvt.s32.f32 %v4969
    %v4977 = vmul.f32 %v4976, %v4974
    %v4978 = vxor.u32 %v4977, 2147483648
    %v4979 = vsel %vm4896, %v4978, %v4977
    %v4980 = vsub.s32 4, %v4956
    %v4981 = vsel %vm4896, %v4980, %v4956
    %v4982 = vsel %vm4895, %v891, %v4979
    %v4983 = vsel %vm4895, 0, %v4981
    %v4984 = vcosq.f32.pop %v4982
    %v4985 = vsinq.f32.pop %v4982
    %vm4986 = vweird.f32 %v891
    %v4987 = vadd.s32 %v4983, 3
    %v4988 = vand.u32 %v4987, 3
    %vm4989 = vcmp.lt.s32.totalorder %v4988, 2
    %vm4990 = vcmp.eq.s32.totalorder %v4988, 0
    %v4991 = vxor.u32 %v4985, 2147483648
    %v4992 = vsel %vm4990, %v4984, %v4991
    %vm4993 = vcmp.eq.s32.totalorder %v4988, 2
    %v4994 = vxor.u32 %v4984, 2147483648
    %v4995 = vsel %vm4993, %v4994, %v4985
    %v4996 = vsel %vm4989, %v4992, %v4995
    %v4997 = vsel %vm4986, nan, %v4996
    %v4998 = vand.u32 2147483647, %v892
    %vm4999 = vcmp.le.f32.partialorder %v4998, 0.7853982
    %vm5000 = vcmp.lt.s32.totalorder %v892, 0
    %v5001 = vand.u32 %v892, 2139095040
    %v5002 = vshrl.u32 %v5001, 23
    %v5003 = vsub.s32 %v5002, 127
    %v5004 = vand.u32 2147483647, %v892
    %v5005 = vand.u32 %v5004, 8388607
    %v5006 = vor.u32 %v5005, 8388608
    %v5007 = vsub.s32 0, %v5006
    %v5008 = vadd.s32 %v5003, 1
    %vm5009 = vcmp.gt.s32.totalorder %v5008, 0
    %v5010 = vsel %vm5009, %v5008, 0
    %v5011 = vshrl.u32 %v5010, 5
    %v5012 = vand.u32 %v5010, 31
    %v5013 = vsub.s32 32, %v5012
    %v5014 = vshrl.u32 683565275, %v5013
    %v5015 = vshll.u32 683565275, %v5012
    %v5016 = vshrl.u32 2475754826, %v5013
    %v5017 = vor.u32 %v5015, %v5016
    %v5018 = vshll.u32 2475754826, %v5012
    %v5019 = vshrl.u32 2131351028, %v5013
    %v5020 = vor.u32 %v5018, %v5019
    %v5021 = vshll.u32 2131351028, %v5012
    %v5022 = vshrl.u32 2102212464, %v5013
    %v5023 = vor.u32 %v5021, %v5022
    %v5024 = vshll.u32 2102212464, %v5012
    %v5025 = vshrl.u32 920167782, %v5013
    %v5026 = vor.u32 %v5024, %v5025
    %v5027 = vshll.u32 920167782, %v5012
    %v5028 = vshrl.u32 1326507024, %v5013
    %v5029 = vor.u32 %v5027, %v5028
    %vm5030 = vcmp.lt.s32.totalorder %v5011, 1
    %vm5031 = vcmp.lt.s32.totalorder %v5011, 2
    %vm5032 = vcmp.lt.s32.totalorder %v5011, 3
    %vm5033 = vcmp.lt.s32.totalorder %v5011, 4
    %v5034 = vsel %vm5030, %v5014, %v5017
    %v5035 = vsel %vm5033, %v5023, 2102212464
    %v5036 = vsel %vm5032, %v5020, %v5035
    %v5037 = vsel %vm5031, %v5034, %v5036
    %v5038 = vsel %vm5030, %v5017, %v5020
    %v5039 = vsel %vm5033, %v5026, 920167782
    %v5040 = vsel %vm5032, %v5023, %v5039
    %v5041 = vsel %vm5031, %v5038, %v5040
    %v5042 = vsel %vm5030, %v5020, %v5023
    %v5043 = vsel %vm5033, %v5029, 1326507024
    %v5044 = vsel %vm5032, %v5026, %v5043
    %v5045 = vsel %vm5031, %v5042, %v5044
    %v5046 = vshll.u32 %v5006, 8
    %v5047 = vmul.u32.u64.compose %v5046, %v5045
    %v5048 = vextract.low.u32 %v5047
    %v5049 = vextract.high.u32 %v5047
    %v5050 = vmul.u32.u64.compose %v5046, %v5041
    %v5051 = vextract.low.u32 %v5050
    %v5052 = vextract.high.u32 %v5050
    %v5053 = vmul.u32 %v5046, %v5037
    %v5054 = vadd.s32 %v5049, %v5051
    %vm5055 = vc.u32 %v5049, %v5051
    %v5056 = vadd.s32 %v5052, 1
    %v5057 = vsel %vm5055, %v5056, %v5052
    %v5058 = vadd.s32 %v5053, %v5057
    %v5059 = vadd.s32 %v5058, 536870912
    %v5060 = vshrl.u32 %v5059, 30
    %v5061 = vshll.u32 %v5060, 30
    %v5062 = vsub.s32 %v5058, %v5061
    %vm5063 = vcmp.lt.s32.totalorder %v5062, 0
    %v5064 = vsub.s32 0, %v5062
    %v5065 = vsel %vm5063, %v5064, %v5062
    %v5066 = vclz %v5065
    %v5067 = vsub.s32 %v5066, 2
    %vm5068 = vcmp.gt.s32.totalorder 0, %v5067
    %v5069 = vsel %vm5068, 0, %v5067
    %v5070 = vsub.s32 32, %v5069
    %v5071 = vshll.u32 %v5062, %v5069
    %v5072 = vshrl.u32 %v5054, %v5070
    %v5073 = vor.u32 %v5071, %v5072
    %v5074 = vsub.s32 4294967266, %v5069
    %v5075 = vadd.s32 %v5074, 127
    %v5076 = vshll.u32 %v5075, 23
    %v5077 = vor.u32 4788187, %v5076
    %v5078 = vand.u32 2147483647, %v5077
    %v5080 = vcvt.s32.f32 %v5073
    %v5081 = vmul.f32 %v5080, %v5078
    %v5082 = vxor.u32 %v5081, 2147483648
    %v5083 = vsel %vm5000, %v5082, %v5081
    %v5084 = vsub.s32 4, %v5060
    %v5085 = vsel %vm5000, %v5084, %v5060
    %v5086 = vsel %vm4999, %v892, %v5083
    %v5087 = vsel %vm4999, 0, %v5085
    %v5088 = vcosq.f32.pop %v5086
    %v5089 = vsinq.f32.pop %v5086
    %vm5090 = vweird.f32 %v892
    %v5091 = vadd.s32 %v5087, 3
    %v5092 = vand.u32 %v5091, 3
    %vm5093 = vcmp.lt.s32.totalorder %v5092, 2
    %vm5094 = vcmp.eq.s32.totalorder %v5092, 0
    %v5095 = vxor.u32 %v5089, 2147483648
    %v5096 = vsel %vm5094, %v5088, %v5095
    %vm5097 = vcmp.eq.s32.totalorder %v5092, 2
    %v5098 = vxor.u32 %v5088, 2147483648
    %v5099 = vsel %vm5097, %v5098, %v5089
    %v5100 = vsel %vm5093, %v5096, %v5099
    %v5101 = vsel %vm5090, nan, %v5100
    %v5102 = vand.u32 2147483647, %v893
    %vm5103 = vcmp.le.f32.partialorder %v5102, 0.7853982
    %vm5104 = vcmp.lt.s32.totalorder %v893, 0
    %v5105 = vand.u32 %v893, 2139095040
    %v5106 = vshrl.u32 %v5105, 23
    %v5107 = vsub.s32 %v5106, 127
    %v5108 = vand.u32 2147483647, %v893
    %v5109 = vand.u32 %v5108, 8388607
    %v5110 = vor.u32 %v5109, 8388608
    %v5111 = vsub.s32 0, %v5110
    %v5112 = vadd.s32 %v5107, 1
    %vm5113 = vcmp.gt.s32.totalorder %v5112, 0
    %v5114 = vsel %vm5113, %v5112, 0
    %v5115 = vshrl.u32 %v5114, 5
    %v5116 = vand.u32 %v5114, 31
    %v5117 = vsub.s32 32, %v5116
    %v5118 = vshrl.u32 683565275, %v5117
    %v5119 = vshll.u32 683565275, %v5116
    %v5120 = vshrl.u32 2475754826, %v5117
    %v5121 = vor.u32 %v5119, %v5120
    %v5122 = vshll.u32 2475754826, %v5116
    %v5123 = vshrl.u32 2131351028, %v5117
    %v5124 = vor.u32 %v5122, %v5123
    %v5125 = vshll.u32 2131351028, %v5116
    %v5126 = vshrl.u32 2102212464, %v5117
    %v5127 = vor.u32 %v5125, %v5126
    %v5128 = vshll.u32 2102212464, %v5116
    %v5129 = vshrl.u32 920167782, %v5117
    %v5130 = vor.u32 %v5128, %v5129
    %v5131 = vshll.u32 920167782, %v5116
    %v5132 = vshrl.u32 1326507024, %v5117
    %v5133 = vor.u32 %v5131, %v5132
    %vm5134 = vcmp.lt.s32.totalorder %v5115, 1
    %vm5135 = vcmp.lt.s32.totalorder %v5115, 2
    %vm5136 = vcmp.lt.s32.totalorder %v5115, 3
    %vm5137 = vcmp.lt.s32.totalorder %v5115, 4
    %v5138 = vsel %vm5134, %v5118, %v5121
    %v5139 = vsel %vm5137, %v5127, 2102212464
    %v5140 = vsel %vm5136, %v5124, %v5139
    %v5141 = vsel %vm5135, %v5138, %v5140
    %v5142 = vsel %vm5134, %v5121, %v5124
    %v5143 = vsel %vm5137, %v5130, 920167782
    %v5144 = vsel %vm5136, %v5127, %v5143
    %v5145 = vsel %vm5135, %v5142, %v5144
    %v5146 = vsel %vm5134, %v5124, %v5127
    %v5147 = vsel %vm5137, %v5133, 1326507024
    %v5148 = vsel %vm5136, %v5130, %v5147
    %v5149 = vsel %vm5135, %v5146, %v5148
    %v5150 = vshll.u32 %v5110, 8
    %v5151 = vmul.u32.u64.compose %v5150, %v5149
    %v5152 = vextract.low.u32 %v5151
    %v5153 = vextract.high.u32 %v5151
    %v5154 = vmul.u32.u64.compose %v5150, %v5145
    %v5155 = vextract.low.u32 %v5154
    %v5156 = vextract.high.u32 %v5154
    %v5157 = vmul.u32 %v5150, %v5141
    %v5158 = vadd.s32 %v5153, %v5155
    %vm5159 = vc.u32 %v5153, %v5155
    %v5160 = vadd.s32 %v5156, 1
    %v5161 = vsel %vm5159, %v5160, %v5156
    %v5162 = vadd.s32 %v5157, %v5161
    %v5163 = vadd.s32 %v5162, 536870912
    %v5164 = vshrl.u32 %v5163, 30
    %v5165 = vshll.u32 %v5164, 30
    %v5166 = vsub.s32 %v5162, %v5165
    %vm5167 = vcmp.lt.s32.totalorder %v5166, 0
    %v5168 = vsub.s32 0, %v5166
    %v5169 = vsel %vm5167, %v5168, %v5166
    %v5170 = vclz %v5169
    %v5171 = vsub.s32 %v5170, 2
    %vm5172 = vcmp.gt.s32.totalorder 0, %v5171
    %v5173 = vsel %vm5172, 0, %v5171
    %v5174 = vsub.s32 32, %v5173
    %v5175 = vshll.u32 %v5166, %v5173
    %v5176 = vshrl.u32 %v5158, %v5174
    %v5177 = vor.u32 %v5175, %v5176
    %v5178 = vsub.s32 4294967266, %v5173
    %v5179 = vadd.s32 %v5178, 127
    %v5180 = vshll.u32 %v5179, 23
    %v5181 = vor.u32 4788187, %v5180
    %v5182 = vand.u32 2147483647, %v5181
    %v5184 = vcvt.s32.f32 %v5177
    %v5185 = vmul.f32 %v5184, %v5182
    %v5186 = vxor.u32 %v5185, 2147483648
    %v5187 = vsel %vm5104, %v5186, %v5185
    %v5188 = vsub.s32 4, %v5164
    %v5189 = vsel %vm5104, %v5188, %v5164
    %v5190 = vsel %vm5103, %v893, %v5187
    %v5191 = vsel %vm5103, 0, %v5189
    %v5192 = vcosq.f32.pop %v5190
    %v5193 = vsinq.f32.pop %v5190
    %vm5194 = vweird.f32 %v893
    %v5195 = vadd.s32 %v5191, 3
    %v5196 = vand.u32 %v5195, 3
    %vm5197 = vcmp.lt.s32.totalorder %v5196, 2
    %vm5198 = vcmp.eq.s32.totalorder %v5196, 0
    %v5199 = vxor.u32 %v5193, 2147483648
    %v5200 = vsel %vm5198, %v5192, %v5199
    %vm5201 = vcmp.eq.s32.totalorder %v5196, 2
    %v5202 = vxor.u32 %v5192, 2147483648
    %v5203 = vsel %vm5201, %v5202, %v5193
    %v5204 = vsel %vm5197, %v5200, %v5203
    %v5205 = vsel %vm5194, nan, %v5204
    %v5206 = vand.u32 2147483647, %v894
    %vm5207 = vcmp.le.f32.partialorder %v5206, 0.7853982
    %vm5208 = vcmp.lt.s32.totalorder %v894, 0
    %v5209 = vand.u32 %v894, 2139095040
    %v5210 = vshrl.u32 %v5209, 23
    %v5211 = vsub.s32 %v5210, 127
    %v5212 = vand.u32 2147483647, %v894
    %v5213 = vand.u32 %v5212, 8388607
    %v5214 = vor.u32 %v5213, 8388608
    %v5215 = vsub.s32 0, %v5214
    %v5216 = vadd.s32 %v5211, 1
    %vm5217 = vcmp.gt.s32.totalorder %v5216, 0
    %v5218 = vsel %vm5217, %v5216, 0
    %v5219 = vshrl.u32 %v5218, 5
    %v5220 = vand.u32 %v5218, 31
    %v5221 = vsub.s32 32, %v5220
    %v5222 = vshrl.u32 683565275, %v5221
    %v5223 = vshll.u32 683565275, %v5220
    %v5224 = vshrl.u32 2475754826, %v5221
    %v5225 = vor.u32 %v5223, %v5224
    %v5226 = vshll.u32 2475754826, %v5220
    %v5227 = vshrl.u32 2131351028, %v5221
    %v5228 = vor.u32 %v5226, %v5227
    %v5229 = vshll.u32 2131351028, %v5220
    %v5230 = vshrl.u32 2102212464, %v5221
    %v5231 = vor.u32 %v5229, %v5230
    %v5232 = vshll.u32 2102212464, %v5220
    %v5233 = vshrl.u32 920167782, %v5221
    %v5234 = vor.u32 %v5232, %v5233
    %v5235 = vshll.u32 920167782, %v5220
    %v5236 = vshrl.u32 1326507024, %v5221
    %v5237 = vor.u32 %v5235, %v5236
    %vm5238 = vcmp.lt.s32.totalorder %v5219, 1
    %vm5239 = vcmp.lt.s32.totalorder %v5219, 2
    %vm5240 = vcmp.lt.s32.totalorder %v5219, 3
    %vm5241 = vcmp.lt.s32.totalorder %v5219, 4
    %v5242 = vsel %vm5238, %v5222, %v5225
    %v5243 = vsel %vm5241, %v5231, 2102212464
    %v5244 = vsel %vm5240, %v5228, %v5243
    %v5245 = vsel %vm5239, %v5242, %v5244
    %v5246 = vsel %vm5238, %v5225, %v5228
    %v5247 = vsel %vm5241, %v5234, 920167782
    %v5248 = vsel %vm5240, %v5231, %v5247
    %v5249 = vsel %vm5239, %v5246, %v5248
    %v5250 = vsel %vm5238, %v5228, %v5231
    %v5251 = vsel %vm5241, %v5237, 1326507024
    %v5252 = vsel %vm5240, %v5234, %v5251
    %v5253 = vsel %vm5239, %v5250, %v5252
    %v5254 = vshll.u32 %v5214, 8
    %v5255 = vmul.u32.u64.compose %v5254, %v5253
    %v5256 = vextract.low.u32 %v5255
    %v5257 = vextract.high.u32 %v5255
    %v5258 = vmul.u32.u64.compose %v5254, %v5249
    %v5259 = vextract.low.u32 %v5258
    %v5260 = vextract.high.u32 %v5258
    %v5261 = vmul.u32 %v5254, %v5245
    %v5262 = vadd.s32 %v5257, %v5259
    %vm5263 = vc.u32 %v5257, %v5259
    %v5264 = vadd.s32 %v5260, 1
    %v5265 = vsel %vm5263, %v5264, %v5260
    %v5266 = vadd.s32 %v5261, %v5265
    %v5267 = vadd.s32 %v5266, 536870912
    %v5268 = vshrl.u32 %v5267, 30
    %v5269 = vshll.u32 %v5268, 30
    %v5270 = vsub.s32 %v5266, %v5269
    %vm5271 = vcmp.lt.s32.totalorder %v5270, 0
    %v5272 = vsub.s32 0, %v5270
    %v5273 = vsel %vm5271, %v5272, %v5270
    %v5274 = vclz %v5273
    %v5275 = vsub.s32 %v5274, 2
    %vm5276 = vcmp.gt.s32.totalorder 0, %v5275
    %v5277 = vsel %vm5276, 0, %v5275
    %v5278 = vsub.s32 32, %v5277
    %v5279 = vshll.u32 %v5270, %v5277
    %v5280 = vshrl.u32 %v5262, %v5278
    %v5281 = vor.u32 %v5279, %v5280
    %v5282 = vsub.s32 4294967266, %v5277
    %v5283 = vadd.s32 %v5282, 127
    %v5284 = vshll.u32 %v5283, 23
    %v5285 = vor.u32 4788187, %v5284
    %v5286 = vand.u32 2147483647, %v5285
    %v5288 = vcvt.s32.f32 %v5281
    %v5289 = vmul.f32 %v5288, %v5286
    %v5290 = vxor.u32 %v5289, 2147483648
    %v5291 = vsel %vm5208, %v5290, %v5289
    %v5292 = vsub.s32 4, %v5268
    %v5293 = vsel %vm5208, %v5292, %v5268
    %v5294 = vsel %vm5207, %v894, %v5291
    %v5295 = vsel %vm5207, 0, %v5293
    %v5296 = vcosq.f32.pop %v5294
    %v5297 = vsinq.f32.pop %v5294
    %vm5298 = vweird.f32 %v894
    %v5299 = vadd.s32 %v5295, 3
    %v5300 = vand.u32 %v5299, 3
    %vm5301 = vcmp.lt.s32.totalorder %v5300, 2
    %vm5302 = vcmp.eq.s32.totalorder %v5300, 0
    %v5303 = vxor.u32 %v5297, 2147483648
    %v5304 = vsel %vm5302, %v5296, %v5303
    %vm5305 = vcmp.eq.s32.totalorder %v5300, 2
    %v5306 = vxor.u32 %v5296, 2147483648
    %v5307 = vsel %vm5305, %v5306, %v5297
    %v5308 = vsel %vm5301, %v5304, %v5307
    %v5309 = vsel %vm5298, nan, %v5308
    %v5310 = vand.u32 2147483647, %v895
    %vm5311 = vcmp.le.f32.partialorder %v5310, 0.7853982
    %vm5312 = vcmp.lt.s32.totalorder %v895, 0
    %v5313 = vand.u32 %v895, 2139095040
    %v5314 = vshrl.u32 %v5313, 23
    %v5315 = vsub.s32 %v5314, 127
    %v5316 = vand.u32 2147483647, %v895
    %v5317 = vand.u32 %v5316, 8388607
    %v5318 = vor.u32 %v5317, 8388608
    %v5319 = vsub.s32 0, %v5318
    %v5320 = vadd.s32 %v5315, 1
    %vm5321 = vcmp.gt.s32.totalorder %v5320, 0
    %v5322 = vsel %vm5321, %v5320, 0
    %v5323 = vshrl.u32 %v5322, 5
    %v5324 = vand.u32 %v5322, 31
    %v5325 = vsub.s32 32, %v5324
    %v5326 = vshrl.u32 683565275, %v5325
    %v5327 = vshll.u32 683565275, %v5324
    %v5328 = vshrl.u32 2475754826, %v5325
    %v5329 = vor.u32 %v5327, %v5328
    %v5330 = vshll.u32 2475754826, %v5324
    %v5331 = vshrl.u32 2131351028, %v5325
    %v5332 = vor.u32 %v5330, %v5331
    %v5333 = vshll.u32 2131351028, %v5324
    %v5334 = vshrl.u32 2102212464, %v5325
    %v5335 = vor.u32 %v5333, %v5334
    %v5336 = vshll.u32 2102212464, %v5324
    %v5337 = vshrl.u32 920167782, %v5325
    %v5338 = vor.u32 %v5336, %v5337
    %v5339 = vshll.u32 920167782, %v5324
    %v5340 = vshrl.u32 1326507024, %v5325
    %v5341 = vor.u32 %v5339, %v5340
    %vm5342 = vcmp.lt.s32.totalorder %v5323, 1
    %vm5343 = vcmp.lt.s32.totalorder %v5323, 2
    %vm5344 = vcmp.lt.s32.totalorder %v5323, 3
    %vm5345 = vcmp.lt.s32.totalorder %v5323, 4
    %v5346 = vsel %vm5342, %v5326, %v5329
    %v5347 = vsel %vm5345, %v5335, 2102212464
    %v5348 = vsel %vm5344, %v5332, %v5347
    %v5349 = vsel %vm5343, %v5346, %v5348
    %v5350 = vsel %vm5342, %v5329, %v5332
    %v5351 = vsel %vm5345, %v5338, 920167782
    %v5352 = vsel %vm5344, %v5335, %v5351
    %v5353 = vsel %vm5343, %v5350, %v5352
    %v5354 = vsel %vm5342, %v5332, %v5335
    %v5355 = vsel %vm5345, %v5341, 1326507024
    %v5356 = vsel %vm5344, %v5338, %v5355
    %v5357 = vsel %vm5343, %v5354, %v5356
    %v5358 = vshll.u32 %v5318, 8
    %v5359 = vmul.u32.u64.compose %v5358, %v5357
    %v5360 = vextract.low.u32 %v5359
    %v5361 = vextract.high.u32 %v5359
    %v5362 = vmul.u32.u64.compose %v5358, %v5353
    %v5363 = vextract.low.u32 %v5362
    %v5364 = vextract.high.u32 %v5362
    %v5365 = vmul.u32 %v5358, %v5349
    %v5366 = vadd.s32 %v5361, %v5363
    %vm5367 = vc.u32 %v5361, %v5363
    %v5368 = vadd.s32 %v5364, 1
    %v5369 = vsel %vm5367, %v5368, %v5364
    %v5370 = vadd.s32 %v5365, %v5369
    %v5371 = vadd.s32 %v5370, 536870912
    %v5372 = vshrl.u32 %v5371, 30
    %v5373 = vshll.u32 %v5372, 30
    %v5374 = vsub.s32 %v5370, %v5373
    %vm5375 = vcmp.lt.s32.totalorder %v5374, 0
    %v5376 = vsub.s32 0, %v5374
    %v5377 = vsel %vm5375, %v5376, %v5374
    %v5378 = vclz %v5377
    %v5379 = vsub.s32 %v5378, 2
    %vm5380 = vcmp.gt.s32.totalorder 0, %v5379
    %v5381 = vsel %vm5380, 0, %v5379
    %v5382 = vsub.s32 32, %v5381
    %v5383 = vshll.u32 %v5374, %v5381
    %v5384 = vshrl.u32 %v5366, %v5382
    %v5385 = vor.u32 %v5383, %v5384
    %v5386 = vsub.s32 4294967266, %v5381
    %v5387 = vadd.s32 %v5386, 127
    %v5388 = vshll.u32 %v5387, 23
    %v5389 = vor.u32 4788187, %v5388
    %v5390 = vand.u32 2147483647, %v5389
    %v5392 = vcvt.s32.f32 %v5385
    %v5393 = vmul.f32 %v5392, %v5390
    %v5394 = vxor.u32 %v5393, 2147483648
    %v5395 = vsel %vm5312, %v5394, %v5393
    %v5396 = vsub.s32 4, %v5372
    %v5397 = vsel %vm5312, %v5396, %v5372
    %v5398 = vsel %vm5311, %v895, %v5395
    %v5399 = vsel %vm5311, 0, %v5397
    %v5400 = vcosq.f32.pop %v5398
    %v5401 = vsinq.f32.pop %v5398
    %vm5402 = vweird.f32 %v895
    %v5403 = vadd.s32 %v5399, 3
    %v5404 = vand.u32 %v5403, 3
    %vm5405 = vcmp.lt.s32.totalorder %v5404, 2
    %vm5406 = vcmp.eq.s32.totalorder %v5404, 0
    %v5407 = vxor.u32 %v5401, 2147483648
    %v5408 = vsel %vm5406, %v5400, %v5407
    %vm5409 = vcmp.eq.s32.totalorder %v5404, 2
    %v5410 = vxor.u32 %v5400, 2147483648
    %v5411 = vsel %vm5409, %v5410, %v5401
    %v5412 = vsel %vm5405, %v5408, %v5411
    %v5413 = vsel %vm5402, nan, %v5412
    %v5414 = vand.u32 2147483647, %v896
    %vm5415 = vcmp.le.f32.partialorder %v5414, 0.7853982
    %vm5416 = vcmp.lt.s32.totalorder %v896, 0
    %v5417 = vand.u32 %v896, 2139095040
    %v5418 = vshrl.u32 %v5417, 23
    %v5419 = vsub.s32 %v5418, 127
    %v5420 = vand.u32 2147483647, %v896
    %v5421 = vand.u32 %v5420, 8388607
    %v5422 = vor.u32 %v5421, 8388608
    %v5423 = vsub.s32 0, %v5422
    %v5424 = vadd.s32 %v5419, 1
    %vm5425 = vcmp.gt.s32.totalorder %v5424, 0
    %v5426 = vsel %vm5425, %v5424, 0
    %v5427 = vshrl.u32 %v5426, 5
    %v5428 = vand.u32 %v5426, 31
    %v5429 = vsub.s32 32, %v5428
    %v5430 = vshrl.u32 683565275, %v5429
    %v5431 = vshll.u32 683565275, %v5428
    %v5432 = vshrl.u32 2475754826, %v5429
    %v5433 = vor.u32 %v5431, %v5432
    %v5434 = vshll.u32 2475754826, %v5428
    %v5435 = vshrl.u32 2131351028, %v5429
    %v5436 = vor.u32 %v5434, %v5435
    %v5437 = vshll.u32 2131351028, %v5428
    %v5438 = vshrl.u32 2102212464, %v5429
    %v5439 = vor.u32 %v5437, %v5438
    %v5440 = vshll.u32 2102212464, %v5428
    %v5441 = vshrl.u32 920167782, %v5429
    %v5442 = vor.u32 %v5440, %v5441
    %v5443 = vshll.u32 920167782, %v5428
    %v5444 = vshrl.u32 1326507024, %v5429
    %v5445 = vor.u32 %v5443, %v5444
    %vm5446 = vcmp.lt.s32.totalorder %v5427, 1
    %vm5447 = vcmp.lt.s32.totalorder %v5427, 2
    %vm5448 = vcmp.lt.s32.totalorder %v5427, 3
    %vm5449 = vcmp.lt.s32.totalorder %v5427, 4
    %v5450 = vsel %vm5446, %v5430, %v5433
    %v5451 = vsel %vm5449, %v5439, 2102212464
    %v5452 = vsel %vm5448, %v5436, %v5451
    %v5453 = vsel %vm5447, %v5450, %v5452
    %v5454 = vsel %vm5446, %v5433, %v5436
    %v5455 = vsel %vm5449, %v5442, 920167782
    %v5456 = vsel %vm5448, %v5439, %v5455
    %v5457 = vsel %vm5447, %v5454, %v5456
    %v5458 = vsel %vm5446, %v5436, %v5439
    %v5459 = vsel %vm5449, %v5445, 1326507024
    %v5460 = vsel %vm5448, %v5442, %v5459
    %v5461 = vsel %vm5447, %v5458, %v5460
    %v5462 = vshll.u32 %v5422, 8
    %v5463 = vmul.u32.u64.compose %v5462, %v5461
    %v5464 = vextract.low.u32 %v5463
    %v5465 = vextract.high.u32 %v5463
    %v5466 = vmul.u32.u64.compose %v5462, %v5457
    %v5467 = vextract.low.u32 %v5466
    %v5468 = vextract.high.u32 %v5466
    %v5469 = vmul.u32 %v5462, %v5453
    %v5470 = vadd.s32 %v5465, %v5467
    %vm5471 = vc.u32 %v5465, %v5467
    %v5472 = vadd.s32 %v5468, 1
    %v5473 = vsel %vm5471, %v5472, %v5468
    %v5474 = vadd.s32 %v5469, %v5473
    %v5475 = vadd.s32 %v5474, 536870912
    %v5476 = vshrl.u32 %v5475, 30
    %v5477 = vshll.u32 %v5476, 30
    %v5478 = vsub.s32 %v5474, %v5477
    %vm5479 = vcmp.lt.s32.totalorder %v5478, 0
    %v5480 = vsub.s32 0, %v5478
    %v5481 = vsel %vm5479, %v5480, %v5478
    %v5482 = vclz %v5481
    %v5483 = vsub.s32 %v5482, 2
    %vm5484 = vcmp.gt.s32.totalorder 0, %v5483
    %v5485 = vsel %vm5484, 0, %v5483
    %v5486 = vsub.s32 32, %v5485
    %v5487 = vshll.u32 %v5478, %v5485
    %v5488 = vshrl.u32 %v5470, %v5486
    %v5489 = vor.u32 %v5487, %v5488
    %v5490 = vsub.s32 4294967266, %v5485
    %v5491 = vadd.s32 %v5490, 127
    %v5492 = vshll.u32 %v5491, 23
    %v5493 = vor.u32 4788187, %v5492
    %v5494 = vand.u32 2147483647, %v5493
    %v5496 = vcvt.s32.f32 %v5489
    %v5497 = vmul.f32 %v5496, %v5494
    %v5498 = vxor.u32 %v5497, 2147483648
    %v5499 = vsel %vm5416, %v5498, %v5497
    %v5500 = vsub.s32 4, %v5476
    %v5501 = vsel %vm5416, %v5500, %v5476
    %v5502 = vsel %vm5415, %v896, %v5499
    %v5503 = vsel %vm5415, 0, %v5501
    %v5504 = vcosq.f32.pop %v5502
    %v5505 = vsinq.f32.pop %v5502
    %vm5506 = vweird.f32 %v896
    %v5507 = vadd.s32 %v5503, 3
    %v5508 = vand.u32 %v5507, 3
    %vm5509 = vcmp.lt.s32.totalorder %v5508, 2
    %vm5510 = vcmp.eq.s32.totalorder %v5508, 0
    %v5511 = vxor.u32 %v5505, 2147483648
    %v5512 = vsel %vm5510, %v5504, %v5511
    %vm5513 = vcmp.eq.s32.totalorder %v5508, 2
    %v5514 = vxor.u32 %v5504, 2147483648
    %v5515 = vsel %vm5513, %v5514, %v5505
    %v5516 = vsel %vm5509, %v5512, %v5515
    %v5517 = vsel %vm5506, nan, %v5516
    %v5518 = vand.u32 2147483647, %v897
    %vm5519 = vcmp.le.f32.partialorder %v5518, 0.7853982
    %vm5520 = vcmp.lt.s32.totalorder %v897, 0
    %v5521 = vand.u32 %v897, 2139095040
    %v5522 = vshrl.u32 %v5521, 23
    %v5523 = vsub.s32 %v5522, 127
    %v5524 = vand.u32 2147483647, %v897
    %v5525 = vand.u32 %v5524, 8388607
    %v5526 = vor.u32 %v5525, 8388608
    %v5527 = vsub.s32 0, %v5526
    %v5528 = vadd.s32 %v5523, 1
    %vm5529 = vcmp.gt.s32.totalorder %v5528, 0
    %v5530 = vsel %vm5529, %v5528, 0
    %v5531 = vshrl.u32 %v5530, 5
    %v5532 = vand.u32 %v5530, 31
    %v5533 = vsub.s32 32, %v5532
    %v5534 = vshrl.u32 683565275, %v5533
    %v5535 = vshll.u32 683565275, %v5532
    %v5536 = vshrl.u32 2475754826, %v5533
    %v5537 = vor.u32 %v5535, %v5536
    %v5538 = vshll.u32 2475754826, %v5532
    %v5539 = vshrl.u32 2131351028, %v5533
    %v5540 = vor.u32 %v5538, %v5539
    %v5541 = vshll.u32 2131351028, %v5532
    %v5542 = vshrl.u32 2102212464, %v5533
    %v5543 = vor.u32 %v5541, %v5542
    %v5544 = vshll.u32 2102212464, %v5532
    %v5545 = vshrl.u32 920167782, %v5533
    %v5546 = vor.u32 %v5544, %v5545
    %v5547 = vshll.u32 920167782, %v5532
    %v5548 = vshrl.u32 1326507024, %v5533
    %v5549 = vor.u32 %v5547, %v5548
    %vm5550 = vcmp.lt.s32.totalorder %v5531, 1
    %vm5551 = vcmp.lt.s32.totalorder %v5531, 2
    %vm5552 = vcmp.lt.s32.totalorder %v5531, 3
    %vm5553 = vcmp.lt.s32.totalorder %v5531, 4
    %v5554 = vsel %vm5550, %v5534, %v5537
    %v5555 = vsel %vm5553, %v5543, 2102212464
    %v5556 = vsel %vm5552, %v5540, %v5555
    %v5557 = vsel %vm5551, %v5554, %v5556
    %v5558 = vsel %vm5550, %v5537, %v5540
    %v5559 = vsel %vm5553, %v5546, 920167782
    %v5560 = vsel %vm5552, %v5543, %v5559
    %v5561 = vsel %vm5551, %v5558, %v5560
    %v5562 = vsel %vm5550, %v5540, %v5543
    %v5563 = vsel %vm5553, %v5549, 1326507024
    %v5564 = vsel %vm5552, %v5546, %v5563
    %v5565 = vsel %vm5551, %v5562, %v5564
    %v5566 = vshll.u32 %v5526, 8
    %v5567 = vmul.u32.u64.compose %v5566, %v5565
    %v5568 = vextract.low.u32 %v5567
    %v5569 = vextract.high.u32 %v5567
    %v5570 = vmul.u32.u64.compose %v5566, %v5561
    %v5571 = vextract.low.u32 %v5570
    %v5572 = vextract.high.u32 %v5570
    %v5573 = vmul.u32 %v5566, %v5557
    %v5574 = vadd.s32 %v5569, %v5571
    %vm5575 = vc.u32 %v5569, %v5571
    %v5576 = vadd.s32 %v5572, 1
    %v5577 = vsel %vm5575, %v5576, %v5572
    %v5578 = vadd.s32 %v5573, %v5577
    %v5579 = vadd.s32 %v5578, 536870912
    %v5580 = vshrl.u32 %v5579, 30
    %v5581 = vshll.u32 %v5580, 30
    %v5582 = vsub.s32 %v5578, %v5581
    %vm5583 = vcmp.lt.s32.totalorder %v5582, 0
    %v5584 = vsub.s32 0, %v5582
    %v5585 = vsel %vm5583, %v5584, %v5582
    %v5586 = vclz %v5585
    %v5587 = vsub.s32 %v5586, 2
    %vm5588 = vcmp.gt.s32.totalorder 0, %v5587
    %v5589 = vsel %vm5588, 0, %v5587
    %v5590 = vsub.s32 32, %v5589
    %v5591 = vshll.u32 %v5582, %v5589
    %v5592 = vshrl.u32 %v5574, %v5590
    %v5593 = vor.u32 %v5591, %v5592
    %v5594 = vsub.s32 4294967266, %v5589
    %v5595 = vadd.s32 %v5594, 127
    %v5596 = vshll.u32 %v5595, 23
    %v5597 = vor.u32 4788187, %v5596
    %v5598 = vand.u32 2147483647, %v5597
    %v5600 = vcvt.s32.f32 %v5593
    %v5601 = vmul.f32 %v5600, %v5598
    %v5602 = vxor.u32 %v5601, 2147483648
    %v5603 = vsel %vm5520, %v5602, %v5601
    %v5604 = vsub.s32 4, %v5580
    %v5605 = vsel %vm5520, %v5604, %v5580
    %v5606 = vsel %vm5519, %v897, %v5603
    %v5607 = vsel %vm5519, 0, %v5605
    %v5608 = vcosq.f32.pop %v5606
    %v5609 = vsinq.f32.pop %v5606
    %vm5610 = vweird.f32 %v897
    %v5611 = vadd.s32 %v5607, 3
    %v5612 = vand.u32 %v5611, 3
    %vm5613 = vcmp.lt.s32.totalorder %v5612, 2
    %vm5614 = vcmp.eq.s32.totalorder %v5612, 0
    %v5615 = vxor.u32 %v5609, 2147483648
    %v5616 = vsel %vm5614, %v5608, %v5615
    %vm5617 = vcmp.eq.s32.totalorder %v5612, 2
    %v5618 = vxor.u32 %v5608, 2147483648
    %v5619 = vsel %vm5617, %v5618, %v5609
    %v5620 = vsel %vm5613, %v5616, %v5619
    %v5621 = vsel %vm5610, nan, %v5620
    %v5622 = vand.u32 2147483647, %v898
    %vm5623 = vcmp.le.f32.partialorder %v5622, 0.7853982
    %vm5624 = vcmp.lt.s32.totalorder %v898, 0
    %v5625 = vand.u32 %v898, 2139095040
    %v5626 = vshrl.u32 %v5625, 23
    %v5627 = vsub.s32 %v5626, 127
    %v5628 = vand.u32 2147483647, %v898
    %v5629 = vand.u32 %v5628, 8388607
    %v5630 = vor.u32 %v5629, 8388608
    %v5631 = vsub.s32 0, %v5630
    %v5632 = vadd.s32 %v5627, 1
    %vm5633 = vcmp.gt.s32.totalorder %v5632, 0
    %v5634 = vsel %vm5633, %v5632, 0
    %v5635 = vshrl.u32 %v5634, 5
    %v5636 = vand.u32 %v5634, 31
    %v5637 = vsub.s32 32, %v5636
    %v5638 = vshrl.u32 683565275, %v5637
    %v5639 = vshll.u32 683565275, %v5636
    %v5640 = vshrl.u32 2475754826, %v5637
    %v5641 = vor.u32 %v5639, %v5640
    %v5642 = vshll.u32 2475754826, %v5636
    %v5643 = vshrl.u32 2131351028, %v5637
    %v5644 = vor.u32 %v5642, %v5643
    %v5645 = vshll.u32 2131351028, %v5636
    %v5646 = vshrl.u32 2102212464, %v5637
    %v5647 = vor.u32 %v5645, %v5646
    %v5648 = vshll.u32 2102212464, %v5636
    %v5649 = vshrl.u32 920167782, %v5637
    %v5650 = vor.u32 %v5648, %v5649
    %v5651 = vshll.u32 920167782, %v5636
    %v5652 = vshrl.u32 1326507024, %v5637
    %v5653 = vor.u32 %v5651, %v5652
    %vm5654 = vcmp.lt.s32.totalorder %v5635, 1
    %vm5655 = vcmp.lt.s32.totalorder %v5635, 2
    %vm5656 = vcmp.lt.s32.totalorder %v5635, 3
    %vm5657 = vcmp.lt.s32.totalorder %v5635, 4
    %v5658 = vsel %vm5654, %v5638, %v5641
    %v5659 = vsel %vm5657, %v5647, 2102212464
    %v5660 = vsel %vm5656, %v5644, %v5659
    %v5661 = vsel %vm5655, %v5658, %v5660
    %v5662 = vsel %vm5654, %v5641, %v5644
    %v5663 = vsel %vm5657, %v5650, 920167782
    %v5664 = vsel %vm5656, %v5647, %v5663
    %v5665 = vsel %vm5655, %v5662, %v5664
    %v5666 = vsel %vm5654, %v5644, %v5647
    %v5667 = vsel %vm5657, %v5653, 1326507024
    %v5668 = vsel %vm5656, %v5650, %v5667
    %v5669 = vsel %vm5655, %v5666, %v5668
    %v5670 = vshll.u32 %v5630, 8
    %v5671 = vmul.u32.u64.compose %v5670, %v5669
    %v5672 = vextract.low.u32 %v5671
    %v5673 = vextract.high.u32 %v5671
    %v5674 = vmul.u32.u64.compose %v5670, %v5665
    %v5675 = vextract.low.u32 %v5674
    %v5676 = vextract.high.u32 %v5674
    %v5677 = vmul.u32 %v5670, %v5661
    %v5678 = vadd.s32 %v5673, %v5675
    %vm5679 = vc.u32 %v5673, %v5675
    %v5680 = vadd.s32 %v5676, 1
    %v5681 = vsel %vm5679, %v5680, %v5676
    %v5682 = vadd.s32 %v5677, %v5681
    %v5683 = vadd.s32 %v5682, 536870912
    %v5684 = vshrl.u32 %v5683, 30
    %v5685 = vshll.u32 %v5684, 30
    %v5686 = vsub.s32 %v5682, %v5685
    %vm5687 = vcmp.lt.s32.totalorder %v5686, 0
    %v5688 = vsub.s32 0, %v5686
    %v5689 = vsel %vm5687, %v5688, %v5686
    %v5690 = vclz %v5689
    %v5691 = vsub.s32 %v5690, 2
    %vm5692 = vcmp.gt.s32.totalorder 0, %v5691
    %v5693 = vsel %vm5692, 0, %v5691
    %v5694 = vsub.s32 32, %v5693
    %v5695 = vshll.u32 %v5686, %v5693
    %v5696 = vshrl.u32 %v5678, %v5694
    %v5697 = vor.u32 %v5695, %v5696
    %v5698 = vsub.s32 4294967266, %v5693
    %v5699 = vadd.s32 %v5698, 127
    %v5700 = vshll.u32 %v5699, 23
    %v5701 = vor.u32 4788187, %v5700
    %v5702 = vand.u32 2147483647, %v5701
    %v5704 = vcvt.s32.f32 %v5697
    %v5705 = vmul.f32 %v5704, %v5702
    %v5706 = vxor.u32 %v5705, 2147483648
    %v5707 = vsel %vm5624, %v5706, %v5705
    %v5708 = vsub.s32 4, %v5684
    %v5709 = vsel %vm5624, %v5708, %v5684
    %v5710 = vsel %vm5623, %v898, %v5707
    %v5711 = vsel %vm5623, 0, %v5709
    %v5712 = vcosq.f32.pop %v5710
    %v5713 = vsinq.f32.pop %v5710
    %vm5714 = vweird.f32 %v898
    %v5715 = vadd.s32 %v5711, 3
    %v5716 = vand.u32 %v5715, 3
    %vm5717 = vcmp.lt.s32.totalorder %v5716, 2
    %vm5718 = vcmp.eq.s32.totalorder %v5716, 0
    %v5719 = vxor.u32 %v5713, 2147483648
    %v5720 = vsel %vm5718, %v5712, %v5719
    %vm5721 = vcmp.eq.s32.totalorder %v5716, 2
    %v5722 = vxor.u32 %v5712, 2147483648
    %v5723 = vsel %vm5721, %v5722, %v5713
    %v5724 = vsel %vm5717, %v5720, %v5723
    %v5725 = vsel %vm5714, nan, %v5724
    %v5726 = vand.u32 2147483647, %v899
    %vm5727 = vcmp.le.f32.partialorder %v5726, 0.7853982
    %vm5728 = vcmp.lt.s32.totalorder %v899, 0
    %v5729 = vand.u32 %v899, 2139095040
    %v5730 = vshrl.u32 %v5729, 23
    %v5731 = vsub.s32 %v5730, 127
    %v5732 = vand.u32 2147483647, %v899
    %v5733 = vand.u32 %v5732, 8388607
    %v5734 = vor.u32 %v5733, 8388608
    %v5735 = vsub.s32 0, %v5734
    %v5736 = vadd.s32 %v5731, 1
    %vm5737 = vcmp.gt.s32.totalorder %v5736, 0
    %v5738 = vsel %vm5737, %v5736, 0
    %v5739 = vshrl.u32 %v5738, 5
    %v5740 = vand.u32 %v5738, 31
    %v5741 = vsub.s32 32, %v5740
    %v5742 = vshrl.u32 683565275, %v5741
    %v5743 = vshll.u32 683565275, %v5740
    %v5744 = vshrl.u32 2475754826, %v5741
    %v5745 = vor.u32 %v5743, %v5744
    %v5746 = vshll.u32 2475754826, %v5740
    %v5747 = vshrl.u32 2131351028, %v5741
    %v5748 = vor.u32 %v5746, %v5747
    %v5749 = vshll.u32 2131351028, %v5740
    %v5750 = vshrl.u32 2102212464, %v5741
    %v5751 = vor.u32 %v5749, %v5750
    %v5752 = vshll.u32 2102212464, %v5740
    %v5753 = vshrl.u32 920167782, %v5741
    %v5754 = vor.u32 %v5752, %v5753
    %v5755 = vshll.u32 920167782, %v5740
    %v5756 = vshrl.u32 1326507024, %v5741
    %v5757 = vor.u32 %v5755, %v5756
    %vm5758 = vcmp.lt.s32.totalorder %v5739, 1
    %vm5759 = vcmp.lt.s32.totalorder %v5739, 2
    %vm5760 = vcmp.lt.s32.totalorder %v5739, 3
    %vm5761 = vcmp.lt.s32.totalorder %v5739, 4
    %v5762 = vsel %vm5758, %v5742, %v5745
    %v5763 = vsel %vm5761, %v5751, 2102212464
    %v5764 = vsel %vm5760, %v5748, %v5763
    %v5765 = vsel %vm5759, %v5762, %v5764
    %v5766 = vsel %vm5758, %v5745, %v5748
    %v5767 = vsel %vm5761, %v5754, 920167782
    %v5768 = vsel %vm5760, %v5751, %v5767
    %v5769 = vsel %vm5759, %v5766, %v5768
    %v5770 = vsel %vm5758, %v5748, %v5751
    %v5771 = vsel %vm5761, %v5757, 1326507024
    %v5772 = vsel %vm5760, %v5754, %v5771
    %v5773 = vsel %vm5759, %v5770, %v5772
    %v5774 = vshll.u32 %v5734, 8
    %v5775 = vmul.u32.u64.compose %v5774, %v5773
    %v5776 = vextract.low.u32 %v5775
    %v5777 = vextract.high.u32 %v5775
    %v5778 = vmul.u32.u64.compose %v5774, %v5769
    %v5779 = vextract.low.u32 %v5778
    %v5780 = vextract.high.u32 %v5778
    %v5781 = vmul.u32 %v5774, %v5765
    %v5782 = vadd.s32 %v5777, %v5779
    %vm5783 = vc.u32 %v5777, %v5779
    %v5784 = vadd.s32 %v5780, 1
    %v5785 = vsel %vm5783, %v5784, %v5780
    %v5786 = vadd.s32 %v5781, %v5785
    %v5787 = vadd.s32 %v5786, 536870912
    %v5788 = vshrl.u32 %v5787, 30
    %v5789 = vshll.u32 %v5788, 30
    %v5790 = vsub.s32 %v5786, %v5789
    %vm5791 = vcmp.lt.s32.totalorder %v5790, 0
    %v5792 = vsub.s32 0, %v5790
    %v5793 = vsel %vm5791, %v5792, %v5790
    %v5794 = vclz %v5793
    %v5795 = vsub.s32 %v5794, 2
    %vm5796 = vcmp.gt.s32.totalorder 0, %v5795
    %v5797 = vsel %vm5796, 0, %v5795
    %v5798 = vsub.s32 32, %v5797
    %v5799 = vshll.u32 %v5790, %v5797
    %v5800 = vshrl.u32 %v5782, %v5798
    %v5801 = vor.u32 %v5799, %v5800
    %v5802 = vsub.s32 4294967266, %v5797
    %v5803 = vadd.s32 %v5802, 127
    %v5804 = vshll.u32 %v5803, 23
    %v5805 = vor.u32 4788187, %v5804
    %v5806 = vand.u32 2147483647, %v5805
    %v5808 = vcvt.s32.f32 %v5801
    %v5809 = vmul.f32 %v5808, %v5806
    %v5810 = vxor.u32 %v5809, 2147483648
    %v5811 = vsel %vm5728, %v5810, %v5809
    %v5812 = vsub.s32 4, %v5788
    %v5813 = vsel %vm5728, %v5812, %v5788
    %v5814 = vsel %vm5727, %v899, %v5811
    %v5815 = vsel %vm5727, 0, %v5813
    %v5816 = vcosq.f32.pop %v5814
    %v5817 = vsinq.f32.pop %v5814
    %vm5818 = vweird.f32 %v899
    %v5819 = vadd.s32 %v5815, 3
    %v5820 = vand.u32 %v5819, 3
    %vm5821 = vcmp.lt.s32.totalorder %v5820, 2
    %vm5822 = vcmp.eq.s32.totalorder %v5820, 0
    %v5823 = vxor.u32 %v5817, 2147483648
    %v5824 = vsel %vm5822, %v5816, %v5823
    %vm5825 = vcmp.eq.s32.totalorder %v5820, 2
    %v5826 = vxor.u32 %v5816, 2147483648
    %v5827 = vsel %vm5825, %v5826, %v5817
    %v5828 = vsel %vm5821, %v5824, %v5827
    %v5829 = vsel %vm5818, nan, %v5828
    %v5830 = vand.u32 2147483647, %v900
    %vm5831 = vcmp.le.f32.partialorder %v5830, 0.7853982
    %vm5832 = vcmp.lt.s32.totalorder %v900, 0
    %v5833 = vand.u32 %v900, 2139095040
    %v5834 = vshrl.u32 %v5833, 23
    %v5835 = vsub.s32 %v5834, 127
    %v5836 = vand.u32 2147483647, %v900
    %v5837 = vand.u32 %v5836, 8388607
    %v5838 = vor.u32 %v5837, 8388608
    %v5839 = vsub.s32 0, %v5838
    %v5840 = vadd.s32 %v5835, 1
    %vm5841 = vcmp.gt.s32.totalorder %v5840, 0
    %v5842 = vsel %vm5841, %v5840, 0
    %v5843 = vshrl.u32 %v5842, 5
    %v5844 = vand.u32 %v5842, 31
    %v5845 = vsub.s32 32, %v5844
    %v5846 = vshrl.u32 683565275, %v5845
    %v5847 = vshll.u32 683565275, %v5844
    %v5848 = vshrl.u32 2475754826, %v5845
    %v5849 = vor.u32 %v5847, %v5848
    %v5850 = vshll.u32 2475754826, %v5844
    %v5851 = vshrl.u32 2131351028, %v5845
    %v5852 = vor.u32 %v5850, %v5851
    %v5853 = vshll.u32 2131351028, %v5844
    %v5854 = vshrl.u32 2102212464, %v5845
    %v5855 = vor.u32 %v5853, %v5854
    %v5856 = vshll.u32 2102212464, %v5844
    %v5857 = vshrl.u32 920167782, %v5845
    %v5858 = vor.u32 %v5856, %v5857
    %v5859 = vshll.u32 920167782, %v5844
    %v5860 = vshrl.u32 1326507024, %v5845
    %v5861 = vor.u32 %v5859, %v5860
    %vm5862 = vcmp.lt.s32.totalorder %v5843, 1
    %vm5863 = vcmp.lt.s32.totalorder %v5843, 2
    %vm5864 = vcmp.lt.s32.totalorder %v5843, 3
    %vm5865 = vcmp.lt.s32.totalorder %v5843, 4
    %v5866 = vsel %vm5862, %v5846, %v5849
    %v5867 = vsel %vm5865, %v5855, 2102212464
    %v5868 = vsel %vm5864, %v5852, %v5867
    %v5869 = vsel %vm5863, %v5866, %v5868
    %v5870 = vsel %vm5862, %v5849, %v5852
    %v5871 = vsel %vm5865, %v5858, 920167782
    %v5872 = vsel %vm5864, %v5855, %v5871
    %v5873 = vsel %vm5863, %v5870, %v5872
    %v5874 = vsel %vm5862, %v5852, %v5855
    %v5875 = vsel %vm5865, %v5861, 1326507024
    %v5876 = vsel %vm5864, %v5858, %v5875
    %v5877 = vsel %vm5863, %v5874, %v5876
    %v5878 = vshll.u32 %v5838, 8
    %v5879 = vmul.u32.u64.compose %v5878, %v5877
    %v5880 = vextract.low.u32 %v5879
    %v5881 = vextract.high.u32 %v5879
    %v5882 = vmul.u32.u64.compose %v5878, %v5873
    %v5883 = vextract.low.u32 %v5882
    %v5884 = vextract.high.u32 %v5882
    %v5885 = vmul.u32 %v5878, %v5869
    %v5886 = vadd.s32 %v5881, %v5883
    %vm5887 = vc.u32 %v5881, %v5883
    %v5888 = vadd.s32 %v5884, 1
    %v5889 = vsel %vm5887, %v5888, %v5884
    %v5890 = vadd.s32 %v5885, %v5889
    %v5891 = vadd.s32 %v5890, 536870912
    %v5892 = vshrl.u32 %v5891, 30
    %v5893 = vshll.u32 %v5892, 30
    %v5894 = vsub.s32 %v5890, %v5893
    %vm5895 = vcmp.lt.s32.totalorder %v5894, 0
    %v5896 = vsub.s32 0, %v5894
    %v5897 = vsel %vm5895, %v5896, %v5894
    %v5898 = vclz %v5897
    %v5899 = vsub.s32 %v5898, 2
    %vm5900 = vcmp.gt.s32.totalorder 0, %v5899
    %v5901 = vsel %vm5900, 0, %v5899
    %v5902 = vsub.s32 32, %v5901
    %v5903 = vshll.u32 %v5894, %v5901
    %v5904 = vshrl.u32 %v5886, %v5902
    %v5905 = vor.u32 %v5903, %v5904
    %v5906 = vsub.s32 4294967266, %v5901
    %v5907 = vadd.s32 %v5906, 127
    %v5908 = vshll.u32 %v5907, 23
    %v5909 = vor.u32 4788187, %v5908
    %v5910 = vand.u32 2147483647, %v5909
    %v5912 = vcvt.s32.f32 %v5905
    %v5913 = vmul.f32 %v5912, %v5910
    %v5914 = vxor.u32 %v5913, 2147483648
    %v5915 = vsel %vm5832, %v5914, %v5913
    %v5916 = vsub.s32 4, %v5892
    %v5917 = vsel %vm5832, %v5916, %v5892
    %v5918 = vsel %vm5831, %v900, %v5915
    %v5919 = vsel %vm5831, 0, %v5917
    %v5920 = vcosq.f32.pop %v5918
    %v5921 = vsinq.f32.pop %v5918
    %vm5922 = vweird.f32 %v900
    %v5923 = vadd.s32 %v5919, 3
    %v5924 = vand.u32 %v5923, 3
    %vm5925 = vcmp.lt.s32.totalorder %v5924, 2
    %vm5926 = vcmp.eq.s32.totalorder %v5924, 0
    %v5927 = vxor.u32 %v5921, 2147483648
    %v5928 = vsel %vm5926, %v5920, %v5927
    %vm5929 = vcmp.eq.s32.totalorder %v5924, 2
    %v5930 = vxor.u32 %v5920, 2147483648
    %v5931 = vsel %vm5929, %v5930, %v5921
    %v5932 = vsel %vm5925, %v5928, %v5931
    %v5933 = vsel %vm5922, nan, %v5932
    %v5934 = vand.u32 2147483647, %v901
    %vm5935 = vcmp.le.f32.partialorder %v5934, 0.7853982
    %vm5936 = vcmp.lt.s32.totalorder %v901, 0
    %v5937 = vand.u32 %v901, 2139095040
    %v5938 = vshrl.u32 %v5937, 23
    %v5939 = vsub.s32 %v5938, 127
    %v5940 = vand.u32 2147483647, %v901
    %v5941 = vand.u32 %v5940, 8388607
    %v5942 = vor.u32 %v5941, 8388608
    %v5943 = vsub.s32 0, %v5942
    %v5944 = vadd.s32 %v5939, 1
    %vm5945 = vcmp.gt.s32.totalorder %v5944, 0
    %v5946 = vsel %vm5945, %v5944, 0
    %v5947 = vshrl.u32 %v5946, 5
    %v5948 = vand.u32 %v5946, 31
    %v5949 = vsub.s32 32, %v5948
    %v5950 = vshrl.u32 683565275, %v5949
    %v5951 = vshll.u32 683565275, %v5948
    %v5952 = vshrl.u32 2475754826, %v5949
    %v5953 = vor.u32 %v5951, %v5952
    %v5954 = vshll.u32 2475754826, %v5948
    %v5955 = vshrl.u32 2131351028, %v5949
    %v5956 = vor.u32 %v5954, %v5955
    %v5957 = vshll.u32 2131351028, %v5948
    %v5958 = vshrl.u32 2102212464, %v5949
    %v5959 = vor.u32 %v5957, %v5958
    %v5960 = vshll.u32 2102212464, %v5948
    %v5961 = vshrl.u32 920167782, %v5949
    %v5962 = vor.u32 %v5960, %v5961
    %v5963 = vshll.u32 920167782, %v5948
    %v5964 = vshrl.u32 1326507024, %v5949
    %v5965 = vor.u32 %v5963, %v5964
    %vm5966 = vcmp.lt.s32.totalorder %v5947, 1
    %vm5967 = vcmp.lt.s32.totalorder %v5947, 2
    %vm5968 = vcmp.lt.s32.totalorder %v5947, 3
    %vm5969 = vcmp.lt.s32.totalorder %v5947, 4
    %v5970 = vsel %vm5966, %v5950, %v5953
    %v5971 = vsel %vm5969, %v5959, 2102212464
    %v5972 = vsel %vm5968, %v5956, %v5971
    %v5973 = vsel %vm5967, %v5970, %v5972
    %v5974 = vsel %vm5966, %v5953, %v5956
    %v5975 = vsel %vm5969, %v5962, 920167782
    %v5976 = vsel %vm5968, %v5959, %v5975
    %v5977 = vsel %vm5967, %v5974, %v5976
    %v5978 = vsel %vm5966, %v5956, %v5959
    %v5979 = vsel %vm5969, %v5965, 1326507024
    %v5980 = vsel %vm5968, %v5962, %v5979
    %v5981 = vsel %vm5967, %v5978, %v5980
    %v5982 = vshll.u32 %v5942, 8
    %v5983 = vmul.u32.u64.compose %v5982, %v5981
    %v5984 = vextract.low.u32 %v5983
    %v5985 = vextract.high.u32 %v5983
    %v5986 = vmul.u32.u64.compose %v5982, %v5977
    %v5987 = vextract.low.u32 %v5986
    %v5988 = vextract.high.u32 %v5986
    %v5989 = vmul.u32 %v5982, %v5973
    %v5990 = vadd.s32 %v5985, %v5987
    %vm5991 = vc.u32 %v5985, %v5987
    %v5992 = vadd.s32 %v5988, 1
    %v5993 = vsel %vm5991, %v5992, %v5988
    %v5994 = vadd.s32 %v5989, %v5993
    %v5995 = vadd.s32 %v5994, 536870912
    %v5996 = vshrl.u32 %v5995, 30
    %v5997 = vshll.u32 %v5996, 30
    %v5998 = vsub.s32 %v5994, %v5997
    %vm5999 = vcmp.lt.s32.totalorder %v5998, 0
    %v6000 = vsub.s32 0, %v5998
    %v6001 = vsel %vm5999, %v6000, %v5998
    %v6002 = vclz %v6001
    %v6003 = vsub.s32 %v6002, 2
    %vm6004 = vcmp.gt.s32.totalorder 0, %v6003
    %v6005 = vsel %vm6004, 0, %v6003
    %v6006 = vsub.s32 32, %v6005
    %v6007 = vshll.u32 %v5998, %v6005
    %v6008 = vshrl.u32 %v5990, %v6006
    %v6009 = vor.u32 %v6007, %v6008
    %v6010 = vsub.s32 4294967266, %v6005
    %v6011 = vadd.s32 %v6010, 127
    %v6012 = vshll.u32 %v6011, 23
    %v6013 = vor.u32 4788187, %v6012
    %v6014 = vand.u32 2147483647, %v6013
    %v6016 = vcvt.s32.f32 %v6009
    %v6017 = vmul.f32 %v6016, %v6014
    %v6018 = vxor.u32 %v6017, 2147483648
    %v6019 = vsel %vm5936, %v6018, %v6017
    %v6020 = vsub.s32 4, %v5996
    %v6021 = vsel %vm5936, %v6020, %v5996
    %v6022 = vsel %vm5935, %v901, %v6019
    %v6023 = vsel %vm5935, 0, %v6021
    %v6024 = vcosq.f32.pop %v6022
    %v6025 = vsinq.f32.pop %v6022
    %vm6026 = vweird.f32 %v901
    %v6027 = vadd.s32 %v6023, 3
    %v6028 = vand.u32 %v6027, 3
    %vm6029 = vcmp.lt.s32.totalorder %v6028, 2
    %vm6030 = vcmp.eq.s32.totalorder %v6028, 0
    %v6031 = vxor.u32 %v6025, 2147483648
    %v6032 = vsel %vm6030, %v6024, %v6031
    %vm6033 = vcmp.eq.s32.totalorder %v6028, 2
    %v6034 = vxor.u32 %v6024, 2147483648
    %v6035 = vsel %vm6033, %v6034, %v6025
    %v6036 = vsel %vm6029, %v6032, %v6035
    %v6037 = vsel %vm6026, nan, %v6036
    %v6038 = vand.u32 2147483647, %v902
    %vm6039 = vcmp.le.f32.partialorder %v6038, 0.7853982
    %vm6040 = vcmp.lt.s32.totalorder %v902, 0
    %v6041 = vand.u32 %v902, 2139095040
    %v6042 = vshrl.u32 %v6041, 23
    %v6043 = vsub.s32 %v6042, 127
    %v6044 = vand.u32 2147483647, %v902
    %v6045 = vand.u32 %v6044, 8388607
    %v6046 = vor.u32 %v6045, 8388608
    %v6047 = vsub.s32 0, %v6046
    %v6048 = vadd.s32 %v6043, 1
    %vm6049 = vcmp.gt.s32.totalorder %v6048, 0
    %v6050 = vsel %vm6049, %v6048, 0
    %v6051 = vshrl.u32 %v6050, 5
    %v6052 = vand.u32 %v6050, 31
    %v6053 = vsub.s32 32, %v6052
    %v6054 = vshrl.u32 683565275, %v6053
    %v6055 = vshll.u32 683565275, %v6052
    %v6056 = vshrl.u32 2475754826, %v6053
    %v6057 = vor.u32 %v6055, %v6056
    %v6058 = vshll.u32 2475754826, %v6052
    %v6059 = vshrl.u32 2131351028, %v6053
    %v6060 = vor.u32 %v6058, %v6059
    %v6061 = vshll.u32 2131351028, %v6052
    %v6062 = vshrl.u32 2102212464, %v6053
    %v6063 = vor.u32 %v6061, %v6062
    %v6064 = vshll.u32 2102212464, %v6052
    %v6065 = vshrl.u32 920167782, %v6053
    %v6066 = vor.u32 %v6064, %v6065
    %v6067 = vshll.u32 920167782, %v6052
    %v6068 = vshrl.u32 1326507024, %v6053
    %v6069 = vor.u32 %v6067, %v6068
    %vm6070 = vcmp.lt.s32.totalorder %v6051, 1
    %vm6071 = vcmp.lt.s32.totalorder %v6051, 2
    %vm6072 = vcmp.lt.s32.totalorder %v6051, 3
    %vm6073 = vcmp.lt.s32.totalorder %v6051, 4
    %v6074 = vsel %vm6070, %v6054, %v6057
    %v6075 = vsel %vm6073, %v6063, 2102212464
    %v6076 = vsel %vm6072, %v6060, %v6075
    %v6077 = vsel %vm6071, %v6074, %v6076
    %v6078 = vsel %vm6070, %v6057, %v6060
    %v6079 = vsel %vm6073, %v6066, 920167782
    %v6080 = vsel %vm6072, %v6063, %v6079
    %v6081 = vsel %vm6071, %v6078, %v6080
    %v6082 = vsel %vm6070, %v6060, %v6063
    %v6083 = vsel %vm6073, %v6069, 1326507024
    %v6084 = vsel %vm6072, %v6066, %v6083
    %v6085 = vsel %vm6071, %v6082, %v6084
    %v6086 = vshll.u32 %v6046, 8
    %v6087 = vmul.u32.u64.compose %v6086, %v6085
    %v6088 = vextract.low.u32 %v6087
    %v6089 = vextract.high.u32 %v6087
    %v6090 = vmul.u32.u64.compose %v6086, %v6081
    %v6091 = vextract.low.u32 %v6090
    %v6092 = vextract.high.u32 %v6090
    %v6093 = vmul.u32 %v6086, %v6077
    %v6094 = vadd.s32 %v6089, %v6091
    %vm6095 = vc.u32 %v6089, %v6091
    %v6096 = vadd.s32 %v6092, 1
    %v6097 = vsel %vm6095, %v6096, %v6092
    %v6098 = vadd.s32 %v6093, %v6097
    %v6099 = vadd.s32 %v6098, 536870912
    %v6100 = vshrl.u32 %v6099, 30
    %v6101 = vshll.u32 %v6100, 30
    %v6102 = vsub.s32 %v6098, %v6101
    %vm6103 = vcmp.lt.s32.totalorder %v6102, 0
    %v6104 = vsub.s32 0, %v6102
    %v6105 = vsel %vm6103, %v6104, %v6102
    %v6106 = vclz %v6105
    %v6107 = vsub.s32 %v6106, 2
    %vm6108 = vcmp.gt.s32.totalorder 0, %v6107
    %v6109 = vsel %vm6108, 0, %v6107
    %v6110 = vsub.s32 32, %v6109
    %v6111 = vshll.u32 %v6102, %v6109
    %v6112 = vshrl.u32 %v6094, %v6110
    %v6113 = vor.u32 %v6111, %v6112
    %v6114 = vsub.s32 4294967266, %v6109
    %v6115 = vadd.s32 %v6114, 127
    %v6116 = vshll.u32 %v6115, 23
    %v6117 = vor.u32 4788187, %v6116
    %v6118 = vand.u32 2147483647, %v6117
    %v6120 = vcvt.s32.f32 %v6113
    %v6121 = vmul.f32 %v6120, %v6118
    %v6122 = vxor.u32 %v6121, 2147483648
    %v6123 = vsel %vm6040, %v6122, %v6121
    %v6124 = vsub.s32 4, %v6100
    %v6125 = vsel %vm6040, %v6124, %v6100
    %v6126 = vsel %vm6039, %v902, %v6123
    %v6127 = vsel %vm6039, 0, %v6125
    %v6128 = vcosq.f32.pop %v6126
    %v6129 = vsinq.f32.pop %v6126
    %vm6130 = vweird.f32 %v902
    %v6131 = vadd.s32 %v6127, 3
    %v6132 = vand.u32 %v6131, 3
    %vm6133 = vcmp.lt.s32.totalorder %v6132, 2
    %vm6134 = vcmp.eq.s32.totalorder %v6132, 0
    %v6135 = vxor.u32 %v6129, 2147483648
    %v6136 = vsel %vm6134, %v6128, %v6135
    %vm6137 = vcmp.eq.s32.totalorder %v6132, 2
    %v6138 = vxor.u32 %v6128, 2147483648
    %v6139 = vsel %vm6137, %v6138, %v6129
    %v6140 = vsel %vm6133, %v6136, %v6139
    %v6141 = vsel %vm6130, nan, %v6140
    %v6142 = vand.u32 2147483647, %v903
    %vm6143 = vcmp.le.f32.partialorder %v6142, 0.7853982
    %vm6144 = vcmp.lt.s32.totalorder %v903, 0
    %v6145 = vand.u32 %v903, 2139095040
    %v6146 = vshrl.u32 %v6145, 23
    %v6147 = vsub.s32 %v6146, 127
    %v6148 = vand.u32 2147483647, %v903
    %v6149 = vand.u32 %v6148, 8388607
    %v6150 = vor.u32 %v6149, 8388608
    %v6151 = vsub.s32 0, %v6150
    %v6152 = vadd.s32 %v6147, 1
    %vm6153 = vcmp.gt.s32.totalorder %v6152, 0
    %v6154 = vsel %vm6153, %v6152, 0
    %v6155 = vshrl.u32 %v6154, 5
    %v6156 = vand.u32 %v6154, 31
    %v6157 = vsub.s32 32, %v6156
    %v6158 = vshrl.u32 683565275, %v6157
    %v6159 = vshll.u32 683565275, %v6156
    %v6160 = vshrl.u32 2475754826, %v6157
    %v6161 = vor.u32 %v6159, %v6160
    %v6162 = vshll.u32 2475754826, %v6156
    %v6163 = vshrl.u32 2131351028, %v6157
    %v6164 = vor.u32 %v6162, %v6163
    %v6165 = vshll.u32 2131351028, %v6156
    %v6166 = vshrl.u32 2102212464, %v6157
    %v6167 = vor.u32 %v6165, %v6166
    %v6168 = vshll.u32 2102212464, %v6156
    %v6169 = vshrl.u32 920167782, %v6157
    %v6170 = vor.u32 %v6168, %v6169
    %v6171 = vshll.u32 920167782, %v6156
    %v6172 = vshrl.u32 1326507024, %v6157
    %v6173 = vor.u32 %v6171, %v6172
    %vm6174 = vcmp.lt.s32.totalorder %v6155, 1
    %vm6175 = vcmp.lt.s32.totalorder %v6155, 2
    %vm6176 = vcmp.lt.s32.totalorder %v6155, 3
    %vm6177 = vcmp.lt.s32.totalorder %v6155, 4
    %v6178 = vsel %vm6174, %v6158, %v6161
    %v6179 = vsel %vm6177, %v6167, 2102212464
    %v6180 = vsel %vm6176, %v6164, %v6179
    %v6181 = vsel %vm6175, %v6178, %v6180
    %v6182 = vsel %vm6174, %v6161, %v6164
    %v6183 = vsel %vm6177, %v6170, 920167782
    %v6184 = vsel %vm6176, %v6167, %v6183
    %v6185 = vsel %vm6175, %v6182, %v6184
    %v6186 = vsel %vm6174, %v6164, %v6167
    %v6187 = vsel %vm6177, %v6173, 1326507024
    %v6188 = vsel %vm6176, %v6170, %v6187
    %v6189 = vsel %vm6175, %v6186, %v6188
    %v6190 = vshll.u32 %v6150, 8
    %v6191 = vmul.u32.u64.compose %v6190, %v6189
    %v6192 = vextract.low.u32 %v6191
    %v6193 = vextract.high.u32 %v6191
    %v6194 = vmul.u32.u64.compose %v6190, %v6185
    %v6195 = vextract.low.u32 %v6194
    %v6196 = vextract.high.u32 %v6194
    %v6197 = vmul.u32 %v6190, %v6181
    %v6198 = vadd.s32 %v6193, %v6195
    %vm6199 = vc.u32 %v6193, %v6195
    %v6200 = vadd.s32 %v6196, 1
    %v6201 = vsel %vm6199, %v6200, %v6196
    %v6202 = vadd.s32 %v6197, %v6201
    %v6203 = vadd.s32 %v6202, 536870912
    %v6204 = vshrl.u32 %v6203, 30
    %v6205 = vshll.u32 %v6204, 30
    %v6206 = vsub.s32 %v6202, %v6205
    %vm6207 = vcmp.lt.s32.totalorder %v6206, 0
    %v6208 = vsub.s32 0, %v6206
    %v6209 = vsel %vm6207, %v6208, %v6206
    %v6210 = vclz %v6209
    %v6211 = vsub.s32 %v6210, 2
    %vm6212 = vcmp.gt.s32.totalorder 0, %v6211
    %v6213 = vsel %vm6212, 0, %v6211
    %v6214 = vsub.s32 32, %v6213
    %v6215 = vshll.u32 %v6206, %v6213
    %v6216 = vshrl.u32 %v6198, %v6214
    %v6217 = vor.u32 %v6215, %v6216
    %v6218 = vsub.s32 4294967266, %v6213
    %v6219 = vadd.s32 %v6218, 127
    %v6220 = vshll.u32 %v6219, 23
    %v6221 = vor.u32 4788187, %v6220
    %v6222 = vand.u32 2147483647, %v6221
    %v6224 = vcvt.s32.f32 %v6217
    %v6225 = vmul.f32 %v6224, %v6222
    %v6226 = vxor.u32 %v6225, 2147483648
    %v6227 = vsel %vm6144, %v6226, %v6225
    %v6228 = vsub.s32 4, %v6204
    %v6229 = vsel %vm6144, %v6228, %v6204
    %v6230 = vsel %vm6143, %v903, %v6227
    %v6231 = vsel %vm6143, 0, %v6229
    %v6232 = vcosq.f32.pop %v6230
    %v6233 = vsinq.f32.pop %v6230
    %vm6234 = vweird.f32 %v903
    %v6235 = vadd.s32 %v6231, 3
    %v6236 = vand.u32 %v6235, 3
    %vm6237 = vcmp.lt.s32.totalorder %v6236, 2
    %vm6238 = vcmp.eq.s32.totalorder %v6236, 0
    %v6239 = vxor.u32 %v6233, 2147483648
    %v6240 = vsel %vm6238, %v6232, %v6239
    %vm6241 = vcmp.eq.s32.totalorder %v6236, 2
    %v6242 = vxor.u32 %v6232, 2147483648
    %v6243 = vsel %vm6241, %v6242, %v6233
    %v6244 = vsel %vm6237, %v6240, %v6243
    %v6245 = vsel %vm6234, nan, %v6244
    %v6246 = vand.u32 2147483647, %v904
    %vm6247 = vcmp.le.f32.partialorder %v6246, 0.7853982
    %vm6248 = vcmp.lt.s32.totalorder %v904, 0
    %v6249 = vand.u32 %v904, 2139095040
    %v6250 = vshrl.u32 %v6249, 23
    %v6251 = vsub.s32 %v6250, 127
    %v6252 = vand.u32 2147483647, %v904
    %v6253 = vand.u32 %v6252, 8388607
    %v6254 = vor.u32 %v6253, 8388608
    %v6255 = vsub.s32 0, %v6254
    %v6256 = vadd.s32 %v6251, 1
    %vm6257 = vcmp.gt.s32.totalorder %v6256, 0
    %v6258 = vsel %vm6257, %v6256, 0
    %v6259 = vshrl.u32 %v6258, 5
    %v6260 = vand.u32 %v6258, 31
    %v6261 = vsub.s32 32, %v6260
    %v6262 = vshrl.u32 683565275, %v6261
    %v6263 = vshll.u32 683565275, %v6260
    %v6264 = vshrl.u32 2475754826, %v6261
    %v6265 = vor.u32 %v6263, %v6264
    %v6266 = vshll.u32 2475754826, %v6260
    %v6267 = vshrl.u32 2131351028, %v6261
    %v6268 = vor.u32 %v6266, %v6267
    %v6269 = vshll.u32 2131351028, %v6260
    %v6270 = vshrl.u32 2102212464, %v6261
    %v6271 = vor.u32 %v6269, %v6270
    %v6272 = vshll.u32 2102212464, %v6260
    %v6273 = vshrl.u32 920167782, %v6261
    %v6274 = vor.u32 %v6272, %v6273
    %v6275 = vshll.u32 920167782, %v6260
    %v6276 = vshrl.u32 1326507024, %v6261
    %v6277 = vor.u32 %v6275, %v6276
    %vm6278 = vcmp.lt.s32.totalorder %v6259, 1
    %vm6279 = vcmp.lt.s32.totalorder %v6259, 2
    %vm6280 = vcmp.lt.s32.totalorder %v6259, 3
    %vm6281 = vcmp.lt.s32.totalorder %v6259, 4
    %v6282 = vsel %vm6278, %v6262, %v6265
    %v6283 = vsel %vm6281, %v6271, 2102212464
    %v6284 = vsel %vm6280, %v6268, %v6283
    %v6285 = vsel %vm6279, %v6282, %v6284
    %v6286 = vsel %vm6278, %v6265, %v6268
    %v6287 = vsel %vm6281, %v6274, 920167782
    %v6288 = vsel %vm6280, %v6271, %v6287
    %v6289 = vsel %vm6279, %v6286, %v6288
    %v6290 = vsel %vm6278, %v6268, %v6271
    %v6291 = vsel %vm6281, %v6277, 1326507024
    %v6292 = vsel %vm6280, %v6274, %v6291
    %v6293 = vsel %vm6279, %v6290, %v6292
    %v6294 = vshll.u32 %v6254, 8
    %v6295 = vmul.u32.u64.compose %v6294, %v6293
    %v6296 = vextract.low.u32 %v6295
    %v6297 = vextract.high.u32 %v6295
    %v6298 = vmul.u32.u64.compose %v6294, %v6289
    %v6299 = vextract.low.u32 %v6298
    %v6300 = vextract.high.u32 %v6298
    %v6301 = vmul.u32 %v6294, %v6285
    %v6302 = vadd.s32 %v6297, %v6299
    %vm6303 = vc.u32 %v6297, %v6299
    %v6304 = vadd.s32 %v6300, 1
    %v6305 = vsel %vm6303, %v6304, %v6300
    %v6306 = vadd.s32 %v6301, %v6305
    %v6307 = vadd.s32 %v6306, 536870912
    %v6308 = vshrl.u32 %v6307, 30
    %v6309 = vshll.u32 %v6308, 30
    %v6310 = vsub.s32 %v6306, %v6309
    %vm6311 = vcmp.lt.s32.totalorder %v6310, 0
    %v6312 = vsub.s32 0, %v6310
    %v6313 = vsel %vm6311, %v6312, %v6310
    %v6314 = vclz %v6313
    %v6315 = vsub.s32 %v6314, 2
    %vm6316 = vcmp.gt.s32.totalorder 0, %v6315
    %v6317 = vsel %vm6316, 0, %v6315
    %v6318 = vsub.s32 32, %v6317
    %v6319 = vshll.u32 %v6310, %v6317
    %v6320 = vshrl.u32 %v6302, %v6318
    %v6321 = vor.u32 %v6319, %v6320
    %v6322 = vsub.s32 4294967266, %v6317
    %v6323 = vadd.s32 %v6322, 127
    %v6324 = vshll.u32 %v6323, 23
    %v6325 = vor.u32 4788187, %v6324
    %v6326 = vand.u32 2147483647, %v6325
    %v6328 = vcvt.s32.f32 %v6321
    %v6329 = vmul.f32 %v6328, %v6326
    %v6330 = vxor.u32 %v6329, 2147483648
    %v6331 = vsel %vm6248, %v6330, %v6329
    %v6332 = vsub.s32 4, %v6308
    %v6333 = vsel %vm6248, %v6332, %v6308
    %v6334 = vsel %vm6247, %v904, %v6331
    %v6335 = vsel %vm6247, 0, %v6333
    %v6336 = vcosq.f32.pop %v6334
    %v6337 = vsinq.f32.pop %v6334
    %vm6338 = vweird.f32 %v904
    %v6339 = vadd.s32 %v6335, 3
    %v6340 = vand.u32 %v6339, 3
    %vm6341 = vcmp.lt.s32.totalorder %v6340, 2
    %vm6342 = vcmp.eq.s32.totalorder %v6340, 0
    %v6343 = vxor.u32 %v6337, 2147483648
    %v6344 = vsel %vm6342, %v6336, %v6343
    %vm6345 = vcmp.eq.s32.totalorder %v6340, 2
    %v6346 = vxor.u32 %v6336, 2147483648
    %v6347 = vsel %vm6345, %v6346, %v6337
    %v6348 = vsel %vm6341, %v6344, %v6347
    %v6349 = vsel %vm6338, nan, %v6348
    %v6350 = vand.u32 2147483647, %v905
    %vm6351 = vcmp.le.f32.partialorder %v6350, 0.7853982
    %vm6352 = vcmp.lt.s32.totalorder %v905, 0
    %v6353 = vand.u32 %v905, 2139095040
    %v6354 = vshrl.u32 %v6353, 23
    %v6355 = vsub.s32 %v6354, 127
    %v6356 = vand.u32 2147483647, %v905
    %v6357 = vand.u32 %v6356, 8388607
    %v6358 = vor.u32 %v6357, 8388608
    %v6359 = vsub.s32 0, %v6358
    %v6360 = vadd.s32 %v6355, 1
    %vm6361 = vcmp.gt.s32.totalorder %v6360, 0
    %v6362 = vsel %vm6361, %v6360, 0
    %v6363 = vshrl.u32 %v6362, 5
    %v6364 = vand.u32 %v6362, 31
    %v6365 = vsub.s32 32, %v6364
    %v6366 = vshrl.u32 683565275, %v6365
    %v6367 = vshll.u32 683565275, %v6364
    %v6368 = vshrl.u32 2475754826, %v6365
    %v6369 = vor.u32 %v6367, %v6368
    %v6370 = vshll.u32 2475754826, %v6364
    %v6371 = vshrl.u32 2131351028, %v6365
    %v6372 = vor.u32 %v6370, %v6371
    %v6373 = vshll.u32 2131351028, %v6364
    %v6374 = vshrl.u32 2102212464, %v6365
    %v6375 = vor.u32 %v6373, %v6374
    %v6376 = vshll.u32 2102212464, %v6364
    %v6377 = vshrl.u32 920167782, %v6365
    %v6378 = vor.u32 %v6376, %v6377
    %v6379 = vshll.u32 920167782, %v6364
    %v6380 = vshrl.u32 1326507024, %v6365
    %v6381 = vor.u32 %v6379, %v6380
    %vm6382 = vcmp.lt.s32.totalorder %v6363, 1
    %vm6383 = vcmp.lt.s32.totalorder %v6363, 2
    %vm6384 = vcmp.lt.s32.totalorder %v6363, 3
    %vm6385 = vcmp.lt.s32.totalorder %v6363, 4
    %v6386 = vsel %vm6382, %v6366, %v6369
    %v6387 = vsel %vm6385, %v6375, 2102212464
    %v6388 = vsel %vm6384, %v6372, %v6387
    %v6389 = vsel %vm6383, %v6386, %v6388
    %v6390 = vsel %vm6382, %v6369, %v6372
    %v6391 = vsel %vm6385, %v6378, 920167782
    %v6392 = vsel %vm6384, %v6375, %v6391
    %v6393 = vsel %vm6383, %v6390, %v6392
    %v6394 = vsel %vm6382, %v6372, %v6375
    %v6395 = vsel %vm6385, %v6381, 1326507024
    %v6396 = vsel %vm6384, %v6378, %v6395
    %v6397 = vsel %vm6383, %v6394, %v6396
    %v6398 = vshll.u32 %v6358, 8
    %v6399 = vmul.u32.u64.compose %v6398, %v6397
    %v6400 = vextract.low.u32 %v6399
    %v6401 = vextract.high.u32 %v6399
    %v6402 = vmul.u32.u64.compose %v6398, %v6393
    %v6403 = vextract.low.u32 %v6402
    %v6404 = vextract.high.u32 %v6402
    %v6405 = vmul.u32 %v6398, %v6389
    %v6406 = vadd.s32 %v6401, %v6403
    %vm6407 = vc.u32 %v6401, %v6403
    %v6408 = vadd.s32 %v6404, 1
    %v6409 = vsel %vm6407, %v6408, %v6404
    %v6410 = vadd.s32 %v6405, %v6409
    %v6411 = vadd.s32 %v6410, 536870912
    %v6412 = vshrl.u32 %v6411, 30
    %v6413 = vshll.u32 %v6412, 30
    %v6414 = vsub.s32 %v6410, %v6413
    %vm6415 = vcmp.lt.s32.totalorder %v6414, 0
    %v6416 = vsub.s32 0, %v6414
    %v6417 = vsel %vm6415, %v6416, %v6414
    %v6418 = vclz %v6417
    %v6419 = vsub.s32 %v6418, 2
    %vm6420 = vcmp.gt.s32.totalorder 0, %v6419
    %v6421 = vsel %vm6420, 0, %v6419
    %v6422 = vsub.s32 32, %v6421
    %v6423 = vshll.u32 %v6414, %v6421
    %v6424 = vshrl.u32 %v6406, %v6422
    %v6425 = vor.u32 %v6423, %v6424
    %v6426 = vsub.s32 4294967266, %v6421
    %v6427 = vadd.s32 %v6426, 127
    %v6428 = vshll.u32 %v6427, 23
    %v6429 = vor.u32 4788187, %v6428
    %v6430 = vand.u32 2147483647, %v6429
    %v6432 = vcvt.s32.f32 %v6425
    %v6433 = vmul.f32 %v6432, %v6430
    %v6434 = vxor.u32 %v6433, 2147483648
    %v6435 = vsel %vm6352, %v6434, %v6433
    %v6436 = vsub.s32 4, %v6412
    %v6437 = vsel %vm6352, %v6436, %v6412
    %v6438 = vsel %vm6351, %v905, %v6435
    %v6439 = vsel %vm6351, 0, %v6437
    %v6440 = vcosq.f32.pop %v6438
    %v6441 = vsinq.f32.pop %v6438
    %vm6442 = vweird.f32 %v905
    %v6443 = vadd.s32 %v6439, 3
    %v6444 = vand.u32 %v6443, 3
    %vm6445 = vcmp.lt.s32.totalorder %v6444, 2
    %vm6446 = vcmp.eq.s32.totalorder %v6444, 0
    %v6447 = vxor.u32 %v6441, 2147483648
    %v6448 = vsel %vm6446, %v6440, %v6447
    %vm6449 = vcmp.eq.s32.totalorder %v6444, 2
    %v6450 = vxor.u32 %v6440, 2147483648
    %v6451 = vsel %vm6449, %v6450, %v6441
    %v6452 = vsel %vm6445, %v6448, %v6451
    %v6453 = vsel %vm6442, nan, %v6452
    %v6454 = vand.u32 2147483647, %v906
    %vm6455 = vcmp.le.f32.partialorder %v6454, 0.7853982
    %vm6456 = vcmp.lt.s32.totalorder %v906, 0
    %v6457 = vand.u32 %v906, 2139095040
    %v6458 = vshrl.u32 %v6457, 23
    %v6459 = vsub.s32 %v6458, 127
    %v6460 = vand.u32 2147483647, %v906
    %v6461 = vand.u32 %v6460, 8388607
    %v6462 = vor.u32 %v6461, 8388608
    %v6463 = vsub.s32 0, %v6462
    %v6464 = vadd.s32 %v6459, 1
    %vm6465 = vcmp.gt.s32.totalorder %v6464, 0
    %v6466 = vsel %vm6465, %v6464, 0
    %v6467 = vshrl.u32 %v6466, 5
    %v6468 = vand.u32 %v6466, 31
    %v6469 = vsub.s32 32, %v6468
    %v6470 = vshrl.u32 683565275, %v6469
    %v6471 = vshll.u32 683565275, %v6468
    %v6472 = vshrl.u32 2475754826, %v6469
    %v6473 = vor.u32 %v6471, %v6472
    %v6474 = vshll.u32 2475754826, %v6468
    %v6475 = vshrl.u32 2131351028, %v6469
    %v6476 = vor.u32 %v6474, %v6475
    %v6477 = vshll.u32 2131351028, %v6468
    %v6478 = vshrl.u32 2102212464, %v6469
    %v6479 = vor.u32 %v6477, %v6478
    %v6480 = vshll.u32 2102212464, %v6468
    %v6481 = vshrl.u32 920167782, %v6469
    %v6482 = vor.u32 %v6480, %v6481
    %v6483 = vshll.u32 920167782, %v6468
    %v6484 = vshrl.u32 1326507024, %v6469
    %v6485 = vor.u32 %v6483, %v6484
    %vm6486 = vcmp.lt.s32.totalorder %v6467, 1
    %vm6487 = vcmp.lt.s32.totalorder %v6467, 2
    %vm6488 = vcmp.lt.s32.totalorder %v6467, 3
    %vm6489 = vcmp.lt.s32.totalorder %v6467, 4
    %v6490 = vsel %vm6486, %v6470, %v6473
    %v6491 = vsel %vm6489, %v6479, 2102212464
    %v6492 = vsel %vm6488, %v6476, %v6491
    %v6493 = vsel %vm6487, %v6490, %v6492
    %v6494 = vsel %vm6486, %v6473, %v6476
    %v6495 = vsel %vm6489, %v6482, 920167782
    %v6496 = vsel %vm6488, %v6479, %v6495
    %v6497 = vsel %vm6487, %v6494, %v6496
    %v6498 = vsel %vm6486, %v6476, %v6479
    %v6499 = vsel %vm6489, %v6485, 1326507024
    %v6500 = vsel %vm6488, %v6482, %v6499
    %v6501 = vsel %vm6487, %v6498, %v6500
    %v6502 = vshll.u32 %v6462, 8
    %v6503 = vmul.u32.u64.compose %v6502, %v6501
    %v6504 = vextract.low.u32 %v6503
    %v6505 = vextract.high.u32 %v6503
    %v6506 = vmul.u32.u64.compose %v6502, %v6497
    %v6507 = vextract.low.u32 %v6506
    %v6508 = vextract.high.u32 %v6506
    %v6509 = vmul.u32 %v6502, %v6493
    %v6510 = vadd.s32 %v6505, %v6507
    %vm6511 = vc.u32 %v6505, %v6507
    %v6512 = vadd.s32 %v6508, 1
    %v6513 = vsel %vm6511, %v6512, %v6508
    %v6514 = vadd.s32 %v6509, %v6513
    %v6515 = vadd.s32 %v6514, 536870912
    %v6516 = vshrl.u32 %v6515, 30
    %v6517 = vshll.u32 %v6516, 30
    %v6518 = vsub.s32 %v6514, %v6517
    %vm6519 = vcmp.lt.s32.totalorder %v6518, 0
    %v6520 = vsub.s32 0, %v6518
    %v6521 = vsel %vm6519, %v6520, %v6518
    %v6522 = vclz %v6521
    %v6523 = vsub.s32 %v6522, 2
    %vm6524 = vcmp.gt.s32.totalorder 0, %v6523
    %v6525 = vsel %vm6524, 0, %v6523
    %v6526 = vsub.s32 32, %v6525
    %v6527 = vshll.u32 %v6518, %v6525
    %v6528 = vshrl.u32 %v6510, %v6526
    %v6529 = vor.u32 %v6527, %v6528
    %v6530 = vsub.s32 4294967266, %v6525
    %v6531 = vadd.s32 %v6530, 127
    %v6532 = vshll.u32 %v6531, 23
    %v6533 = vor.u32 4788187, %v6532
    %v6534 = vand.u32 2147483647, %v6533
    %v6536 = vcvt.s32.f32 %v6529
    %v6537 = vmul.f32 %v6536, %v6534
    %v6538 = vxor.u32 %v6537, 2147483648
    %v6539 = vsel %vm6456, %v6538, %v6537
    %v6540 = vsub.s32 4, %v6516
    %v6541 = vsel %vm6456, %v6540, %v6516
    %v6542 = vsel %vm6455, %v906, %v6539
    %v6543 = vsel %vm6455, 0, %v6541
    %v6544 = vcosq.f32.pop %v6542
    %v6545 = vsinq.f32.pop %v6542
    %vm6546 = vweird.f32 %v906
    %v6547 = vadd.s32 %v6543, 3
    %v6548 = vand.u32 %v6547, 3
    %vm6549 = vcmp.lt.s32.totalorder %v6548, 2
    %vm6550 = vcmp.eq.s32.totalorder %v6548, 0
    %v6551 = vxor.u32 %v6545, 2147483648
    %v6552 = vsel %vm6550, %v6544, %v6551
    %vm6553 = vcmp.eq.s32.totalorder %v6548, 2
    %v6554 = vxor.u32 %v6544, 2147483648
    %v6555 = vsel %vm6553, %v6554, %v6545
    %v6556 = vsel %vm6549, %v6552, %v6555
    %v6557 = vsel %vm6546, nan, %v6556
    %v6558 = vand.u32 2147483647, %v907
    %vm6559 = vcmp.le.f32.partialorder %v6558, 0.7853982
    %vm6560 = vcmp.lt.s32.totalorder %v907, 0
    %v6561 = vand.u32 %v907, 2139095040
    %v6562 = vshrl.u32 %v6561, 23
    %v6563 = vsub.s32 %v6562, 127
    %v6564 = vand.u32 2147483647, %v907
    %v6565 = vand.u32 %v6564, 8388607
    %v6566 = vor.u32 %v6565, 8388608
    %v6567 = vsub.s32 0, %v6566
    %v6568 = vadd.s32 %v6563, 1
    %vm6569 = vcmp.gt.s32.totalorder %v6568, 0
    %v6570 = vsel %vm6569, %v6568, 0
    %v6571 = vshrl.u32 %v6570, 5
    %v6572 = vand.u32 %v6570, 31
    %v6573 = vsub.s32 32, %v6572
    %v6574 = vshrl.u32 683565275, %v6573
    %v6575 = vshll.u32 683565275, %v6572
    %v6576 = vshrl.u32 2475754826, %v6573
    %v6577 = vor.u32 %v6575, %v6576
    %v6578 = vshll.u32 2475754826, %v6572
    %v6579 = vshrl.u32 2131351028, %v6573
    %v6580 = vor.u32 %v6578, %v6579
    %v6581 = vshll.u32 2131351028, %v6572
    %v6582 = vshrl.u32 2102212464, %v6573
    %v6583 = vor.u32 %v6581, %v6582
    %v6584 = vshll.u32 2102212464, %v6572
    %v6585 = vshrl.u32 920167782, %v6573
    %v6586 = vor.u32 %v6584, %v6585
    %v6587 = vshll.u32 920167782, %v6572
    %v6588 = vshrl.u32 1326507024, %v6573
    %v6589 = vor.u32 %v6587, %v6588
    %vm6590 = vcmp.lt.s32.totalorder %v6571, 1
    %vm6591 = vcmp.lt.s32.totalorder %v6571, 2
    %vm6592 = vcmp.lt.s32.totalorder %v6571, 3
    %vm6593 = vcmp.lt.s32.totalorder %v6571, 4
    %v6594 = vsel %vm6590, %v6574, %v6577
    %v6595 = vsel %vm6593, %v6583, 2102212464
    %v6596 = vsel %vm6592, %v6580, %v6595
    %v6597 = vsel %vm6591, %v6594, %v6596
    %v6598 = vsel %vm6590, %v6577, %v6580
    %v6599 = vsel %vm6593, %v6586, 920167782
    %v6600 = vsel %vm6592, %v6583, %v6599
    %v6601 = vsel %vm6591, %v6598, %v6600
    %v6602 = vsel %vm6590, %v6580, %v6583
    %v6603 = vsel %vm6593, %v6589, 1326507024
    %v6604 = vsel %vm6592, %v6586, %v6603
    %v6605 = vsel %vm6591, %v6602, %v6604
    %v6606 = vshll.u32 %v6566, 8
    %v6607 = vmul.u32.u64.compose %v6606, %v6605
    %v6608 = vextract.low.u32 %v6607
    %v6609 = vextract.high.u32 %v6607
    %v6610 = vmul.u32.u64.compose %v6606, %v6601
    %v6611 = vextract.low.u32 %v6610
    %v6612 = vextract.high.u32 %v6610
    %v6613 = vmul.u32 %v6606, %v6597
    %v6614 = vadd.s32 %v6609, %v6611
    %vm6615 = vc.u32 %v6609, %v6611
    %v6616 = vadd.s32 %v6612, 1
    %v6617 = vsel %vm6615, %v6616, %v6612
    %v6618 = vadd.s32 %v6613, %v6617
    %v6619 = vadd.s32 %v6618, 536870912
    %v6620 = vshrl.u32 %v6619, 30
    %v6621 = vshll.u32 %v6620, 30
    %v6622 = vsub.s32 %v6618, %v6621
    %vm6623 = vcmp.lt.s32.totalorder %v6622, 0
    %v6624 = vsub.s32 0, %v6622
    %v6625 = vsel %vm6623, %v6624, %v6622
    %v6626 = vclz %v6625
    %v6627 = vsub.s32 %v6626, 2
    %vm6628 = vcmp.gt.s32.totalorder 0, %v6627
    %v6629 = vsel %vm6628, 0, %v6627
    %v6630 = vsub.s32 32, %v6629
    %v6631 = vshll.u32 %v6622, %v6629
    %v6632 = vshrl.u32 %v6614, %v6630
    %v6633 = vor.u32 %v6631, %v6632
    %v6634 = vsub.s32 4294967266, %v6629
    %v6635 = vadd.s32 %v6634, 127
    %v6636 = vshll.u32 %v6635, 23
    %v6637 = vor.u32 4788187, %v6636
    %v6638 = vand.u32 2147483647, %v6637
    %v6640 = vcvt.s32.f32 %v6633
    %v6641 = vmul.f32 %v6640, %v6638
    %v6642 = vxor.u32 %v6641, 2147483648
    %v6643 = vsel %vm6560, %v6642, %v6641
    %v6644 = vsub.s32 4, %v6620
    %v6645 = vsel %vm6560, %v6644, %v6620
    %v6646 = vsel %vm6559, %v907, %v6643
    %v6647 = vsel %vm6559, 0, %v6645
    %v6648 = vcosq.f32.pop %v6646
    %v6649 = vsinq.f32.pop %v6646
    %vm6650 = vweird.f32 %v907
    %v6651 = vadd.s32 %v6647, 3
    %v6652 = vand.u32 %v6651, 3
    %vm6653 = vcmp.lt.s32.totalorder %v6652, 2
    %vm6654 = vcmp.eq.s32.totalorder %v6652, 0
    %v6655 = vxor.u32 %v6649, 2147483648
    %v6656 = vsel %vm6654, %v6648, %v6655
    %vm6657 = vcmp.eq.s32.totalorder %v6652, 2
    %v6658 = vxor.u32 %v6648, 2147483648
    %v6659 = vsel %vm6657, %v6658, %v6649
    %v6660 = vsel %vm6653, %v6656, %v6659
    %v6661 = vsel %vm6650, nan, %v6660
    %v6662 = vand.u32 2147483647, %v908
    %vm6663 = vcmp.le.f32.partialorder %v6662, 0.7853982
    %vm6664 = vcmp.lt.s32.totalorder %v908, 0
    %v6665 = vand.u32 %v908, 2139095040
    %v6666 = vshrl.u32 %v6665, 23
    %v6667 = vsub.s32 %v6666, 127
    %v6668 = vand.u32 2147483647, %v908
    %v6669 = vand.u32 %v6668, 8388607
    %v6670 = vor.u32 %v6669, 8388608
    %v6671 = vsub.s32 0, %v6670
    %v6672 = vadd.s32 %v6667, 1
    %vm6673 = vcmp.gt.s32.totalorder %v6672, 0
    %v6674 = vsel %vm6673, %v6672, 0
    %v6675 = vshrl.u32 %v6674, 5
    %v6676 = vand.u32 %v6674, 31
    %v6677 = vsub.s32 32, %v6676
    %v6678 = vshrl.u32 683565275, %v6677
    %v6679 = vshll.u32 683565275, %v6676
    %v6680 = vshrl.u32 2475754826, %v6677
    %v6681 = vor.u32 %v6679, %v6680
    %v6682 = vshll.u32 2475754826, %v6676
    %v6683 = vshrl.u32 2131351028, %v6677
    %v6684 = vor.u32 %v6682, %v6683
    %v6685 = vshll.u32 2131351028, %v6676
    %v6686 = vshrl.u32 2102212464, %v6677
    %v6687 = vor.u32 %v6685, %v6686
    %v6688 = vshll.u32 2102212464, %v6676
    %v6689 = vshrl.u32 920167782, %v6677
    %v6690 = vor.u32 %v6688, %v6689
    %v6691 = vshll.u32 920167782, %v6676
    %v6692 = vshrl.u32 1326507024, %v6677
    %v6693 = vor.u32 %v6691, %v6692
    %vm6694 = vcmp.lt.s32.totalorder %v6675, 1
    %vm6695 = vcmp.lt.s32.totalorder %v6675, 2
    %vm6696 = vcmp.lt.s32.totalorder %v6675, 3
    %vm6697 = vcmp.lt.s32.totalorder %v6675, 4
    %v6698 = vsel %vm6694, %v6678, %v6681
    %v6699 = vsel %vm6697, %v6687, 2102212464
    %v6700 = vsel %vm6696, %v6684, %v6699
    %v6701 = vsel %vm6695, %v6698, %v6700
    %v6702 = vsel %vm6694, %v6681, %v6684
    %v6703 = vsel %vm6697, %v6690, 920167782
    %v6704 = vsel %vm6696, %v6687, %v6703
    %v6705 = vsel %vm6695, %v6702, %v6704
    %v6706 = vsel %vm6694, %v6684, %v6687
    %v6707 = vsel %vm6697, %v6693, 1326507024
    %v6708 = vsel %vm6696, %v6690, %v6707
    %v6709 = vsel %vm6695, %v6706, %v6708
    %v6710 = vshll.u32 %v6670, 8
    %v6711 = vmul.u32.u64.compose %v6710, %v6709
    %v6712 = vextract.low.u32 %v6711
    %v6713 = vextract.high.u32 %v6711
    %v6714 = vmul.u32.u64.compose %v6710, %v6705
    %v6715 = vextract.low.u32 %v6714
    %v6716 = vextract.high.u32 %v6714
    %v6717 = vmul.u32 %v6710, %v6701
    %v6718 = vadd.s32 %v6713, %v6715
    %vm6719 = vc.u32 %v6713, %v6715
    %v6720 = vadd.s32 %v6716, 1
    %v6721 = vsel %vm6719, %v6720, %v6716
    %v6722 = vadd.s32 %v6717, %v6721
    %v6723 = vadd.s32 %v6722, 536870912
    %v6724 = vshrl.u32 %v6723, 30
    %v6725 = vshll.u32 %v6724, 30
    %v6726 = vsub.s32 %v6722, %v6725
    %vm6727 = vcmp.lt.s32.totalorder %v6726, 0
    %v6728 = vsub.s32 0, %v6726
    %v6729 = vsel %vm6727, %v6728, %v6726
    %v6730 = vclz %v6729
    %v6731 = vsub.s32 %v6730, 2
    %vm6732 = vcmp.gt.s32.totalorder 0, %v6731
    %v6733 = vsel %vm6732, 0, %v6731
    %v6734 = vsub.s32 32, %v6733
    %v6735 = vshll.u32 %v6726, %v6733
    %v6736 = vshrl.u32 %v6718, %v6734
    %v6737 = vor.u32 %v6735, %v6736
    %v6738 = vsub.s32 4294967266, %v6733
    %v6739 = vadd.s32 %v6738, 127
    %v6740 = vshll.u32 %v6739, 23
    %v6741 = vor.u32 4788187, %v6740
    %v6742 = vand.u32 2147483647, %v6741
    %v6744 = vcvt.s32.f32 %v6737
    %v6745 = vmul.f32 %v6744, %v6742
    %v6746 = vxor.u32 %v6745, 2147483648
    %v6747 = vsel %vm6664, %v6746, %v6745
    %v6748 = vsub.s32 4, %v6724
    %v6749 = vsel %vm6664, %v6748, %v6724
    %v6750 = vsel %vm6663, %v908, %v6747
    %v6751 = vsel %vm6663, 0, %v6749
    %v6752 = vcosq.f32.pop %v6750
    %v6753 = vsinq.f32.pop %v6750
    %vm6754 = vweird.f32 %v908
    %v6755 = vadd.s32 %v6751, 3
    %v6756 = vand.u32 %v6755, 3
    %vm6757 = vcmp.lt.s32.totalorder %v6756, 2
    %vm6758 = vcmp.eq.s32.totalorder %v6756, 0
    %v6759 = vxor.u32 %v6753, 2147483648
    %v6760 = vsel %vm6758, %v6752, %v6759
    %vm6761 = vcmp.eq.s32.totalorder %v6756, 2
    %v6762 = vxor.u32 %v6752, 2147483648
    %v6763 = vsel %vm6761, %v6762, %v6753
    %v6764 = vsel %vm6757, %v6760, %v6763
    %v6765 = vsel %vm6754, nan, %v6764
    %v6766 = vand.u32 2147483647, %v909
    %vm6767 = vcmp.le.f32.partialorder %v6766, 0.7853982
    %vm6768 = vcmp.lt.s32.totalorder %v909, 0
    %v6769 = vand.u32 %v909, 2139095040
    %v6770 = vshrl.u32 %v6769, 23
    %v6771 = vsub.s32 %v6770, 127
    %v6772 = vand.u32 2147483647, %v909
    %v6773 = vand.u32 %v6772, 8388607
    %v6774 = vor.u32 %v6773, 8388608
    %v6775 = vsub.s32 0, %v6774
    %v6776 = vadd.s32 %v6771, 1
    %vm6777 = vcmp.gt.s32.totalorder %v6776, 0
    %v6778 = vsel %vm6777, %v6776, 0
    %v6779 = vshrl.u32 %v6778, 5
    %v6780 = vand.u32 %v6778, 31
    %v6781 = vsub.s32 32, %v6780
    %v6782 = vshrl.u32 683565275, %v6781
    %v6783 = vshll.u32 683565275, %v6780
    %v6784 = vshrl.u32 2475754826, %v6781
    %v6785 = vor.u32 %v6783, %v6784
    %v6786 = vshll.u32 2475754826, %v6780
    %v6787 = vshrl.u32 2131351028, %v6781
    %v6788 = vor.u32 %v6786, %v6787
    %v6789 = vshll.u32 2131351028, %v6780
    %v6790 = vshrl.u32 2102212464, %v6781
    %v6791 = vor.u32 %v6789, %v6790
    %v6792 = vshll.u32 2102212464, %v6780
    %v6793 = vshrl.u32 920167782, %v6781
    %v6794 = vor.u32 %v6792, %v6793
    %v6795 = vshll.u32 920167782, %v6780
    %v6796 = vshrl.u32 1326507024, %v6781
    %v6797 = vor.u32 %v6795, %v6796
    %vm6798 = vcmp.lt.s32.totalorder %v6779, 1
    %vm6799 = vcmp.lt.s32.totalorder %v6779, 2
    %vm6800 = vcmp.lt.s32.totalorder %v6779, 3
    %vm6801 = vcmp.lt.s32.totalorder %v6779, 4
    %v6802 = vsel %vm6798, %v6782, %v6785
    %v6803 = vsel %vm6801, %v6791, 2102212464
    %v6804 = vsel %vm6800, %v6788, %v6803
    %v6805 = vsel %vm6799, %v6802, %v6804
    %v6806 = vsel %vm6798, %v6785, %v6788
    %v6807 = vsel %vm6801, %v6794, 920167782
    %v6808 = vsel %vm6800, %v6791, %v6807
    %v6809 = vsel %vm6799, %v6806, %v6808
    %v6810 = vsel %vm6798, %v6788, %v6791
    %v6811 = vsel %vm6801, %v6797, 1326507024
    %v6812 = vsel %vm6800, %v6794, %v6811
    %v6813 = vsel %vm6799, %v6810, %v6812
    %v6814 = vshll.u32 %v6774, 8
    %v6815 = vmul.u32.u64.compose %v6814, %v6813
    %v6816 = vextract.low.u32 %v6815
    %v6817 = vextract.high.u32 %v6815
    %v6818 = vmul.u32.u64.compose %v6814, %v6809
    %v6819 = vextract.low.u32 %v6818
    %v6820 = vextract.high.u32 %v6818
    %v6821 = vmul.u32 %v6814, %v6805
    %v6822 = vadd.s32 %v6817, %v6819
    %vm6823 = vc.u32 %v6817, %v6819
    %v6824 = vadd.s32 %v6820, 1
    %v6825 = vsel %vm6823, %v6824, %v6820
    %v6826 = vadd.s32 %v6821, %v6825
    %v6827 = vadd.s32 %v6826, 536870912
    %v6828 = vshrl.u32 %v6827, 30
    %v6829 = vshll.u32 %v6828, 30
    %v6830 = vsub.s32 %v6826, %v6829
    %vm6831 = vcmp.lt.s32.totalorder %v6830, 0
    %v6832 = vsub.s32 0, %v6830
    %v6833 = vsel %vm6831, %v6832, %v6830
    %v6834 = vclz %v6833
    %v6835 = vsub.s32 %v6834, 2
    %vm6836 = vcmp.gt.s32.totalorder 0, %v6835
    %v6837 = vsel %vm6836, 0, %v6835
    %v6838 = vsub.s32 32, %v6837
    %v6839 = vshll.u32 %v6830, %v6837
    %v6840 = vshrl.u32 %v6822, %v6838
    %v6841 = vor.u32 %v6839, %v6840
    %v6842 = vsub.s32 4294967266, %v6837
    %v6843 = vadd.s32 %v6842, 127
    %v6844 = vshll.u32 %v6843, 23
    %v6845 = vor.u32 4788187, %v6844
    %v6846 = vand.u32 2147483647, %v6845
    %v6848 = vcvt.s32.f32 %v6841
    %v6849 = vmul.f32 %v6848, %v6846
    %v6850 = vxor.u32 %v6849, 2147483648
    %v6851 = vsel %vm6768, %v6850, %v6849
    %v6852 = vsub.s32 4, %v6828
    %v6853 = vsel %vm6768, %v6852, %v6828
    %v6854 = vsel %vm6767, %v909, %v6851
    %v6855 = vsel %vm6767, 0, %v6853
    %v6856 = vcosq.f32.pop %v6854
    %v6857 = vsinq.f32.pop %v6854
    %vm6858 = vweird.f32 %v909
    %v6859 = vadd.s32 %v6855, 3
    %v6860 = vand.u32 %v6859, 3
    %vm6861 = vcmp.lt.s32.totalorder %v6860, 2
    %vm6862 = vcmp.eq.s32.totalorder %v6860, 0
    %v6863 = vxor.u32 %v6857, 2147483648
    %v6864 = vsel %vm6862, %v6856, %v6863
    %vm6865 = vcmp.eq.s32.totalorder %v6860, 2
    %v6866 = vxor.u32 %v6856, 2147483648
    %v6867 = vsel %vm6865, %v6866, %v6857
    %v6868 = vsel %vm6861, %v6864, %v6867
    %v6869 = vsel %vm6858, nan, %v6868
    %v6870 = vand.u32 2147483647, %v910
    %vm6871 = vcmp.le.f32.partialorder %v6870, 0.7853982
    %vm6872 = vcmp.lt.s32.totalorder %v910, 0
    %v6873 = vand.u32 %v910, 2139095040
    %v6874 = vshrl.u32 %v6873, 23
    %v6875 = vsub.s32 %v6874, 127
    %v6876 = vand.u32 2147483647, %v910
    %v6877 = vand.u32 %v6876, 8388607
    %v6878 = vor.u32 %v6877, 8388608
    %v6879 = vsub.s32 0, %v6878
    %v6880 = vadd.s32 %v6875, 1
    %vm6881 = vcmp.gt.s32.totalorder %v6880, 0
    %v6882 = vsel %vm6881, %v6880, 0
    %v6883 = vshrl.u32 %v6882, 5
    %v6884 = vand.u32 %v6882, 31
    %v6885 = vsub.s32 32, %v6884
    %v6886 = vshrl.u32 683565275, %v6885
    %v6887 = vshll.u32 683565275, %v6884
    %v6888 = vshrl.u32 2475754826, %v6885
    %v6889 = vor.u32 %v6887, %v6888
    %v6890 = vshll.u32 2475754826, %v6884
    %v6891 = vshrl.u32 2131351028, %v6885
    %v6892 = vor.u32 %v6890, %v6891
    %v6893 = vshll.u32 2131351028, %v6884
    %v6894 = vshrl.u32 2102212464, %v6885
    %v6895 = vor.u32 %v6893, %v6894
    %v6896 = vshll.u32 2102212464, %v6884
    %v6897 = vshrl.u32 920167782, %v6885
    %v6898 = vor.u32 %v6896, %v6897
    %v6899 = vshll.u32 920167782, %v6884
    %v6900 = vshrl.u32 1326507024, %v6885
    %v6901 = vor.u32 %v6899, %v6900
    %vm6902 = vcmp.lt.s32.totalorder %v6883, 1
    %vm6903 = vcmp.lt.s32.totalorder %v6883, 2
    %vm6904 = vcmp.lt.s32.totalorder %v6883, 3
    %vm6905 = vcmp.lt.s32.totalorder %v6883, 4
    %v6906 = vsel %vm6902, %v6886, %v6889
    %v6907 = vsel %vm6905, %v6895, 2102212464
    %v6908 = vsel %vm6904, %v6892, %v6907
    %v6909 = vsel %vm6903, %v6906, %v6908
    %v6910 = vsel %vm6902, %v6889, %v6892
    %v6911 = vsel %vm6905, %v6898, 920167782
    %v6912 = vsel %vm6904, %v6895, %v6911
    %v6913 = vsel %vm6903, %v6910, %v6912
    %v6914 = vsel %vm6902, %v6892, %v6895
    %v6915 = vsel %vm6905, %v6901, 1326507024
    %v6916 = vsel %vm6904, %v6898, %v6915
    %v6917 = vsel %vm6903, %v6914, %v6916
    %v6918 = vshll.u32 %v6878, 8
    %v6919 = vmul.u32.u64.compose %v6918, %v6917
    %v6920 = vextract.low.u32 %v6919
    %v6921 = vextract.high.u32 %v6919
    %v6922 = vmul.u32.u64.compose %v6918, %v6913
    %v6923 = vextract.low.u32 %v6922
    %v6924 = vextract.high.u32 %v6922
    %v6925 = vmul.u32 %v6918, %v6909
    %v6926 = vadd.s32 %v6921, %v6923
    %vm6927 = vc.u32 %v6921, %v6923
    %v6928 = vadd.s32 %v6924, 1
    %v6929 = vsel %vm6927, %v6928, %v6924
    %v6930 = vadd.s32 %v6925, %v6929
    %v6931 = vadd.s32 %v6930, 536870912
    %v6932 = vshrl.u32 %v6931, 30
    %v6933 = vshll.u32 %v6932, 30
    %v6934 = vsub.s32 %v6930, %v6933
    %vm6935 = vcmp.lt.s32.totalorder %v6934, 0
    %v6936 = vsub.s32 0, %v6934
    %v6937 = vsel %vm6935, %v6936, %v6934
    %v6938 = vclz %v6937
    %v6939 = vsub.s32 %v6938, 2
    %vm6940 = vcmp.gt.s32.totalorder 0, %v6939
    %v6941 = vsel %vm6940, 0, %v6939
    %v6942 = vsub.s32 32, %v6941
    %v6943 = vshll.u32 %v6934, %v6941
    %v6944 = vshrl.u32 %v6926, %v6942
    %v6945 = vor.u32 %v6943, %v6944
    %v6946 = vsub.s32 4294967266, %v6941
    %v6947 = vadd.s32 %v6946, 127
    %v6948 = vshll.u32 %v6947, 23
    %v6949 = vor.u32 4788187, %v6948
    %v6950 = vand.u32 2147483647, %v6949
    %v6952 = vcvt.s32.f32 %v6945
    %v6953 = vmul.f32 %v6952, %v6950
    %v6954 = vxor.u32 %v6953, 2147483648
    %v6955 = vsel %vm6872, %v6954, %v6953
    %v6956 = vsub.s32 4, %v6932
    %v6957 = vsel %vm6872, %v6956, %v6932
    %v6958 = vsel %vm6871, %v910, %v6955
    %v6959 = vsel %vm6871, 0, %v6957
    %v6960 = vcosq.f32.pop %v6958
    %v6961 = vsinq.f32.pop %v6958
    %vm6962 = vweird.f32 %v910
    %v6963 = vadd.s32 %v6959, 3
    %v6964 = vand.u32 %v6963, 3
    %vm6965 = vcmp.lt.s32.totalorder %v6964, 2
    %vm6966 = vcmp.eq.s32.totalorder %v6964, 0
    %v6967 = vxor.u32 %v6961, 2147483648
    %v6968 = vsel %vm6966, %v6960, %v6967
    %vm6969 = vcmp.eq.s32.totalorder %v6964, 2
    %v6970 = vxor.u32 %v6960, 2147483648
    %v6971 = vsel %vm6969, %v6970, %v6961
    %v6972 = vsel %vm6965, %v6968, %v6971
    %v6973 = vsel %vm6962, nan, %v6972
    %v6974 = vand.u32 2147483647, %v911
    %vm6975 = vcmp.le.f32.partialorder %v6974, 0.7853982
    %vm6976 = vcmp.lt.s32.totalorder %v911, 0
    %v6977 = vand.u32 %v911, 2139095040
    %v6978 = vshrl.u32 %v6977, 23
    %v6979 = vsub.s32 %v6978, 127
    %v6980 = vand.u32 2147483647, %v911
    %v6981 = vand.u32 %v6980, 8388607
    %v6982 = vor.u32 %v6981, 8388608
    %v6983 = vsub.s32 0, %v6982
    %v6984 = vadd.s32 %v6979, 1
    %vm6985 = vcmp.gt.s32.totalorder %v6984, 0
    %v6986 = vsel %vm6985, %v6984, 0
    %v6987 = vshrl.u32 %v6986, 5
    %v6988 = vand.u32 %v6986, 31
    %v6989 = vsub.s32 32, %v6988
    %v6990 = vshrl.u32 683565275, %v6989
    %v6991 = vshll.u32 683565275, %v6988
    %v6992 = vshrl.u32 2475754826, %v6989
    %v6993 = vor.u32 %v6991, %v6992
    %v6994 = vshll.u32 2475754826, %v6988
    %v6995 = vshrl.u32 2131351028, %v6989
    %v6996 = vor.u32 %v6994, %v6995
    %v6997 = vshll.u32 2131351028, %v6988
    %v6998 = vshrl.u32 2102212464, %v6989
    %v6999 = vor.u32 %v6997, %v6998
    %v7000 = vshll.u32 2102212464, %v6988
    %v7001 = vshrl.u32 920167782, %v6989
    %v7002 = vor.u32 %v7000, %v7001
    %v7003 = vshll.u32 920167782, %v6988
    %v7004 = vshrl.u32 1326507024, %v6989
    %v7005 = vor.u32 %v7003, %v7004
    %vm7006 = vcmp.lt.s32.totalorder %v6987, 1
    %vm7007 = vcmp.lt.s32.totalorder %v6987, 2
    %vm7008 = vcmp.lt.s32.totalorder %v6987, 3
    %vm7009 = vcmp.lt.s32.totalorder %v6987, 4
    %v7010 = vsel %vm7006, %v6990, %v6993
    %v7011 = vsel %vm7009, %v6999, 2102212464
    %v7012 = vsel %vm7008, %v6996, %v7011
    %v7013 = vsel %vm7007, %v7010, %v7012
    %v7014 = vsel %vm7006, %v6993, %v6996
    %v7015 = vsel %vm7009, %v7002, 920167782
    %v7016 = vsel %vm7008, %v6999, %v7015
    %v7017 = vsel %vm7007, %v7014, %v7016
    %v7018 = vsel %vm7006, %v6996, %v6999
    %v7019 = vsel %vm7009, %v7005, 1326507024
    %v7020 = vsel %vm7008, %v7002, %v7019
    %v7021 = vsel %vm7007, %v7018, %v7020
    %v7022 = vshll.u32 %v6982, 8
    %v7023 = vmul.u32.u64.compose %v7022, %v7021
    %v7024 = vextract.low.u32 %v7023
    %v7025 = vextract.high.u32 %v7023
    %v7026 = vmul.u32.u64.compose %v7022, %v7017
    %v7027 = vextract.low.u32 %v7026
    %v7028 = vextract.high.u32 %v7026
    %v7029 = vmul.u32 %v7022, %v7013
    %v7030 = vadd.s32 %v7025, %v7027
    %vm7031 = vc.u32 %v7025, %v7027
    %v7032 = vadd.s32 %v7028, 1
    %v7033 = vsel %vm7031, %v7032, %v7028
    %v7034 = vadd.s32 %v7029, %v7033
    %v7035 = vadd.s32 %v7034, 536870912
    %v7036 = vshrl.u32 %v7035, 30
    %v7037 = vshll.u32 %v7036, 30
    %v7038 = vsub.s32 %v7034, %v7037
    %vm7039 = vcmp.lt.s32.totalorder %v7038, 0
    %v7040 = vsub.s32 0, %v7038
    %v7041 = vsel %vm7039, %v7040, %v7038
    %v7042 = vclz %v7041
    %v7043 = vsub.s32 %v7042, 2
    %vm7044 = vcmp.gt.s32.totalorder 0, %v7043
    %v7045 = vsel %vm7044, 0, %v7043
    %v7046 = vsub.s32 32, %v7045
    %v7047 = vshll.u32 %v7038, %v7045
    %v7048 = vshrl.u32 %v7030, %v7046
    %v7049 = vor.u32 %v7047, %v7048
    %v7050 = vsub.s32 4294967266, %v7045
    %v7051 = vadd.s32 %v7050, 127
    %v7052 = vshll.u32 %v7051, 23
    %v7053 = vor.u32 4788187, %v7052
    %v7054 = vand.u32 2147483647, %v7053
    %v7056 = vcvt.s32.f32 %v7049
    %v7057 = vmul.f32 %v7056, %v7054
    %v7058 = vxor.u32 %v7057, 2147483648
    %v7059 = vsel %vm6976, %v7058, %v7057
    %v7060 = vsub.s32 4, %v7036
    %v7061 = vsel %vm6976, %v7060, %v7036
    %v7062 = vsel %vm6975, %v911, %v7059
    %v7063 = vsel %vm6975, 0, %v7061
    %v7064 = vcosq.f32.pop %v7062
    %v7065 = vsinq.f32.pop %v7062
    %vm7066 = vweird.f32 %v911
    %v7067 = vadd.s32 %v7063, 3
    %v7068 = vand.u32 %v7067, 3
    %vm7069 = vcmp.lt.s32.totalorder %v7068, 2
    %vm7070 = vcmp.eq.s32.totalorder %v7068, 0
    %v7071 = vxor.u32 %v7065, 2147483648
    %v7072 = vsel %vm7070, %v7064, %v7071
    %vm7073 = vcmp.eq.s32.totalorder %v7068, 2
    %v7074 = vxor.u32 %v7064, 2147483648
    %v7075 = vsel %vm7073, %v7074, %v7065
    %v7076 = vsel %vm7069, %v7072, %v7075
    %v7077 = vsel %vm7066, nan, %v7076
    %v7078 = vand.u32 2147483647, %v912
    %vm7079 = vcmp.le.f32.partialorder %v7078, 0.7853982
    %vm7080 = vcmp.lt.s32.totalorder %v912, 0
    %v7081 = vand.u32 %v912, 2139095040
    %v7082 = vshrl.u32 %v7081, 23
    %v7083 = vsub.s32 %v7082, 127
    %v7084 = vand.u32 2147483647, %v912
    %v7085 = vand.u32 %v7084, 8388607
    %v7086 = vor.u32 %v7085, 8388608
    %v7087 = vsub.s32 0, %v7086
    %v7088 = vadd.s32 %v7083, 1
    %vm7089 = vcmp.gt.s32.totalorder %v7088, 0
    %v7090 = vsel %vm7089, %v7088, 0
    %v7091 = vshrl.u32 %v7090, 5
    %v7092 = vand.u32 %v7090, 31
    %v7093 = vsub.s32 32, %v7092
    %v7094 = vshrl.u32 683565275, %v7093
    %v7095 = vshll.u32 683565275, %v7092
    %v7096 = vshrl.u32 2475754826, %v7093
    %v7097 = vor.u32 %v7095, %v7096
    %v7098 = vshll.u32 2475754826, %v7092
    %v7099 = vshrl.u32 2131351028, %v7093
    %v7100 = vor.u32 %v7098, %v7099
    %v7101 = vshll.u32 2131351028, %v7092
    %v7102 = vshrl.u32 2102212464, %v7093
    %v7103 = vor.u32 %v7101, %v7102
    %v7104 = vshll.u32 2102212464, %v7092
    %v7105 = vshrl.u32 920167782, %v7093
    %v7106 = vor.u32 %v7104, %v7105
    %v7107 = vshll.u32 920167782, %v7092
    %v7108 = vshrl.u32 1326507024, %v7093
    %v7109 = vor.u32 %v7107, %v7108
    %vm7110 = vcmp.lt.s32.totalorder %v7091, 1
    %vm7111 = vcmp.lt.s32.totalorder %v7091, 2
    %vm7112 = vcmp.lt.s32.totalorder %v7091, 3
    %vm7113 = vcmp.lt.s32.totalorder %v7091, 4
    %v7114 = vsel %vm7110, %v7094, %v7097
    %v7115 = vsel %vm7113, %v7103, 2102212464
    %v7116 = vsel %vm7112, %v7100, %v7115
    %v7117 = vsel %vm7111, %v7114, %v7116
    %v7118 = vsel %vm7110, %v7097, %v7100
    %v7119 = vsel %vm7113, %v7106, 920167782
    %v7120 = vsel %vm7112, %v7103, %v7119
    %v7121 = vsel %vm7111, %v7118, %v7120
    %v7122 = vsel %vm7110, %v7100, %v7103
    %v7123 = vsel %vm7113, %v7109, 1326507024
    %v7124 = vsel %vm7112, %v7106, %v7123
    %v7125 = vsel %vm7111, %v7122, %v7124
    %v7126 = vshll.u32 %v7086, 8
    %v7127 = vmul.u32.u64.compose %v7126, %v7125
    %v7128 = vextract.low.u32 %v7127
    %v7129 = vextract.high.u32 %v7127
    %v7130 = vmul.u32.u64.compose %v7126, %v7121
    %v7131 = vextract.low.u32 %v7130
    %v7132 = vextract.high.u32 %v7130
    %v7133 = vmul.u32 %v7126, %v7117
    %v7134 = vadd.s32 %v7129, %v7131
    %vm7135 = vc.u32 %v7129, %v7131
    %v7136 = vadd.s32 %v7132, 1
    %v7137 = vsel %vm7135, %v7136, %v7132
    %v7138 = vadd.s32 %v7133, %v7137
    %v7139 = vadd.s32 %v7138, 536870912
    %v7140 = vshrl.u32 %v7139, 30
    %v7141 = vshll.u32 %v7140, 30
    %v7142 = vsub.s32 %v7138, %v7141
    %vm7143 = vcmp.lt.s32.totalorder %v7142, 0
    %v7144 = vsub.s32 0, %v7142
    %v7145 = vsel %vm7143, %v7144, %v7142
    %v7146 = vclz %v7145
    %v7147 = vsub.s32 %v7146, 2
    %vm7148 = vcmp.gt.s32.totalorder 0, %v7147
    %v7149 = vsel %vm7148, 0, %v7147
    %v7150 = vsub.s32 32, %v7149
    %v7151 = vshll.u32 %v7142, %v7149
    %v7152 = vshrl.u32 %v7134, %v7150
    %v7153 = vor.u32 %v7151, %v7152
    %v7154 = vsub.s32 4294967266, %v7149
    %v7155 = vadd.s32 %v7154, 127
    %v7156 = vshll.u32 %v7155, 23
    %v7157 = vor.u32 4788187, %v7156
    %v7158 = vand.u32 2147483647, %v7157
    %v7160 = vcvt.s32.f32 %v7153
    %v7161 = vmul.f32 %v7160, %v7158
    %v7162 = vxor.u32 %v7161, 2147483648
    %v7163 = vsel %vm7080, %v7162, %v7161
    %v7164 = vsub.s32 4, %v7140
    %v7165 = vsel %vm7080, %v7164, %v7140
    %v7166 = vsel %vm7079, %v912, %v7163
    %v7167 = vsel %vm7079, 0, %v7165
    %v7168 = vcosq.f32.pop %v7166
    %v7169 = vsinq.f32.pop %v7166
    %vm7170 = vweird.f32 %v912
    %v7171 = vadd.s32 %v7167, 3
    %v7172 = vand.u32 %v7171, 3
    %vm7173 = vcmp.lt.s32.totalorder %v7172, 2
    %vm7174 = vcmp.eq.s32.totalorder %v7172, 0
    %v7175 = vxor.u32 %v7169, 2147483648
    %v7176 = vsel %vm7174, %v7168, %v7175
    %vm7177 = vcmp.eq.s32.totalorder %v7172, 2
    %v7178 = vxor.u32 %v7168, 2147483648
    %v7179 = vsel %vm7177, %v7178, %v7169
    %v7180 = vsel %vm7173, %v7176, %v7179
    %v7181 = vsel %vm7170, nan, %v7180
    %v7182 = vand.u32 2147483647, %v913
    %vm7183 = vcmp.le.f32.partialorder %v7182, 0.7853982
    %vm7184 = vcmp.lt.s32.totalorder %v913, 0
    %v7185 = vand.u32 %v913, 2139095040
    %v7186 = vshrl.u32 %v7185, 23
    %v7187 = vsub.s32 %v7186, 127
    %v7188 = vand.u32 2147483647, %v913
    %v7189 = vand.u32 %v7188, 8388607
    %v7190 = vor.u32 %v7189, 8388608
    %v7191 = vsub.s32 0, %v7190
    %v7192 = vadd.s32 %v7187, 1
    %vm7193 = vcmp.gt.s32.totalorder %v7192, 0
    %v7194 = vsel %vm7193, %v7192, 0
    %v7195 = vshrl.u32 %v7194, 5
    %v7196 = vand.u32 %v7194, 31
    %v7197 = vsub.s32 32, %v7196
    %v7198 = vshrl.u32 683565275, %v7197
    %v7199 = vshll.u32 683565275, %v7196
    %v7200 = vshrl.u32 2475754826, %v7197
    %v7201 = vor.u32 %v7199, %v7200
    %v7202 = vshll.u32 2475754826, %v7196
    %v7203 = vshrl.u32 2131351028, %v7197
    %v7204 = vor.u32 %v7202, %v7203
    %v7205 = vshll.u32 2131351028, %v7196
    %v7206 = vshrl.u32 2102212464, %v7197
    %v7207 = vor.u32 %v7205, %v7206
    %v7208 = vshll.u32 2102212464, %v7196
    %v7209 = vshrl.u32 920167782, %v7197
    %v7210 = vor.u32 %v7208, %v7209
    %v7211 = vshll.u32 920167782, %v7196
    %v7212 = vshrl.u32 1326507024, %v7197
    %v7213 = vor.u32 %v7211, %v7212
    %vm7214 = vcmp.lt.s32.totalorder %v7195, 1
    %vm7215 = vcmp.lt.s32.totalorder %v7195, 2
    %vm7216 = vcmp.lt.s32.totalorder %v7195, 3
    %vm7217 = vcmp.lt.s32.totalorder %v7195, 4
    %v7218 = vsel %vm7214, %v7198, %v7201
    %v7219 = vsel %vm7217, %v7207, 2102212464
    %v7220 = vsel %vm7216, %v7204, %v7219
    %v7221 = vsel %vm7215, %v7218, %v7220
    %v7222 = vsel %vm7214, %v7201, %v7204
    %v7223 = vsel %vm7217, %v7210, 920167782
    %v7224 = vsel %vm7216, %v7207, %v7223
    %v7225 = vsel %vm7215, %v7222, %v7224
    %v7226 = vsel %vm7214, %v7204, %v7207
    %v7227 = vsel %vm7217, %v7213, 1326507024
    %v7228 = vsel %vm7216, %v7210, %v7227
    %v7229 = vsel %vm7215, %v7226, %v7228
    %v7230 = vshll.u32 %v7190, 8
    %v7231 = vmul.u32.u64.compose %v7230, %v7229
    %v7232 = vextract.low.u32 %v7231
    %v7233 = vextract.high.u32 %v7231
    %v7234 = vmul.u32.u64.compose %v7230, %v7225
    %v7235 = vextract.low.u32 %v7234
    %v7236 = vextract.high.u32 %v7234
    %v7237 = vmul.u32 %v7230, %v7221
    %v7238 = vadd.s32 %v7233, %v7235
    %vm7239 = vc.u32 %v7233, %v7235
    %v7240 = vadd.s32 %v7236, 1
    %v7241 = vsel %vm7239, %v7240, %v7236
    %v7242 = vadd.s32 %v7237, %v7241
    %v7243 = vadd.s32 %v7242, 536870912
    %v7244 = vshrl.u32 %v7243, 30
    %v7245 = vshll.u32 %v7244, 30
    %v7246 = vsub.s32 %v7242, %v7245
    %vm7247 = vcmp.lt.s32.totalorder %v7246, 0
    %v7248 = vsub.s32 0, %v7246
    %v7249 = vsel %vm7247, %v7248, %v7246
    %v7250 = vclz %v7249
    %v7251 = vsub.s32 %v7250, 2
    %vm7252 = vcmp.gt.s32.totalorder 0, %v7251
    %v7253 = vsel %vm7252, 0, %v7251
    %v7254 = vsub.s32 32, %v7253
    %v7255 = vshll.u32 %v7246, %v7253
    %v7256 = vshrl.u32 %v7238, %v7254
    %v7257 = vor.u32 %v7255, %v7256
    %v7258 = vsub.s32 4294967266, %v7253
    %v7259 = vadd.s32 %v7258, 127
    %v7260 = vshll.u32 %v7259, 23
    %v7261 = vor.u32 4788187, %v7260
    %v7262 = vand.u32 2147483647, %v7261
    %v7264 = vcvt.s32.f32 %v7257
    %v7265 = vmul.f32 %v7264, %v7262
    %v7266 = vxor.u32 %v7265, 2147483648
    %v7267 = vsel %vm7184, %v7266, %v7265
    %v7268 = vsub.s32 4, %v7244
    %v7269 = vsel %vm7184, %v7268, %v7244
    %v7270 = vsel %vm7183, %v913, %v7267
    %v7271 = vsel %vm7183, 0, %v7269
    %v7272 = vcosq.f32.pop %v7270
    %v7273 = vsinq.f32.pop %v7270
    %vm7274 = vweird.f32 %v913
    %v7275 = vadd.s32 %v7271, 3
    %v7276 = vand.u32 %v7275, 3
    %vm7277 = vcmp.lt.s32.totalorder %v7276, 2
    %vm7278 = vcmp.eq.s32.totalorder %v7276, 0
    %v7279 = vxor.u32 %v7273, 2147483648
    %v7280 = vsel %vm7278, %v7272, %v7279
    %vm7281 = vcmp.eq.s32.totalorder %v7276, 2
    %v7282 = vxor.u32 %v7272, 2147483648
    %v7283 = vsel %vm7281, %v7282, %v7273
    %v7284 = vsel %vm7277, %v7280, %v7283
    %v7285 = vsel %vm7274, nan, %v7284
    %v7286 = vand.u32 2147483647, %v914
    %vm7287 = vcmp.le.f32.partialorder %v7286, 0.7853982
    %vm7288 = vcmp.lt.s32.totalorder %v914, 0
    %v7289 = vand.u32 %v914, 2139095040
    %v7290 = vshrl.u32 %v7289, 23
    %v7291 = vsub.s32 %v7290, 127
    %v7292 = vand.u32 2147483647, %v914
    %v7293 = vand.u32 %v7292, 8388607
    %v7294 = vor.u32 %v7293, 8388608
    %v7295 = vsub.s32 0, %v7294
    %v7296 = vadd.s32 %v7291, 1
    %vm7297 = vcmp.gt.s32.totalorder %v7296, 0
    %v7298 = vsel %vm7297, %v7296, 0
    %v7299 = vshrl.u32 %v7298, 5
    %v7300 = vand.u32 %v7298, 31
    %v7301 = vsub.s32 32, %v7300
    %v7302 = vshrl.u32 683565275, %v7301
    %v7303 = vshll.u32 683565275, %v7300
    %v7304 = vshrl.u32 2475754826, %v7301
    %v7305 = vor.u32 %v7303, %v7304
    %v7306 = vshll.u32 2475754826, %v7300
    %v7307 = vshrl.u32 2131351028, %v7301
    %v7308 = vor.u32 %v7306, %v7307
    %v7309 = vshll.u32 2131351028, %v7300
    %v7310 = vshrl.u32 2102212464, %v7301
    %v7311 = vor.u32 %v7309, %v7310
    %v7312 = vshll.u32 2102212464, %v7300
    %v7313 = vshrl.u32 920167782, %v7301
    %v7314 = vor.u32 %v7312, %v7313
    %v7315 = vshll.u32 920167782, %v7300
    %v7316 = vshrl.u32 1326507024, %v7301
    %v7317 = vor.u32 %v7315, %v7316
    %vm7318 = vcmp.lt.s32.totalorder %v7299, 1
    %vm7319 = vcmp.lt.s32.totalorder %v7299, 2
    %vm7320 = vcmp.lt.s32.totalorder %v7299, 3
    %vm7321 = vcmp.lt.s32.totalorder %v7299, 4
    %v7322 = vsel %vm7318, %v7302, %v7305
    %v7323 = vsel %vm7321, %v7311, 2102212464
    %v7324 = vsel %vm7320, %v7308, %v7323
    %v7325 = vsel %vm7319, %v7322, %v7324
    %v7326 = vsel %vm7318, %v7305, %v7308
    %v7327 = vsel %vm7321, %v7314, 920167782
    %v7328 = vsel %vm7320, %v7311, %v7327
    %v7329 = vsel %vm7319, %v7326, %v7328
    %v7330 = vsel %vm7318, %v7308, %v7311
    %v7331 = vsel %vm7321, %v7317, 1326507024
    %v7332 = vsel %vm7320, %v7314, %v7331
    %v7333 = vsel %vm7319, %v7330, %v7332
    %v7334 = vshll.u32 %v7294, 8
    %v7335 = vmul.u32.u64.compose %v7334, %v7333
    %v7336 = vextract.low.u32 %v7335
    %v7337 = vextract.high.u32 %v7335
    %v7338 = vmul.u32.u64.compose %v7334, %v7329
    %v7339 = vextract.low.u32 %v7338
    %v7340 = vextract.high.u32 %v7338
    %v7341 = vmul.u32 %v7334, %v7325
    %v7342 = vadd.s32 %v7337, %v7339
    %vm7343 = vc.u32 %v7337, %v7339
    %v7344 = vadd.s32 %v7340, 1
    %v7345 = vsel %vm7343, %v7344, %v7340
    %v7346 = vadd.s32 %v7341, %v7345
    %v7347 = vadd.s32 %v7346, 536870912
    %v7348 = vshrl.u32 %v7347, 30
    %v7349 = vshll.u32 %v7348, 30
    %v7350 = vsub.s32 %v7346, %v7349
    %vm7351 = vcmp.lt.s32.totalorder %v7350, 0
    %v7352 = vsub.s32 0, %v7350
    %v7353 = vsel %vm7351, %v7352, %v7350
    %v7354 = vclz %v7353
    %v7355 = vsub.s32 %v7354, 2
    %vm7356 = vcmp.gt.s32.totalorder 0, %v7355
    %v7357 = vsel %vm7356, 0, %v7355
    %v7358 = vsub.s32 32, %v7357
    %v7359 = vshll.u32 %v7350, %v7357
    %v7360 = vshrl.u32 %v7342, %v7358
    %v7361 = vor.u32 %v7359, %v7360
    %v7362 = vsub.s32 4294967266, %v7357
    %v7363 = vadd.s32 %v7362, 127
    %v7364 = vshll.u32 %v7363, 23
    %v7365 = vor.u32 4788187, %v7364
    %v7366 = vand.u32 2147483647, %v7365
    %v7368 = vcvt.s32.f32 %v7361
    %v7369 = vmul.f32 %v7368, %v7366
    %v7370 = vxor.u32 %v7369, 2147483648
    %v7371 = vsel %vm7288, %v7370, %v7369
    %v7372 = vsub.s32 4, %v7348
    %v7373 = vsel %vm7288, %v7372, %v7348
    %v7374 = vsel %vm7287, %v914, %v7371
    %v7375 = vsel %vm7287, 0, %v7373
    %v7376 = vcosq.f32.pop %v7374
    %v7377 = vsinq.f32.pop %v7374
    %vm7378 = vweird.f32 %v914
    %v7379 = vadd.s32 %v7375, 3
    %v7380 = vand.u32 %v7379, 3
    %vm7381 = vcmp.lt.s32.totalorder %v7380, 2
    %vm7382 = vcmp.eq.s32.totalorder %v7380, 0
    %v7383 = vxor.u32 %v7377, 2147483648
    %v7384 = vsel %vm7382, %v7376, %v7383
    %vm7385 = vcmp.eq.s32.totalorder %v7380, 2
    %v7386 = vxor.u32 %v7376, 2147483648
    %v7387 = vsel %vm7385, %v7386, %v7377
    %v7388 = vsel %vm7381, %v7384, %v7387
    %v7389 = vsel %vm7378, nan, %v7388
    %v7390 = vand.u32 2147483647, %v915
    %vm7391 = vcmp.le.f32.partialorder %v7390, 0.7853982
    %vm7392 = vcmp.lt.s32.totalorder %v915, 0
    %v7393 = vand.u32 %v915, 2139095040
    %v7394 = vshrl.u32 %v7393, 23
    %v7395 = vsub.s32 %v7394, 127
    %v7396 = vand.u32 2147483647, %v915
    %v7397 = vand.u32 %v7396, 8388607
    %v7398 = vor.u32 %v7397, 8388608
    %v7399 = vsub.s32 0, %v7398
    %v7400 = vadd.s32 %v7395, 1
    %vm7401 = vcmp.gt.s32.totalorder %v7400, 0
    %v7402 = vsel %vm7401, %v7400, 0
    %v7403 = vshrl.u32 %v7402, 5
    %v7404 = vand.u32 %v7402, 31
    %v7405 = vsub.s32 32, %v7404
    %v7406 = vshrl.u32 683565275, %v7405
    %v7407 = vshll.u32 683565275, %v7404
    %v7408 = vshrl.u32 2475754826, %v7405
    %v7409 = vor.u32 %v7407, %v7408
    %v7410 = vshll.u32 2475754826, %v7404
    %v7411 = vshrl.u32 2131351028, %v7405
    %v7412 = vor.u32 %v7410, %v7411
    %v7413 = vshll.u32 2131351028, %v7404
    %v7414 = vshrl.u32 2102212464, %v7405
    %v7415 = vor.u32 %v7413, %v7414
    %v7416 = vshll.u32 2102212464, %v7404
    %v7417 = vshrl.u32 920167782, %v7405
    %v7418 = vor.u32 %v7416, %v7417
    %v7419 = vshll.u32 920167782, %v7404
    %v7420 = vshrl.u32 1326507024, %v7405
    %v7421 = vor.u32 %v7419, %v7420
    %vm7422 = vcmp.lt.s32.totalorder %v7403, 1
    %vm7423 = vcmp.lt.s32.totalorder %v7403, 2
    %vm7424 = vcmp.lt.s32.totalorder %v7403, 3
    %vm7425 = vcmp.lt.s32.totalorder %v7403, 4
    %v7426 = vsel %vm7422, %v7406, %v7409
    %v7427 = vsel %vm7425, %v7415, 2102212464
    %v7428 = vsel %vm7424, %v7412, %v7427
    %v7429 = vsel %vm7423, %v7426, %v7428
    %v7430 = vsel %vm7422, %v7409, %v7412
    %v7431 = vsel %vm7425, %v7418, 920167782
    %v7432 = vsel %vm7424, %v7415, %v7431
    %v7433 = vsel %vm7423, %v7430, %v7432
    %v7434 = vsel %vm7422, %v7412, %v7415
    %v7435 = vsel %vm7425, %v7421, 1326507024
    %v7436 = vsel %vm7424, %v7418, %v7435
    %v7437 = vsel %vm7423, %v7434, %v7436
    %v7438 = vshll.u32 %v7398, 8
    %v7439 = vmul.u32.u64.compose %v7438, %v7437
    %v7440 = vextract.low.u32 %v7439
    %v7441 = vextract.high.u32 %v7439
    %v7442 = vmul.u32.u64.compose %v7438, %v7433
    %v7443 = vextract.low.u32 %v7442
    %v7444 = vextract.high.u32 %v7442
    %v7445 = vmul.u32 %v7438, %v7429
    %v7446 = vadd.s32 %v7441, %v7443
    %vm7447 = vc.u32 %v7441, %v7443
    %v7448 = vadd.s32 %v7444, 1
    %v7449 = vsel %vm7447, %v7448, %v7444
    %v7450 = vadd.s32 %v7445, %v7449
    %v7451 = vadd.s32 %v7450, 536870912
    %v7452 = vshrl.u32 %v7451, 30
    %v7453 = vshll.u32 %v7452, 30
    %v7454 = vsub.s32 %v7450, %v7453
    %vm7455 = vcmp.lt.s32.totalorder %v7454, 0
    %v7456 = vsub.s32 0, %v7454
    %v7457 = vsel %vm7455, %v7456, %v7454
    %v7458 = vclz %v7457
    %v7459 = vsub.s32 %v7458, 2
    %vm7460 = vcmp.gt.s32.totalorder 0, %v7459
    %v7461 = vsel %vm7460, 0, %v7459
    %v7462 = vsub.s32 32, %v7461
    %v7463 = vshll.u32 %v7454, %v7461
    %v7464 = vshrl.u32 %v7446, %v7462
    %v7465 = vor.u32 %v7463, %v7464
    %v7466 = vsub.s32 4294967266, %v7461
    %v7467 = vadd.s32 %v7466, 127
    %v7468 = vshll.u32 %v7467, 23
    %v7469 = vor.u32 4788187, %v7468
    %v7470 = vand.u32 2147483647, %v7469
    %v7472 = vcvt.s32.f32 %v7465
    %v7473 = vmul.f32 %v7472, %v7470
    %v7474 = vxor.u32 %v7473, 2147483648
    %v7475 = vsel %vm7392, %v7474, %v7473
    %v7476 = vsub.s32 4, %v7452
    %v7477 = vsel %vm7392, %v7476, %v7452
    %v7478 = vsel %vm7391, %v915, %v7475
    %v7479 = vsel %vm7391, 0, %v7477
    %v7480 = vcosq.f32.pop %v7478
    %v7481 = vsinq.f32.pop %v7478
    %vm7482 = vweird.f32 %v915
    %v7483 = vadd.s32 %v7479, 3
    %v7484 = vand.u32 %v7483, 3
    %vm7485 = vcmp.lt.s32.totalorder %v7484, 2
    %vm7486 = vcmp.eq.s32.totalorder %v7484, 0
    %v7487 = vxor.u32 %v7481, 2147483648
    %v7488 = vsel %vm7486, %v7480, %v7487
    %vm7489 = vcmp.eq.s32.totalorder %v7484, 2
    %v7490 = vxor.u32 %v7480, 2147483648
    %v7491 = vsel %vm7489, %v7490, %v7481
    %v7492 = vsel %vm7485, %v7488, %v7491
    %v7493 = vsel %vm7482, nan, %v7492
    %v7494 = vand.u32 2147483647, %v916
    %vm7495 = vcmp.le.f32.partialorder %v7494, 0.7853982
    %vm7496 = vcmp.lt.s32.totalorder %v916, 0
    %v7497 = vand.u32 %v916, 2139095040
    %v7498 = vshrl.u32 %v7497, 23
    %v7499 = vsub.s32 %v7498, 127
    %v7500 = vand.u32 2147483647, %v916
    %v7501 = vand.u32 %v7500, 8388607
    %v7502 = vor.u32 %v7501, 8388608
    %v7503 = vsub.s32 0, %v7502
    %v7504 = vadd.s32 %v7499, 1
    %vm7505 = vcmp.gt.s32.totalorder %v7504, 0
    %v7506 = vsel %vm7505, %v7504, 0
    %v7507 = vshrl.u32 %v7506, 5
    %v7508 = vand.u32 %v7506, 31
    %v7509 = vsub.s32 32, %v7508
    %v7510 = vshrl.u32 683565275, %v7509
    %v7511 = vshll.u32 683565275, %v7508
    %v7512 = vshrl.u32 2475754826, %v7509
    %v7513 = vor.u32 %v7511, %v7512
    %v7514 = vshll.u32 2475754826, %v7508
    %v7515 = vshrl.u32 2131351028, %v7509
    %v7516 = vor.u32 %v7514, %v7515
    %v7517 = vshll.u32 2131351028, %v7508
    %v7518 = vshrl.u32 2102212464, %v7509
    %v7519 = vor.u32 %v7517, %v7518
    %v7520 = vshll.u32 2102212464, %v7508
    %v7521 = vshrl.u32 920167782, %v7509
    %v7522 = vor.u32 %v7520, %v7521
    %v7523 = vshll.u32 920167782, %v7508
    %v7524 = vshrl.u32 1326507024, %v7509
    %v7525 = vor.u32 %v7523, %v7524
    %vm7526 = vcmp.lt.s32.totalorder %v7507, 1
    %vm7527 = vcmp.lt.s32.totalorder %v7507, 2
    %vm7528 = vcmp.lt.s32.totalorder %v7507, 3
    %vm7529 = vcmp.lt.s32.totalorder %v7507, 4
    %v7530 = vsel %vm7526, %v7510, %v7513
    %v7531 = vsel %vm7529, %v7519, 2102212464
    %v7532 = vsel %vm7528, %v7516, %v7531
    %v7533 = vsel %vm7527, %v7530, %v7532
    %v7534 = vsel %vm7526, %v7513, %v7516
    %v7535 = vsel %vm7529, %v7522, 920167782
    %v7536 = vsel %vm7528, %v7519, %v7535
    %v7537 = vsel %vm7527, %v7534, %v7536
    %v7538 = vsel %vm7526, %v7516, %v7519
    %v7539 = vsel %vm7529, %v7525, 1326507024
    %v7540 = vsel %vm7528, %v7522, %v7539
    %v7541 = vsel %vm7527, %v7538, %v7540
    %v7542 = vshll.u32 %v7502, 8
    %v7543 = vmul.u32.u64.compose %v7542, %v7541
    %v7544 = vextract.low.u32 %v7543
    %v7545 = vextract.high.u32 %v7543
    %v7546 = vmul.u32.u64.compose %v7542, %v7537
    %v7547 = vextract.low.u32 %v7546
    %v7548 = vextract.high.u32 %v7546
    %v7549 = vmul.u32 %v7542, %v7533
    %v7550 = vadd.s32 %v7545, %v7547
    %vm7551 = vc.u32 %v7545, %v7547
    %v7552 = vadd.s32 %v7548, 1
    %v7553 = vsel %vm7551, %v7552, %v7548
    %v7554 = vadd.s32 %v7549, %v7553
    %v7555 = vadd.s32 %v7554, 536870912
    %v7556 = vshrl.u32 %v7555, 30
    %v7557 = vshll.u32 %v7556, 30
    %v7558 = vsub.s32 %v7554, %v7557
    %vm7559 = vcmp.lt.s32.totalorder %v7558, 0
    %v7560 = vsub.s32 0, %v7558
    %v7561 = vsel %vm7559, %v7560, %v7558
    %v7562 = vclz %v7561
    %v7563 = vsub.s32 %v7562, 2
    %vm7564 = vcmp.gt.s32.totalorder 0, %v7563
    %v7565 = vsel %vm7564, 0, %v7563
    %v7566 = vsub.s32 32, %v7565
    %v7567 = vshll.u32 %v7558, %v7565
    %v7568 = vshrl.u32 %v7550, %v7566
    %v7569 = vor.u32 %v7567, %v7568
    %v7570 = vsub.s32 4294967266, %v7565
    %v7571 = vadd.s32 %v7570, 127
    %v7572 = vshll.u32 %v7571, 23
    %v7573 = vor.u32 4788187, %v7572
    %v7574 = vand.u32 2147483647, %v7573
    %v7576 = vcvt.s32.f32 %v7569
    %v7577 = vmul.f32 %v7576, %v7574
    %v7578 = vxor.u32 %v7577, 2147483648
    %v7579 = vsel %vm7496, %v7578, %v7577
    %v7580 = vsub.s32 4, %v7556
    %v7581 = vsel %vm7496, %v7580, %v7556
    %v7582 = vsel %vm7495, %v916, %v7579
    %v7583 = vsel %vm7495, 0, %v7581
    %v7584 = vcosq.f32.pop %v7582
    %v7585 = vsinq.f32.pop %v7582
    %vm7586 = vweird.f32 %v916
    %v7587 = vadd.s32 %v7583, 3
    %v7588 = vand.u32 %v7587, 3
    %vm7589 = vcmp.lt.s32.totalorder %v7588, 2
    %vm7590 = vcmp.eq.s32.totalorder %v7588, 0
    %v7591 = vxor.u32 %v7585, 2147483648
    %v7592 = vsel %vm7590, %v7584, %v7591
    %vm7593 = vcmp.eq.s32.totalorder %v7588, 2
    %v7594 = vxor.u32 %v7584, 2147483648
    %v7595 = vsel %vm7593, %v7594, %v7585
    %v7596 = vsel %vm7589, %v7592, %v7595
    %v7597 = vsel %vm7586, nan, %v7596
    %v7598 = vand.u32 2147483647, %v917
    %vm7599 = vcmp.le.f32.partialorder %v7598, 0.7853982
    %vm7600 = vcmp.lt.s32.totalorder %v917, 0
    %v7601 = vand.u32 %v917, 2139095040
    %v7602 = vshrl.u32 %v7601, 23
    %v7603 = vsub.s32 %v7602, 127
    %v7604 = vand.u32 2147483647, %v917
    %v7605 = vand.u32 %v7604, 8388607
    %v7606 = vor.u32 %v7605, 8388608
    %v7607 = vsub.s32 0, %v7606
    %v7608 = vadd.s32 %v7603, 1
    %vm7609 = vcmp.gt.s32.totalorder %v7608, 0
    %v7610 = vsel %vm7609, %v7608, 0
    %v7611 = vshrl.u32 %v7610, 5
    %v7612 = vand.u32 %v7610, 31
    %v7613 = vsub.s32 32, %v7612
    %v7614 = vshrl.u32 683565275, %v7613
    %v7615 = vshll.u32 683565275, %v7612
    %v7616 = vshrl.u32 2475754826, %v7613
    %v7617 = vor.u32 %v7615, %v7616
    %v7618 = vshll.u32 2475754826, %v7612
    %v7619 = vshrl.u32 2131351028, %v7613
    %v7620 = vor.u32 %v7618, %v7619
    %v7621 = vshll.u32 2131351028, %v7612
    %v7622 = vshrl.u32 2102212464, %v7613
    %v7623 = vor.u32 %v7621, %v7622
    %v7624 = vshll.u32 2102212464, %v7612
    %v7625 = vshrl.u32 920167782, %v7613
    %v7626 = vor.u32 %v7624, %v7625
    %v7627 = vshll.u32 920167782, %v7612
    %v7628 = vshrl.u32 1326507024, %v7613
    %v7629 = vor.u32 %v7627, %v7628
    %vm7630 = vcmp.lt.s32.totalorder %v7611, 1
    %vm7631 = vcmp.lt.s32.totalorder %v7611, 2
    %vm7632 = vcmp.lt.s32.totalorder %v7611, 3
    %vm7633 = vcmp.lt.s32.totalorder %v7611, 4
    %v7634 = vsel %vm7630, %v7614, %v7617
    %v7635 = vsel %vm7633, %v7623, 2102212464
    %v7636 = vsel %vm7632, %v7620, %v7635
    %v7637 = vsel %vm7631, %v7634, %v7636
    %v7638 = vsel %vm7630, %v7617, %v7620
    %v7639 = vsel %vm7633, %v7626, 920167782
    %v7640 = vsel %vm7632, %v7623, %v7639
    %v7641 = vsel %vm7631, %v7638, %v7640
    %v7642 = vsel %vm7630, %v7620, %v7623
    %v7643 = vsel %vm7633, %v7629, 1326507024
    %v7644 = vsel %vm7632, %v7626, %v7643
    %v7645 = vsel %vm7631, %v7642, %v7644
    %v7646 = vshll.u32 %v7606, 8
    %v7647 = vmul.u32.u64.compose %v7646, %v7645
    %v7648 = vextract.low.u32 %v7647
    %v7649 = vextract.high.u32 %v7647
    %v7650 = vmul.u32.u64.compose %v7646, %v7641
    %v7651 = vextract.low.u32 %v7650
    %v7652 = vextract.high.u32 %v7650
    %v7653 = vmul.u32 %v7646, %v7637
    %v7654 = vadd.s32 %v7649, %v7651
    %vm7655 = vc.u32 %v7649, %v7651
    %v7656 = vadd.s32 %v7652, 1
    %v7657 = vsel %vm7655, %v7656, %v7652
    %v7658 = vadd.s32 %v7653, %v7657
    %v7659 = vadd.s32 %v7658, 536870912
    %v7660 = vshrl.u32 %v7659, 30
    %v7661 = vshll.u32 %v7660, 30
    %v7662 = vsub.s32 %v7658, %v7661
    %vm7663 = vcmp.lt.s32.totalorder %v7662, 0
    %v7664 = vsub.s32 0, %v7662
    %v7665 = vsel %vm7663, %v7664, %v7662
    %v7666 = vclz %v7665
    %v7667 = vsub.s32 %v7666, 2
    %vm7668 = vcmp.gt.s32.totalorder 0, %v7667
    %v7669 = vsel %vm7668, 0, %v7667
    %v7670 = vsub.s32 32, %v7669
    %v7671 = vshll.u32 %v7662, %v7669
    %v7672 = vshrl.u32 %v7654, %v7670
    %v7673 = vor.u32 %v7671, %v7672
    %v7674 = vsub.s32 4294967266, %v7669
    %v7675 = vadd.s32 %v7674, 127
    %v7676 = vshll.u32 %v7675, 23
    %v7677 = vor.u32 4788187, %v7676
    %v7678 = vand.u32 2147483647, %v7677
    %v7680 = vcvt.s32.f32 %v7673
    %v7681 = vmul.f32 %v7680, %v7678
    %v7682 = vxor.u32 %v7681, 2147483648
    %v7683 = vsel %vm7600, %v7682, %v7681
    %v7684 = vsub.s32 4, %v7660
    %v7685 = vsel %vm7600, %v7684, %v7660
    %v7686 = vsel %vm7599, %v917, %v7683
    %v7687 = vsel %vm7599, 0, %v7685
    %v7688 = vcosq.f32.pop %v7686
    %v7689 = vsinq.f32.pop %v7686
    %vm7690 = vweird.f32 %v917
    %v7691 = vadd.s32 %v7687, 3
    %v7692 = vand.u32 %v7691, 3
    %vm7693 = vcmp.lt.s32.totalorder %v7692, 2
    %vm7694 = vcmp.eq.s32.totalorder %v7692, 0
    %v7695 = vxor.u32 %v7689, 2147483648
    %v7696 = vsel %vm7694, %v7688, %v7695
    %vm7697 = vcmp.eq.s32.totalorder %v7692, 2
    %v7698 = vxor.u32 %v7688, 2147483648
    %v7699 = vsel %vm7697, %v7698, %v7689
    %v7700 = vsel %vm7693, %v7696, %v7699
    %v7701 = vsel %vm7690, nan, %v7700
    %7734 = vrot.lane.b32.xlu0 %v4477, 64
    %v7735 = vpop.permute.xlu0 %7734
    %7736 = vrot.lane.b32.xlu0 %v4581, 64
    %v7737 = vpop.permute.xlu0 %7736
    %7738 = vrot.lane.b32.xlu0 %v4685, 64
    %v7739 = vpop.permute.xlu0 %7738
    %7740 = vrot.lane.b32.xlu0 %v4789, 64
    %v7741 = vpop.permute.xlu0 %7740
    %7742 = vrot.lane.b32.xlu0 %v4893, 64
    %v7743 = vpop.permute.xlu0 %7742
    %7744 = vrot.lane.b32.xlu0 %v4997, 64
    %v7745 = vpop.permute.xlu0 %7744
    %7746 = vrot.lane.b32.xlu0 %v5101, 64
    %v7747 = vpop.permute.xlu0 %7746
    %7748 = vrot.lane.b32.xlu0 %v5205, 64
    %v7749 = vpop.permute.xlu0 %7748
    %7750 = vrot.lane.b32.xlu0 %v5309, 64
    %v7751 = vpop.permute.xlu0 %7750
    %7752 = vrot.lane.b32.xlu0 %v5413, 64
    %v7753 = vpop.permute.xlu0 %7752
    %7754 = vrot.lane.b32.xlu0 %v5517, 64
    %v7755 = vpop.permute.xlu0 %7754
    %7756 = vrot.lane.b32.xlu0 %v5621, 64
    %v7757 = vpop.permute.xlu0 %7756
    %7758 = vrot.lane.b32.xlu0 %v5725, 64
    %v7759 = vpop.permute.xlu0 %7758
    %7760 = vrot.lane.b32.xlu0 %v5829, 64
    %v7761 = vpop.permute.xlu0 %7760
    %7762 = vrot.lane.b32.xlu0 %v5933, 64
    %v7763 = vpop.permute.xlu0 %7762
    %7764 = vrot.lane.b32.xlu0 %v6037, 64
    %v7765 = vpop.permute.xlu0 %7764
    %7766 = vrot.lane.b32.xlu0 %v6141, 64
    %v7767 = vpop.permute.xlu0 %7766
    %7768 = vrot.lane.b32.xlu0 %v6245, 64
    %v7769 = vpop.permute.xlu0 %7768
    %7770 = vrot.lane.b32.xlu0 %v6349, 64
    %v7771 = vpop.permute.xlu0 %7770
    %7772 = vrot.lane.b32.xlu0 %v6453, 64
    %v7773 = vpop.permute.xlu0 %7772
    %7774 = vrot.lane.b32.xlu0 %v6557, 64
    %v7775 = vpop.permute.xlu0 %7774
    %7776 = vrot.lane.b32.xlu0 %v6661, 64
    %v7777 = vpop.permute.xlu0 %7776
    %7778 = vrot.lane.b32.xlu0 %v6765, 64
    %v7779 = vpop.permute.xlu0 %7778
    %7780 = vrot.lane.b32.xlu0 %v6869, 64
    %v7781 = vpop.permute.xlu0 %7780
    %7782 = vrot.lane.b32.xlu0 %v6973, 64
    %v7783 = vpop.permute.xlu0 %7782
    %7784 = vrot.lane.b32.xlu0 %v7077, 64
    %v7785 = vpop.permute.xlu0 %7784
    %7786 = vrot.lane.b32.xlu0 %v7181, 64
    %v7787 = vpop.permute.xlu0 %7786
    %7788 = vrot.lane.b32.xlu0 %v7285, 64
    %v7789 = vpop.permute.xlu0 %7788
    %7790 = vrot.lane.b32.xlu0 %v7389, 64
    %v7791 = vpop.permute.xlu0 %7790
    %7792 = vrot.lane.b32.xlu0 %v7493, 64
    %v7793 = vpop.permute.xlu0 %7792
    %7794 = vrot.lane.b32.xlu0 %v7597, 64
    %v7795 = vpop.permute.xlu0 %7794
    %7796 = vrot.lane.b32.xlu0 %v7701, 64
    %v7797 = vpop.permute.xlu0 %7796
    %v7830 = vmul.f32 %v822, %v7735
    %v7831 = vmul.f32 %v824, %v7737
    %v7832 = vmul.f32 %v826, %v7739
    %v7833 = vmul.f32 %v828, %v7741
    %v7834 = vmul.f32 %v830, %v7743
    %v7835 = vmul.f32 %v832, %v7745
    %v7836 = vmul.f32 %v834, %v7747
    %v7837 = vmul.f32 %v836, %v7749
    %v7838 = vmul.f32 %v838, %v7751
    %v7839 = vmul.f32 %v840, %v7753
    %v7840 = vmul.f32 %v842, %v7755
    %v7841 = vmul.f32 %v844, %v7757
    %v7842 = vmul.f32 %v846, %v7759
    %v7843 = vmul.f32 %v848, %v7761
    %v7844 = vmul.f32 %v850, %v7763
    %v7845 = vmul.f32 %v852, %v7765
    %v7846 = vmul.f32 %v854, %v7767
    %v7847 = vmul.f32 %v856, %v7769
    %v7848 = vmul.f32 %v858, %v7771
    %v7849 = vmul.f32 %v860, %v7773
    %v7850 = vmul.f32 %v862, %v7775
    %v7851 = vmul.f32 %v864, %v7777
    %v7852 = vmul.f32 %v866, %v7779
    %v7853 = vmul.f32 %v868, %v7781
    %v7854 = vmul.f32 %v870, %v7783
    %v7855 = vmul.f32 %v872, %v7785
    %v7856 = vmul.f32 %v874, %v7787
    %v7857 = vmul.f32 %v876, %v7789
    %v7858 = vmul.f32 %v878, %v7791
    %v7859 = vmul.f32 %v880, %v7793
    %v7860 = vmul.f32 %v882, %v7795
    %v7861 = vmul.f32 %v884, %v7797
    %7894 = vrot.lane.b32.xlu0 %v4342, 64
    %v7895 = vpop.permute.xlu0 %7894
    %7896 = vrot.lane.b32.xlu0 %v4343, 64
    %v7897 = vpop.permute.xlu0 %7896
    %7898 = vrot.lane.b32.xlu0 %v4344, 64
    %v7899 = vpop.permute.xlu0 %7898
    %7900 = vrot.lane.b32.xlu0 %v4345, 64
    %v7901 = vpop.permute.xlu0 %7900
    %7902 = vrot.lane.b32.xlu0 %v4346, 64
    %v7903 = vpop.permute.xlu0 %7902
    %7904 = vrot.lane.b32.xlu0 %v4347, 64
    %v7905 = vpop.permute.xlu0 %7904
    %7906 = vrot.lane.b32.xlu0 %v4348, 64
    %v7907 = vpop.permute.xlu0 %7906
    %7908 = vrot.lane.b32.xlu0 %v4349, 64
    %v7909 = vpop.permute.xlu0 %7908
    %7910 = vrot.lane.b32.xlu0 %v4350, 64
    %v7911 = vpop.permute.xlu0 %7910
    %7912 = vrot.lane.b32.xlu0 %v4351, 64
    %v7913 = vpop.permute.xlu0 %7912
    %7914 = vrot.lane.b32.xlu0 %v4352, 64
    %v7915 = vpop.permute.xlu0 %7914
    %7916 = vrot.lane.b32.xlu0 %v4353, 64
    %v7917 = vpop.permute.xlu0 %7916
    %7918 = vrot.lane.b32.xlu0 %v4354, 64
    %v7919 = vpop.permute.xlu0 %7918
    %7920 = vrot.lane.b32.xlu0 %v4355, 64
    %v7921 = vpop.permute.xlu0 %7920
    %7922 = vrot.lane.b32.xlu0 %v4356, 64
    %v7923 = vpop.permute.xlu0 %7922
    %7924 = vrot.lane.b32.xlu0 %v4357, 64
    %v7925 = vpop.permute.xlu0 %7924
    %7926 = vrot.lane.b32.xlu0 %v4358, 64
    %v7927 = vpop.permute.xlu0 %7926
    %7928 = vrot.lane.b32.xlu0 %v4359, 64
    %v7929 = vpop.permute.xlu0 %7928
    %7930 = vrot.lane.b32.xlu0 %v4360, 64
    %v7931 = vpop.permute.xlu0 %7930
    %7932 = vrot.lane.b32.xlu0 %v4361, 64
    %v7933 = vpop.permute.xlu0 %7932
    %7934 = vrot.lane.b32.xlu0 %v4362, 64
    %v7935 = vpop.permute.xlu0 %7934
    %7936 = vrot.lane.b32.xlu0 %v4363, 64
    %v7937 = vpop.permute.xlu0 %7936
    %7938 = vrot.lane.b32.xlu0 %v4364, 64
    %v7939 = vpop.permute.xlu0 %7938
    %7940 = vrot.lane.b32.xlu0 %v4365, 64
    %v7941 = vpop.permute.xlu0 %7940
    %7942 = vrot.lane.b32.xlu0 %v4366, 64
    %v7943 = vpop.permute.xlu0 %7942
    %7944 = vrot.lane.b32.xlu0 %v4367, 64
    %v7945 = vpop.permute.xlu0 %7944
    %7946 = vrot.lane.b32.xlu0 %v4368, 64
    %v7947 = vpop.permute.xlu0 %7946
    %7948 = vrot.lane.b32.xlu0 %v4369, 64
    %v7949 = vpop.permute.xlu0 %7948
    %7950 = vrot.lane.b32.xlu0 %v4370, 64
    %v7951 = vpop.permute.xlu0 %7950
    %7952 = vrot.lane.b32.xlu0 %v4371, 64
    %v7953 = vpop.permute.xlu0 %7952
    %7954 = vrot.lane.b32.xlu0 %v4372, 64
    %v7955 = vpop.permute.xlu0 %7954
    %7956 = vrot.lane.b32.xlu0 %v4373, 64
    %v7957 = vpop.permute.xlu0 %7956
    %v7990 = vsel %vm78, %v7895, %v7830
    %v7991 = vsel %vm78, %v7897, %v7831
    %v7992 = vsel %vm78, %v7899, %v7832
    %v7993 = vsel %vm78, %v7901, %v7833
    %v7994 = vsel %vm78, %v7903, %v7834
    %v7995 = vsel %vm78, %v7905, %v7835
    %v7996 = vsel %vm78, %v7907, %v7836
    %v7997 = vsel %vm78, %v7909, %v7837
    %v7998 = vsel %vm78, %v7911, %v7838
    %v7999 = vsel %vm78, %v7913, %v7839
    %v8000 = vsel %vm78, %v7915, %v7840
    %v8001 = vsel %vm78, %v7917, %v7841
    %v8002 = vsel %vm78, %v7919, %v7842
    %v8003 = vsel %vm78, %v7921, %v7843
    %v8004 = vsel %vm78, %v7923, %v7844
    %v8005 = vsel %vm78, %v7925, %v7845
    %v8006 = vsel %vm78, %v7927, %v7846
    %v8007 = vsel %vm78, %v7929, %v7847
    %v8008 = vsel %vm78, %v7931, %v7848
    %v8009 = vsel %vm78, %v7933, %v7849
    %v8010 = vsel %vm78, %v7935, %v7850
    %v8011 = vsel %vm78, %v7937, %v7851
    %v8012 = vsel %vm78, %v7939, %v7852
    %v8013 = vsel %vm78, %v7941, %v7853
    %v8014 = vsel %vm78, %v7943, %v7854
    %v8015 = vsel %vm78, %v7945, %v7855
    %v8016 = vsel %vm78, %v7947, %v7856
    %v8017 = vsel %vm78, %v7949, %v7857
    %v8018 = vsel %vm78, %v7951, %v7858
    %v8019 = vsel %vm78, %v7953, %v7859
    %v8020 = vsel %vm78, %v7955, %v7860
    %v8021 = vsel %vm78, %v7957, %v7861
    %8022 = vst [vmem:[#allocation5] sm:$0xff] %v7990
    %8023 = vst [vmem:[#allocation5 + $0x8] sm:$0xff] %v7991
    %8024 = vst [vmem:[#allocation5 + $0x10] sm:$0xff] %v7992
    %8025 = vst [vmem:[#allocation5 + $0x18] sm:$0xff] %v7993
    %8026 = vst [vmem:[#allocation5 + $0x20] sm:$0xff] %v7994
    %8027 = vst [vmem:[#allocation5 + $0x28] sm:$0xff] %v7995
    %8028 = vst [vmem:[#allocation5 + $0x30] sm:$0xff] %v7996
    %8029 = vst [vmem:[#allocation5 + $0x38] sm:$0xff] %v7997
    %8030 = vst [vmem:[#allocation5 + $0x40] sm:$0xff] %v7998
    %8031 = vst [vmem:[#allocation5 + $0x48] sm:$0xff] %v7999
    %8032 = vst [vmem:[#allocation5 + $0x50] sm:$0xff] %v8000
    %8033 = vst [vmem:[#allocation5 + $0x58] sm:$0xff] %v8001
    %8034 = vst [vmem:[#allocation5 + $0x60] sm:$0xff] %v8002
    %8035 = vst [vmem:[#allocation5 + $0x68] sm:$0xff] %v8003
    %8036 = vst [vmem:[#allocation5 + $0x70] sm:$0xff] %v8004
    %8037 = vst [vmem:[#allocation5 + $0x78] sm:$0xff] %v8005
    %8038 = vst [vmem:[#allocation5 + $0x80] sm:$0xff] %v8006
    %8039 = vst [vmem:[#allocation5 + $0x88] sm:$0xff] %v8007
    %8040 = vst [vmem:[#allocation5 + $0x90] sm:$0xff] %v8008
    %8041 = vst [vmem:[#allocation5 + $0x98] sm:$0xff] %v8009
    %8042 = vst [vmem:[#allocation5 + $0xa0] sm:$0xff] %v8010
    %8043 = vst [vmem:[#allocation5 + $0xa8] sm:$0xff] %v8011
    %8044 = vst [vmem:[#allocation5 + $0xb0] sm:$0xff] %v8012
    %8045 = vst [vmem:[#allocation5 + $0xb8] sm:$0xff] %v8013
    %8046 = vst [vmem:[#allocation5 + $0xc0] sm:$0xff] %v8014
    %8047 = vst [vmem:[#allocation5 + $0xc8] sm:$0xff] %v8015
    %8048 = vst [vmem:[#allocation5 + $0xd0] sm:$0xff] %v8016
    %8049 = vst [vmem:[#allocation5 + $0xd8] sm:$0xff] %v8017
    %8050 = vst [vmem:[#allocation5 + $0xe0] sm:$0xff] %v8018
    %8051 = vst [vmem:[#allocation5 + $0xe8] sm:$0xff] %v8019
    %8052 = vst [vmem:[#allocation5 + $0xf0] sm:$0xff] %v8020
    %8053 = vst [vmem:[#allocation5 + $0xf8] sm:$0xff] %v8021
    // Predicated region
    $region22: #{tpu_custom_call.1} parent=1 // pred_check
      _
    $region23: #{tpu_custom_call.1} parent=1 // pred_check_branch
      %8055 = sbr.rel (0) target = $region25
    $region24: #{tpu_custom_call.1} parent=1 // pred_region
      %s8057 = ssub.s32 4096, 4096
      %8058 = vsyncadd [#allocation3], %s8057
      %s8059 = sshll.u32 [#allocation5], 4
      %s8060 = int_to_ptr.vmem [resolvable:$true] %s8059
      %8065 = dma.vmem_to_hbm [thread:$0]  %s8060, 4096, %s4, [#allocation3], 128, 128, 8
    $region25: #{tpu_custom_call.1} parent=1 // pred_fallthru
      _
    // Predicated region
    $region26: #{tpu_custom_call.1} parent=1 // pred_check
      _
    $region27: #{tpu_custom_call.1} parent=1 // pred_check_branch
      %8067 = sbr.rel (0) target = $region29
    $region28: #{tpu_custom_call.1} parent=1 // pred_region
      %8068 = dma.done [#allocation3], 4096
    $region29: #{tpu_custom_call.1} parent=1 // pred_fallthru
      _
    %8069 = vsyncpa [#allocation3], 1
    %8070 = vsyncpa [#allocation4], 1

</llo_original>
